<compile_context>
chip_gen: v7x
topology: tpu7x:2x2x1
jax: 0.10.0
libtpu: 0.0.40
codegen_flags: <defaults>
</compile_context>

<pallas_src>
import numpy as np
import jax
import jax.numpy as jnp
from jax.experimental import pallas as pl
from jax.experimental.pallas import tpu as pltpu


def _adaptive_pool_matrix(in_size: int, out_size: int) -> np.ndarray:
    """Row-stochastic (out, in) matrix with PyTorch AdaptiveAvgPool bin rule."""
    p = np.zeros((out_size, in_size), dtype=np.float32)
    for i in range(out_size):
        start = (i * in_size) // out_size
        end = -(-((i + 1) * in_size) // out_size)  # ceil
        p[i, start:end] = 1.0 / (end - start)
    return p


def prepare_conv_regressor_params(params, *, chls, h, w, dim, eps=1e-5,
                                  compute_dtype=jnp.bfloat16):
    """One-time (init-time) weight preparation: transposes, BN folding,
    pooling-matrix construction, lane padding and bf16 casts.  Call once and
    reuse the result; the forward path then does no weight-sized XLA work."""
    C, H, W = chls, h, w
    HW = H * W
    n1 = params["w1"].shape[0]          # 4096
    n2 = params["w2"].shape[0]          # 200
    n3 = params["w3"].shape[0]          # 2*dim
    assert n3 == 2 * dim
    n3p = ((n3 + 127) // 128) * 128     # lane-dense fc3 output width

    # Exact PyTorch adaptive-avg-pool as a block-diagonal (C*HW, C*49) matrix,
    # whose output column order c*49 + i*7 + j matches torch's
    # x.view(-1, 7*7*chls) flatten order.
    ph = _adaptive_pool_matrix(H, 7)
    pw = _adaptive_pool_matrix(W, 7)
    p = np.kron(ph, pw).T                                  # (HW, 49)
    pool_bd = np.zeros((C * HW, C * 49), np.float32)
    for c in range(C):
        pool_bd[c * HW:(c + 1) * HW, c * 49:(c + 1) * 49] = p

    # fc1: torch's flatten order IS w1's K order, so a plain transpose suffices.
    w1f = jnp.transpose(params["w1"]).astype(compute_dtype)          # (C*49, 4096)
    s1 = (params["g1"] / jnp.sqrt(params["v1"] + eps)).astype(jnp.float32)
    t1 = ((params["b1"] - params["m1"]) * s1 + params["bt1"]).astype(jnp.float32)

    w2t = jnp.transpose(params["w2"]).astype(compute_dtype)          # (4096, 200)
    s2 = (params["g2"] / jnp.sqrt(params["v2"] + eps)).astype(jnp.float32)
    t2 = ((params["b2"] - params["m2"]) * s2 + params["bt2"]).astype(jnp.float32)

    # fc3: zero-pad output width 2*dim -> n3p so the final store is lane-dense.
    w3t = jnp.zeros((n2, n3p), compute_dtype).at[:, :n3].set(
        jnp.transpose(params["w3"]).astype(compute_dtype))           # (200, n3p)
    b3 = jnp.zeros((1, n3p), jnp.float32).at[0, :n3].set(
        params["b3"].astype(jnp.float32))

    return dict(
        pool_bd=jnp.asarray(pool_bd, compute_dtype),                 # (C*HW, C*49)
        w1f=w1f, s1=s1.reshape(1, n1), t1=t1.reshape(1, n1),
        w2t=w2t, s2=s2.reshape(1, n2), t2=t2.reshape(1, n2),
        w3t=w3t, b3=b3,
        meta=dict(chls=C, h=H, w=W, dim=dim, n1=n1, n2=n2, n3=n3, n3p=n3p),
    )


def _conv_regressor_kernel(x_ref, pool_ref, w1_ref, s1_ref, t1_ref,
                           w2_ref, s2_ref, t2_ref, w3_ref, b3_ref, o_ref):
    # x_ref   : (TB, C*HW) f32   batch tile, NCHW pre-flattened (metadata only)
    # pool_ref: (C*HW, C*49) bf16 block-diagonal adaptive-avg-pool matrix
    # w1_ref  : (C*49, 4096) bf16  fc1 weight (torch flatten order baked in)
    # s1,t1   : (1, 4096) f32     folded BN1 scale / shift (fc1 bias folded in)
    # w2_ref  : (4096, 200) bf16   s2,t2: (1, 200) f32
    # w3_ref  : (200, n3p) bf16    b3: (1, n3p) f32   (n3p = padded 2*dim)
    # o_ref   : (TB, n3p)
    cdt = pool_ref.dtype

    # --- AdaptiveAvgPool2d((7,7)) + flatten + fc1: two lane-dense GEMMs -----
    xb = x_ref[...].astype(cdt)                                    # (TB, C*HW)
    pooled = jnp.dot(xb, pool_ref[...],
                     preferred_element_type=jnp.float32)           # (TB, C*49)
    h1 = jnp.dot(pooled.astype(cdt), w1_ref[...],
                 preferred_element_type=jnp.float32)               # (TB, 4096)
    a1 = jnp.maximum(h1 * s1_ref[...] + t1_ref[...], 0.0)          # BN + ReLU (f32)

    # --- fc2 + BN + ReLU -----------------------------------------------------
    h2 = jnp.dot(a1.astype(cdt), w2_ref[...],
                 preferred_element_type=jnp.float32)               # (TB, 200)
    a2 = jnp.maximum(h2 * s2_ref[...] + t2_ref[...], 0.0)

    # --- fc3 (lane-padded output) --------------------------------------------
    y = jnp.dot(a2.astype(cdt), w3_ref[...],
                preferred_element_type=jnp.float32) + b3_ref[...]
    o_ref[...] = y.astype(o_ref.dtype)


_TB_MAX = 256   # batch-tile rows; fills the 256-row MXU on v6e/v7x


def conv_regressor_forward(x, prepared):
    """Pallas equivalent of ConvRegressor.forward (BatchNorm in inference mode).

    `prepared` comes from prepare_conv_regressor_params (called once at init)."""
    meta = prepared["meta"]
    C, H, W, dim = meta["chls"], meta["h"], meta["w"], meta["dim"]
    n1, n2, n3, n3p = meta["n1"], meta["n2"], meta["n3"], meta["n3p"]
    B = x.shape[0]
    assert x.shape[1:] == (C, H, W), x.shape
    CHW = C * H * W
    C49 = C * 49

    x_flat = x.reshape(B, CHW)                                     # metadata-only
    if B > _TB_MAX:
        tb = _TB_MAX
        bp = pl.cdiv(B, tb) * tb
        if bp != B:
            x_flat = jnp.pad(x_flat, ((0, bp - B), (0, 0)))
    else:
        tb, bp = B, B
    num_tiles = bp // tb

    weights = (prepared["pool_bd"], prepared["w1f"],
               prepared["s1"], prepared["t1"],
               prepared["w2t"], prepared["s2"], prepared["t2"],
               prepared["w3t"], prepared["b3"])

    # VMEM budget derived from actual buffer sizes (x2 for default double
    # buffering) plus headroom for f32 intermediates; clamped well under the
    # 64-MiB physical VMEM of v7x.
    block_bytes = (tb * CHW + tb * n3p) * x.dtype.itemsize \
        + sum(int(np.prod(a.shape)) * a.dtype.itemsize for a in weights)
    vmem_limit = int(min(56 << 20,
                         max(16 << 20, 2 * block_bytes + 8 * tb * n1 * 4)))

    const2 = lambda i: (0, 0)
    batch2 = lambda i: (i, 0)

    out = pl.pallas_call(
        _conv_regressor_kernel,
        out_shape=jax.ShapeDtypeStruct((bp, n3p), x.dtype),
        grid_spec=pltpu.PrefetchScalarGridSpec(
            num_scalar_prefetch=0,
            grid=(num_tiles,),
            in_specs=[
                pl.BlockSpec((tb, CHW), batch2),     # x tile (pipelined over batch)
                pl.BlockSpec((CHW, C49), const2),    # pooling matrix (VMEM-resident)
                pl.BlockSpec((C49, n1), const2),     # fc1 weight     (VMEM-resident)
                pl.BlockSpec((1, n1), const2),       # BN1 scale
                pl.BlockSpec((1, n1), const2),       # BN1 shift
                pl.BlockSpec((n1, n2), const2),      # fc2 weight
                pl.BlockSpec((1, n2), const2),       # BN2 scale
                pl.BlockSpec((1, n2), const2),       # BN2 shift
                pl.BlockSpec((n2, n3p), const2),     # fc3 weight (lane-padded)
                pl.BlockSpec((1, n3p), const2),      # fc3 bias   (lane-padded)
            ],
            out_specs=pl.BlockSpec((tb, n3p), batch2),
        ),
        compiler_params=pltpu.CompilerParams(
            # Shard batch tiles across v7x's two TensorCores only when there
            # is more than one tile; a single tile fetches weights once.
            dimension_semantics=("parallel",) if num_tiles > 1 else ("arbitrary",),
            vmem_limit_bytes=vmem_limit,
        ),
    )(x_flat, *weights)

    return out[:B, :n3].reshape(B, dim, 2)


def _reference_forward(x, params, *, dim, eps=1e-5):
    """Pure-JAX f32 reference with identical (inference-mode BN) semantics."""
    B, C, H, W = x.shape
    ph = jnp.asarray(_adaptive_pool_matrix(H, 7))
    pw = jnp.asarray(_adaptive_pool_matrix(W, 7))
    pooled = jnp.einsum("ih,bchw,jw->bcij", ph, x, pw)
    flat = pooled.reshape(B, C * 49)

    h1 = flat @ params["w1"].T + params["b1"]
    h1 = (h1 - params["m1"]) / jnp.sqrt(params["v1"] + eps) * params["g1"] + params["bt1"]
    h1 = jnp.maximum(h1, 0.0)

    h2 = h1 @ params["w2"].T + params["b2"]
    h2 = (h2 - params["m2"]) / jnp.sqrt(params["v2"] + eps) * params["g2"] + params["bt2"]
    h2 = jnp.maximum(h2, 0.0)

    y = h2 @ params["w3"].T + params["b3"]
    return y.reshape(B, dim, 2)


if __name__ == "__main__":
    B, C, H, W, dim = 2, 4, 16, 16, 3
    F1, N1, N2, N3 = C * 49, 4096, 200, 2 * dim

    key = jax.random.PRNGKey(0)
    ks = jax.random.split(key, 16)

    def lin_init(kw, kb, out_f, in_f):
        bound = 1.0 / np.sqrt(in_f)
        w = jax.random.uniform(kw, (out_f, in_f), jnp.float32, -bound, bound)
        b = jax.random.uniform(kb, (out_f,), jnp.float32, -bound, bound)
        return w, b

    x = jax.random.normal(ks[0], (B, C, H, W), jnp.float32)
    w1, b1 = lin_init(ks[1], ks[2], N1, F1)
    w2, b2 = lin_init(ks[3], ks[4], N2, N1)
    w3, b3 = lin_init(ks[5], ks[6], N3, N2)

    params = dict(
        w1=w1, b1=b1,
        g1=jax.random.uniform(ks[7], (N1,), jnp.float32, 0.5, 1.5),
        bt1=0.1 * jax.random.normal(ks[8], (N1,), jnp.float32),
        m1=0.1 * jax.random.normal(ks[9], (N1,), jnp.float32),
        v1=jax.random.uniform(ks[10], (N1,), jnp.float32, 0.5, 1.5),
        w2=w2, b2=b2,
        g2=jax.random.uniform(ks[11], (N2,), jnp.float32, 0.5, 1.5),
        bt2=0.1 * jax.random.normal(ks[12], (N2,), jnp.float32),
        m2=0.1 * jax.random.normal(ks[13], (N2,), jnp.float32),
        v2=jax.random.uniform(ks[14], (N2,), jnp.float32, 0.5, 1.5),
        w3=w3, b3=b3,
    )

    # One-time weight preparation (hoisted out of the forward path).
    prepared = prepare_conv_regressor_params(params, chls=C, h=H, w=W, dim=dim)
    prepared = jax.tree_util.tree_map(
        lambda a: jax.block_until_ready(a) if isinstance(a, jax.Array) else a,
        prepared)

    y = conv_regressor_forward(x, prepared)
    y = jax.block_until_ready(y)

    y_ref = jax.block_until_ready(_reference_forward(x, params, dim=dim))

    assert y.shape == (B, dim, 2), y.shape
    assert y.dtype == x.dtype, y.dtype
    max_err = float(jnp.max(jnp.abs(y - y_ref)))
    assert max_err < 2e-2, f"max abs error vs reference: {max_err}"

    print("KERNEL_OK")
</pallas_src>

<mosaic_0001>
module attributes {stable_mosaic.version = 11 : i64} {
  func.func @_conv_regressor_kernel(%arg0: i32, %arg1: memref<2x1024xf32, #tpu.memory_space<vmem>>, %arg2: memref<1024x196xbf16, #tpu.memory_space<vmem>>, %arg3: memref<196x4096xbf16, #tpu.memory_space<vmem>>, %arg4: memref<1x4096xf32, #tpu.memory_space<vmem>>, %arg5: memref<1x4096xf32, #tpu.memory_space<vmem>>, %arg6: memref<4096x200xbf16, #tpu.memory_space<vmem>>, %arg7: memref<1x200xf32, #tpu.memory_space<vmem>>, %arg8: memref<1x200xf32, #tpu.memory_space<vmem>>, %arg9: memref<200x128xbf16, #tpu.memory_space<vmem>>, %arg10: memref<1x128xf32, #tpu.memory_space<vmem>>, %arg11: memref<2x128xf32, #tpu.memory_space<vmem>>) attributes {dimension_semantics = [#tpu.dimension_semantics<arbitrary>], iteration_bounds = array<i64: 1>, scalar_prefetch = 0 : i64, scratch_operands = 0 : i64, tpu.core_type = #tpu.core_type<tc>, window_params = [{transform_indices = @transform_0, window_bounds = array<i64: 2, 1024>}, {pipeline_mode = #tpu.pipeline_mode<synchronous>, transform_indices = @transform_1, window_bounds = array<i64: 1024, 196>}, {pipeline_mode = #tpu.pipeline_mode<synchronous>, transform_indices = @transform_2, window_bounds = array<i64: 196, 4096>}, {pipeline_mode = #tpu.pipeline_mode<synchronous>, transform_indices = @transform_3, window_bounds = array<i64: 1, 4096>}, {pipeline_mode = #tpu.pipeline_mode<synchronous>, transform_indices = @transform_4, window_bounds = array<i64: 1, 4096>}, {pipeline_mode = #tpu.pipeline_mode<synchronous>, transform_indices = @transform_5, window_bounds = array<i64: 4096, 200>}, {pipeline_mode = #tpu.pipeline_mode<synchronous>, transform_indices = @transform_6, window_bounds = array<i64: 1, 200>}, {pipeline_mode = #tpu.pipeline_mode<synchronous>, transform_indices = @transform_7, window_bounds = array<i64: 1, 200>}, {pipeline_mode = #tpu.pipeline_mode<synchronous>, transform_indices = @transform_8, window_bounds = array<i64: 200, 128>}, {pipeline_mode = #tpu.pipeline_mode<synchronous>, transform_indices = @transform_9, window_bounds = array<i64: 1, 128>}, {transform_indices = @transform_10, window_bounds = array<i64: 2, 128>}]} {
    %c0 = arith.constant 0 : index
    %c0_0 = arith.constant 0 : index
    %0 = vector.load %arg1[%c0, %c0_0] : memref<2x1024xf32, #tpu.memory_space<vmem>>, vector<2x1024xf32>
    %1 = arith.truncf %0 : vector<2x1024xf32> to vector<2x1024xbf16>
    %c0_1 = arith.constant 0 : index
    %c0_2 = arith.constant 0 : index
    %2 = vector.load %arg2[%c0_1, %c0_2] : memref<1024x196xbf16, #tpu.memory_space<vmem>>, vector<1024x196xbf16>
    %cst = arith.constant dense<0.000000e+00> : vector<2x196xf32>
    %3 = tpu.matmul %1, %2, %cst {dimension_numbers = #tpu.dot_dimension_numbers<[1], [0], [0], [1], [0, 0, 1, 1], [], []>} : vector<2x1024xbf16>, vector<1024x196xbf16>, vector<2x196xf32> -> vector<2x196xf32>
    %4 = arith.truncf %3 : vector<2x196xf32> to vector<2x196xbf16>
    %c0_3 = arith.constant 0 : index
    %c0_4 = arith.constant 0 : index
    %5 = vector.load %arg3[%c0_3, %c0_4] : memref<196x4096xbf16, #tpu.memory_space<vmem>>, vector<196x4096xbf16>
    %cst_5 = arith.constant dense<0.000000e+00> : vector<2x4096xf32>
    %6 = tpu.matmul %4, %5, %cst_5 {dimension_numbers = #tpu.dot_dimension_numbers<[1], [0], [0], [1], [0, 0, 1, 1], [], []>} : vector<2x196xbf16>, vector<196x4096xbf16>, vector<2x4096xf32> -> vector<2x4096xf32>
    %c0_6 = arith.constant 0 : index
    %c0_7 = arith.constant 0 : index
    %7 = vector.load %arg4[%c0_6, %c0_7] : memref<1x4096xf32, #tpu.memory_space<vmem>>, vector<1x4096xf32>
    %8 = vector.broadcast %7 : vector<1x4096xf32> to vector<2x4096xf32>
    %9 = arith.mulf %6, %8 : vector<2x4096xf32>
    %c0_8 = arith.constant 0 : index
    %c0_9 = arith.constant 0 : index
    %10 = vector.load %arg5[%c0_8, %c0_9] : memref<1x4096xf32, #tpu.memory_space<vmem>>, vector<1x4096xf32>
    %11 = vector.broadcast %10 : vector<1x4096xf32> to vector<2x4096xf32>
    %12 = arith.addf %9, %11 : vector<2x4096xf32>
    %cst_10 = arith.constant 0.000000e+00 : f32
    %13 = vector.broadcast %cst_10 : f32 to vector<2x4096xf32>
    %14 = arith.maximumf %12, %13 : vector<2x4096xf32>
    %15 = arith.truncf %14 : vector<2x4096xf32> to vector<2x4096xbf16>
    %c0_11 = arith.constant 0 : index
    %c0_12 = arith.constant 0 : index
    %16 = vector.load %arg6[%c0_11, %c0_12] : memref<4096x200xbf16, #tpu.memory_space<vmem>>, vector<4096x200xbf16>
    %cst_13 = arith.constant dense<0.000000e+00> : vector<2x200xf32>
    %17 = tpu.matmul %15, %16, %cst_13 {dimension_numbers = #tpu.dot_dimension_numbers<[1], [0], [0], [1], [0, 0, 1, 1], [], []>} : vector<2x4096xbf16>, vector<4096x200xbf16>, vector<2x200xf32> -> vector<2x200xf32>
    %c0_14 = arith.constant 0 : index
    %c0_15 = arith.constant 0 : index
    %18 = vector.load %arg7[%c0_14, %c0_15] : memref<1x200xf32, #tpu.memory_space<vmem>>, vector<1x200xf32>
    %19 = vector.broadcast %18 : vector<1x200xf32> to vector<2x200xf32>
    %20 = arith.mulf %17, %19 : vector<2x200xf32>
    %c0_16 = arith.constant 0 : index
    %c0_17 = arith.constant 0 : index
    %21 = vector.load %arg8[%c0_16, %c0_17] : memref<1x200xf32, #tpu.memory_space<vmem>>, vector<1x200xf32>
    %22 = vector.broadcast %21 : vector<1x200xf32> to vector<2x200xf32>
    %23 = arith.addf %20, %22 : vector<2x200xf32>
    %cst_18 = arith.constant 0.000000e+00 : f32
    %24 = vector.broadcast %cst_18 : f32 to vector<2x200xf32>
    %25 = arith.maximumf %23, %24 : vector<2x200xf32>
    %26 = arith.truncf %25 : vector<2x200xf32> to vector<2x200xbf16>
    %c0_19 = arith.constant 0 : index
    %c0_20 = arith.constant 0 : index
    %27 = vector.load %arg9[%c0_19, %c0_20] : memref<200x128xbf16, #tpu.memory_space<vmem>>, vector<200x128xbf16>
    %cst_21 = arith.constant dense<0.000000e+00> : vector<2x128xf32>
    %28 = tpu.matmul %26, %27, %cst_21 {dimension_numbers = #tpu.dot_dimension_numbers<[1], [0], [0], [1], [0, 0, 1, 1], [], []>} : vector<2x200xbf16>, vector<200x128xbf16>, vector<2x128xf32> -> vector<2x128xf32>
    %c0_22 = arith.constant 0 : index
    %c0_23 = arith.constant 0 : index
    %29 = vector.load %arg10[%c0_22, %c0_23] : memref<1x128xf32, #tpu.memory_space<vmem>>, vector<1x128xf32>
    %30 = vector.broadcast %29 : vector<1x128xf32> to vector<2x128xf32>
    %31 = arith.addf %28, %30 : vector<2x128xf32>
    %c0_24 = arith.constant 0 : index
    %c0_25 = arith.constant 0 : index
    %32 = vector.load %arg11[%c0_24, %c0_25] : memref<2x128xf32, #tpu.memory_space<vmem>>, vector<2x128xf32>
    tpu.vector_store %arg11[%c0_24, %c0_25], %31 {strides = array<i32>} : memref<2x128xf32, #tpu.memory_space<vmem>>, vector<2x128xf32>,
    return
  }
  func.func @transform_0(%arg0: i32) -> (i32, i32) {
    %c0_i32 = arith.constant 0 : i32
    %c0_i32_0 = arith.constant 0 : i32
    return %arg0, %c0_i32 : i32, i32
  }
  func.func @transform_1(%arg0: i32) -> (i32, i32) {
    %c0_i32 = arith.constant 0 : i32
    %c0_i32_0 = arith.constant 0 : i32
    %c0_i32_1 = arith.constant 0 : i32
    return %c0_i32, %c0_i32_0 : i32, i32
  }
  func.func @transform_2(%arg0: i32) -> (i32, i32) {
    %c0_i32 = arith.constant 0 : i32
    %c0_i32_0 = arith.constant 0 : i32
    %c0_i32_1 = arith.constant 0 : i32
    return %c0_i32, %c0_i32_0 : i32, i32
  }
  func.func @transform_3(%arg0: i32) -> (i32, i32) {
    %c0_i32 = arith.constant 0 : i32
    %c0_i32_0 = arith.constant 0 : i32
    %c0_i32_1 = arith.constant 0 : i32
    return %c0_i32, %c0_i32_0 : i32, i32
  }
  func.func @transform_4(%arg0: i32) -> (i32, i32) {
    %c0_i32 = arith.constant 0 : i32
    %c0_i32_0 = arith.constant 0 : i32
    %c0_i32_1 = arith.constant 0 : i32
    return %c0_i32, %c0_i32_0 : i32, i32
  }
  func.func @transform_5(%arg0: i32) -> (i32, i32) {
    %c0_i32 = arith.constant 0 : i32
    %c0_i32_0 = arith.constant 0 : i32
    %c0_i32_1 = arith.constant 0 : i32
    return %c0_i32, %c0_i32_0 : i32, i32
  }
  func.func @transform_6(%arg0: i32) -> (i32, i32) {
    %c0_i32 = arith.constant 0 : i32
    %c0_i32_0 = arith.constant 0 : i32
    %c0_i32_1 = arith.constant 0 : i32
    return %c0_i32, %c0_i32_0 : i32, i32
  }
  func.func @transform_7(%arg0: i32) -> (i32, i32) {
    %c0_i32 = arith.constant 0 : i32
    %c0_i32_0 = arith.constant 0 : i32
    %c0_i32_1 = arith.constant 0 : i32
    return %c0_i32, %c0_i32_0 : i32, i32
  }
  func.func @transform_8(%arg0: i32) -> (i32, i32) {
    %c0_i32 = arith.constant 0 : i32
    %c0_i32_0 = arith.constant 0 : i32
    %c0_i32_1 = arith.constant 0 : i32
    return %c0_i32, %c0_i32_0 : i32, i32
  }
  func.func @transform_9(%arg0: i32) -> (i32, i32) {
    %c0_i32 = arith.constant 0 : i32
    %c0_i32_0 = arith.constant 0 : i32
    %c0_i32_1 = arith.constant 0 : i32
    return %c0_i32, %c0_i32_0 : i32, i32
  }
  func.func @transform_10(%arg0: i32) -> (i32, i32) {
    %c0_i32 = arith.constant 0 : i32
    %c0_i32_0 = arith.constant 0 : i32
    return %arg0, %c0_i32 : i32, i32
  }
}

</mosaic_0001>

<llo_original>
// kernel: tpu_custom_call.1
$region0: #{tpu_custom_call.1}
  #allocation0 [shape = 'u32[]', space=smem, size = 0x4, offset = 0x4, fixed_abs, tag = 'smem constant byte address 0x4 - core index']
  #allocation1 [shape = 'u32[144,128]{1,0:T(1,128)}', space=vmem, size = 0x12000, scoped, tag = 'internal scratch']
  %s0 = inlined_call_operand.vmem [shape: f32[2,1024], index: 0, kind: input, shape index: {}]
  %s1 = inlined_call_operand.vmem [shape: bf16[1024,196], index: 1, kind: input, shape index: {}]
  %s2 = inlined_call_operand.vmem [shape: bf16[196,4096], index: 2, kind: input, shape index: {}]
  %s3 = inlined_call_operand.vmem [shape: f32[1,4096], index: 3, kind: input, shape index: {}]
  %s4 = inlined_call_operand.vmem [shape: f32[1,4096], index: 4, kind: input, shape index: {}]
  %s5 = inlined_call_operand.vmem [shape: bf16[4096,200], index: 5, kind: input, shape index: {}]
  %s6 = inlined_call_operand.vmem [shape: f32[1,200], index: 6, kind: input, shape index: {}]
  %s7 = inlined_call_operand.vmem [shape: f32[1,200], index: 7, kind: input, shape index: {}]
  %s8 = inlined_call_operand.vmem [shape: bf16[200,128], index: 8, kind: input, shape index: {}]
  %s9 = inlined_call_operand.vmem [shape: f32[1,128], index: 9, kind: input, shape index: {}]
  %s10 = inlined_call_operand.hbm [shape: f32[2,128], index: 10, kind: output, shape index: {}]
  %s11 = sld [smem:[#allocation0]]
  $region50: #{tpu_custom_call.1} parent=0
    _
  %s13 = ssub.s32 1, %s11
  %s14 = scalar_select 0, %s13, %s11
  $region1: #{tpu_custom_call.1} parent=0
    #allocation2 [shape = 'u8[1024]{0}', space=vmem, size = 0x400, scoped, tag = 'output window, operand 0, single buffered']
    #allocation3 [shape = 's32[1]{0}', space=sflag, size = 0x4, scoped, tag = 'scoped memory for tpu_custom_call.1']
    %15 = vsyncpa [#allocation3], 0
    // Predicated region
    $region2: #{tpu_custom_call.1} parent=1 // pred_check
      _
    $region3: #{tpu_custom_call.1} parent=1 // pred_check_branch
      %17 = sbr.rel (0) target = $region5
    $region4: #{tpu_custom_call.1} parent=1 // pred_region
      _
    $region5: #{tpu_custom_call.1} parent=1 // pred_fallthru
      _
    // Predicated region
    $region6: #{tpu_custom_call.1} parent=1 // pred_check
      _
    $region7: #{tpu_custom_call.1} parent=1 // pred_check_branch
      %19 = sbr.rel (0) target = $region9
    $region8: #{tpu_custom_call.1} parent=1 // pred_region
      _
    $region9: #{tpu_custom_call.1} parent=1 // pred_fallthru
      _
    // Predicated region
    $region10: #{tpu_custom_call.1} parent=1 // pred_check
      _
    $region11: #{tpu_custom_call.1} parent=1 // pred_check_branch
      %21 = sbr.rel (0) target = $region13
    $region12: #{tpu_custom_call.1} parent=1 // pred_region
      _
    $region13: #{tpu_custom_call.1} parent=1 // pred_fallthru
      _
    // Predicated region
    $region14: #{tpu_custom_call.1} parent=1 // pred_check
      _
    $region15: #{tpu_custom_call.1} parent=1 // pred_check_branch
      %23 = sbr.rel (0) target = $region17
    $region16: #{tpu_custom_call.1} parent=1 // pred_region
      _
    $region17: #{tpu_custom_call.1} parent=1 // pred_fallthru
      _
    // Predicated region
    $region18: #{tpu_custom_call.1} parent=1 // pred_check
      _
    $region19: #{tpu_custom_call.1} parent=1 // pred_check_branch
      %25 = sbr.rel (0) target = $region21
    $region20: #{tpu_custom_call.1} parent=1 // pred_region
      _
    $region21: #{tpu_custom_call.1} parent=1 // pred_fallthru
      _
    // Predicated region
    $region22: #{tpu_custom_call.1} parent=1 // pred_check
      _
    $region23: #{tpu_custom_call.1} parent=1 // pred_check_branch
      %27 = sbr.rel (0) target = $region25
    $region24: #{tpu_custom_call.1} parent=1 // pred_region
      _
    $region25: #{tpu_custom_call.1} parent=1 // pred_fallthru
      _
    // Predicated region
    $region26: #{tpu_custom_call.1} parent=1 // pred_check
      _
    $region27: #{tpu_custom_call.1} parent=1 // pred_check_branch
      %29 = sbr.rel (0) target = $region29
    $region28: #{tpu_custom_call.1} parent=1 // pred_region
      _
    $region29: #{tpu_custom_call.1} parent=1 // pred_fallthru
      _
    // Predicated region
    $region30: #{tpu_custom_call.1} parent=1 // pred_check
      _
    $region31: #{tpu_custom_call.1} parent=1 // pred_check_branch
      %31 = sbr.rel (0) target = $region33
    $region32: #{tpu_custom_call.1} parent=1 // pred_region
      _
    $region33: #{tpu_custom_call.1} parent=1 // pred_fallthru
      _
    // Predicated region
    $region34: #{tpu_custom_call.1} parent=1 // pred_check
      _
    $region35: #{tpu_custom_call.1} parent=1 // pred_check_branch
      %33 = sbr.rel (0) target = $region37
    $region36: #{tpu_custom_call.1} parent=1 // pred_region
      _
    $region37: #{tpu_custom_call.1} parent=1 // pred_fallthru
      _
    // Predicated region
    $region38: #{tpu_custom_call.1} parent=1 // pred_check
      _
    $region39: #{tpu_custom_call.1} parent=1 // pred_check_branch
      %35 = sbr.rel (0) target = $region41
    $region40: #{tpu_custom_call.1} parent=1 // pred_region
      _
    $region41: #{tpu_custom_call.1} parent=1 // pred_fallthru
      _
    %v37 = vld [vmem:[%s0] sm:$0xff]
    %v38 = vld [vmem:[%s0 + $0x8] sm:$0xff]
    %v41 = vcombine.high %v37, %v37
    %v43 = vunpack.c.l.s4 1983009808
    %v44 = vunpack.c.0.s8 %v43
    %v45 = vlaneseq
    %v46 = vshrl.u32 %v45, 7
    %v47 = vsub.s32 %v44, %v46
    %v48 = vrot.slane %v37, %v47
    %v50 = vunpack.c.l.s4 1983009808
    %v51 = vunpack.c.0.s8 %v50
    %v52 = vlaneseq
    %v53 = vshrl.u32 %v52, 7
    %v54 = vsub.s32 %v51, %v53
    %v55 = vrot.slane %v41, %v54
    %v56 = vcombine.high %v48, %v48
    %v57 = vcombine.high %v55, %v55
    %v58 = vcombine.high %v38, %v38
    %v60 = vunpack.c.l.s4 1983009808
    %v61 = vunpack.c.0.s8 %v60
    %v62 = vlaneseq
    %v63 = vshrl.u32 %v62, 7
    %v64 = vsub.s32 %v61, %v63
    %v65 = vrot.slane %v38, %v64
    %v67 = vunpack.c.l.s4 1983009808
    %v68 = vunpack.c.0.s8 %v67
    %v69 = vlaneseq
    %v70 = vshrl.u32 %v69, 7
    %v71 = vsub.s32 %v68, %v70
    %v72 = vrot.slane %v58, %v71
    %v73 = vcombine.high %v65, %v65
    %v74 = vcombine.high %v72, %v72
    %v83 = vpack.c.bf16 %v48, %v48
    %v84 = vpack.c.bf16 %v56, %v56
    %v85 = vpack.c.bf16 %v55, %v55
    %v86 = vpack.c.bf16 %v57, %v57
    %v87 = vpack.c.bf16 %v65, %v65
    %v88 = vpack.c.bf16 %v73, %v73
    %v89 = vpack.c.bf16 %v72, %v72
    %v90 = vpack.c.bf16 %v74, %v74
    %v91 = vld [vmem:[%s1] sm:$0xff]
    %v92 = vld [vmem:[%s1 + $0x8] sm:$0xff]
    %v93 = vld [vmem:[%s1 + $0x10] sm:$0xff]
    %v94 = vld [vmem:[%s1 + $0x18] sm:$0xff]
    %v95 = vld [vmem:[%s1 + $0x20] sm:$0xff]
    %v96 = vld [vmem:[%s1 + $0x28] sm:$0xff]
    %v97 = vld [vmem:[%s1 + $0x30] sm:$0xff]
    %v98 = vld [vmem:[%s1 + $0x38] sm:$0xff]
    %v99 = vld [vmem:[%s1 + $0x40] sm:$0xff]
    %v100 = vld [vmem:[%s1 + $0x48] sm:$0xff]
    %v101 = vld [vmem:[%s1 + $0x50] sm:$0xff]
    %v102 = vld [vmem:[%s1 + $0x58] sm:$0xff]
    %v103 = vld [vmem:[%s1 + $0x60] sm:$0xff]
    %v104 = vld [vmem:[%s1 + $0x68] sm:$0xff]
    %v105 = vld [vmem:[%s1 + $0x70] sm:$0xff]
    %v106 = vld [vmem:[%s1 + $0x78] sm:$0xff]
    %v107 = vld [vmem:[%s1 + $0x80] sm:$0xff]
    %v108 = vld [vmem:[%s1 + $0x88] sm:$0xff]
    %v109 = vld [vmem:[%s1 + $0x90] sm:$0xff]
    %v110 = vld [vmem:[%s1 + $0x98] sm:$0xff]
    %v111 = vld [vmem:[%s1 + $0xa0] sm:$0xff]
    %v112 = vld [vmem:[%s1 + $0xa8] sm:$0xff]
    %v113 = vld [vmem:[%s1 + $0xb0] sm:$0xff]
    %v114 = vld [vmem:[%s1 + $0xb8] sm:$0xff]
    %v115 = vld [vmem:[%s1 + $0xc0] sm:$0xff]
    %v116 = vld [vmem:[%s1 + $0xc8] sm:$0xff]
    %v117 = vld [vmem:[%s1 + $0xd0] sm:$0xff]
    %v118 = vld [vmem:[%s1 + $0xd8] sm:$0xff]
    %v119 = vld [vmem:[%s1 + $0xe0] sm:$0xff]
    %v120 = vld [vmem:[%s1 + $0xe8] sm:$0xff]
    %v121 = vld [vmem:[%s1 + $0xf0] sm:$0xff]
    %v122 = vld [vmem:[%s1 + $0xf8] sm:$0xff]
    %v123 = vld [vmem:[%s1 + $0x100] sm:$0xff]
    %v124 = vld [vmem:[%s1 + $0x108] sm:$0xff]
    %v125 = vld [vmem:[%s1 + $0x110] sm:$0xff]
    %v126 = vld [vmem:[%s1 + $0x118] sm:$0xff]
    %v127 = vld [vmem:[%s1 + $0x120] sm:$0xff]
    %v128 = vld [vmem:[%s1 + $0x128] sm:$0xff]
    %v129 = vld [vmem:[%s1 + $0x130] sm:$0xff]
    %v130 = vld [vmem:[%s1 + $0x138] sm:$0xff]
    %v131 = vld [vmem:[%s1 + $0x140] sm:$0xff]
    %v132 = vld [vmem:[%s1 + $0x148] sm:$0xff]
    %v133 = vld [vmem:[%s1 + $0x150] sm:$0xff]
    %v134 = vld [vmem:[%s1 + $0x158] sm:$0xff]
    %v135 = vld [vmem:[%s1 + $0x160] sm:$0xff]
    %v136 = vld [vmem:[%s1 + $0x168] sm:$0xff]
    %v137 = vld [vmem:[%s1 + $0x170] sm:$0xff]
    %v138 = vld [vmem:[%s1 + $0x178] sm:$0xff]
    %v139 = vld [vmem:[%s1 + $0x180] sm:$0xff]
    %v140 = vld [vmem:[%s1 + $0x188] sm:$0xff]
    %v141 = vld [vmem:[%s1 + $0x190] sm:$0xff]
    %v142 = vld [vmem:[%s1 + $0x198] sm:$0xff]
    %v143 = vld [vmem:[%s1 + $0x1a0] sm:$0xff]
    %v144 = vld [vmem:[%s1 + $0x1a8] sm:$0xff]
    %v145 = vld [vmem:[%s1 + $0x1b0] sm:$0xff]
    %v146 = vld [vmem:[%s1 + $0x1b8] sm:$0xff]
    %v147 = vld [vmem:[%s1 + $0x1c0] sm:$0xff]
    %v148 = vld [vmem:[%s1 + $0x1c8] sm:$0xff]
    %v149 = vld [vmem:[%s1 + $0x1d0] sm:$0xff]
    %v150 = vld [vmem:[%s1 + $0x1d8] sm:$0xff]
    %v151 = vld [vmem:[%s1 + $0x1e0] sm:$0xff]
    %v152 = vld [vmem:[%s1 + $0x1e8] sm:$0xff]
    %v153 = vld [vmem:[%s1 + $0x1f0] sm:$0xff]
    %v154 = vld [vmem:[%s1 + $0x1f8] sm:$0xff]
    %v155 = vld [vmem:[%s1 + $0x200] sm:$0xff]
    %v156 = vld [vmem:[%s1 + $0x208] sm:$0xff]
    %v157 = vld [vmem:[%s1 + $0x210] sm:$0xff]
    %v158 = vld [vmem:[%s1 + $0x218] sm:$0xff]
    %v159 = vld [vmem:[%s1 + $0x220] sm:$0xff]
    %v160 = vld [vmem:[%s1 + $0x228] sm:$0xff]
    %v161 = vld [vmem:[%s1 + $0x230] sm:$0xff]
    %v162 = vld [vmem:[%s1 + $0x238] sm:$0xff]
    %v163 = vld [vmem:[%s1 + $0x240] sm:$0xff]
    %v164 = vld [vmem:[%s1 + $0x248] sm:$0xff]
    %v165 = vld [vmem:[%s1 + $0x250] sm:$0xff]
    %v166 = vld [vmem:[%s1 + $0x258] sm:$0xff]
    %v167 = vld [vmem:[%s1 + $0x260] sm:$0xff]
    %v168 = vld [vmem:[%s1 + $0x268] sm:$0xff]
    %v169 = vld [vmem:[%s1 + $0x270] sm:$0xff]
    %v170 = vld [vmem:[%s1 + $0x278] sm:$0xff]
    %v171 = vld [vmem:[%s1 + $0x280] sm:$0xff]
    %v172 = vld [vmem:[%s1 + $0x288] sm:$0xff]
    %v173 = vld [vmem:[%s1 + $0x290] sm:$0xff]
    %v174 = vld [vmem:[%s1 + $0x298] sm:$0xff]
    %v175 = vld [vmem:[%s1 + $0x2a0] sm:$0xff]
    %v176 = vld [vmem:[%s1 + $0x2a8] sm:$0xff]
    %v177 = vld [vmem:[%s1 + $0x2b0] sm:$0xff]
    %v178 = vld [vmem:[%s1 + $0x2b8] sm:$0xff]
    %v179 = vld [vmem:[%s1 + $0x2c0] sm:$0xff]
    %v180 = vld [vmem:[%s1 + $0x2c8] sm:$0xff]
    %v181 = vld [vmem:[%s1 + $0x2d0] sm:$0xff]
    %v182 = vld [vmem:[%s1 + $0x2d8] sm:$0xff]
    %v183 = vld [vmem:[%s1 + $0x2e0] sm:$0xff]
    %v184 = vld [vmem:[%s1 + $0x2e8] sm:$0xff]
    %v185 = vld [vmem:[%s1 + $0x2f0] sm:$0xff]
    %v186 = vld [vmem:[%s1 + $0x2f8] sm:$0xff]
    %v187 = vld [vmem:[%s1 + $0x300] sm:$0xff]
    %v188 = vld [vmem:[%s1 + $0x308] sm:$0xff]
    %v189 = vld [vmem:[%s1 + $0x310] sm:$0xff]
    %v190 = vld [vmem:[%s1 + $0x318] sm:$0xff]
    %v191 = vld [vmem:[%s1 + $0x320] sm:$0xff]
    %v192 = vld [vmem:[%s1 + $0x328] sm:$0xff]
    %v193 = vld [vmem:[%s1 + $0x330] sm:$0xff]
    %v194 = vld [vmem:[%s1 + $0x338] sm:$0xff]
    %v195 = vld [vmem:[%s1 + $0x340] sm:$0xff]
    %v196 = vld [vmem:[%s1 + $0x348] sm:$0xff]
    %v197 = vld [vmem:[%s1 + $0x350] sm:$0xff]
    %v198 = vld [vmem:[%s1 + $0x358] sm:$0xff]
    %v199 = vld [vmem:[%s1 + $0x360] sm:$0xff]
    %v200 = vld [vmem:[%s1 + $0x368] sm:$0xff]
    %v201 = vld [vmem:[%s1 + $0x370] sm:$0xff]
    %v202 = vld [vmem:[%s1 + $0x378] sm:$0xff]
    %v203 = vld [vmem:[%s1 + $0x380] sm:$0xff]
    %v204 = vld [vmem:[%s1 + $0x388] sm:$0xff]
    %v205 = vld [vmem:[%s1 + $0x390] sm:$0xff]
    %v206 = vld [vmem:[%s1 + $0x398] sm:$0xff]
    %v207 = vld [vmem:[%s1 + $0x3a0] sm:$0xff]
    %v208 = vld [vmem:[%s1 + $0x3a8] sm:$0xff]
    %v209 = vld [vmem:[%s1 + $0x3b0] sm:$0xff]
    %v210 = vld [vmem:[%s1 + $0x3b8] sm:$0xff]
    %v211 = vld [vmem:[%s1 + $0x3c0] sm:$0xff]
    %v212 = vld [vmem:[%s1 + $0x3c8] sm:$0xff]
    %v213 = vld [vmem:[%s1 + $0x3d0] sm:$0xff]
    %v214 = vld [vmem:[%s1 + $0x3d8] sm:$0xff]
    %v215 = vld [vmem:[%s1 + $0x3e0] sm:$0xff]
    %v216 = vld [vmem:[%s1 + $0x3e8] sm:$0xff]
    %v217 = vld [vmem:[%s1 + $0x3f0] sm:$0xff]
    %v218 = vld [vmem:[%s1 + $0x3f8] sm:$0xff]
    %v347 = vunpack.c.l.b16 %v91
    %v348 = vunpack.c.h.b16 %v91
    %v349 = vunpack.c.l.b16 %v92
    %v350 = vunpack.c.h.b16 %v92
    %v351 = vunpack.c.l.b16 %v93
    %v352 = vunpack.c.h.b16 %v93
    %v353 = vunpack.c.l.b16 %v94
    %v354 = vunpack.c.h.b16 %v94
    %v355 = vunpack.c.l.b16 %v95
    %v356 = vunpack.c.h.b16 %v95
    %v357 = vunpack.c.l.b16 %v96
    %v358 = vunpack.c.h.b16 %v96
    %v359 = vunpack.c.l.b16 %v97
    %v360 = vunpack.c.h.b16 %v97
    %v361 = vunpack.c.l.b16 %v98
    %v362 = vunpack.c.h.b16 %v98
    %v363 = vunpack.c.l.b16 %v99
    %v364 = vunpack.c.h.b16 %v99
    %v365 = vunpack.c.l.b16 %v100
    %v366 = vunpack.c.h.b16 %v100
    %v367 = vunpack.c.l.b16 %v101
    %v368 = vunpack.c.h.b16 %v101
    %v369 = vunpack.c.l.b16 %v102
    %v370 = vunpack.c.h.b16 %v102
    %v371 = vunpack.c.l.b16 %v103
    %v372 = vunpack.c.h.b16 %v103
    %v373 = vunpack.c.l.b16 %v104
    %v374 = vunpack.c.h.b16 %v104
    %v375 = vunpack.c.l.b16 %v105
    %v376 = vunpack.c.h.b16 %v105
    %v377 = vunpack.c.l.b16 %v106
    %v378 = vunpack.c.h.b16 %v106
    %v379 = vunpack.c.l.b16 %v107
    %v380 = vunpack.c.h.b16 %v107
    %v381 = vunpack.c.l.b16 %v108
    %v382 = vunpack.c.h.b16 %v108
    %v383 = vunpack.c.l.b16 %v109
    %v384 = vunpack.c.h.b16 %v109
    %v385 = vunpack.c.l.b16 %v110
    %v386 = vunpack.c.h.b16 %v110
    %v387 = vunpack.c.l.b16 %v111
    %v388 = vunpack.c.h.b16 %v111
    %v389 = vunpack.c.l.b16 %v112
    %v390 = vunpack.c.h.b16 %v112
    %v391 = vunpack.c.l.b16 %v113
    %v392 = vunpack.c.h.b16 %v113
    %v393 = vunpack.c.l.b16 %v114
    %v394 = vunpack.c.h.b16 %v114
    %v395 = vunpack.c.l.b16 %v115
    %v396 = vunpack.c.h.b16 %v115
    %v397 = vunpack.c.l.b16 %v116
    %v398 = vunpack.c.h.b16 %v116
    %v399 = vunpack.c.l.b16 %v117
    %v400 = vunpack.c.h.b16 %v117
    %v401 = vunpack.c.l.b16 %v118
    %v402 = vunpack.c.h.b16 %v118
    %v403 = vunpack.c.l.b16 %v119
    %v404 = vunpack.c.h.b16 %v119
    %v405 = vunpack.c.l.b16 %v120
    %v406 = vunpack.c.h.b16 %v120
    %v407 = vunpack.c.l.b16 %v121
    %v408 = vunpack.c.h.b16 %v121
    %v409 = vunpack.c.l.b16 %v122
    %v410 = vunpack.c.h.b16 %v122
    %v411 = vunpack.c.l.b16 %v123
    %v412 = vunpack.c.h.b16 %v123
    %v413 = vunpack.c.l.b16 %v124
    %v414 = vunpack.c.h.b16 %v124
    %v415 = vunpack.c.l.b16 %v125
    %v416 = vunpack.c.h.b16 %v125
    %v417 = vunpack.c.l.b16 %v126
    %v418 = vunpack.c.h.b16 %v126
    %v419 = vunpack.c.l.b16 %v127
    %v420 = vunpack.c.h.b16 %v127
    %v421 = vunpack.c.l.b16 %v128
    %v422 = vunpack.c.h.b16 %v128
    %v423 = vunpack.c.l.b16 %v129
    %v424 = vunpack.c.h.b16 %v129
    %v425 = vunpack.c.l.b16 %v130
    %v426 = vunpack.c.h.b16 %v130
    %v427 = vunpack.c.l.b16 %v131
    %v428 = vunpack.c.h.b16 %v131
    %v429 = vunpack.c.l.b16 %v132
    %v430 = vunpack.c.h.b16 %v132
    %v431 = vunpack.c.l.b16 %v133
    %v432 = vunpack.c.h.b16 %v133
    %v433 = vunpack.c.l.b16 %v134
    %v434 = vunpack.c.h.b16 %v134
    %v435 = vunpack.c.l.b16 %v135
    %v436 = vunpack.c.h.b16 %v135
    %v437 = vunpack.c.l.b16 %v136
    %v438 = vunpack.c.h.b16 %v136
    %v439 = vunpack.c.l.b16 %v137
    %v440 = vunpack.c.h.b16 %v137
    %v441 = vunpack.c.l.b16 %v138
    %v442 = vunpack.c.h.b16 %v138
    %v443 = vunpack.c.l.b16 %v139
    %v444 = vunpack.c.h.b16 %v139
    %v445 = vunpack.c.l.b16 %v140
    %v446 = vunpack.c.h.b16 %v140
    %v447 = vunpack.c.l.b16 %v141
    %v448 = vunpack.c.h.b16 %v141
    %v449 = vunpack.c.l.b16 %v142
    %v450 = vunpack.c.h.b16 %v142
    %v451 = vunpack.c.l.b16 %v143
    %v452 = vunpack.c.h.b16 %v143
    %v453 = vunpack.c.l.b16 %v144
    %v454 = vunpack.c.h.b16 %v144
    %v455 = vunpack.c.l.b16 %v145
    %v456 = vunpack.c.h.b16 %v145
    %v457 = vunpack.c.l.b16 %v146
    %v458 = vunpack.c.h.b16 %v146
    %v459 = vunpack.c.l.b16 %v147
    %v460 = vunpack.c.h.b16 %v147
    %v461 = vunpack.c.l.b16 %v148
    %v462 = vunpack.c.h.b16 %v148
    %v463 = vunpack.c.l.b16 %v149
    %v464 = vunpack.c.h.b16 %v149
    %v465 = vunpack.c.l.b16 %v150
    %v466 = vunpack.c.h.b16 %v150
    %v467 = vunpack.c.l.b16 %v151
    %v468 = vunpack.c.h.b16 %v151
    %v469 = vunpack.c.l.b16 %v152
    %v470 = vunpack.c.h.b16 %v152
    %v471 = vunpack.c.l.b16 %v153
    %v472 = vunpack.c.h.b16 %v153
    %v473 = vunpack.c.l.b16 %v154
    %v474 = vunpack.c.h.b16 %v154
    %v475 = vunpack.c.l.b16 %v155
    %v476 = vunpack.c.h.b16 %v155
    %v477 = vunpack.c.l.b16 %v156
    %v478 = vunpack.c.h.b16 %v156
    %v479 = vunpack.c.l.b16 %v157
    %v480 = vunpack.c.h.b16 %v157
    %v481 = vunpack.c.l.b16 %v158
    %v482 = vunpack.c.h.b16 %v158
    %v483 = vunpack.c.l.b16 %v159
    %v484 = vunpack.c.h.b16 %v159
    %v485 = vunpack.c.l.b16 %v160
    %v486 = vunpack.c.h.b16 %v160
    %v487 = vunpack.c.l.b16 %v161
    %v488 = vunpack.c.h.b16 %v161
    %v489 = vunpack.c.l.b16 %v162
    %v490 = vunpack.c.h.b16 %v162
    %v491 = vunpack.c.l.b16 %v163
    %v492 = vunpack.c.h.b16 %v163
    %v493 = vunpack.c.l.b16 %v164
    %v494 = vunpack.c.h.b16 %v164
    %v495 = vunpack.c.l.b16 %v165
    %v496 = vunpack.c.h.b16 %v165
    %v497 = vunpack.c.l.b16 %v166
    %v498 = vunpack.c.h.b16 %v166
    %v499 = vunpack.c.l.b16 %v167
    %v500 = vunpack.c.h.b16 %v167
    %v501 = vunpack.c.l.b16 %v168
    %v502 = vunpack.c.h.b16 %v168
    %v503 = vunpack.c.l.b16 %v169
    %v504 = vunpack.c.h.b16 %v169
    %v505 = vunpack.c.l.b16 %v170
    %v506 = vunpack.c.h.b16 %v170
    %v507 = vunpack.c.l.b16 %v171
    %v508 = vunpack.c.h.b16 %v171
    %v509 = vunpack.c.l.b16 %v172
    %v510 = vunpack.c.h.b16 %v172
    %v511 = vunpack.c.l.b16 %v173
    %v512 = vunpack.c.h.b16 %v173
    %v513 = vunpack.c.l.b16 %v174
    %v514 = vunpack.c.h.b16 %v174
    %v515 = vunpack.c.l.b16 %v175
    %v516 = vunpack.c.h.b16 %v175
    %v517 = vunpack.c.l.b16 %v176
    %v518 = vunpack.c.h.b16 %v176
    %v519 = vunpack.c.l.b16 %v177
    %v520 = vunpack.c.h.b16 %v177
    %v521 = vunpack.c.l.b16 %v178
    %v522 = vunpack.c.h.b16 %v178
    %v523 = vunpack.c.l.b16 %v179
    %v524 = vunpack.c.h.b16 %v179
    %v525 = vunpack.c.l.b16 %v180
    %v526 = vunpack.c.h.b16 %v180
    %v527 = vunpack.c.l.b16 %v181
    %v528 = vunpack.c.h.b16 %v181
    %v529 = vunpack.c.l.b16 %v182
    %v530 = vunpack.c.h.b16 %v182
    %v531 = vunpack.c.l.b16 %v183
    %v532 = vunpack.c.h.b16 %v183
    %v533 = vunpack.c.l.b16 %v184
    %v534 = vunpack.c.h.b16 %v184
    %v535 = vunpack.c.l.b16 %v185
    %v536 = vunpack.c.h.b16 %v185
    %v537 = vunpack.c.l.b16 %v186
    %v538 = vunpack.c.h.b16 %v186
    %v539 = vunpack.c.l.b16 %v187
    %v540 = vunpack.c.h.b16 %v187
    %v541 = vunpack.c.l.b16 %v188
    %v542 = vunpack.c.h.b16 %v188
    %v543 = vunpack.c.l.b16 %v189
    %v544 = vunpack.c.h.b16 %v189
    %v545 = vunpack.c.l.b16 %v190
    %v546 = vunpack.c.h.b16 %v190
    %v547 = vunpack.c.l.b16 %v191
    %v548 = vunpack.c.h.b16 %v191
    %v549 = vunpack.c.l.b16 %v192
    %v550 = vunpack.c.h.b16 %v192
    %v551 = vunpack.c.l.b16 %v193
    %v552 = vunpack.c.h.b16 %v193
    %v553 = vunpack.c.l.b16 %v194
    %v554 = vunpack.c.h.b16 %v194
    %v555 = vunpack.c.l.b16 %v195
    %v556 = vunpack.c.h.b16 %v195
    %v557 = vunpack.c.l.b16 %v196
    %v558 = vunpack.c.h.b16 %v196
    %v559 = vunpack.c.l.b16 %v197
    %v560 = vunpack.c.h.b16 %v197
    %v561 = vunpack.c.l.b16 %v198
    %v562 = vunpack.c.h.b16 %v198
    %v563 = vunpack.c.l.b16 %v199
    %v564 = vunpack.c.h.b16 %v199
    %v565 = vunpack.c.l.b16 %v200
    %v566 = vunpack.c.h.b16 %v200
    %v567 = vunpack.c.l.b16 %v201
    %v568 = vunpack.c.h.b16 %v201
    %v569 = vunpack.c.l.b16 %v202
    %v570 = vunpack.c.h.b16 %v202
    %v571 = vunpack.c.l.b16 %v203
    %v572 = vunpack.c.h.b16 %v203
    %v573 = vunpack.c.l.b16 %v204
    %v574 = vunpack.c.h.b16 %v204
    %v575 = vunpack.c.l.b16 %v205
    %v576 = vunpack.c.h.b16 %v205
    %v577 = vunpack.c.l.b16 %v206
    %v578 = vunpack.c.h.b16 %v206
    %v579 = vunpack.c.l.b16 %v207
    %v580 = vunpack.c.h.b16 %v207
    %v581 = vunpack.c.l.b16 %v208
    %v582 = vunpack.c.h.b16 %v208
    %v583 = vunpack.c.l.b16 %v209
    %v584 = vunpack.c.h.b16 %v209
    %v585 = vunpack.c.l.b16 %v210
    %v586 = vunpack.c.h.b16 %v210
    %v587 = vunpack.c.l.b16 %v211
    %v588 = vunpack.c.h.b16 %v211
    %v589 = vunpack.c.l.b16 %v212
    %v590 = vunpack.c.h.b16 %v212
    %v591 = vunpack.c.l.b16 %v213
    %v592 = vunpack.c.h.b16 %v213
    %v593 = vunpack.c.l.b16 %v214
    %v594 = vunpack.c.h.b16 %v214
    %v595 = vunpack.c.l.b16 %v215
    %v596 = vunpack.c.h.b16 %v215
    %v597 = vunpack.c.l.b16 %v216
    %v598 = vunpack.c.h.b16 %v216
    %v599 = vunpack.c.l.b16 %v217
    %v600 = vunpack.c.h.b16 %v217
    %v601 = vunpack.c.l.b16 %v218
    %v602 = vunpack.c.h.b16 %v218
    %v603 = vpack.c.b16 %v349, %v347
    %v604 = vpack.c.b16 %v350, %v348
    %v605 = vpack.c.b16 %v353, %v351
    %v606 = vpack.c.b16 %v354, %v352
    %v607 = vpack.c.b16 %v357, %v355
    %v608 = vpack.c.b16 %v358, %v356
    %v609 = vpack.c.b16 %v361, %v359
    %v610 = vpack.c.b16 %v362, %v360
    %v611 = vpack.c.b16 %v365, %v363
    %v612 = vpack.c.b16 %v366, %v364
    %v613 = vpack.c.b16 %v369, %v367
    %v614 = vpack.c.b16 %v370, %v368
    %v615 = vpack.c.b16 %v373, %v371
    %v616 = vpack.c.b16 %v374, %v372
    %v617 = vpack.c.b16 %v377, %v375
    %v618 = vpack.c.b16 %v378, %v376
    %v619 = vpack.c.b16 %v381, %v379
    %v620 = vpack.c.b16 %v382, %v380
    %v621 = vpack.c.b16 %v385, %v383
    %v622 = vpack.c.b16 %v386, %v384
    %v623 = vpack.c.b16 %v389, %v387
    %v624 = vpack.c.b16 %v390, %v388
    %v625 = vpack.c.b16 %v393, %v391
    %v626 = vpack.c.b16 %v394, %v392
    %v627 = vpack.c.b16 %v397, %v395
    %v628 = vpack.c.b16 %v398, %v396
    %v629 = vpack.c.b16 %v401, %v399
    %v630 = vpack.c.b16 %v402, %v400
    %v631 = vpack.c.b16 %v405, %v403
    %v632 = vpack.c.b16 %v406, %v404
    %v633 = vpack.c.b16 %v409, %v407
    %v634 = vpack.c.b16 %v410, %v408
    %v635 = vpack.c.b16 %v413, %v411
    %v636 = vpack.c.b16 %v414, %v412
    %v637 = vpack.c.b16 %v417, %v415
    %v638 = vpack.c.b16 %v418, %v416
    %v639 = vpack.c.b16 %v421, %v419
    %v640 = vpack.c.b16 %v422, %v420
    %v641 = vpack.c.b16 %v425, %v423
    %v642 = vpack.c.b16 %v426, %v424
    %v643 = vpack.c.b16 %v429, %v427
    %v644 = vpack.c.b16 %v430, %v428
    %v645 = vpack.c.b16 %v433, %v431
    %v646 = vpack.c.b16 %v434, %v432
    %v647 = vpack.c.b16 %v437, %v435
    %v648 = vpack.c.b16 %v438, %v436
    %v649 = vpack.c.b16 %v441, %v439
    %v650 = vpack.c.b16 %v442, %v440
    %v651 = vpack.c.b16 %v445, %v443
    %v652 = vpack.c.b16 %v446, %v444
    %v653 = vpack.c.b16 %v449, %v447
    %v654 = vpack.c.b16 %v450, %v448
    %v655 = vpack.c.b16 %v453, %v451
    %v656 = vpack.c.b16 %v454, %v452
    %v657 = vpack.c.b16 %v457, %v455
    %v658 = vpack.c.b16 %v458, %v456
    %v659 = vpack.c.b16 %v461, %v459
    %v660 = vpack.c.b16 %v462, %v460
    %v661 = vpack.c.b16 %v465, %v463
    %v662 = vpack.c.b16 %v466, %v464
    %v663 = vpack.c.b16 %v469, %v467
    %v664 = vpack.c.b16 %v470, %v468
    %v665 = vpack.c.b16 %v473, %v471
    %v666 = vpack.c.b16 %v474, %v472
    %v667 = vpack.c.b16 %v477, %v475
    %v668 = vpack.c.b16 %v478, %v476
    %v669 = vpack.c.b16 %v481, %v479
    %v670 = vpack.c.b16 %v482, %v480
    %v671 = vpack.c.b16 %v485, %v483
    %v672 = vpack.c.b16 %v486, %v484
    %v673 = vpack.c.b16 %v489, %v487
    %v674 = vpack.c.b16 %v490, %v488
    %v675 = vpack.c.b16 %v493, %v491
    %v676 = vpack.c.b16 %v494, %v492
    %v677 = vpack.c.b16 %v497, %v495
    %v678 = vpack.c.b16 %v498, %v496
    %v679 = vpack.c.b16 %v501, %v499
    %v680 = vpack.c.b16 %v502, %v500
    %v681 = vpack.c.b16 %v505, %v503
    %v682 = vpack.c.b16 %v506, %v504
    %v683 = vpack.c.b16 %v509, %v507
    %v684 = vpack.c.b16 %v510, %v508
    %v685 = vpack.c.b16 %v513, %v511
    %v686 = vpack.c.b16 %v514, %v512
    %v687 = vpack.c.b16 %v517, %v515
    %v688 = vpack.c.b16 %v518, %v516
    %v689 = vpack.c.b16 %v521, %v519
    %v690 = vpack.c.b16 %v522, %v520
    %v691 = vpack.c.b16 %v525, %v523
    %v692 = vpack.c.b16 %v526, %v524
    %v693 = vpack.c.b16 %v529, %v527
    %v694 = vpack.c.b16 %v530, %v528
    %v695 = vpack.c.b16 %v533, %v531
    %v696 = vpack.c.b16 %v534, %v532
    %v697 = vpack.c.b16 %v537, %v535
    %v698 = vpack.c.b16 %v538, %v536
    %v699 = vpack.c.b16 %v541, %v539
    %v700 = vpack.c.b16 %v542, %v540
    %v701 = vpack.c.b16 %v545, %v543
    %v702 = vpack.c.b16 %v546, %v544
    %v703 = vpack.c.b16 %v549, %v547
    %v704 = vpack.c.b16 %v550, %v548
    %v705 = vpack.c.b16 %v553, %v551
    %v706 = vpack.c.b16 %v554, %v552
    %v707 = vpack.c.b16 %v557, %v555
    %v708 = vpack.c.b16 %v558, %v556
    %v709 = vpack.c.b16 %v561, %v559
    %v710 = vpack.c.b16 %v562, %v560
    %v711 = vpack.c.b16 %v565, %v563
    %v712 = vpack.c.b16 %v566, %v564
    %v713 = vpack.c.b16 %v569, %v567
    %v714 = vpack.c.b16 %v570, %v568
    %v715 = vpack.c.b16 %v573, %v571
    %v716 = vpack.c.b16 %v574, %v572
    %v717 = vpack.c.b16 %v577, %v575
    %v718 = vpack.c.b16 %v578, %v576
    %v719 = vpack.c.b16 %v581, %v579
    %v720 = vpack.c.b16 %v582, %v580
    %v721 = vpack.c.b16 %v585, %v583
    %v722 = vpack.c.b16 %v586, %v584
    %v723 = vpack.c.b16 %v589, %v587
    %v724 = vpack.c.b16 %v590, %v588
    %v725 = vpack.c.b16 %v593, %v591
    %v726 = vpack.c.b16 %v594, %v592
    %v727 = vpack.c.b16 %v597, %v595
    %v728 = vpack.c.b16 %v598, %v596
    %v729 = vpack.c.b16 %v601, %v599
    %v730 = vpack.c.b16 %v602, %v600
    %859 = vmatprep.subr.bf16.mxu0 %v604
    %860 = vmatpush1.bf16.msra.mxu0 %v603
    %861 = vmatprep.subr.bf16.mxu0 %v606
    %862 = vmatpush1.bf16.msra.mxu0 %v605
    %863 = vmatprep.subr.bf16.mxu0 %v608
    %864 = vmatpush1.bf16.msra.mxu0 %v607
    %865 = vmatprep.subr.bf16.mxu0 %v610
    %866 = vmatpush1.bf16.msra.mxu0 %v609
    %867 = vmatprep.subr.bf16.mxu0 %v612
    %868 = vmatpush1.bf16.msra.mxu0 %v611
    %869 = vmatprep.subr.bf16.mxu0 %v614
    %870 = vmatpush1.bf16.msra.mxu0 %v613
    %871 = vmatprep.subr.bf16.mxu0 %v616
    %872 = vmatpush1.bf16.msra.mxu0 %v615
    %873 = vmatprep.subr.bf16.mxu0 %v618
    %874 = vmatpush1.bf16.msra.mxu0 %v617
    %875 = vmatprep.subr.bf16.mxu0 %v620
    %876 = vmatpush1.bf16.msra.mxu0 %v619
    %877 = vmatprep.subr.bf16.mxu0 %v622
    %878 = vmatpush1.bf16.msra.mxu0 %v621
    %879 = vmatprep.subr.bf16.mxu0 %v624
    %880 = vmatpush1.bf16.msra.mxu0 %v623
    %881 = vmatprep.subr.bf16.mxu0 %v626
    %882 = vmatpush1.bf16.msra.mxu0 %v625
    %883 = vmatprep.subr.bf16.mxu0 %v628
    %884 = vmatpush1.bf16.msra.mxu0 %v627
    %885 = vmatprep.subr.bf16.mxu0 %v630
    %886 = vmatpush1.bf16.msra.mxu0 %v629
    %887 = vmatprep.subr.bf16.mxu0 %v632
    %888 = vmatpush1.bf16.msra.mxu0 %v631
    %889 = vmatprep.subr.bf16.mxu0 %v634
    %890 = vmatpush1.bf16.msra.mxu0 %v633
    %891 = vmatprep.mubr.bf16.mxu0 %v84
    %892 = vmatmul.mubr.bf16.gmra.mrb[0].mxu0 %v83
    %v893 = vpop.f32.mrb[0].mxu0
    %v894 = vadd.f32 0.0, %v893
    %v895 = vpop.f32.mrb[0].mxu0
    %v896 = vadd.f32 0.0, %v895
    %v897 = vpop.f32.mrb[0].mxu0
    %v898 = vpop.f32.mrb[0].mxu0
    %899 = vdwg.mxu0
    %900 = vmatprep.subr.bf16.mxu0 %v636
    %901 = vmatpush1.bf16.msra.mxu0 %v635
    %902 = vmatprep.subr.bf16.mxu0 %v638
    %903 = vmatpush1.bf16.msra.mxu0 %v637
    %904 = vmatprep.subr.bf16.mxu0 %v640
    %905 = vmatpush1.bf16.msra.mxu0 %v639
    %906 = vmatprep.subr.bf16.mxu0 %v642
    %907 = vmatpush1.bf16.msra.mxu0 %v641
    %908 = vmatprep.subr.bf16.mxu0 %v644
    %909 = vmatpush1.bf16.msra.mxu0 %v643
    %910 = vmatprep.subr.bf16.mxu0 %v646
    %911 = vmatpush1.bf16.msra.mxu0 %v645
    %912 = vmatprep.subr.bf16.mxu0 %v648
    %913 = vmatpush1.bf16.msra.mxu0 %v647
    %914 = vmatprep.subr.bf16.mxu0 %v650
    %915 = vmatpush1.bf16.msra.mxu0 %v649
    %916 = vmatprep.subr.bf16.mxu0 %v652
    %917 = vmatpush1.bf16.msra.mxu0 %v651
    %918 = vmatprep.subr.bf16.mxu0 %v654
    %919 = vmatpush1.bf16.msra.mxu0 %v653
    %920 = vmatprep.subr.bf16.mxu0 %v656
    %921 = vmatpush1.bf16.msra.mxu0 %v655
    %922 = vmatprep.subr.bf16.mxu0 %v658
    %923 = vmatpush1.bf16.msra.mxu0 %v657
    %924 = vmatprep.subr.bf16.mxu0 %v660
    %925 = vmatpush1.bf16.msra.mxu0 %v659
    %926 = vmatprep.subr.bf16.mxu0 %v662
    %927 = vmatpush1.bf16.msra.mxu0 %v661
    %928 = vmatprep.subr.bf16.mxu0 %v664
    %929 = vmatpush1.bf16.msra.mxu0 %v663
    %930 = vmatprep.subr.bf16.mxu0 %v666
    %931 = vmatpush1.bf16.msra.mxu0 %v665
    %932 = vmatprep.mubr.bf16.mxu0 %v86
    %933 = vmatmul.mubr.bf16.gmra.mrb[0].mxu0 %v85
    %v934 = vpop.f32.mrb[0].mxu0
    %v935 = vadd.f32 %v894, %v934
    %v936 = vpop.f32.mrb[0].mxu0
    %v937 = vadd.f32 %v896, %v936
    %v938 = vpop.f32.mrb[0].mxu0
    %v939 = vpop.f32.mrb[0].mxu0
    %940 = vdwg.mxu0
    %941 = vmatprep.subr.bf16.mxu0 %v668
    %942 = vmatpush1.bf16.msra.mxu0 %v667
    %943 = vmatprep.subr.bf16.mxu0 %v670
    %944 = vmatpush1.bf16.msra.mxu0 %v669
    %945 = vmatprep.subr.bf16.mxu0 %v672
    %946 = vmatpush1.bf16.msra.mxu0 %v671
    %947 = vmatprep.subr.bf16.mxu0 %v674
    %948 = vmatpush1.bf16.msra.mxu0 %v673
    %949 = vmatprep.subr.bf16.mxu0 %v676
    %950 = vmatpush1.bf16.msra.mxu0 %v675
    %951 = vmatprep.subr.bf16.mxu0 %v678
    %952 = vmatpush1.bf16.msra.mxu0 %v677
    %953 = vmatprep.subr.bf16.mxu0 %v680
    %954 = vmatpush1.bf16.msra.mxu0 %v679
    %955 = vmatprep.subr.bf16.mxu0 %v682
    %956 = vmatpush1.bf16.msra.mxu0 %v681
    %957 = vmatprep.subr.bf16.mxu0 %v684
    %958 = vmatpush1.bf16.msra.mxu0 %v683
    %959 = vmatprep.subr.bf16.mxu0 %v686
    %960 = vmatpush1.bf16.msra.mxu0 %v685
    %961 = vmatprep.subr.bf16.mxu0 %v688
    %962 = vmatpush1.bf16.msra.mxu0 %v687
    %963 = vmatprep.subr.bf16.mxu0 %v690
    %964 = vmatpush1.bf16.msra.mxu0 %v689
    %965 = vmatprep.subr.bf16.mxu0 %v692
    %966 = vmatpush1.bf16.msra.mxu0 %v691
    %967 = vmatprep.subr.bf16.mxu0 %v694
    %968 = vmatpush1.bf16.msra.mxu0 %v693
    %969 = vmatprep.subr.bf16.mxu0 %v696
    %970 = vmatpush1.bf16.msra.mxu0 %v695
    %971 = vmatprep.subr.bf16.mxu0 %v698
    %972 = vmatpush1.bf16.msra.mxu0 %v697
    %973 = vmatprep.mubr.bf16.mxu0 %v88
    %974 = vmatmul.mubr.bf16.gmra.mrb[0].mxu0 %v87
    %v975 = vpop.f32.mrb[0].mxu0
    %v976 = vadd.f32 %v935, %v975
    %v977 = vpop.f32.mrb[0].mxu0
    %v978 = vadd.f32 %v937, %v977
    %v979 = vpop.f32.mrb[0].mxu0
    %v980 = vpop.f32.mrb[0].mxu0
    %981 = vdwg.mxu0
    %982 = vmatprep.subr.bf16.mxu0 %v700
    %983 = vmatpush1.bf16.msra.mxu0 %v699
    %984 = vmatprep.subr.bf16.mxu0 %v702
    %985 = vmatpush1.bf16.msra.mxu0 %v701
    %986 = vmatprep.subr.bf16.mxu0 %v704
    %987 = vmatpush1.bf16.msra.mxu0 %v703
    %988 = vmatprep.subr.bf16.mxu0 %v706
    %989 = vmatpush1.bf16.msra.mxu0 %v705
    %990 = vmatprep.subr.bf16.mxu0 %v708
    %991 = vmatpush1.bf16.msra.mxu0 %v707
    %992 = vmatprep.subr.bf16.mxu0 %v710
    %993 = vmatpush1.bf16.msra.mxu0 %v709
    %994 = vmatprep.subr.bf16.mxu0 %v712
    %995 = vmatpush1.bf16.msra.mxu0 %v711
    %996 = vmatprep.subr.bf16.mxu0 %v714
    %997 = vmatpush1.bf16.msra.mxu0 %v713
    %998 = vmatprep.subr.bf16.mxu0 %v716
    %999 = vmatpush1.bf16.msra.mxu0 %v715
    %1000 = vmatprep.subr.bf16.mxu0 %v718
    %1001 = vmatpush1.bf16.msra.mxu0 %v717
    %1002 = vmatprep.subr.bf16.mxu0 %v720
    %1003 = vmatpush1.bf16.msra.mxu0 %v719
    %1004 = vmatprep.subr.bf16.mxu0 %v722
    %1005 = vmatpush1.bf16.msra.mxu0 %v721
    %1006 = vmatprep.subr.bf16.mxu0 %v724
    %1007 = vmatpush1.bf16.msra.mxu0 %v723
    %1008 = vmatprep.subr.bf16.mxu0 %v726
    %1009 = vmatpush1.bf16.msra.mxu0 %v725
    %1010 = vmatprep.subr.bf16.mxu0 %v728
    %1011 = vmatpush1.bf16.msra.mxu0 %v727
    %1012 = vmatprep.subr.bf16.mxu0 %v730
    %1013 = vmatpush1.bf16.msra.mxu0 %v729
    %1014 = vmatprep.mubr.bf16.mxu0 %v90
    %1015 = vmatmul.mubr.bf16.gmra.mrb[0].mxu0 %v89
    %v1016 = vpop.f32.mrb[0].mxu0
    %v1017 = vadd.f32 %v976, %v1016
    %v1018 = vpop.f32.mrb[0].mxu0
    %v1019 = vadd.f32 %v978, %v1018
    %v1020 = vpop.f32.mrb[0].mxu0
    %v1021 = vpop.f32.mrb[0].mxu0
    %1022 = vdwg.mxu0
    %v1023 = vpack.c.bf16 %v1017, %v1017
    %v1024 = vpack.c.bf16 %v1019, %v1019
    %v1025 = vld [vmem:[%s2] sm:$0xff]
    %v1026 = vld [vmem:[%s2 + $0x8] sm:$0xff]
    %v1027 = vld [vmem:[%s2 + $0x10] sm:$0xff]
    %v1028 = vld [vmem:[%s2 + $0x18] sm:$0xff]
    %v1029 = vld [vmem:[%s2 + $0x20] sm:$0xff]
    %v1030 = vld [vmem:[%s2 + $0x28] sm:$0xff]
    %v1031 = vld [vmem:[%s2 + $0x30] sm:$0xff]
    %v1032 = vld [vmem:[%s2 + $0x38] sm:$0xff]
    %v1033 = vld [vmem:[%s2 + $0x40] sm:$0xff]
    %v1034 = vld [vmem:[%s2 + $0x48] sm:$0xff]
    %v1035 = vld [vmem:[%s2 + $0x50] sm:$0xff]
    %v1036 = vld [vmem:[%s2 + $0x58] sm:$0xff]
    %v1037 = vld [vmem:[%s2 + $0x60] sm:$0xff]
    %v1038 = vld [vmem:[%s2 + $0x68] sm:$0xff]
    %v1039 = vld [vmem:[%s2 + $0x70] sm:$0xff]
    %v1040 = vld [vmem:[%s2 + $0x78] sm:$0xff]
    %v1041 = vld [vmem:[%s2 + $0x80] sm:$0xff]
    %v1042 = vld [vmem:[%s2 + $0x88] sm:$0xff]
    %v1043 = vld [vmem:[%s2 + $0x90] sm:$0xff]
    %v1044 = vld [vmem:[%s2 + $0x98] sm:$0xff]
    %v1045 = vld [vmem:[%s2 + $0xa0] sm:$0xff]
    %v1046 = vld [vmem:[%s2 + $0xa8] sm:$0xff]
    %v1047 = vld [vmem:[%s2 + $0xb0] sm:$0xff]
    %v1048 = vld [vmem:[%s2 + $0xb8] sm:$0xff]
    %v1049 = vld [vmem:[%s2 + $0xc0] sm:$0xff]
    %v1050 = vld [vmem:[%s2 + $0xc8] sm:$0xff]
    %v1051 = vld [vmem:[%s2 + $0xd0] sm:$0xff]
    %v1052 = vld [vmem:[%s2 + $0xd8] sm:$0xff]
    %v1053 = vld [vmem:[%s2 + $0xe0] sm:$0xff]
    %v1054 = vld [vmem:[%s2 + $0xe8] sm:$0xff]
    %v1055 = vld [vmem:[%s2 + $0xf0] sm:$0xff]
    %v1056 = vld [vmem:[%s2 + $0xf8] sm:$0xff]
    %v1057 = vld [vmem:[%s2 + $0x100] sm:$0xff]
    %v1058 = vld [vmem:[%s2 + $0x108] sm:$0xff]
    %v1059 = vld [vmem:[%s2 + $0x110] sm:$0xff]
    %v1060 = vld [vmem:[%s2 + $0x118] sm:$0xff]
    %v1061 = vld [vmem:[%s2 + $0x120] sm:$0xff]
    %v1062 = vld [vmem:[%s2 + $0x128] sm:$0xff]
    %v1063 = vld [vmem:[%s2 + $0x130] sm:$0xff]
    %v1064 = vld [vmem:[%s2 + $0x138] sm:$0xff]
    %v1065 = vld [vmem:[%s2 + $0x140] sm:$0xff]
    %v1066 = vld [vmem:[%s2 + $0x148] sm:$0xff]
    %v1067 = vld [vmem:[%s2 + $0x150] sm:$0xff]
    %v1068 = vld [vmem:[%s2 + $0x158] sm:$0xff]
    %v1069 = vld [vmem:[%s2 + $0x160] sm:$0xff]
    %v1070 = vld [vmem:[%s2 + $0x168] sm:$0xff]
    %v1071 = vld [vmem:[%s2 + $0x170] sm:$0xff]
    %v1072 = vld [vmem:[%s2 + $0x178] sm:$0xff]
    %v1073 = vld [vmem:[%s2 + $0x180] sm:$0xff]
    %v1074 = vld [vmem:[%s2 + $0x188] sm:$0xff]
    %v1075 = vld [vmem:[%s2 + $0x190] sm:$0xff]
    %v1076 = vld [vmem:[%s2 + $0x198] sm:$0xff]
    %v1077 = vld [vmem:[%s2 + $0x1a0] sm:$0xff]
    %v1078 = vld [vmem:[%s2 + $0x1a8] sm:$0xff]
    %v1079 = vld [vmem:[%s2 + $0x1b0] sm:$0xff]
    %v1080 = vld [vmem:[%s2 + $0x1b8] sm:$0xff]
    %v1081 = vld [vmem:[%s2 + $0x1c0] sm:$0xff]
    %v1082 = vld [vmem:[%s2 + $0x1c8] sm:$0xff]
    %v1083 = vld [vmem:[%s2 + $0x1d0] sm:$0xff]
    %v1084 = vld [vmem:[%s2 + $0x1d8] sm:$0xff]
    %v1085 = vld [vmem:[%s2 + $0x1e0] sm:$0xff]
    %v1086 = vld [vmem:[%s2 + $0x1e8] sm:$0xff]
    %v1087 = vld [vmem:[%s2 + $0x1f0] sm:$0xff]
    %v1088 = vld [vmem:[%s2 + $0x1f8] sm:$0xff]
    %v1089 = vld [vmem:[%s2 + $0x200] sm:$0xff]
    %v1090 = vld [vmem:[%s2 + $0x208] sm:$0xff]
    %v1091 = vld [vmem:[%s2 + $0x210] sm:$0xff]
    %v1092 = vld [vmem:[%s2 + $0x218] sm:$0xff]
    %v1093 = vld [vmem:[%s2 + $0x220] sm:$0xff]
    %v1094 = vld [vmem:[%s2 + $0x228] sm:$0xff]
    %v1095 = vld [vmem:[%s2 + $0x230] sm:$0xff]
    %v1096 = vld [vmem:[%s2 + $0x238] sm:$0xff]
    %v1097 = vld [vmem:[%s2 + $0x240] sm:$0xff]
    %v1098 = vld [vmem:[%s2 + $0x248] sm:$0xff]
    %v1099 = vld [vmem:[%s2 + $0x250] sm:$0xff]
    %v1100 = vld [vmem:[%s2 + $0x258] sm:$0xff]
    %v1101 = vld [vmem:[%s2 + $0x260] sm:$0xff]
    %v1102 = vld [vmem:[%s2 + $0x268] sm:$0xff]
    %v1103 = vld [vmem:[%s2 + $0x270] sm:$0xff]
    %v1104 = vld [vmem:[%s2 + $0x278] sm:$0xff]
    %v1105 = vld [vmem:[%s2 + $0x280] sm:$0xff]
    %v1106 = vld [vmem:[%s2 + $0x288] sm:$0xff]
    %v1107 = vld [vmem:[%s2 + $0x290] sm:$0xff]
    %v1108 = vld [vmem:[%s2 + $0x298] sm:$0xff]
    %v1109 = vld [vmem:[%s2 + $0x2a0] sm:$0xff]
    %v1110 = vld [vmem:[%s2 + $0x2a8] sm:$0xff]
    %v1111 = vld [vmem:[%s2 + $0x2b0] sm:$0xff]
    %v1112 = vld [vmem:[%s2 + $0x2b8] sm:$0xff]
    %v1113 = vld [vmem:[%s2 + $0x2c0] sm:$0xff]
    %v1114 = vld [vmem:[%s2 + $0x2c8] sm:$0xff]
    %v1115 = vld [vmem:[%s2 + $0x2d0] sm:$0xff]
    %v1116 = vld [vmem:[%s2 + $0x2d8] sm:$0xff]
    %v1117 = vld [vmem:[%s2 + $0x2e0] sm:$0xff]
    %v1118 = vld [vmem:[%s2 + $0x2e8] sm:$0xff]
    %v1119 = vld [vmem:[%s2 + $0x2f0] sm:$0xff]
    %v1120 = vld [vmem:[%s2 + $0x2f8] sm:$0xff]
    %v1121 = vld [vmem:[%s2 + $0x300] sm:$0xff]
    %v1122 = vld [vmem:[%s2 + $0x308] sm:$0xff]
    %v1123 = vld [vmem:[%s2 + $0x310] sm:$0xff]
    %v1124 = vld [vmem:[%s2 + $0x318] sm:$0xff]
    %v1125 = vld [vmem:[%s2 + $0x320] sm:$0xff]
    %v1126 = vld [vmem:[%s2 + $0x328] sm:$0xff]
    %v1127 = vld [vmem:[%s2 + $0x330] sm:$0xff]
    %v1128 = vld [vmem:[%s2 + $0x338] sm:$0xff]
    %v1129 = vld [vmem:[%s2 + $0x340] sm:$0xff]
    %v1130 = vld [vmem:[%s2 + $0x348] sm:$0xff]
    %v1131 = vld [vmem:[%s2 + $0x350] sm:$0xff]
    %v1132 = vld [vmem:[%s2 + $0x358] sm:$0xff]
    %v1133 = vld [vmem:[%s2 + $0x360] sm:$0xff]
    %v1134 = vld [vmem:[%s2 + $0x368] sm:$0xff]
    %v1135 = vld [vmem:[%s2 + $0x370] sm:$0xff]
    %v1136 = vld [vmem:[%s2 + $0x378] sm:$0xff]
    %v1137 = vld [vmem:[%s2 + $0x380] sm:$0xff]
    %v1138 = vld [vmem:[%s2 + $0x388] sm:$0xff]
    %v1139 = vld [vmem:[%s2 + $0x390] sm:$0xff]
    %v1140 = vld [vmem:[%s2 + $0x398] sm:$0xff]
    %v1141 = vld [vmem:[%s2 + $0x3a0] sm:$0xff]
    %v1142 = vld [vmem:[%s2 + $0x3a8] sm:$0xff]
    %v1143 = vld [vmem:[%s2 + $0x3b0] sm:$0xff]
    %v1144 = vld [vmem:[%s2 + $0x3b8] sm:$0xff]
    %v1145 = vld [vmem:[%s2 + $0x3c0] sm:$0xff]
    %v1146 = vld [vmem:[%s2 + $0x3c8] sm:$0xff]
    %v1147 = vld [vmem:[%s2 + $0x3d0] sm:$0xff]
    %v1148 = vld [vmem:[%s2 + $0x3d8] sm:$0xff]
    %v1149 = vld [vmem:[%s2 + $0x3e0] sm:$0xff]
    %v1150 = vld [vmem:[%s2 + $0x3e8] sm:$0xff]
    %v1151 = vld [vmem:[%s2 + $0x3f0] sm:$0xff]
    %v1152 = vld [vmem:[%s2 + $0x3f8] sm:$0xff]
    %v1153 = vld [vmem:[%s2 + $0x400] sm:$0xff]
    %v1154 = vld [vmem:[%s2 + $0x408] sm:$0xff]
    %v1155 = vld [vmem:[%s2 + $0x410] sm:$0xff]
    %v1156 = vld [vmem:[%s2 + $0x418] sm:$0xff]
    %v1157 = vld [vmem:[%s2 + $0x420] sm:$0xff]
    %v1158 = vld [vmem:[%s2 + $0x428] sm:$0xff]
    %v1159 = vld [vmem:[%s2 + $0x430] sm:$0xff]
    %v1160 = vld [vmem:[%s2 + $0x438] sm:$0xff]
    %v1161 = vld [vmem:[%s2 + $0x440] sm:$0xff]
    %v1162 = vld [vmem:[%s2 + $0x448] sm:$0xff]
    %v1163 = vld [vmem:[%s2 + $0x450] sm:$0xff]
    %v1164 = vld [vmem:[%s2 + $0x458] sm:$0xff]
    %v1165 = vld [vmem:[%s2 + $0x460] sm:$0xff]
    %v1166 = vld [vmem:[%s2 + $0x468] sm:$0xff]
    %v1167 = vld [vmem:[%s2 + $0x470] sm:$0xff]
    %v1168 = vld [vmem:[%s2 + $0x478] sm:$0xff]
    %v1169 = vld [vmem:[%s2 + $0x480] sm:$0xff]
    %v1170 = vld [vmem:[%s2 + $0x488] sm:$0xff]
    %v1171 = vld [vmem:[%s2 + $0x490] sm:$0xff]
    %v1172 = vld [vmem:[%s2 + $0x498] sm:$0xff]
    %v1173 = vld [vmem:[%s2 + $0x4a0] sm:$0xff]
    %v1174 = vld [vmem:[%s2 + $0x4a8] sm:$0xff]
    %v1175 = vld [vmem:[%s2 + $0x4b0] sm:$0xff]
    %v1176 = vld [vmem:[%s2 + $0x4b8] sm:$0xff]
    %v1177 = vld [vmem:[%s2 + $0x4c0] sm:$0xff]
    %v1178 = vld [vmem:[%s2 + $0x4c8] sm:$0xff]
    %v1179 = vld [vmem:[%s2 + $0x4d0] sm:$0xff]
    %v1180 = vld [vmem:[%s2 + $0x4d8] sm:$0xff]
    %v1181 = vld [vmem:[%s2 + $0x4e0] sm:$0xff]
    %v1182 = vld [vmem:[%s2 + $0x4e8] sm:$0xff]
    %v1183 = vld [vmem:[%s2 + $0x4f0] sm:$0xff]
    %v1184 = vld [vmem:[%s2 + $0x4f8] sm:$0xff]
    %v1185 = vld [vmem:[%s2 + $0x500] sm:$0xff]
    %v1186 = vld [vmem:[%s2 + $0x508] sm:$0xff]
    %v1187 = vld [vmem:[%s2 + $0x510] sm:$0xff]
    %v1188 = vld [vmem:[%s2 + $0x518] sm:$0xff]
    %v1189 = vld [vmem:[%s2 + $0x520] sm:$0xff]
    %v1190 = vld [vmem:[%s2 + $0x528] sm:$0xff]
    %v1191 = vld [vmem:[%s2 + $0x530] sm:$0xff]
    %v1192 = vld [vmem:[%s2 + $0x538] sm:$0xff]
    %v1193 = vld [vmem:[%s2 + $0x540] sm:$0xff]
    %v1194 = vld [vmem:[%s2 + $0x548] sm:$0xff]
    %v1195 = vld [vmem:[%s2 + $0x550] sm:$0xff]
    %v1196 = vld [vmem:[%s2 + $0x558] sm:$0xff]
    %v1197 = vld [vmem:[%s2 + $0x560] sm:$0xff]
    %v1198 = vld [vmem:[%s2 + $0x568] sm:$0xff]
    %v1199 = vld [vmem:[%s2 + $0x570] sm:$0xff]
    %v1200 = vld [vmem:[%s2 + $0x578] sm:$0xff]
    %v1201 = vld [vmem:[%s2 + $0x580] sm:$0xff]
    %v1202 = vld [vmem:[%s2 + $0x588] sm:$0xff]
    %v1203 = vld [vmem:[%s2 + $0x590] sm:$0xff]
    %v1204 = vld [vmem:[%s2 + $0x598] sm:$0xff]
    %v1205 = vld [vmem:[%s2 + $0x5a0] sm:$0xff]
    %v1206 = vld [vmem:[%s2 + $0x5a8] sm:$0xff]
    %v1207 = vld [vmem:[%s2 + $0x5b0] sm:$0xff]
    %v1208 = vld [vmem:[%s2 + $0x5b8] sm:$0xff]
    %v1209 = vld [vmem:[%s2 + $0x5c0] sm:$0xff]
    %v1210 = vld [vmem:[%s2 + $0x5c8] sm:$0xff]
    %v1211 = vld [vmem:[%s2 + $0x5d0] sm:$0xff]
    %v1212 = vld [vmem:[%s2 + $0x5d8] sm:$0xff]
    %v1213 = vld [vmem:[%s2 + $0x5e0] sm:$0xff]
    %v1214 = vld [vmem:[%s2 + $0x5e8] sm:$0xff]
    %v1215 = vld [vmem:[%s2 + $0x5f0] sm:$0xff]
    %v1216 = vld [vmem:[%s2 + $0x5f8] sm:$0xff]
    %v1217 = vld [vmem:[%s2 + $0x600] sm:$0xff]
    %v1218 = vld [vmem:[%s2 + $0x608] sm:$0xff]
    %v1219 = vld [vmem:[%s2 + $0x610] sm:$0xff]
    %v1220 = vld [vmem:[%s2 + $0x618] sm:$0xff]
    %v1221 = vld [vmem:[%s2 + $0x620] sm:$0xff]
    %v1222 = vld [vmem:[%s2 + $0x628] sm:$0xff]
    %v1223 = vld [vmem:[%s2 + $0x630] sm:$0xff]
    %v1224 = vld [vmem:[%s2 + $0x638] sm:$0xff]
    %v1225 = vld [vmem:[%s2 + $0x640] sm:$0xff]
    %v1226 = vld [vmem:[%s2 + $0x648] sm:$0xff]
    %v1227 = vld [vmem:[%s2 + $0x650] sm:$0xff]
    %v1228 = vld [vmem:[%s2 + $0x658] sm:$0xff]
    %v1229 = vld [vmem:[%s2 + $0x660] sm:$0xff]
    %v1230 = vld [vmem:[%s2 + $0x668] sm:$0xff]
    %v1231 = vld [vmem:[%s2 + $0x670] sm:$0xff]
    %v1232 = vld [vmem:[%s2 + $0x678] sm:$0xff]
    %v1233 = vld [vmem:[%s2 + $0x680] sm:$0xff]
    %v1234 = vld [vmem:[%s2 + $0x688] sm:$0xff]
    %v1235 = vld [vmem:[%s2 + $0x690] sm:$0xff]
    %v1236 = vld [vmem:[%s2 + $0x698] sm:$0xff]
    %v1237 = vld [vmem:[%s2 + $0x6a0] sm:$0xff]
    %v1238 = vld [vmem:[%s2 + $0x6a8] sm:$0xff]
    %v1239 = vld [vmem:[%s2 + $0x6b0] sm:$0xff]
    %v1240 = vld [vmem:[%s2 + $0x6b8] sm:$0xff]
    %v1241 = vld [vmem:[%s2 + $0x6c0] sm:$0xff]
    %v1242 = vld [vmem:[%s2 + $0x6c8] sm:$0xff]
    %v1243 = vld [vmem:[%s2 + $0x6d0] sm:$0xff]
    %v1244 = vld [vmem:[%s2 + $0x6d8] sm:$0xff]
    %v1245 = vld [vmem:[%s2 + $0x6e0] sm:$0xff]
    %v1246 = vld [vmem:[%s2 + $0x6e8] sm:$0xff]
    %v1247 = vld [vmem:[%s2 + $0x6f0] sm:$0xff]
    %v1248 = vld [vmem:[%s2 + $0x6f8] sm:$0xff]
    %v1249 = vld [vmem:[%s2 + $0x700] sm:$0xff]
    %v1250 = vld [vmem:[%s2 + $0x708] sm:$0xff]
    %v1251 = vld [vmem:[%s2 + $0x710] sm:$0xff]
    %v1252 = vld [vmem:[%s2 + $0x718] sm:$0xff]
    %v1253 = vld [vmem:[%s2 + $0x720] sm:$0xff]
    %v1254 = vld [vmem:[%s2 + $0x728] sm:$0xff]
    %v1255 = vld [vmem:[%s2 + $0x730] sm:$0xff]
    %v1256 = vld [vmem:[%s2 + $0x738] sm:$0xff]
    %v1257 = vld [vmem:[%s2 + $0x740] sm:$0xff]
    %v1258 = vld [vmem:[%s2 + $0x748] sm:$0xff]
    %v1259 = vld [vmem:[%s2 + $0x750] sm:$0xff]
    %v1260 = vld [vmem:[%s2 + $0x758] sm:$0xff]
    %v1261 = vld [vmem:[%s2 + $0x760] sm:$0xff]
    %v1262 = vld [vmem:[%s2 + $0x768] sm:$0xff]
    %v1263 = vld [vmem:[%s2 + $0x770] sm:$0xff]
    %v1264 = vld [vmem:[%s2 + $0x778] sm:$0xff]
    %v1265 = vld [vmem:[%s2 + $0x780] sm:$0xff]
    %v1266 = vld [vmem:[%s2 + $0x788] sm:$0xff]
    %v1267 = vld [vmem:[%s2 + $0x790] sm:$0xff]
    %v1268 = vld [vmem:[%s2 + $0x798] sm:$0xff]
    %v1269 = vld [vmem:[%s2 + $0x7a0] sm:$0xff]
    %v1270 = vld [vmem:[%s2 + $0x7a8] sm:$0xff]
    %v1271 = vld [vmem:[%s2 + $0x7b0] sm:$0xff]
    %v1272 = vld [vmem:[%s2 + $0x7b8] sm:$0xff]
    %v1273 = vld [vmem:[%s2 + $0x7c0] sm:$0xff]
    %v1274 = vld [vmem:[%s2 + $0x7c8] sm:$0xff]
    %v1275 = vld [vmem:[%s2 + $0x7d0] sm:$0xff]
    %v1276 = vld [vmem:[%s2 + $0x7d8] sm:$0xff]
    %v1277 = vld [vmem:[%s2 + $0x7e0] sm:$0xff]
    %v1278 = vld [vmem:[%s2 + $0x7e8] sm:$0xff]
    %v1279 = vld [vmem:[%s2 + $0x7f0] sm:$0xff]
    %v1280 = vld [vmem:[%s2 + $0x7f8] sm:$0xff]
    %v1281 = vld [vmem:[%s2 + $0x800] sm:$0xff]
    %v1282 = vld [vmem:[%s2 + $0x808] sm:$0xff]
    %v1283 = vld [vmem:[%s2 + $0x810] sm:$0xff]
    %v1284 = vld [vmem:[%s2 + $0x818] sm:$0xff]
    %v1285 = vld [vmem:[%s2 + $0x820] sm:$0xff]
    %v1286 = vld [vmem:[%s2 + $0x828] sm:$0xff]
    %v1287 = vld [vmem:[%s2 + $0x830] sm:$0xff]
    %v1288 = vld [vmem:[%s2 + $0x838] sm:$0xff]
    %v1289 = vld [vmem:[%s2 + $0x840] sm:$0xff]
    %v1290 = vld [vmem:[%s2 + $0x848] sm:$0xff]
    %v1291 = vld [vmem:[%s2 + $0x850] sm:$0xff]
    %v1292 = vld [vmem:[%s2 + $0x858] sm:$0xff]
    %v1293 = vld [vmem:[%s2 + $0x860] sm:$0xff]
    %v1294 = vld [vmem:[%s2 + $0x868] sm:$0xff]
    %v1295 = vld [vmem:[%s2 + $0x870] sm:$0xff]
    %v1296 = vld [vmem:[%s2 + $0x878] sm:$0xff]
    %v1297 = vld [vmem:[%s2 + $0x880] sm:$0xff]
    %v1298 = vld [vmem:[%s2 + $0x888] sm:$0xff]
    %v1299 = vld [vmem:[%s2 + $0x890] sm:$0xff]
    %v1300 = vld [vmem:[%s2 + $0x898] sm:$0xff]
    %v1301 = vld [vmem:[%s2 + $0x8a0] sm:$0xff]
    %v1302 = vld [vmem:[%s2 + $0x8a8] sm:$0xff]
    %v1303 = vld [vmem:[%s2 + $0x8b0] sm:$0xff]
    %v1304 = vld [vmem:[%s2 + $0x8b8] sm:$0xff]
    %v1305 = vld [vmem:[%s2 + $0x8c0] sm:$0xff]
    %v1306 = vld [vmem:[%s2 + $0x8c8] sm:$0xff]
    %v1307 = vld [vmem:[%s2 + $0x8d0] sm:$0xff]
    %v1308 = vld [vmem:[%s2 + $0x8d8] sm:$0xff]
    %v1309 = vld [vmem:[%s2 + $0x8e0] sm:$0xff]
    %v1310 = vld [vmem:[%s2 + $0x8e8] sm:$0xff]
    %v1311 = vld [vmem:[%s2 + $0x8f0] sm:$0xff]
    %v1312 = vld [vmem:[%s2 + $0x8f8] sm:$0xff]
    %v1313 = vld [vmem:[%s2 + $0x900] sm:$0xff]
    %v1314 = vld [vmem:[%s2 + $0x908] sm:$0xff]
    %v1315 = vld [vmem:[%s2 + $0x910] sm:$0xff]
    %v1316 = vld [vmem:[%s2 + $0x918] sm:$0xff]
    %v1317 = vld [vmem:[%s2 + $0x920] sm:$0xff]
    %v1318 = vld [vmem:[%s2 + $0x928] sm:$0xff]
    %v1319 = vld [vmem:[%s2 + $0x930] sm:$0xff]
    %v1320 = vld [vmem:[%s2 + $0x938] sm:$0xff]
    %v1321 = vld [vmem:[%s2 + $0x940] sm:$0xff]
    %v1322 = vld [vmem:[%s2 + $0x948] sm:$0xff]
    %v1323 = vld [vmem:[%s2 + $0x950] sm:$0xff]
    %v1324 = vld [vmem:[%s2 + $0x958] sm:$0xff]
    %v1325 = vld [vmem:[%s2 + $0x960] sm:$0xff]
    %v1326 = vld [vmem:[%s2 + $0x968] sm:$0xff]
    %v1327 = vld [vmem:[%s2 + $0x970] sm:$0xff]
    %v1328 = vld [vmem:[%s2 + $0x978] sm:$0xff]
    %v1329 = vld [vmem:[%s2 + $0x980] sm:$0xff]
    %v1330 = vld [vmem:[%s2 + $0x988] sm:$0xff]
    %v1331 = vld [vmem:[%s2 + $0x990] sm:$0xff]
    %v1332 = vld [vmem:[%s2 + $0x998] sm:$0xff]
    %v1333 = vld [vmem:[%s2 + $0x9a0] sm:$0xff]
    %v1334 = vld [vmem:[%s2 + $0x9a8] sm:$0xff]
    %v1335 = vld [vmem:[%s2 + $0x9b0] sm:$0xff]
    %v1336 = vld [vmem:[%s2 + $0x9b8] sm:$0xff]
    %v1337 = vld [vmem:[%s2 + $0x9c0] sm:$0xff]
    %v1338 = vld [vmem:[%s2 + $0x9c8] sm:$0xff]
    %v1339 = vld [vmem:[%s2 + $0x9d0] sm:$0xff]
    %v1340 = vld [vmem:[%s2 + $0x9d8] sm:$0xff]
    %v1341 = vld [vmem:[%s2 + $0x9e0] sm:$0xff]
    %v1342 = vld [vmem:[%s2 + $0x9e8] sm:$0xff]
    %v1343 = vld [vmem:[%s2 + $0x9f0] sm:$0xff]
    %v1344 = vld [vmem:[%s2 + $0x9f8] sm:$0xff]
    %v1345 = vld [vmem:[%s2 + $0xa00] sm:$0xff]
    %v1346 = vld [vmem:[%s2 + $0xa08] sm:$0xff]
    %v1347 = vld [vmem:[%s2 + $0xa10] sm:$0xff]
    %v1348 = vld [vmem:[%s2 + $0xa18] sm:$0xff]
    %v1349 = vld [vmem:[%s2 + $0xa20] sm:$0xff]
    %v1350 = vld [vmem:[%s2 + $0xa28] sm:$0xff]
    %v1351 = vld [vmem:[%s2 + $0xa30] sm:$0xff]
    %v1352 = vld [vmem:[%s2 + $0xa38] sm:$0xff]
    %v1353 = vld [vmem:[%s2 + $0xa40] sm:$0xff]
    %v1354 = vld [vmem:[%s2 + $0xa48] sm:$0xff]
    %v1355 = vld [vmem:[%s2 + $0xa50] sm:$0xff]
    %v1356 = vld [vmem:[%s2 + $0xa58] sm:$0xff]
    %v1357 = vld [vmem:[%s2 + $0xa60] sm:$0xff]
    %v1358 = vld [vmem:[%s2 + $0xa68] sm:$0xff]
    %v1359 = vld [vmem:[%s2 + $0xa70] sm:$0xff]
    %v1360 = vld [vmem:[%s2 + $0xa78] sm:$0xff]
    %v1361 = vld [vmem:[%s2 + $0xa80] sm:$0xff]
    %v1362 = vld [vmem:[%s2 + $0xa88] sm:$0xff]
    %v1363 = vld [vmem:[%s2 + $0xa90] sm:$0xff]
    %v1364 = vld [vmem:[%s2 + $0xa98] sm:$0xff]
    %v1365 = vld [vmem:[%s2 + $0xaa0] sm:$0xff]
    %v1366 = vld [vmem:[%s2 + $0xaa8] sm:$0xff]
    %v1367 = vld [vmem:[%s2 + $0xab0] sm:$0xff]
    %v1368 = vld [vmem:[%s2 + $0xab8] sm:$0xff]
    %v1369 = vld [vmem:[%s2 + $0xac0] sm:$0xff]
    %v1370 = vld [vmem:[%s2 + $0xac8] sm:$0xff]
    %v1371 = vld [vmem:[%s2 + $0xad0] sm:$0xff]
    %v1372 = vld [vmem:[%s2 + $0xad8] sm:$0xff]
    %v1373 = vld [vmem:[%s2 + $0xae0] sm:$0xff]
    %v1374 = vld [vmem:[%s2 + $0xae8] sm:$0xff]
    %v1375 = vld [vmem:[%s2 + $0xaf0] sm:$0xff]
    %v1376 = vld [vmem:[%s2 + $0xaf8] sm:$0xff]
    %v1377 = vld [vmem:[%s2 + $0xb00] sm:$0xff]
    %v1378 = vld [vmem:[%s2 + $0xb08] sm:$0xff]
    %v1379 = vld [vmem:[%s2 + $0xb10] sm:$0xff]
    %v1380 = vld [vmem:[%s2 + $0xb18] sm:$0xff]
    %v1381 = vld [vmem:[%s2 + $0xb20] sm:$0xff]
    %v1382 = vld [vmem:[%s2 + $0xb28] sm:$0xff]
    %v1383 = vld [vmem:[%s2 + $0xb30] sm:$0xff]
    %v1384 = vld [vmem:[%s2 + $0xb38] sm:$0xff]
    %v1385 = vld [vmem:[%s2 + $0xb40] sm:$0xff]
    %v1386 = vld [vmem:[%s2 + $0xb48] sm:$0xff]
    %v1387 = vld [vmem:[%s2 + $0xb50] sm:$0xff]
    %v1388 = vld [vmem:[%s2 + $0xb58] sm:$0xff]
    %v1389 = vld [vmem:[%s2 + $0xb60] sm:$0xff]
    %v1390 = vld [vmem:[%s2 + $0xb68] sm:$0xff]
    %v1391 = vld [vmem:[%s2 + $0xb70] sm:$0xff]
    %v1392 = vld [vmem:[%s2 + $0xb78] sm:$0xff]
    %v1393 = vld [vmem:[%s2 + $0xb80] sm:$0xff]
    %v1394 = vld [vmem:[%s2 + $0xb88] sm:$0xff]
    %v1395 = vld [vmem:[%s2 + $0xb90] sm:$0xff]
    %v1396 = vld [vmem:[%s2 + $0xb98] sm:$0xff]
    %v1397 = vld [vmem:[%s2 + $0xba0] sm:$0xff]
    %v1398 = vld [vmem:[%s2 + $0xba8] sm:$0xff]
    %v1399 = vld [vmem:[%s2 + $0xbb0] sm:$0xff]
    %v1400 = vld [vmem:[%s2 + $0xbb8] sm:$0xff]
    %v1401 = vld [vmem:[%s2 + $0xbc0] sm:$0xff]
    %v1402 = vld [vmem:[%s2 + $0xbc8] sm:$0xff]
    %v1403 = vld [vmem:[%s2 + $0xbd0] sm:$0xff]
    %v1404 = vld [vmem:[%s2 + $0xbd8] sm:$0xff]
    %v1405 = vld [vmem:[%s2 + $0xbe0] sm:$0xff]
    %v1406 = vld [vmem:[%s2 + $0xbe8] sm:$0xff]
    %v1407 = vld [vmem:[%s2 + $0xbf0] sm:$0xff]
    %v1408 = vld [vmem:[%s2 + $0xbf8] sm:$0xff]
    %v1409 = vld [vmem:[%s2 + $0xc00] sm:$0x33]
    %v1410 = vld [vmem:[%s2 + $0xc08] sm:$0x33]
    %v1411 = vld [vmem:[%s2 + $0xc10] sm:$0x33]
    %v1412 = vld [vmem:[%s2 + $0xc18] sm:$0x33]
    %v1413 = vld [vmem:[%s2 + $0xc20] sm:$0x33]
    %v1414 = vld [vmem:[%s2 + $0xc28] sm:$0x33]
    %v1415 = vld [vmem:[%s2 + $0xc30] sm:$0x33]
    %v1416 = vld [vmem:[%s2 + $0xc38] sm:$0x33]
    %v1417 = vld [vmem:[%s2 + $0xc40] sm:$0x33]
    %v1418 = vld [vmem:[%s2 + $0xc48] sm:$0x33]
    %v1419 = vld [vmem:[%s2 + $0xc50] sm:$0x33]
    %v1420 = vld [vmem:[%s2 + $0xc58] sm:$0x33]
    %v1421 = vld [vmem:[%s2 + $0xc60] sm:$0x33]
    %v1422 = vld [vmem:[%s2 + $0xc68] sm:$0x33]
    %v1423 = vld [vmem:[%s2 + $0xc70] sm:$0x33]
    %v1424 = vld [vmem:[%s2 + $0xc78] sm:$0x33]
    %v1825 = vunpack.c.l.b16 %v1025
    %v1826 = vunpack.c.h.b16 %v1025
    %v1827 = vunpack.c.l.b16 %v1026
    %v1828 = vunpack.c.h.b16 %v1026
    %v1829 = vunpack.c.l.b16 %v1027
    %v1830 = vunpack.c.h.b16 %v1027
    %v1831 = vunpack.c.l.b16 %v1028
    %v1832 = vunpack.c.h.b16 %v1028
    %v1833 = vunpack.c.l.b16 %v1029
    %v1834 = vunpack.c.h.b16 %v1029
    %v1835 = vunpack.c.l.b16 %v1030
    %v1836 = vunpack.c.h.b16 %v1030
    %v1837 = vunpack.c.l.b16 %v1031
    %v1838 = vunpack.c.h.b16 %v1031
    %v1839 = vunpack.c.l.b16 %v1032
    %v1840 = vunpack.c.h.b16 %v1032
    %v1841 = vunpack.c.l.b16 %v1033
    %v1842 = vunpack.c.h.b16 %v1033
    %v1843 = vunpack.c.l.b16 %v1034
    %v1844 = vunpack.c.h.b16 %v1034
    %v1845 = vunpack.c.l.b16 %v1035
    %v1846 = vunpack.c.h.b16 %v1035
    %v1847 = vunpack.c.l.b16 %v1036
    %v1848 = vunpack.c.h.b16 %v1036
    %v1849 = vunpack.c.l.b16 %v1037
    %v1850 = vunpack.c.h.b16 %v1037
    %v1851 = vunpack.c.l.b16 %v1038
    %v1852 = vunpack.c.h.b16 %v1038
    %v1853 = vunpack.c.l.b16 %v1039
    %v1854 = vunpack.c.h.b16 %v1039
    %v1855 = vunpack.c.l.b16 %v1040
    %v1856 = vunpack.c.h.b16 %v1040
    %v1857 = vunpack.c.l.b16 %v1041
    %v1858 = vunpack.c.h.b16 %v1041
    %v1859 = vunpack.c.l.b16 %v1042
    %v1860 = vunpack.c.h.b16 %v1042
    %v1861 = vunpack.c.l.b16 %v1043
    %v1862 = vunpack.c.h.b16 %v1043
    %v1863 = vunpack.c.l.b16 %v1044
    %v1864 = vunpack.c.h.b16 %v1044
    %v1865 = vunpack.c.l.b16 %v1045
    %v1866 = vunpack.c.h.b16 %v1045
    %v1867 = vunpack.c.l.b16 %v1046
    %v1868 = vunpack.c.h.b16 %v1046
    %v1869 = vunpack.c.l.b16 %v1047
    %v1870 = vunpack.c.h.b16 %v1047
    %v1871 = vunpack.c.l.b16 %v1048
    %v1872 = vunpack.c.h.b16 %v1048
    %v1873 = vunpack.c.l.b16 %v1049
    %v1874 = vunpack.c.h.b16 %v1049
    %v1875 = vunpack.c.l.b16 %v1050
    %v1876 = vunpack.c.h.b16 %v1050
    %v1877 = vunpack.c.l.b16 %v1051
    %v1878 = vunpack.c.h.b16 %v1051
    %v1879 = vunpack.c.l.b16 %v1052
    %v1880 = vunpack.c.h.b16 %v1052
    %v1881 = vunpack.c.l.b16 %v1053
    %v1882 = vunpack.c.h.b16 %v1053
    %v1883 = vunpack.c.l.b16 %v1054
    %v1884 = vunpack.c.h.b16 %v1054
    %v1885 = vunpack.c.l.b16 %v1055
    %v1886 = vunpack.c.h.b16 %v1055
    %v1887 = vunpack.c.l.b16 %v1056
    %v1888 = vunpack.c.h.b16 %v1056
    %v1889 = vunpack.c.l.b16 %v1057
    %v1890 = vunpack.c.h.b16 %v1057
    %v1891 = vunpack.c.l.b16 %v1058
    %v1892 = vunpack.c.h.b16 %v1058
    %v1893 = vunpack.c.l.b16 %v1059
    %v1894 = vunpack.c.h.b16 %v1059
    %v1895 = vunpack.c.l.b16 %v1060
    %v1896 = vunpack.c.h.b16 %v1060
    %v1897 = vunpack.c.l.b16 %v1061
    %v1898 = vunpack.c.h.b16 %v1061
    %v1899 = vunpack.c.l.b16 %v1062
    %v1900 = vunpack.c.h.b16 %v1062
    %v1901 = vunpack.c.l.b16 %v1063
    %v1902 = vunpack.c.h.b16 %v1063
    %v1903 = vunpack.c.l.b16 %v1064
    %v1904 = vunpack.c.h.b16 %v1064
    %v1905 = vunpack.c.l.b16 %v1065
    %v1906 = vunpack.c.h.b16 %v1065
    %v1907 = vunpack.c.l.b16 %v1066
    %v1908 = vunpack.c.h.b16 %v1066
    %v1909 = vunpack.c.l.b16 %v1067
    %v1910 = vunpack.c.h.b16 %v1067
    %v1911 = vunpack.c.l.b16 %v1068
    %v1912 = vunpack.c.h.b16 %v1068
    %v1913 = vunpack.c.l.b16 %v1069
    %v1914 = vunpack.c.h.b16 %v1069
    %v1915 = vunpack.c.l.b16 %v1070
    %v1916 = vunpack.c.h.b16 %v1070
    %v1917 = vunpack.c.l.b16 %v1071
    %v1918 = vunpack.c.h.b16 %v1071
    %v1919 = vunpack.c.l.b16 %v1072
    %v1920 = vunpack.c.h.b16 %v1072
    %v1921 = vunpack.c.l.b16 %v1073
    %v1922 = vunpack.c.h.b16 %v1073
    %v1923 = vunpack.c.l.b16 %v1074
    %v1924 = vunpack.c.h.b16 %v1074
    %v1925 = vunpack.c.l.b16 %v1075
    %v1926 = vunpack.c.h.b16 %v1075
    %v1927 = vunpack.c.l.b16 %v1076
    %v1928 = vunpack.c.h.b16 %v1076
    %v1929 = vunpack.c.l.b16 %v1077
    %v1930 = vunpack.c.h.b16 %v1077
    %v1931 = vunpack.c.l.b16 %v1078
    %v1932 = vunpack.c.h.b16 %v1078
    %v1933 = vunpack.c.l.b16 %v1079
    %v1934 = vunpack.c.h.b16 %v1079
    %v1935 = vunpack.c.l.b16 %v1080
    %v1936 = vunpack.c.h.b16 %v1080
    %v1937 = vunpack.c.l.b16 %v1081
    %v1938 = vunpack.c.h.b16 %v1081
    %v1939 = vunpack.c.l.b16 %v1082
    %v1940 = vunpack.c.h.b16 %v1082
    %v1941 = vunpack.c.l.b16 %v1083
    %v1942 = vunpack.c.h.b16 %v1083
    %v1943 = vunpack.c.l.b16 %v1084
    %v1944 = vunpack.c.h.b16 %v1084
    %v1945 = vunpack.c.l.b16 %v1085
    %v1946 = vunpack.c.h.b16 %v1085
    %v1947 = vunpack.c.l.b16 %v1086
    %v1948 = vunpack.c.h.b16 %v1086
    %v1949 = vunpack.c.l.b16 %v1087
    %v1950 = vunpack.c.h.b16 %v1087
    %v1951 = vunpack.c.l.b16 %v1088
    %v1952 = vunpack.c.h.b16 %v1088
    %v1953 = vunpack.c.l.b16 %v1089
    %v1954 = vunpack.c.h.b16 %v1089
    %v1955 = vunpack.c.l.b16 %v1090
    %v1956 = vunpack.c.h.b16 %v1090
    %v1957 = vunpack.c.l.b16 %v1091
    %v1958 = vunpack.c.h.b16 %v1091
    %v1959 = vunpack.c.l.b16 %v1092
    %v1960 = vunpack.c.h.b16 %v1092
    %v1961 = vunpack.c.l.b16 %v1093
    %v1962 = vunpack.c.h.b16 %v1093
    %v1963 = vunpack.c.l.b16 %v1094
    %v1964 = vunpack.c.h.b16 %v1094
    %v1965 = vunpack.c.l.b16 %v1095
    %v1966 = vunpack.c.h.b16 %v1095
    %v1967 = vunpack.c.l.b16 %v1096
    %v1968 = vunpack.c.h.b16 %v1096
    %v1969 = vunpack.c.l.b16 %v1097
    %v1970 = vunpack.c.h.b16 %v1097
    %v1971 = vunpack.c.l.b16 %v1098
    %v1972 = vunpack.c.h.b16 %v1098
    %v1973 = vunpack.c.l.b16 %v1099
    %v1974 = vunpack.c.h.b16 %v1099
    %v1975 = vunpack.c.l.b16 %v1100
    %v1976 = vunpack.c.h.b16 %v1100
    %v1977 = vunpack.c.l.b16 %v1101
    %v1978 = vunpack.c.h.b16 %v1101
    %v1979 = vunpack.c.l.b16 %v1102
    %v1980 = vunpack.c.h.b16 %v1102
    %v1981 = vunpack.c.l.b16 %v1103
    %v1982 = vunpack.c.h.b16 %v1103
    %v1983 = vunpack.c.l.b16 %v1104
    %v1984 = vunpack.c.h.b16 %v1104
    %v1985 = vunpack.c.l.b16 %v1105
    %v1986 = vunpack.c.h.b16 %v1105
    %v1987 = vunpack.c.l.b16 %v1106
    %v1988 = vunpack.c.h.b16 %v1106
    %v1989 = vunpack.c.l.b16 %v1107
    %v1990 = vunpack.c.h.b16 %v1107
    %v1991 = vunpack.c.l.b16 %v1108
    %v1992 = vunpack.c.h.b16 %v1108
    %v1993 = vunpack.c.l.b16 %v1109
    %v1994 = vunpack.c.h.b16 %v1109
    %v1995 = vunpack.c.l.b16 %v1110
    %v1996 = vunpack.c.h.b16 %v1110
    %v1997 = vunpack.c.l.b16 %v1111
    %v1998 = vunpack.c.h.b16 %v1111
    %v1999 = vunpack.c.l.b16 %v1112
    %v2000 = vunpack.c.h.b16 %v1112
    %v2001 = vunpack.c.l.b16 %v1113
    %v2002 = vunpack.c.h.b16 %v1113
    %v2003 = vunpack.c.l.b16 %v1114
    %v2004 = vunpack.c.h.b16 %v1114
    %v2005 = vunpack.c.l.b16 %v1115
    %v2006 = vunpack.c.h.b16 %v1115
    %v2007 = vunpack.c.l.b16 %v1116
    %v2008 = vunpack.c.h.b16 %v1116
    %v2009 = vunpack.c.l.b16 %v1117
    %v2010 = vunpack.c.h.b16 %v1117
    %v2011 = vunpack.c.l.b16 %v1118
    %v2012 = vunpack.c.h.b16 %v1118
    %v2013 = vunpack.c.l.b16 %v1119
    %v2014 = vunpack.c.h.b16 %v1119
    %v2015 = vunpack.c.l.b16 %v1120
    %v2016 = vunpack.c.h.b16 %v1120
    %v2017 = vunpack.c.l.b16 %v1121
    %v2018 = vunpack.c.h.b16 %v1121
    %v2019 = vunpack.c.l.b16 %v1122
    %v2020 = vunpack.c.h.b16 %v1122
    %v2021 = vunpack.c.l.b16 %v1123
    %v2022 = vunpack.c.h.b16 %v1123
    %v2023 = vunpack.c.l.b16 %v1124
    %v2024 = vunpack.c.h.b16 %v1124
    %v2025 = vunpack.c.l.b16 %v1125
    %v2026 = vunpack.c.h.b16 %v1125
    %v2027 = vunpack.c.l.b16 %v1126
    %v2028 = vunpack.c.h.b16 %v1126
    %v2029 = vunpack.c.l.b16 %v1127
    %v2030 = vunpack.c.h.b16 %v1127
    %v2031 = vunpack.c.l.b16 %v1128
    %v2032 = vunpack.c.h.b16 %v1128
    %v2033 = vunpack.c.l.b16 %v1129
    %v2034 = vunpack.c.h.b16 %v1129
    %v2035 = vunpack.c.l.b16 %v1130
    %v2036 = vunpack.c.h.b16 %v1130
    %v2037 = vunpack.c.l.b16 %v1131
    %v2038 = vunpack.c.h.b16 %v1131
    %v2039 = vunpack.c.l.b16 %v1132
    %v2040 = vunpack.c.h.b16 %v1132
    %v2041 = vunpack.c.l.b16 %v1133
    %v2042 = vunpack.c.h.b16 %v1133
    %v2043 = vunpack.c.l.b16 %v1134
    %v2044 = vunpack.c.h.b16 %v1134
    %v2045 = vunpack.c.l.b16 %v1135
    %v2046 = vunpack.c.h.b16 %v1135
    %v2047 = vunpack.c.l.b16 %v1136
    %v2048 = vunpack.c.h.b16 %v1136
    %v2049 = vunpack.c.l.b16 %v1137
    %v2050 = vunpack.c.h.b16 %v1137
    %v2051 = vunpack.c.l.b16 %v1138
    %v2052 = vunpack.c.h.b16 %v1138
    %v2053 = vunpack.c.l.b16 %v1139
    %v2054 = vunpack.c.h.b16 %v1139
    %v2055 = vunpack.c.l.b16 %v1140
    %v2056 = vunpack.c.h.b16 %v1140
    %v2057 = vunpack.c.l.b16 %v1141
    %v2058 = vunpack.c.h.b16 %v1141
    %v2059 = vunpack.c.l.b16 %v1142
    %v2060 = vunpack.c.h.b16 %v1142
    %v2061 = vunpack.c.l.b16 %v1143
    %v2062 = vunpack.c.h.b16 %v1143
    %v2063 = vunpack.c.l.b16 %v1144
    %v2064 = vunpack.c.h.b16 %v1144
    %v2065 = vunpack.c.l.b16 %v1145
    %v2066 = vunpack.c.h.b16 %v1145
    %v2067 = vunpack.c.l.b16 %v1146
    %v2068 = vunpack.c.h.b16 %v1146
    %v2069 = vunpack.c.l.b16 %v1147
    %v2070 = vunpack.c.h.b16 %v1147
    %v2071 = vunpack.c.l.b16 %v1148
    %v2072 = vunpack.c.h.b16 %v1148
    %v2073 = vunpack.c.l.b16 %v1149
    %v2074 = vunpack.c.h.b16 %v1149
    %v2075 = vunpack.c.l.b16 %v1150
    %v2076 = vunpack.c.h.b16 %v1150
    %v2077 = vunpack.c.l.b16 %v1151
    %v2078 = vunpack.c.h.b16 %v1151
    %v2079 = vunpack.c.l.b16 %v1152
    %v2080 = vunpack.c.h.b16 %v1152
    %v2081 = vunpack.c.l.b16 %v1153
    %v2082 = vunpack.c.h.b16 %v1153
    %v2083 = vunpack.c.l.b16 %v1154
    %v2084 = vunpack.c.h.b16 %v1154
    %v2085 = vunpack.c.l.b16 %v1155
    %v2086 = vunpack.c.h.b16 %v1155
    %v2087 = vunpack.c.l.b16 %v1156
    %v2088 = vunpack.c.h.b16 %v1156
    %v2089 = vunpack.c.l.b16 %v1157
    %v2090 = vunpack.c.h.b16 %v1157
    %v2091 = vunpack.c.l.b16 %v1158
    %v2092 = vunpack.c.h.b16 %v1158
    %v2093 = vunpack.c.l.b16 %v1159
    %v2094 = vunpack.c.h.b16 %v1159
    %v2095 = vunpack.c.l.b16 %v1160
    %v2096 = vunpack.c.h.b16 %v1160
    %v2097 = vunpack.c.l.b16 %v1161
    %v2098 = vunpack.c.h.b16 %v1161
    %v2099 = vunpack.c.l.b16 %v1162
    %v2100 = vunpack.c.h.b16 %v1162
    %v2101 = vunpack.c.l.b16 %v1163
    %v2102 = vunpack.c.h.b16 %v1163
    %v2103 = vunpack.c.l.b16 %v1164
    %v2104 = vunpack.c.h.b16 %v1164
    %v2105 = vunpack.c.l.b16 %v1165
    %v2106 = vunpack.c.h.b16 %v1165
    %v2107 = vunpack.c.l.b16 %v1166
    %v2108 = vunpack.c.h.b16 %v1166
    %v2109 = vunpack.c.l.b16 %v1167
    %v2110 = vunpack.c.h.b16 %v1167
    %v2111 = vunpack.c.l.b16 %v1168
    %v2112 = vunpack.c.h.b16 %v1168
    %v2113 = vunpack.c.l.b16 %v1169
    %v2114 = vunpack.c.h.b16 %v1169
    %v2115 = vunpack.c.l.b16 %v1170
    %v2116 = vunpack.c.h.b16 %v1170
    %v2117 = vunpack.c.l.b16 %v1171
    %v2118 = vunpack.c.h.b16 %v1171
    %v2119 = vunpack.c.l.b16 %v1172
    %v2120 = vunpack.c.h.b16 %v1172
    %v2121 = vunpack.c.l.b16 %v1173
    %v2122 = vunpack.c.h.b16 %v1173
    %v2123 = vunpack.c.l.b16 %v1174
    %v2124 = vunpack.c.h.b16 %v1174
    %v2125 = vunpack.c.l.b16 %v1175
    %v2126 = vunpack.c.h.b16 %v1175
    %v2127 = vunpack.c.l.b16 %v1176
    %v2128 = vunpack.c.h.b16 %v1176
    %v2129 = vunpack.c.l.b16 %v1177
    %v2130 = vunpack.c.h.b16 %v1177
    %v2131 = vunpack.c.l.b16 %v1178
    %v2132 = vunpack.c.h.b16 %v1178
    %v2133 = vunpack.c.l.b16 %v1179
    %v2134 = vunpack.c.h.b16 %v1179
    %v2135 = vunpack.c.l.b16 %v1180
    %v2136 = vunpack.c.h.b16 %v1180
    %v2137 = vunpack.c.l.b16 %v1181
    %v2138 = vunpack.c.h.b16 %v1181
    %v2139 = vunpack.c.l.b16 %v1182
    %v2140 = vunpack.c.h.b16 %v1182
    %v2141 = vunpack.c.l.b16 %v1183
    %v2142 = vunpack.c.h.b16 %v1183
    %v2143 = vunpack.c.l.b16 %v1184
    %v2144 = vunpack.c.h.b16 %v1184
    %v2145 = vunpack.c.l.b16 %v1185
    %v2146 = vunpack.c.h.b16 %v1185
    %v2147 = vunpack.c.l.b16 %v1186
    %v2148 = vunpack.c.h.b16 %v1186
    %v2149 = vunpack.c.l.b16 %v1187
    %v2150 = vunpack.c.h.b16 %v1187
    %v2151 = vunpack.c.l.b16 %v1188
    %v2152 = vunpack.c.h.b16 %v1188
    %v2153 = vunpack.c.l.b16 %v1189
    %v2154 = vunpack.c.h.b16 %v1189
    %v2155 = vunpack.c.l.b16 %v1190
    %v2156 = vunpack.c.h.b16 %v1190
    %v2157 = vunpack.c.l.b16 %v1191
    %v2158 = vunpack.c.h.b16 %v1191
    %v2159 = vunpack.c.l.b16 %v1192
    %v2160 = vunpack.c.h.b16 %v1192
    %v2161 = vunpack.c.l.b16 %v1193
    %v2162 = vunpack.c.h.b16 %v1193
    %v2163 = vunpack.c.l.b16 %v1194
    %v2164 = vunpack.c.h.b16 %v1194
    %v2165 = vunpack.c.l.b16 %v1195
    %v2166 = vunpack.c.h.b16 %v1195
    %v2167 = vunpack.c.l.b16 %v1196
    %v2168 = vunpack.c.h.b16 %v1196
    %v2169 = vunpack.c.l.b16 %v1197
    %v2170 = vunpack.c.h.b16 %v1197
    %v2171 = vunpack.c.l.b16 %v1198
    %v2172 = vunpack.c.h.b16 %v1198
    %v2173 = vunpack.c.l.b16 %v1199
    %v2174 = vunpack.c.h.b16 %v1199
    %v2175 = vunpack.c.l.b16 %v1200
    %v2176 = vunpack.c.h.b16 %v1200
    %v2177 = vunpack.c.l.b16 %v1201
    %v2178 = vunpack.c.h.b16 %v1201
    %v2179 = vunpack.c.l.b16 %v1202
    %v2180 = vunpack.c.h.b16 %v1202
    %v2181 = vunpack.c.l.b16 %v1203
    %v2182 = vunpack.c.h.b16 %v1203
    %v2183 = vunpack.c.l.b16 %v1204
    %v2184 = vunpack.c.h.b16 %v1204
    %v2185 = vunpack.c.l.b16 %v1205
    %v2186 = vunpack.c.h.b16 %v1205
    %v2187 = vunpack.c.l.b16 %v1206
    %v2188 = vunpack.c.h.b16 %v1206
    %v2189 = vunpack.c.l.b16 %v1207
    %v2190 = vunpack.c.h.b16 %v1207
    %v2191 = vunpack.c.l.b16 %v1208
    %v2192 = vunpack.c.h.b16 %v1208
    %v2193 = vunpack.c.l.b16 %v1209
    %v2194 = vunpack.c.h.b16 %v1209
    %v2195 = vunpack.c.l.b16 %v1210
    %v2196 = vunpack.c.h.b16 %v1210
    %v2197 = vunpack.c.l.b16 %v1211
    %v2198 = vunpack.c.h.b16 %v1211
    %v2199 = vunpack.c.l.b16 %v1212
    %v2200 = vunpack.c.h.b16 %v1212
    %v2201 = vunpack.c.l.b16 %v1213
    %v2202 = vunpack.c.h.b16 %v1213
    %v2203 = vunpack.c.l.b16 %v1214
    %v2204 = vunpack.c.h.b16 %v1214
    %v2205 = vunpack.c.l.b16 %v1215
    %v2206 = vunpack.c.h.b16 %v1215
    %v2207 = vunpack.c.l.b16 %v1216
    %v2208 = vunpack.c.h.b16 %v1216
    %v2209 = vunpack.c.l.b16 %v1217
    %v2210 = vunpack.c.h.b16 %v1217
    %v2211 = vunpack.c.l.b16 %v1218
    %v2212 = vunpack.c.h.b16 %v1218
    %v2213 = vunpack.c.l.b16 %v1219
    %v2214 = vunpack.c.h.b16 %v1219
    %v2215 = vunpack.c.l.b16 %v1220
    %v2216 = vunpack.c.h.b16 %v1220
    %v2217 = vunpack.c.l.b16 %v1221
    %v2218 = vunpack.c.h.b16 %v1221
    %v2219 = vunpack.c.l.b16 %v1222
    %v2220 = vunpack.c.h.b16 %v1222
    %v2221 = vunpack.c.l.b16 %v1223
    %v2222 = vunpack.c.h.b16 %v1223
    %v2223 = vunpack.c.l.b16 %v1224
    %v2224 = vunpack.c.h.b16 %v1224
    %v2225 = vunpack.c.l.b16 %v1225
    %v2226 = vunpack.c.h.b16 %v1225
    %v2227 = vunpack.c.l.b16 %v1226
    %v2228 = vunpack.c.h.b16 %v1226
    %v2229 = vunpack.c.l.b16 %v1227
    %v2230 = vunpack.c.h.b16 %v1227
    %v2231 = vunpack.c.l.b16 %v1228
    %v2232 = vunpack.c.h.b16 %v1228
    %v2233 = vunpack.c.l.b16 %v1229
    %v2234 = vunpack.c.h.b16 %v1229
    %v2235 = vunpack.c.l.b16 %v1230
    %v2236 = vunpack.c.h.b16 %v1230
    %v2237 = vunpack.c.l.b16 %v1231
    %v2238 = vunpack.c.h.b16 %v1231
    %v2239 = vunpack.c.l.b16 %v1232
    %v2240 = vunpack.c.h.b16 %v1232
    %v2241 = vunpack.c.l.b16 %v1233
    %v2242 = vunpack.c.h.b16 %v1233
    %v2243 = vunpack.c.l.b16 %v1234
    %v2244 = vunpack.c.h.b16 %v1234
    %v2245 = vunpack.c.l.b16 %v1235
    %v2246 = vunpack.c.h.b16 %v1235
    %v2247 = vunpack.c.l.b16 %v1236
    %v2248 = vunpack.c.h.b16 %v1236
    %v2249 = vunpack.c.l.b16 %v1237
    %v2250 = vunpack.c.h.b16 %v1237
    %v2251 = vunpack.c.l.b16 %v1238
    %v2252 = vunpack.c.h.b16 %v1238
    %v2253 = vunpack.c.l.b16 %v1239
    %v2254 = vunpack.c.h.b16 %v1239
    %v2255 = vunpack.c.l.b16 %v1240
    %v2256 = vunpack.c.h.b16 %v1240
    %v2257 = vunpack.c.l.b16 %v1241
    %v2258 = vunpack.c.h.b16 %v1241
    %v2259 = vunpack.c.l.b16 %v1242
    %v2260 = vunpack.c.h.b16 %v1242
    %v2261 = vunpack.c.l.b16 %v1243
    %v2262 = vunpack.c.h.b16 %v1243
    %v2263 = vunpack.c.l.b16 %v1244
    %v2264 = vunpack.c.h.b16 %v1244
    %v2265 = vunpack.c.l.b16 %v1245
    %v2266 = vunpack.c.h.b16 %v1245
    %v2267 = vunpack.c.l.b16 %v1246
    %v2268 = vunpack.c.h.b16 %v1246
    %v2269 = vunpack.c.l.b16 %v1247
    %v2270 = vunpack.c.h.b16 %v1247
    %v2271 = vunpack.c.l.b16 %v1248
    %v2272 = vunpack.c.h.b16 %v1248
    %v2273 = vunpack.c.l.b16 %v1249
    %v2274 = vunpack.c.h.b16 %v1249
    %v2275 = vunpack.c.l.b16 %v1250
    %v2276 = vunpack.c.h.b16 %v1250
    %v2277 = vunpack.c.l.b16 %v1251
    %v2278 = vunpack.c.h.b16 %v1251
    %v2279 = vunpack.c.l.b16 %v1252
    %v2280 = vunpack.c.h.b16 %v1252
    %v2281 = vunpack.c.l.b16 %v1253
    %v2282 = vunpack.c.h.b16 %v1253
    %v2283 = vunpack.c.l.b16 %v1254
    %v2284 = vunpack.c.h.b16 %v1254
    %v2285 = vunpack.c.l.b16 %v1255
    %v2286 = vunpack.c.h.b16 %v1255
    %v2287 = vunpack.c.l.b16 %v1256
    %v2288 = vunpack.c.h.b16 %v1256
    %v2289 = vunpack.c.l.b16 %v1257
    %v2290 = vunpack.c.h.b16 %v1257
    %v2291 = vunpack.c.l.b16 %v1258
    %v2292 = vunpack.c.h.b16 %v1258
    %v2293 = vunpack.c.l.b16 %v1259
    %v2294 = vunpack.c.h.b16 %v1259
    %v2295 = vunpack.c.l.b16 %v1260
    %v2296 = vunpack.c.h.b16 %v1260
    %v2297 = vunpack.c.l.b16 %v1261
    %v2298 = vunpack.c.h.b16 %v1261
    %v2299 = vunpack.c.l.b16 %v1262
    %v2300 = vunpack.c.h.b16 %v1262
    %v2301 = vunpack.c.l.b16 %v1263
    %v2302 = vunpack.c.h.b16 %v1263
    %v2303 = vunpack.c.l.b16 %v1264
    %v2304 = vunpack.c.h.b16 %v1264
    %v2305 = vunpack.c.l.b16 %v1265
    %v2306 = vunpack.c.h.b16 %v1265
    %v2307 = vunpack.c.l.b16 %v1266
    %v2308 = vunpack.c.h.b16 %v1266
    %v2309 = vunpack.c.l.b16 %v1267
    %v2310 = vunpack.c.h.b16 %v1267
    %v2311 = vunpack.c.l.b16 %v1268
    %v2312 = vunpack.c.h.b16 %v1268
    %v2313 = vunpack.c.l.b16 %v1269
    %v2314 = vunpack.c.h.b16 %v1269
    %v2315 = vunpack.c.l.b16 %v1270
    %v2316 = vunpack.c.h.b16 %v1270
    %v2317 = vunpack.c.l.b16 %v1271
    %v2318 = vunpack.c.h.b16 %v1271
    %v2319 = vunpack.c.l.b16 %v1272
    %v2320 = vunpack.c.h.b16 %v1272
    %v2321 = vunpack.c.l.b16 %v1273
    %v2322 = vunpack.c.h.b16 %v1273
    %v2323 = vunpack.c.l.b16 %v1274
    %v2324 = vunpack.c.h.b16 %v1274
    %v2325 = vunpack.c.l.b16 %v1275
    %v2326 = vunpack.c.h.b16 %v1275
    %v2327 = vunpack.c.l.b16 %v1276
    %v2328 = vunpack.c.h.b16 %v1276
    %v2329 = vunpack.c.l.b16 %v1277
    %v2330 = vunpack.c.h.b16 %v1277
    %v2331 = vunpack.c.l.b16 %v1278
    %v2332 = vunpack.c.h.b16 %v1278
    %v2333 = vunpack.c.l.b16 %v1279
    %v2334 = vunpack.c.h.b16 %v1279
    %v2335 = vunpack.c.l.b16 %v1280
    %v2336 = vunpack.c.h.b16 %v1280
    %v2337 = vunpack.c.l.b16 %v1281
    %v2338 = vunpack.c.h.b16 %v1281
    %v2339 = vunpack.c.l.b16 %v1282
    %v2340 = vunpack.c.h.b16 %v1282
    %v2341 = vunpack.c.l.b16 %v1283
    %v2342 = vunpack.c.h.b16 %v1283
    %v2343 = vunpack.c.l.b16 %v1284
    %v2344 = vunpack.c.h.b16 %v1284
    %v2345 = vunpack.c.l.b16 %v1285
    %v2346 = vunpack.c.h.b16 %v1285
    %v2347 = vunpack.c.l.b16 %v1286
    %v2348 = vunpack.c.h.b16 %v1286
    %v2349 = vunpack.c.l.b16 %v1287
    %v2350 = vunpack.c.h.b16 %v1287
    %v2351 = vunpack.c.l.b16 %v1288
    %v2352 = vunpack.c.h.b16 %v1288
    %v2353 = vunpack.c.l.b16 %v1289
    %v2354 = vunpack.c.h.b16 %v1289
    %v2355 = vunpack.c.l.b16 %v1290
    %v2356 = vunpack.c.h.b16 %v1290
    %v2357 = vunpack.c.l.b16 %v1291
    %v2358 = vunpack.c.h.b16 %v1291
    %v2359 = vunpack.c.l.b16 %v1292
    %v2360 = vunpack.c.h.b16 %v1292
    %v2361 = vunpack.c.l.b16 %v1293
    %v2362 = vunpack.c.h.b16 %v1293
    %v2363 = vunpack.c.l.b16 %v1294
    %v2364 = vunpack.c.h.b16 %v1294
    %v2365 = vunpack.c.l.b16 %v1295
    %v2366 = vunpack.c.h.b16 %v1295
    %v2367 = vunpack.c.l.b16 %v1296
    %v2368 = vunpack.c.h.b16 %v1296
    %v2369 = vunpack.c.l.b16 %v1297
    %v2370 = vunpack.c.h.b16 %v1297
    %v2371 = vunpack.c.l.b16 %v1298
    %v2372 = vunpack.c.h.b16 %v1298
    %v2373 = vunpack.c.l.b16 %v1299
    %v2374 = vunpack.c.h.b16 %v1299
    %v2375 = vunpack.c.l.b16 %v1300
    %v2376 = vunpack.c.h.b16 %v1300
    %v2377 = vunpack.c.l.b16 %v1301
    %v2378 = vunpack.c.h.b16 %v1301
    %v2379 = vunpack.c.l.b16 %v1302
    %v2380 = vunpack.c.h.b16 %v1302
    %v2381 = vunpack.c.l.b16 %v1303
    %v2382 = vunpack.c.h.b16 %v1303
    %v2383 = vunpack.c.l.b16 %v1304
    %v2384 = vunpack.c.h.b16 %v1304
    %v2385 = vunpack.c.l.b16 %v1305
    %v2386 = vunpack.c.h.b16 %v1305
    %v2387 = vunpack.c.l.b16 %v1306
    %v2388 = vunpack.c.h.b16 %v1306
    %v2389 = vunpack.c.l.b16 %v1307
    %v2390 = vunpack.c.h.b16 %v1307
    %v2391 = vunpack.c.l.b16 %v1308
    %v2392 = vunpack.c.h.b16 %v1308
    %v2393 = vunpack.c.l.b16 %v1309
    %v2394 = vunpack.c.h.b16 %v1309
    %v2395 = vunpack.c.l.b16 %v1310
    %v2396 = vunpack.c.h.b16 %v1310
    %v2397 = vunpack.c.l.b16 %v1311
    %v2398 = vunpack.c.h.b16 %v1311
    %v2399 = vunpack.c.l.b16 %v1312
    %v2400 = vunpack.c.h.b16 %v1312
    %v2401 = vunpack.c.l.b16 %v1313
    %v2402 = vunpack.c.h.b16 %v1313
    %v2403 = vunpack.c.l.b16 %v1314
    %v2404 = vunpack.c.h.b16 %v1314
    %v2405 = vunpack.c.l.b16 %v1315
    %v2406 = vunpack.c.h.b16 %v1315
    %v2407 = vunpack.c.l.b16 %v1316
    %v2408 = vunpack.c.h.b16 %v1316
    %v2409 = vunpack.c.l.b16 %v1317
    %v2410 = vunpack.c.h.b16 %v1317
    %v2411 = vunpack.c.l.b16 %v1318
    %v2412 = vunpack.c.h.b16 %v1318
    %v2413 = vunpack.c.l.b16 %v1319
    %v2414 = vunpack.c.h.b16 %v1319
    %v2415 = vunpack.c.l.b16 %v1320
    %v2416 = vunpack.c.h.b16 %v1320
    %v2417 = vunpack.c.l.b16 %v1321
    %v2418 = vunpack.c.h.b16 %v1321
    %v2419 = vunpack.c.l.b16 %v1322
    %v2420 = vunpack.c.h.b16 %v1322
    %v2421 = vunpack.c.l.b16 %v1323
    %v2422 = vunpack.c.h.b16 %v1323
    %v2423 = vunpack.c.l.b16 %v1324
    %v2424 = vunpack.c.h.b16 %v1324
    %v2425 = vunpack.c.l.b16 %v1325
    %v2426 = vunpack.c.h.b16 %v1325
    %v2427 = vunpack.c.l.b16 %v1326
    %v2428 = vunpack.c.h.b16 %v1326
    %v2429 = vunpack.c.l.b16 %v1327
    %v2430 = vunpack.c.h.b16 %v1327
    %v2431 = vunpack.c.l.b16 %v1328
    %v2432 = vunpack.c.h.b16 %v1328
    %v2433 = vunpack.c.l.b16 %v1329
    %v2434 = vunpack.c.h.b16 %v1329
    %v2435 = vunpack.c.l.b16 %v1330
    %v2436 = vunpack.c.h.b16 %v1330
    %v2437 = vunpack.c.l.b16 %v1331
    %v2438 = vunpack.c.h.b16 %v1331
    %v2439 = vunpack.c.l.b16 %v1332
    %v2440 = vunpack.c.h.b16 %v1332
    %v2441 = vunpack.c.l.b16 %v1333
    %v2442 = vunpack.c.h.b16 %v1333
    %v2443 = vunpack.c.l.b16 %v1334
    %v2444 = vunpack.c.h.b16 %v1334
    %v2445 = vunpack.c.l.b16 %v1335
    %v2446 = vunpack.c.h.b16 %v1335
    %v2447 = vunpack.c.l.b16 %v1336
    %v2448 = vunpack.c.h.b16 %v1336
    %v2449 = vunpack.c.l.b16 %v1337
    %v2450 = vunpack.c.h.b16 %v1337
    %v2451 = vunpack.c.l.b16 %v1338
    %v2452 = vunpack.c.h.b16 %v1338
    %v2453 = vunpack.c.l.b16 %v1339
    %v2454 = vunpack.c.h.b16 %v1339
    %v2455 = vunpack.c.l.b16 %v1340
    %v2456 = vunpack.c.h.b16 %v1340
    %v2457 = vunpack.c.l.b16 %v1341
    %v2458 = vunpack.c.h.b16 %v1341
    %v2459 = vunpack.c.l.b16 %v1342
    %v2460 = vunpack.c.h.b16 %v1342
    %v2461 = vunpack.c.l.b16 %v1343
    %v2462 = vunpack.c.h.b16 %v1343
    %v2463 = vunpack.c.l.b16 %v1344
    %v2464 = vunpack.c.h.b16 %v1344
    %v2465 = vunpack.c.l.b16 %v1345
    %v2466 = vunpack.c.h.b16 %v1345
    %v2467 = vunpack.c.l.b16 %v1346
    %v2468 = vunpack.c.h.b16 %v1346
    %v2469 = vunpack.c.l.b16 %v1347
    %v2470 = vunpack.c.h.b16 %v1347
    %v2471 = vunpack.c.l.b16 %v1348
    %v2472 = vunpack.c.h.b16 %v1348
    %v2473 = vunpack.c.l.b16 %v1349
    %v2474 = vunpack.c.h.b16 %v1349
    %v2475 = vunpack.c.l.b16 %v1350
    %v2476 = vunpack.c.h.b16 %v1350
    %v2477 = vunpack.c.l.b16 %v1351
    %v2478 = vunpack.c.h.b16 %v1351
    %v2479 = vunpack.c.l.b16 %v1352
    %v2480 = vunpack.c.h.b16 %v1352
    %v2481 = vunpack.c.l.b16 %v1353
    %v2482 = vunpack.c.h.b16 %v1353
    %v2483 = vunpack.c.l.b16 %v1354
    %v2484 = vunpack.c.h.b16 %v1354
    %v2485 = vunpack.c.l.b16 %v1355
    %v2486 = vunpack.c.h.b16 %v1355
    %v2487 = vunpack.c.l.b16 %v1356
    %v2488 = vunpack.c.h.b16 %v1356
    %v2489 = vunpack.c.l.b16 %v1357
    %v2490 = vunpack.c.h.b16 %v1357
    %v2491 = vunpack.c.l.b16 %v1358
    %v2492 = vunpack.c.h.b16 %v1358
    %v2493 = vunpack.c.l.b16 %v1359
    %v2494 = vunpack.c.h.b16 %v1359
    %v2495 = vunpack.c.l.b16 %v1360
    %v2496 = vunpack.c.h.b16 %v1360
    %v2497 = vunpack.c.l.b16 %v1361
    %v2498 = vunpack.c.h.b16 %v1361
    %v2499 = vunpack.c.l.b16 %v1362
    %v2500 = vunpack.c.h.b16 %v1362
    %v2501 = vunpack.c.l.b16 %v1363
    %v2502 = vunpack.c.h.b16 %v1363
    %v2503 = vunpack.c.l.b16 %v1364
    %v2504 = vunpack.c.h.b16 %v1364
    %v2505 = vunpack.c.l.b16 %v1365
    %v2506 = vunpack.c.h.b16 %v1365
    %v2507 = vunpack.c.l.b16 %v1366
    %v2508 = vunpack.c.h.b16 %v1366
    %v2509 = vunpack.c.l.b16 %v1367
    %v2510 = vunpack.c.h.b16 %v1367
    %v2511 = vunpack.c.l.b16 %v1368
    %v2512 = vunpack.c.h.b16 %v1368
    %v2513 = vunpack.c.l.b16 %v1369
    %v2514 = vunpack.c.h.b16 %v1369
    %v2515 = vunpack.c.l.b16 %v1370
    %v2516 = vunpack.c.h.b16 %v1370
    %v2517 = vunpack.c.l.b16 %v1371
    %v2518 = vunpack.c.h.b16 %v1371
    %v2519 = vunpack.c.l.b16 %v1372
    %v2520 = vunpack.c.h.b16 %v1372
    %v2521 = vunpack.c.l.b16 %v1373
    %v2522 = vunpack.c.h.b16 %v1373
    %v2523 = vunpack.c.l.b16 %v1374
    %v2524 = vunpack.c.h.b16 %v1374
    %v2525 = vunpack.c.l.b16 %v1375
    %v2526 = vunpack.c.h.b16 %v1375
    %v2527 = vunpack.c.l.b16 %v1376
    %v2528 = vunpack.c.h.b16 %v1376
    %v2529 = vunpack.c.l.b16 %v1377
    %v2530 = vunpack.c.h.b16 %v1377
    %v2531 = vunpack.c.l.b16 %v1378
    %v2532 = vunpack.c.h.b16 %v1378
    %v2533 = vunpack.c.l.b16 %v1379
    %v2534 = vunpack.c.h.b16 %v1379
    %v2535 = vunpack.c.l.b16 %v1380
    %v2536 = vunpack.c.h.b16 %v1380
    %v2537 = vunpack.c.l.b16 %v1381
    %v2538 = vunpack.c.h.b16 %v1381
    %v2539 = vunpack.c.l.b16 %v1382
    %v2540 = vunpack.c.h.b16 %v1382
    %v2541 = vunpack.c.l.b16 %v1383
    %v2542 = vunpack.c.h.b16 %v1383
    %v2543 = vunpack.c.l.b16 %v1384
    %v2544 = vunpack.c.h.b16 %v1384
    %v2545 = vunpack.c.l.b16 %v1385
    %v2546 = vunpack.c.h.b16 %v1385
    %v2547 = vunpack.c.l.b16 %v1386
    %v2548 = vunpack.c.h.b16 %v1386
    %v2549 = vunpack.c.l.b16 %v1387
    %v2550 = vunpack.c.h.b16 %v1387
    %v2551 = vunpack.c.l.b16 %v1388
    %v2552 = vunpack.c.h.b16 %v1388
    %v2553 = vunpack.c.l.b16 %v1389
    %v2554 = vunpack.c.h.b16 %v1389
    %v2555 = vunpack.c.l.b16 %v1390
    %v2556 = vunpack.c.h.b16 %v1390
    %v2557 = vunpack.c.l.b16 %v1391
    %v2558 = vunpack.c.h.b16 %v1391
    %v2559 = vunpack.c.l.b16 %v1392
    %v2560 = vunpack.c.h.b16 %v1392
    %v2561 = vunpack.c.l.b16 %v1393
    %v2562 = vunpack.c.h.b16 %v1393
    %v2563 = vunpack.c.l.b16 %v1394
    %v2564 = vunpack.c.h.b16 %v1394
    %v2565 = vunpack.c.l.b16 %v1395
    %v2566 = vunpack.c.h.b16 %v1395
    %v2567 = vunpack.c.l.b16 %v1396
    %v2568 = vunpack.c.h.b16 %v1396
    %v2569 = vunpack.c.l.b16 %v1397
    %v2570 = vunpack.c.h.b16 %v1397
    %v2571 = vunpack.c.l.b16 %v1398
    %v2572 = vunpack.c.h.b16 %v1398
    %v2573 = vunpack.c.l.b16 %v1399
    %v2574 = vunpack.c.h.b16 %v1399
    %v2575 = vunpack.c.l.b16 %v1400
    %v2576 = vunpack.c.h.b16 %v1400
    %v2577 = vunpack.c.l.b16 %v1401
    %v2578 = vunpack.c.h.b16 %v1401
    %v2579 = vunpack.c.l.b16 %v1402
    %v2580 = vunpack.c.h.b16 %v1402
    %v2581 = vunpack.c.l.b16 %v1403
    %v2582 = vunpack.c.h.b16 %v1403
    %v2583 = vunpack.c.l.b16 %v1404
    %v2584 = vunpack.c.h.b16 %v1404
    %v2585 = vunpack.c.l.b16 %v1405
    %v2586 = vunpack.c.h.b16 %v1405
    %v2587 = vunpack.c.l.b16 %v1406
    %v2588 = vunpack.c.h.b16 %v1406
    %v2589 = vunpack.c.l.b16 %v1407
    %v2590 = vunpack.c.h.b16 %v1407
    %v2591 = vunpack.c.l.b16 %v1408
    %v2592 = vunpack.c.h.b16 %v1408
    %v2593 = vunpack.c.l.b16 %v1409
    %v2594 = vunpack.c.h.b16 %v1409
    %v2595 = vunpack.c.l.b16 %v1410
    %v2596 = vunpack.c.h.b16 %v1410
    %v2597 = vunpack.c.l.b16 %v1411
    %v2598 = vunpack.c.h.b16 %v1411
    %v2599 = vunpack.c.l.b16 %v1412
    %v2600 = vunpack.c.h.b16 %v1412
    %v2601 = vunpack.c.l.b16 %v1413
    %v2602 = vunpack.c.h.b16 %v1413
    %v2603 = vunpack.c.l.b16 %v1414
    %v2604 = vunpack.c.h.b16 %v1414
    %v2605 = vunpack.c.l.b16 %v1415
    %v2606 = vunpack.c.h.b16 %v1415
    %v2607 = vunpack.c.l.b16 %v1416
    %v2608 = vunpack.c.h.b16 %v1416
    %v2609 = vunpack.c.l.b16 %v1417
    %v2610 = vunpack.c.h.b16 %v1417
    %v2611 = vunpack.c.l.b16 %v1418
    %v2612 = vunpack.c.h.b16 %v1418
    %v2613 = vunpack.c.l.b16 %v1419
    %v2614 = vunpack.c.h.b16 %v1419
    %v2615 = vunpack.c.l.b16 %v1420
    %v2616 = vunpack.c.h.b16 %v1420
    %v2617 = vunpack.c.l.b16 %v1421
    %v2618 = vunpack.c.h.b16 %v1421
    %v2619 = vunpack.c.l.b16 %v1422
    %v2620 = vunpack.c.h.b16 %v1422
    %v2621 = vunpack.c.l.b16 %v1423
    %v2622 = vunpack.c.h.b16 %v1423
    %v2623 = vunpack.c.l.b16 %v1424
    %v2624 = vunpack.c.h.b16 %v1424
    %v2625 = vpack.c.b16 %v1857, %v1825
    %v2626 = vpack.c.b16 %v1858, %v1826
    %v2627 = vpack.c.b16 %v1859, %v1827
    %v2628 = vpack.c.b16 %v1860, %v1828
    %v2629 = vpack.c.b16 %v1861, %v1829
    %v2630 = vpack.c.b16 %v1862, %v1830
    %v2631 = vpack.c.b16 %v1863, %v1831
    %v2632 = vpack.c.b16 %v1864, %v1832
    %v2633 = vpack.c.b16 %v1865, %v1833
    %v2634 = vpack.c.b16 %v1866, %v1834
    %v2635 = vpack.c.b16 %v1867, %v1835
    %v2636 = vpack.c.b16 %v1868, %v1836
    %v2637 = vpack.c.b16 %v1869, %v1837
    %v2638 = vpack.c.b16 %v1870, %v1838
    %v2639 = vpack.c.b16 %v1871, %v1839
    %v2640 = vpack.c.b16 %v1872, %v1840
    %v2641 = vpack.c.b16 %v1873, %v1841
    %v2642 = vpack.c.b16 %v1874, %v1842
    %v2643 = vpack.c.b16 %v1875, %v1843
    %v2644 = vpack.c.b16 %v1876, %v1844
    %v2645 = vpack.c.b16 %v1877, %v1845
    %v2646 = vpack.c.b16 %v1878, %v1846
    %v2647 = vpack.c.b16 %v1879, %v1847
    %v2648 = vpack.c.b16 %v1880, %v1848
    %v2649 = vpack.c.b16 %v1881, %v1849
    %v2650 = vpack.c.b16 %v1882, %v1850
    %v2651 = vpack.c.b16 %v1883, %v1851
    %v2652 = vpack.c.b16 %v1884, %v1852
    %v2653 = vpack.c.b16 %v1885, %v1853
    %v2654 = vpack.c.b16 %v1886, %v1854
    %v2655 = vpack.c.b16 %v1887, %v1855
    %v2656 = vpack.c.b16 %v1888, %v1856
    %v2657 = vpack.c.b16 %v1921, %v1889
    %v2658 = vpack.c.b16 %v1922, %v1890
    %v2659 = vpack.c.b16 %v1923, %v1891
    %v2660 = vpack.c.b16 %v1924, %v1892
    %v2661 = vpack.c.b16 %v1925, %v1893
    %v2662 = vpack.c.b16 %v1926, %v1894
    %v2663 = vpack.c.b16 %v1927, %v1895
    %v2664 = vpack.c.b16 %v1928, %v1896
    %v2665 = vpack.c.b16 %v1929, %v1897
    %v2666 = vpack.c.b16 %v1930, %v1898
    %v2667 = vpack.c.b16 %v1931, %v1899
    %v2668 = vpack.c.b16 %v1932, %v1900
    %v2669 = vpack.c.b16 %v1933, %v1901
    %v2670 = vpack.c.b16 %v1934, %v1902
    %v2671 = vpack.c.b16 %v1935, %v1903
    %v2672 = vpack.c.b16 %v1936, %v1904
    %v2673 = vpack.c.b16 %v1937, %v1905
    %v2674 = vpack.c.b16 %v1938, %v1906
    %v2675 = vpack.c.b16 %v1939, %v1907
    %v2676 = vpack.c.b16 %v1940, %v1908
    %v2677 = vpack.c.b16 %v1941, %v1909
    %v2678 = vpack.c.b16 %v1942, %v1910
    %v2679 = vpack.c.b16 %v1943, %v1911
    %v2680 = vpack.c.b16 %v1944, %v1912
    %v2681 = vpack.c.b16 %v1945, %v1913
    %v2682 = vpack.c.b16 %v1946, %v1914
    %v2683 = vpack.c.b16 %v1947, %v1915
    %v2684 = vpack.c.b16 %v1948, %v1916
    %v2685 = vpack.c.b16 %v1949, %v1917
    %v2686 = vpack.c.b16 %v1950, %v1918
    %v2687 = vpack.c.b16 %v1951, %v1919
    %v2688 = vpack.c.b16 %v1952, %v1920
    %v2689 = vpack.c.b16 %v1985, %v1953
    %v2690 = vpack.c.b16 %v1986, %v1954
    %v2691 = vpack.c.b16 %v1987, %v1955
    %v2692 = vpack.c.b16 %v1988, %v1956
    %v2693 = vpack.c.b16 %v1989, %v1957
    %v2694 = vpack.c.b16 %v1990, %v1958
    %v2695 = vpack.c.b16 %v1991, %v1959
    %v2696 = vpack.c.b16 %v1992, %v1960
    %v2697 = vpack.c.b16 %v1993, %v1961
    %v2698 = vpack.c.b16 %v1994, %v1962
    %v2699 = vpack.c.b16 %v1995, %v1963
    %v2700 = vpack.c.b16 %v1996, %v1964
    %v2701 = vpack.c.b16 %v1997, %v1965
    %v2702 = vpack.c.b16 %v1998, %v1966
    %v2703 = vpack.c.b16 %v1999, %v1967
    %v2704 = vpack.c.b16 %v2000, %v1968
    %v2705 = vpack.c.b16 %v2001, %v1969
    %v2706 = vpack.c.b16 %v2002, %v1970
    %v2707 = vpack.c.b16 %v2003, %v1971
    %v2708 = vpack.c.b16 %v2004, %v1972
    %v2709 = vpack.c.b16 %v2005, %v1973
    %v2710 = vpack.c.b16 %v2006, %v1974
    %v2711 = vpack.c.b16 %v2007, %v1975
    %v2712 = vpack.c.b16 %v2008, %v1976
    %v2713 = vpack.c.b16 %v2009, %v1977
    %v2714 = vpack.c.b16 %v2010, %v1978
    %v2715 = vpack.c.b16 %v2011, %v1979
    %v2716 = vpack.c.b16 %v2012, %v1980
    %v2717 = vpack.c.b16 %v2013, %v1981
    %v2718 = vpack.c.b16 %v2014, %v1982
    %v2719 = vpack.c.b16 %v2015, %v1983
    %v2720 = vpack.c.b16 %v2016, %v1984
    %v2721 = vpack.c.b16 %v2049, %v2017
    %v2722 = vpack.c.b16 %v2050, %v2018
    %v2723 = vpack.c.b16 %v2051, %v2019
    %v2724 = vpack.c.b16 %v2052, %v2020
    %v2725 = vpack.c.b16 %v2053, %v2021
    %v2726 = vpack.c.b16 %v2054, %v2022
    %v2727 = vpack.c.b16 %v2055, %v2023
    %v2728 = vpack.c.b16 %v2056, %v2024
    %v2729 = vpack.c.b16 %v2057, %v2025
    %v2730 = vpack.c.b16 %v2058, %v2026
    %v2731 = vpack.c.b16 %v2059, %v2027
    %v2732 = vpack.c.b16 %v2060, %v2028
    %v2733 = vpack.c.b16 %v2061, %v2029
    %v2734 = vpack.c.b16 %v2062, %v2030
    %v2735 = vpack.c.b16 %v2063, %v2031
    %v2736 = vpack.c.b16 %v2064, %v2032
    %v2737 = vpack.c.b16 %v2065, %v2033
    %v2738 = vpack.c.b16 %v2066, %v2034
    %v2739 = vpack.c.b16 %v2067, %v2035
    %v2740 = vpack.c.b16 %v2068, %v2036
    %v2741 = vpack.c.b16 %v2069, %v2037
    %v2742 = vpack.c.b16 %v2070, %v2038
    %v2743 = vpack.c.b16 %v2071, %v2039
    %v2744 = vpack.c.b16 %v2072, %v2040
    %v2745 = vpack.c.b16 %v2073, %v2041
    %v2746 = vpack.c.b16 %v2074, %v2042
    %v2747 = vpack.c.b16 %v2075, %v2043
    %v2748 = vpack.c.b16 %v2076, %v2044
    %v2749 = vpack.c.b16 %v2077, %v2045
    %v2750 = vpack.c.b16 %v2078, %v2046
    %v2751 = vpack.c.b16 %v2079, %v2047
    %v2752 = vpack.c.b16 %v2080, %v2048
    %v2753 = vpack.c.b16 %v2113, %v2081
    %v2754 = vpack.c.b16 %v2114, %v2082
    %v2755 = vpack.c.b16 %v2115, %v2083
    %v2756 = vpack.c.b16 %v2116, %v2084
    %v2757 = vpack.c.b16 %v2117, %v2085
    %v2758 = vpack.c.b16 %v2118, %v2086
    %v2759 = vpack.c.b16 %v2119, %v2087
    %v2760 = vpack.c.b16 %v2120, %v2088
    %v2761 = vpack.c.b16 %v2121, %v2089
    %v2762 = vpack.c.b16 %v2122, %v2090
    %v2763 = vpack.c.b16 %v2123, %v2091
    %v2764 = vpack.c.b16 %v2124, %v2092
    %v2765 = vpack.c.b16 %v2125, %v2093
    %v2766 = vpack.c.b16 %v2126, %v2094
    %v2767 = vpack.c.b16 %v2127, %v2095
    %v2768 = vpack.c.b16 %v2128, %v2096
    %v2769 = vpack.c.b16 %v2129, %v2097
    %v2770 = vpack.c.b16 %v2130, %v2098
    %v2771 = vpack.c.b16 %v2131, %v2099
    %v2772 = vpack.c.b16 %v2132, %v2100
    %v2773 = vpack.c.b16 %v2133, %v2101
    %v2774 = vpack.c.b16 %v2134, %v2102
    %v2775 = vpack.c.b16 %v2135, %v2103
    %v2776 = vpack.c.b16 %v2136, %v2104
    %v2777 = vpack.c.b16 %v2137, %v2105
    %v2778 = vpack.c.b16 %v2138, %v2106
    %v2779 = vpack.c.b16 %v2139, %v2107
    %v2780 = vpack.c.b16 %v2140, %v2108
    %v2781 = vpack.c.b16 %v2141, %v2109
    %v2782 = vpack.c.b16 %v2142, %v2110
    %v2783 = vpack.c.b16 %v2143, %v2111
    %v2784 = vpack.c.b16 %v2144, %v2112
    %v2785 = vpack.c.b16 %v2177, %v2145
    %v2786 = vpack.c.b16 %v2178, %v2146
    %v2787 = vpack.c.b16 %v2179, %v2147
    %v2788 = vpack.c.b16 %v2180, %v2148
    %v2789 = vpack.c.b16 %v2181, %v2149
    %v2790 = vpack.c.b16 %v2182, %v2150
    %v2791 = vpack.c.b16 %v2183, %v2151
    %v2792 = vpack.c.b16 %v2184, %v2152
    %v2793 = vpack.c.b16 %v2185, %v2153
    %v2794 = vpack.c.b16 %v2186, %v2154
    %v2795 = vpack.c.b16 %v2187, %v2155
    %v2796 = vpack.c.b16 %v2188, %v2156
    %v2797 = vpack.c.b16 %v2189, %v2157
    %v2798 = vpack.c.b16 %v2190, %v2158
    %v2799 = vpack.c.b16 %v2191, %v2159
    %v2800 = vpack.c.b16 %v2192, %v2160
    %v2801 = vpack.c.b16 %v2193, %v2161
    %v2802 = vpack.c.b16 %v2194, %v2162
    %v2803 = vpack.c.b16 %v2195, %v2163
    %v2804 = vpack.c.b16 %v2196, %v2164
    %v2805 = vpack.c.b16 %v2197, %v2165
    %v2806 = vpack.c.b16 %v2198, %v2166
    %v2807 = vpack.c.b16 %v2199, %v2167
    %v2808 = vpack.c.b16 %v2200, %v2168
    %v2809 = vpack.c.b16 %v2201, %v2169
    %v2810 = vpack.c.b16 %v2202, %v2170
    %v2811 = vpack.c.b16 %v2203, %v2171
    %v2812 = vpack.c.b16 %v2204, %v2172
    %v2813 = vpack.c.b16 %v2205, %v2173
    %v2814 = vpack.c.b16 %v2206, %v2174
    %v2815 = vpack.c.b16 %v2207, %v2175
    %v2816 = vpack.c.b16 %v2208, %v2176
    %v2817 = vpack.c.b16 %v2241, %v2209
    %v2818 = vpack.c.b16 %v2242, %v2210
    %v2819 = vpack.c.b16 %v2243, %v2211
    %v2820 = vpack.c.b16 %v2244, %v2212
    %v2821 = vpack.c.b16 %v2245, %v2213
    %v2822 = vpack.c.b16 %v2246, %v2214
    %v2823 = vpack.c.b16 %v2247, %v2215
    %v2824 = vpack.c.b16 %v2248, %v2216
    %v2825 = vpack.c.b16 %v2249, %v2217
    %v2826 = vpack.c.b16 %v2250, %v2218
    %v2827 = vpack.c.b16 %v2251, %v2219
    %v2828 = vpack.c.b16 %v2252, %v2220
    %v2829 = vpack.c.b16 %v2253, %v2221
    %v2830 = vpack.c.b16 %v2254, %v2222
    %v2831 = vpack.c.b16 %v2255, %v2223
    %v2832 = vpack.c.b16 %v2256, %v2224
    %v2833 = vpack.c.b16 %v2257, %v2225
    %v2834 = vpack.c.b16 %v2258, %v2226
    %v2835 = vpack.c.b16 %v2259, %v2227
    %v2836 = vpack.c.b16 %v2260, %v2228
    %v2837 = vpack.c.b16 %v2261, %v2229
    %v2838 = vpack.c.b16 %v2262, %v2230
    %v2839 = vpack.c.b16 %v2263, %v2231
    %v2840 = vpack.c.b16 %v2264, %v2232
    %v2841 = vpack.c.b16 %v2265, %v2233
    %v2842 = vpack.c.b16 %v2266, %v2234
    %v2843 = vpack.c.b16 %v2267, %v2235
    %v2844 = vpack.c.b16 %v2268, %v2236
    %v2845 = vpack.c.b16 %v2269, %v2237
    %v2846 = vpack.c.b16 %v2270, %v2238
    %v2847 = vpack.c.b16 %v2271, %v2239
    %v2848 = vpack.c.b16 %v2272, %v2240
    %v2849 = vpack.c.b16 %v2305, %v2273
    %v2850 = vpack.c.b16 %v2306, %v2274
    %v2851 = vpack.c.b16 %v2307, %v2275
    %v2852 = vpack.c.b16 %v2308, %v2276
    %v2853 = vpack.c.b16 %v2309, %v2277
    %v2854 = vpack.c.b16 %v2310, %v2278
    %v2855 = vpack.c.b16 %v2311, %v2279
    %v2856 = vpack.c.b16 %v2312, %v2280
    %v2857 = vpack.c.b16 %v2313, %v2281
    %v2858 = vpack.c.b16 %v2314, %v2282
    %v2859 = vpack.c.b16 %v2315, %v2283
    %v2860 = vpack.c.b16 %v2316, %v2284
    %v2861 = vpack.c.b16 %v2317, %v2285
    %v2862 = vpack.c.b16 %v2318, %v2286
    %v2863 = vpack.c.b16 %v2319, %v2287
    %v2864 = vpack.c.b16 %v2320, %v2288
    %v2865 = vpack.c.b16 %v2321, %v2289
    %v2866 = vpack.c.b16 %v2322, %v2290
    %v2867 = vpack.c.b16 %v2323, %v2291
    %v2868 = vpack.c.b16 %v2324, %v2292
    %v2869 = vpack.c.b16 %v2325, %v2293
    %v2870 = vpack.c.b16 %v2326, %v2294
    %v2871 = vpack.c.b16 %v2327, %v2295
    %v2872 = vpack.c.b16 %v2328, %v2296
    %v2873 = vpack.c.b16 %v2329, %v2297
    %v2874 = vpack.c.b16 %v2330, %v2298
    %v2875 = vpack.c.b16 %v2331, %v2299
    %v2876 = vpack.c.b16 %v2332, %v2300
    %v2877 = vpack.c.b16 %v2333, %v2301
    %v2878 = vpack.c.b16 %v2334, %v2302
    %v2879 = vpack.c.b16 %v2335, %v2303
    %v2880 = vpack.c.b16 %v2336, %v2304
    %v2881 = vpack.c.b16 %v2369, %v2337
    %v2882 = vpack.c.b16 %v2370, %v2338
    %v2883 = vpack.c.b16 %v2371, %v2339
    %v2884 = vpack.c.b16 %v2372, %v2340
    %v2885 = vpack.c.b16 %v2373, %v2341
    %v2886 = vpack.c.b16 %v2374, %v2342
    %v2887 = vpack.c.b16 %v2375, %v2343
    %v2888 = vpack.c.b16 %v2376, %v2344
    %v2889 = vpack.c.b16 %v2377, %v2345
    %v2890 = vpack.c.b16 %v2378, %v2346
    %v2891 = vpack.c.b16 %v2379, %v2347
    %v2892 = vpack.c.b16 %v2380, %v2348
    %v2893 = vpack.c.b16 %v2381, %v2349
    %v2894 = vpack.c.b16 %v2382, %v2350
    %v2895 = vpack.c.b16 %v2383, %v2351
    %v2896 = vpack.c.b16 %v2384, %v2352
    %v2897 = vpack.c.b16 %v2385, %v2353
    %v2898 = vpack.c.b16 %v2386, %v2354
    %v2899 = vpack.c.b16 %v2387, %v2355
    %v2900 = vpack.c.b16 %v2388, %v2356
    %v2901 = vpack.c.b16 %v2389, %v2357
    %v2902 = vpack.c.b16 %v2390, %v2358
    %v2903 = vpack.c.b16 %v2391, %v2359
    %v2904 = vpack.c.b16 %v2392, %v2360
    %v2905 = vpack.c.b16 %v2393, %v2361
    %v2906 = vpack.c.b16 %v2394, %v2362
    %v2907 = vpack.c.b16 %v2395, %v2363
    %v2908 = vpack.c.b16 %v2396, %v2364
    %v2909 = vpack.c.b16 %v2397, %v2365
    %v2910 = vpack.c.b16 %v2398, %v2366
    %v2911 = vpack.c.b16 %v2399, %v2367
    %v2912 = vpack.c.b16 %v2400, %v2368
    %v2913 = vpack.c.b16 %v2433, %v2401
    %v2914 = vpack.c.b16 %v2434, %v2402
    %v2915 = vpack.c.b16 %v2435, %v2403
    %v2916 = vpack.c.b16 %v2436, %v2404
    %v2917 = vpack.c.b16 %v2437, %v2405
    %v2918 = vpack.c.b16 %v2438, %v2406
    %v2919 = vpack.c.b16 %v2439, %v2407
    %v2920 = vpack.c.b16 %v2440, %v2408
    %v2921 = vpack.c.b16 %v2441, %v2409
    %v2922 = vpack.c.b16 %v2442, %v2410
    %v2923 = vpack.c.b16 %v2443, %v2411
    %v2924 = vpack.c.b16 %v2444, %v2412
    %v2925 = vpack.c.b16 %v2445, %v2413
    %v2926 = vpack.c.b16 %v2446, %v2414
    %v2927 = vpack.c.b16 %v2447, %v2415
    %v2928 = vpack.c.b16 %v2448, %v2416
    %v2929 = vpack.c.b16 %v2449, %v2417
    %v2930 = vpack.c.b16 %v2450, %v2418
    %v2931 = vpack.c.b16 %v2451, %v2419
    %v2932 = vpack.c.b16 %v2452, %v2420
    %v2933 = vpack.c.b16 %v2453, %v2421
    %v2934 = vpack.c.b16 %v2454, %v2422
    %v2935 = vpack.c.b16 %v2455, %v2423
    %v2936 = vpack.c.b16 %v2456, %v2424
    %v2937 = vpack.c.b16 %v2457, %v2425
    %v2938 = vpack.c.b16 %v2458, %v2426
    %v2939 = vpack.c.b16 %v2459, %v2427
    %v2940 = vpack.c.b16 %v2460, %v2428
    %v2941 = vpack.c.b16 %v2461, %v2429
    %v2942 = vpack.c.b16 %v2462, %v2430
    %v2943 = vpack.c.b16 %v2463, %v2431
    %v2944 = vpack.c.b16 %v2464, %v2432
    %v2945 = vpack.c.b16 %v2497, %v2465
    %v2946 = vpack.c.b16 %v2498, %v2466
    %v2947 = vpack.c.b16 %v2499, %v2467
    %v2948 = vpack.c.b16 %v2500, %v2468
    %v2949 = vpack.c.b16 %v2501, %v2469
    %v2950 = vpack.c.b16 %v2502, %v2470
    %v2951 = vpack.c.b16 %v2503, %v2471
    %v2952 = vpack.c.b16 %v2504, %v2472
    %v2953 = vpack.c.b16 %v2505, %v2473
    %v2954 = vpack.c.b16 %v2506, %v2474
    %v2955 = vpack.c.b16 %v2507, %v2475
    %v2956 = vpack.c.b16 %v2508, %v2476
    %v2957 = vpack.c.b16 %v2509, %v2477
    %v2958 = vpack.c.b16 %v2510, %v2478
    %v2959 = vpack.c.b16 %v2511, %v2479
    %v2960 = vpack.c.b16 %v2512, %v2480
    %v2961 = vpack.c.b16 %v2513, %v2481
    %v2962 = vpack.c.b16 %v2514, %v2482
    %v2963 = vpack.c.b16 %v2515, %v2483
    %v2964 = vpack.c.b16 %v2516, %v2484
    %v2965 = vpack.c.b16 %v2517, %v2485
    %v2966 = vpack.c.b16 %v2518, %v2486
    %v2967 = vpack.c.b16 %v2519, %v2487
    %v2968 = vpack.c.b16 %v2520, %v2488
    %v2969 = vpack.c.b16 %v2521, %v2489
    %v2970 = vpack.c.b16 %v2522, %v2490
    %v2971 = vpack.c.b16 %v2523, %v2491
    %v2972 = vpack.c.b16 %v2524, %v2492
    %v2973 = vpack.c.b16 %v2525, %v2493
    %v2974 = vpack.c.b16 %v2526, %v2494
    %v2975 = vpack.c.b16 %v2527, %v2495
    %v2976 = vpack.c.b16 %v2528, %v2496
    %v2977 = vpack.c.b16 %v2561, %v2529
    %v2978 = vpack.c.b16 %v2562, %v2530
    %v2979 = vpack.c.b16 %v2563, %v2531
    %v2980 = vpack.c.b16 %v2564, %v2532
    %v2981 = vpack.c.b16 %v2565, %v2533
    %v2982 = vpack.c.b16 %v2566, %v2534
    %v2983 = vpack.c.b16 %v2567, %v2535
    %v2984 = vpack.c.b16 %v2568, %v2536
    %v2985 = vpack.c.b16 %v2569, %v2537
    %v2986 = vpack.c.b16 %v2570, %v2538
    %v2987 = vpack.c.b16 %v2571, %v2539
    %v2988 = vpack.c.b16 %v2572, %v2540
    %v2989 = vpack.c.b16 %v2573, %v2541
    %v2990 = vpack.c.b16 %v2574, %v2542
    %v2991 = vpack.c.b16 %v2575, %v2543
    %v2992 = vpack.c.b16 %v2576, %v2544
    %v2993 = vpack.c.b16 %v2577, %v2545
    %v2994 = vpack.c.b16 %v2578, %v2546
    %v2995 = vpack.c.b16 %v2579, %v2547
    %v2996 = vpack.c.b16 %v2580, %v2548
    %v2997 = vpack.c.b16 %v2581, %v2549
    %v2998 = vpack.c.b16 %v2582, %v2550
    %v2999 = vpack.c.b16 %v2583, %v2551
    %v3000 = vpack.c.b16 %v2584, %v2552
    %v3001 = vpack.c.b16 %v2585, %v2553
    %v3002 = vpack.c.b16 %v2586, %v2554
    %v3003 = vpack.c.b16 %v2587, %v2555
    %v3004 = vpack.c.b16 %v2588, %v2556
    %v3005 = vpack.c.b16 %v2589, %v2557
    %v3006 = vpack.c.b16 %v2590, %v2558
    %v3007 = vpack.c.b16 %v2591, %v2559
    %v3008 = vpack.c.b16 %v2592, %v2560
    %v3009 = vpack.c.b16 %v2593, %v2593
    %v3010 = vpack.c.b16 %v2594, %v2594
    %v3011 = vpack.c.b16 %v2595, %v2595
    %v3012 = vpack.c.b16 %v2596, %v2596
    %v3013 = vpack.c.b16 %v2597, %v2597
    %v3014 = vpack.c.b16 %v2598, %v2598
    %v3015 = vpack.c.b16 %v2599, %v2599
    %v3016 = vpack.c.b16 %v2600, %v2600
    %v3017 = vpack.c.b16 %v2601, %v2601
    %v3018 = vpack.c.b16 %v2602, %v2602
    %v3019 = vpack.c.b16 %v2603, %v2603
    %v3020 = vpack.c.b16 %v2604, %v2604
    %v3021 = vpack.c.b16 %v2605, %v2605
    %v3022 = vpack.c.b16 %v2606, %v2606
    %v3023 = vpack.c.b16 %v2607, %v2607
    %v3024 = vpack.c.b16 %v2608, %v2608
    %v3025 = vpack.c.b16 %v2609, %v2609
    %v3026 = vpack.c.b16 %v2610, %v2610
    %v3027 = vpack.c.b16 %v2611, %v2611
    %v3028 = vpack.c.b16 %v2612, %v2612
    %v3029 = vpack.c.b16 %v2613, %v2613
    %v3030 = vpack.c.b16 %v2614, %v2614
    %v3031 = vpack.c.b16 %v2615, %v2615
    %v3032 = vpack.c.b16 %v2616, %v2616
    %v3033 = vpack.c.b16 %v2617, %v2617
    %v3034 = vpack.c.b16 %v2618, %v2618
    %v3035 = vpack.c.b16 %v2619, %v2619
    %v3036 = vpack.c.b16 %v2620, %v2620
    %v3037 = vpack.c.b16 %v2621, %v2621
    %v3038 = vpack.c.b16 %v2622, %v2622
    %v3039 = vpack.c.b16 %v2623, %v2623
    %v3040 = vpack.c.b16 %v2624, %v2624
    %vm3425 = vcmask 556032
    %v3427 = vsel %vm3425, %v1024, 0
    %vm3429 = vcmask 1041408
    %v3431 = vsel %vm3429, %v3009, 0
    %v3434 = vsel %vm3429, %v3010, 0
    %v3437 = vsel %vm3429, %v3011, 0
    %v3440 = vsel %vm3429, %v3012, 0
    %v3443 = vsel %vm3429, %v3013, 0
    %v3446 = vsel %vm3429, %v3014, 0
    %v3449 = vsel %vm3429, %v3015, 0
    %v3452 = vsel %vm3429, %v3016, 0
    %v3455 = vsel %vm3429, %v3017, 0
    %v3458 = vsel %vm3429, %v3018, 0
    %v3461 = vsel %vm3429, %v3019, 0
    %v3464 = vsel %vm3429, %v3020, 0
    %v3467 = vsel %vm3429, %v3021, 0
    %v3470 = vsel %vm3429, %v3022, 0
    %v3473 = vsel %vm3429, %v3023, 0
    %v3476 = vsel %vm3429, %v3024, 0
    %v3479 = vsel %vm3429, %v3025, 0
    %v3482 = vsel %vm3429, %v3026, 0
    %v3485 = vsel %vm3429, %v3027, 0
    %v3488 = vsel %vm3429, %v3028, 0
    %v3491 = vsel %vm3429, %v3029, 0
    %v3494 = vsel %vm3429, %v3030, 0
    %v3497 = vsel %vm3429, %v3031, 0
    %v3500 = vsel %vm3429, %v3032, 0
    %v3503 = vsel %vm3429, %v3033, 0
    %v3506 = vsel %vm3429, %v3034, 0
    %v3509 = vsel %vm3429, %v3035, 0
    %v3512 = vsel %vm3429, %v3036, 0
    %v3515 = vsel %vm3429, %v3037, 0
    %v3518 = vsel %vm3429, %v3038, 0
    %v3521 = vsel %vm3429, %v3039, 0
    %v3524 = vsel %vm3429, %v3040, 0
    %3526 = vmatprep.subr.bf16.mxu0 %v2626
    %3527 = vmatpush1.bf16.msra.mxu0 %v2625
    %3528 = vmatprep.subr.bf16.mxu0 %v2658
    %3529 = vmatpush1.bf16.msra.mxu0 %v2657
    %3530 = vmatprep.subr.bf16.mxu0 %v2690
    %3531 = vmatpush1.bf16.msra.mxu0 %v2689
    %3532 = vmatprep.subr.bf16.mxu0 %v2722
    %3533 = vmatpush1.bf16.msra.mxu0 %v2721
    %3534 = vmatprep.subr.bf16.mxu0 %v2754
    %3535 = vmatpush1.bf16.msra.mxu0 %v2753
    %3536 = vmatprep.subr.bf16.mxu0 %v2786
    %3537 = vmatpush1.bf16.msra.mxu0 %v2785
    %3538 = vmatprep.subr.bf16.mxu0 %v2818
    %3539 = vmatpush1.bf16.msra.mxu0 %v2817
    %3540 = vmatprep.subr.bf16.mxu0 %v2850
    %3541 = vmatpush1.bf16.msra.mxu0 %v2849
    %3542 = vmatprep.subr.bf16.mxu0 %v2882
    %3543 = vmatpush1.bf16.msra.mxu0 %v2881
    %3544 = vmatprep.subr.bf16.mxu0 %v2914
    %3545 = vmatpush1.bf16.msra.mxu0 %v2913
    %3546 = vmatprep.subr.bf16.mxu0 %v2946
    %3547 = vmatpush1.bf16.msra.mxu0 %v2945
    %3548 = vmatprep.subr.bf16.mxu0 %v2978
    %3549 = vmatpush1.bf16.msra.mxu0 %v2977
    %3550 = vmatprep.subr.bf16.mxu0 %v3434
    %3551 = vmatpush1.bf16.msra.mxu0 %v3431
    %3552 = vmatprep.subr.bf16.mxu0 0
    %3553 = vmatpush1.bf16.msra.mxu0 0
    %3554 = vmatprep.subr.bf16.mxu0 0
    %3555 = vmatpush1.bf16.msra.mxu0 0
    %3556 = vmatprep.subr.bf16.mxu0 0
    %3557 = vmatpush1.bf16.msra.mxu0 0
    %3558 = vmatprep.mubr.bf16.mxu0 %v3427
    %3559 = vmatmul.mubr.bf16.gmra.mrb[0].mxu0 %v1023
    %v3560 = vpop.f32.mrb[0].mxu0
    %v3561 = vadd.f32 0.0, %v3560
    %v3562 = vpop.f32.mrb[0].mxu0
    %v3563 = vadd.f32 0.0, %v3562
    %v3564 = vpop.f32.mrb[0].mxu0
    %v3565 = vpop.f32.mrb[0].mxu0
    %3566 = vdwg.mxu0
    %3567 = vmatprep.subr.bf16.mxu0 %v2628
    %3568 = vmatpush1.bf16.msra.mxu0 %v2627
    %3569 = vmatprep.subr.bf16.mxu0 %v2660
    %3570 = vmatpush1.bf16.msra.mxu0 %v2659
    %3571 = vmatprep.subr.bf16.mxu0 %v2692
    %3572 = vmatpush1.bf16.msra.mxu0 %v2691
    %3573 = vmatprep.subr.bf16.mxu0 %v2724
    %3574 = vmatpush1.bf16.msra.mxu0 %v2723
    %3575 = vmatprep.subr.bf16.mxu0 %v2756
    %3576 = vmatpush1.bf16.msra.mxu0 %v2755
    %3577 = vmatprep.subr.bf16.mxu0 %v2788
    %3578 = vmatpush1.bf16.msra.mxu0 %v2787
    %3579 = vmatprep.subr.bf16.mxu0 %v2820
    %3580 = vmatpush1.bf16.msra.mxu0 %v2819
    %3581 = vmatprep.subr.bf16.mxu0 %v2852
    %3582 = vmatpush1.bf16.msra.mxu0 %v2851
    %3583 = vmatprep.subr.bf16.mxu0 %v2884
    %3584 = vmatpush1.bf16.msra.mxu0 %v2883
    %3585 = vmatprep.subr.bf16.mxu0 %v2916
    %3586 = vmatpush1.bf16.msra.mxu0 %v2915
    %3587 = vmatprep.subr.bf16.mxu0 %v2948
    %3588 = vmatpush1.bf16.msra.mxu0 %v2947
    %3589 = vmatprep.subr.bf16.mxu0 %v2980
    %3590 = vmatpush1.bf16.msra.mxu0 %v2979
    %3591 = vmatprep.subr.bf16.mxu0 %v3440
    %3592 = vmatpush1.bf16.msra.mxu0 %v3437
    %3593 = vmatprep.subr.bf16.mxu0 0
    %3594 = vmatpush1.bf16.msra.mxu0 0
    %3595 = vmatprep.subr.bf16.mxu0 0
    %3596 = vmatpush1.bf16.msra.mxu0 0
    %3597 = vmatprep.subr.bf16.mxu0 0
    %3598 = vmatpush1.bf16.msra.mxu0 0
    %3599 = vmatprep.mubr.bf16.mxu0 %v3427
    %3600 = vmatmul.mubr.bf16.gmra.mrb[0].mxu0 %v1023
    %v3601 = vpop.f32.mrb[0].mxu0
    %v3602 = vadd.f32 0.0, %v3601
    %v3603 = vpop.f32.mrb[0].mxu0
    %v3604 = vadd.f32 0.0, %v3603
    %v3605 = vpop.f32.mrb[0].mxu0
    %v3606 = vpop.f32.mrb[0].mxu0
    %3607 = vdwg.mxu0
    %3608 = vmatprep.subr.bf16.mxu0 %v2630
    %3609 = vmatpush1.bf16.msra.mxu0 %v2629
    %3610 = vmatprep.subr.bf16.mxu0 %v2662
    %3611 = vmatpush1.bf16.msra.mxu0 %v2661
    %3612 = vmatprep.subr.bf16.mxu0 %v2694
    %3613 = vmatpush1.bf16.msra.mxu0 %v2693
    %3614 = vmatprep.subr.bf16.mxu0 %v2726
    %3615 = vmatpush1.bf16.msra.mxu0 %v2725
    %3616 = vmatprep.subr.bf16.mxu0 %v2758
    %3617 = vmatpush1.bf16.msra.mxu0 %v2757
    %3618 = vmatprep.subr.bf16.mxu0 %v2790
    %3619 = vmatpush1.bf16.msra.mxu0 %v2789
    %3620 = vmatprep.subr.bf16.mxu0 %v2822
    %3621 = vmatpush1.bf16.msra.mxu0 %v2821
    %3622 = vmatprep.subr.bf16.mxu0 %v2854
    %3623 = vmatpush1.bf16.msra.mxu0 %v2853
    %3624 = vmatprep.subr.bf16.mxu0 %v2886
    %3625 = vmatpush1.bf16.msra.mxu0 %v2885
    %3626 = vmatprep.subr.bf16.mxu0 %v2918
    %3627 = vmatpush1.bf16.msra.mxu0 %v2917
    %3628 = vmatprep.subr.bf16.mxu0 %v2950
    %3629 = vmatpush1.bf16.msra.mxu0 %v2949
    %3630 = vmatprep.subr.bf16.mxu0 %v2982
    %3631 = vmatpush1.bf16.msra.mxu0 %v2981
    %3632 = vmatprep.subr.bf16.mxu0 %v3446
    %3633 = vmatpush1.bf16.msra.mxu0 %v3443
    %3634 = vmatprep.subr.bf16.mxu0 0
    %3635 = vmatpush1.bf16.msra.mxu0 0
    %3636 = vmatprep.subr.bf16.mxu0 0
    %3637 = vmatpush1.bf16.msra.mxu0 0
    %3638 = vmatprep.subr.bf16.mxu0 0
    %3639 = vmatpush1.bf16.msra.mxu0 0
    %3640 = vmatprep.mubr.bf16.mxu0 %v3427
    %3641 = vmatmul.mubr.bf16.gmra.mrb[0].mxu0 %v1023
    %v3642 = vpop.f32.mrb[0].mxu0
    %v3643 = vadd.f32 0.0, %v3642
    %v3644 = vpop.f32.mrb[0].mxu0
    %v3645 = vadd.f32 0.0, %v3644
    %v3646 = vpop.f32.mrb[0].mxu0
    %v3647 = vpop.f32.mrb[0].mxu0
    %3648 = vdwg.mxu0
    %3649 = vmatprep.subr.bf16.mxu0 %v2632
    %3650 = vmatpush1.bf16.msra.mxu0 %v2631
    %3651 = vmatprep.subr.bf16.mxu0 %v2664
    %3652 = vmatpush1.bf16.msra.mxu0 %v2663
    %3653 = vmatprep.subr.bf16.mxu0 %v2696
    %3654 = vmatpush1.bf16.msra.mxu0 %v2695
    %3655 = vmatprep.subr.bf16.mxu0 %v2728
    %3656 = vmatpush1.bf16.msra.mxu0 %v2727
    %3657 = vmatprep.subr.bf16.mxu0 %v2760
    %3658 = vmatpush1.bf16.msra.mxu0 %v2759
    %3659 = vmatprep.subr.bf16.mxu0 %v2792
    %3660 = vmatpush1.bf16.msra.mxu0 %v2791
    %3661 = vmatprep.subr.bf16.mxu0 %v2824
    %3662 = vmatpush1.bf16.msra.mxu0 %v2823
    %3663 = vmatprep.subr.bf16.mxu0 %v2856
    %3664 = vmatpush1.bf16.msra.mxu0 %v2855
    %3665 = vmatprep.subr.bf16.mxu0 %v2888
    %3666 = vmatpush1.bf16.msra.mxu0 %v2887
    %3667 = vmatprep.subr.bf16.mxu0 %v2920
    %3668 = vmatpush1.bf16.msra.mxu0 %v2919
    %3669 = vmatprep.subr.bf16.mxu0 %v2952
    %3670 = vmatpush1.bf16.msra.mxu0 %v2951
    %3671 = vmatprep.subr.bf16.mxu0 %v2984
    %3672 = vmatpush1.bf16.msra.mxu0 %v2983
    %3673 = vmatprep.subr.bf16.mxu0 %v3452
    %3674 = vmatpush1.bf16.msra.mxu0 %v3449
    %3675 = vmatprep.subr.bf16.mxu0 0
    %3676 = vmatpush1.bf16.msra.mxu0 0
    %3677 = vmatprep.subr.bf16.mxu0 0
    %3678 = vmatpush1.bf16.msra.mxu0 0
    %3679 = vmatprep.subr.bf16.mxu0 0
    %3680 = vmatpush1.bf16.msra.mxu0 0
    %3681 = vmatprep.mubr.bf16.mxu0 %v3427
    %3682 = vmatmul.mubr.bf16.gmra.mrb[0].mxu0 %v1023
    %v3683 = vpop.f32.mrb[0].mxu0
    %v3684 = vadd.f32 0.0, %v3683
    %v3685 = vpop.f32.mrb[0].mxu0
    %v3686 = vadd.f32 0.0, %v3685
    %v3687 = vpop.f32.mrb[0].mxu0
    %v3688 = vpop.f32.mrb[0].mxu0
    %3689 = vdwg.mxu0
    %3690 = vmatprep.subr.bf16.mxu0 %v2634
    %3691 = vmatpush1.bf16.msra.mxu0 %v2633
    %3692 = vmatprep.subr.bf16.mxu0 %v2666
    %3693 = vmatpush1.bf16.msra.mxu0 %v2665
    %3694 = vmatprep.subr.bf16.mxu0 %v2698
    %3695 = vmatpush1.bf16.msra.mxu0 %v2697
    %3696 = vmatprep.subr.bf16.mxu0 %v2730
    %3697 = vmatpush1.bf16.msra.mxu0 %v2729
    %3698 = vmatprep.subr.bf16.mxu0 %v2762
    %3699 = vmatpush1.bf16.msra.mxu0 %v2761
    %3700 = vmatprep.subr.bf16.mxu0 %v2794
    %3701 = vmatpush1.bf16.msra.mxu0 %v2793
    %3702 = vmatprep.subr.bf16.mxu0 %v2826
    %3703 = vmatpush1.bf16.msra.mxu0 %v2825
    %3704 = vmatprep.subr.bf16.mxu0 %v2858
    %3705 = vmatpush1.bf16.msra.mxu0 %v2857
    %3706 = vmatprep.subr.bf16.mxu0 %v2890
    %3707 = vmatpush1.bf16.msra.mxu0 %v2889
    %3708 = vmatprep.subr.bf16.mxu0 %v2922
    %3709 = vmatpush1.bf16.msra.mxu0 %v2921
    %3710 = vmatprep.subr.bf16.mxu0 %v2954
    %3711 = vmatpush1.bf16.msra.mxu0 %v2953
    %3712 = vmatprep.subr.bf16.mxu0 %v2986
    %3713 = vmatpush1.bf16.msra.mxu0 %v2985
    %3714 = vmatprep.subr.bf16.mxu0 %v3458
    %3715 = vmatpush1.bf16.msra.mxu0 %v3455
    %3716 = vmatprep.subr.bf16.mxu0 0
    %3717 = vmatpush1.bf16.msra.mxu0 0
    %3718 = vmatprep.subr.bf16.mxu0 0
    %3719 = vmatpush1.bf16.msra.mxu0 0
    %3720 = vmatprep.subr.bf16.mxu0 0
    %3721 = vmatpush1.bf16.msra.mxu0 0
    %3722 = vmatprep.mubr.bf16.mxu0 %v3427
    %3723 = vmatmul.mubr.bf16.gmra.mrb[0].mxu0 %v1023
    %v3724 = vpop.f32.mrb[0].mxu0
    %v3725 = vadd.f32 0.0, %v3724
    %v3726 = vpop.f32.mrb[0].mxu0
    %v3727 = vadd.f32 0.0, %v3726
    %v3728 = vpop.f32.mrb[0].mxu0
    %v3729 = vpop.f32.mrb[0].mxu0
    %3730 = vdwg.mxu0
    %3731 = vmatprep.subr.bf16.mxu0 %v2636
    %3732 = vmatpush1.bf16.msra.mxu0 %v2635
    %3733 = vmatprep.subr.bf16.mxu0 %v2668
    %3734 = vmatpush1.bf16.msra.mxu0 %v2667
    %3735 = vmatprep.subr.bf16.mxu0 %v2700
    %3736 = vmatpush1.bf16.msra.mxu0 %v2699
    %3737 = vmatprep.subr.bf16.mxu0 %v2732
    %3738 = vmatpush1.bf16.msra.mxu0 %v2731
    %3739 = vmatprep.subr.bf16.mxu0 %v2764
    %3740 = vmatpush1.bf16.msra.mxu0 %v2763
    %3741 = vmatprep.subr.bf16.mxu0 %v2796
    %3742 = vmatpush1.bf16.msra.mxu0 %v2795
    %3743 = vmatprep.subr.bf16.mxu0 %v2828
    %3744 = vmatpush1.bf16.msra.mxu0 %v2827
    %3745 = vmatprep.subr.bf16.mxu0 %v2860
    %3746 = vmatpush1.bf16.msra.mxu0 %v2859
    %3747 = vmatprep.subr.bf16.mxu0 %v2892
    %3748 = vmatpush1.bf16.msra.mxu0 %v2891
    %3749 = vmatprep.subr.bf16.mxu0 %v2924
    %3750 = vmatpush1.bf16.msra.mxu0 %v2923
    %3751 = vmatprep.subr.bf16.mxu0 %v2956
    %3752 = vmatpush1.bf16.msra.mxu0 %v2955
    %3753 = vmatprep.subr.bf16.mxu0 %v2988
    %3754 = vmatpush1.bf16.msra.mxu0 %v2987
    %3755 = vmatprep.subr.bf16.mxu0 %v3464
    %3756 = vmatpush1.bf16.msra.mxu0 %v3461
    %3757 = vmatprep.subr.bf16.mxu0 0
    %3758 = vmatpush1.bf16.msra.mxu0 0
    %3759 = vmatprep.subr.bf16.mxu0 0
    %3760 = vmatpush1.bf16.msra.mxu0 0
    %3761 = vmatprep.subr.bf16.mxu0 0
    %3762 = vmatpush1.bf16.msra.mxu0 0
    %3763 = vmatprep.mubr.bf16.mxu0 %v3427
    %3764 = vmatmul.mubr.bf16.gmra.mrb[0].mxu0 %v1023
    %v3765 = vpop.f32.mrb[0].mxu0
    %v3766 = vadd.f32 0.0, %v3765
    %v3767 = vpop.f32.mrb[0].mxu0
    %v3768 = vadd.f32 0.0, %v3767
    %v3769 = vpop.f32.mrb[0].mxu0
    %v3770 = vpop.f32.mrb[0].mxu0
    %3771 = vdwg.mxu0
    %3772 = vmatprep.subr.bf16.mxu0 %v2638
    %3773 = vmatpush1.bf16.msra.mxu0 %v2637
    %3774 = vmatprep.subr.bf16.mxu0 %v2670
    %3775 = vmatpush1.bf16.msra.mxu0 %v2669
    %3776 = vmatprep.subr.bf16.mxu0 %v2702
    %3777 = vmatpush1.bf16.msra.mxu0 %v2701
    %3778 = vmatprep.subr.bf16.mxu0 %v2734
    %3779 = vmatpush1.bf16.msra.mxu0 %v2733
    %3780 = vmatprep.subr.bf16.mxu0 %v2766
    %3781 = vmatpush1.bf16.msra.mxu0 %v2765
    %3782 = vmatprep.subr.bf16.mxu0 %v2798
    %3783 = vmatpush1.bf16.msra.mxu0 %v2797
    %3784 = vmatprep.subr.bf16.mxu0 %v2830
    %3785 = vmatpush1.bf16.msra.mxu0 %v2829
    %3786 = vmatprep.subr.bf16.mxu0 %v2862
    %3787 = vmatpush1.bf16.msra.mxu0 %v2861
    %3788 = vmatprep.subr.bf16.mxu0 %v2894
    %3789 = vmatpush1.bf16.msra.mxu0 %v2893
    %3790 = vmatprep.subr.bf16.mxu0 %v2926
    %3791 = vmatpush1.bf16.msra.mxu0 %v2925
    %3792 = vmatprep.subr.bf16.mxu0 %v2958
    %3793 = vmatpush1.bf16.msra.mxu0 %v2957
    %3794 = vmatprep.subr.bf16.mxu0 %v2990
    %3795 = vmatpush1.bf16.msra.mxu0 %v2989
    %3796 = vmatprep.subr.bf16.mxu0 %v3470
    %3797 = vmatpush1.bf16.msra.mxu0 %v3467
    %3798 = vmatprep.subr.bf16.mxu0 0
    %3799 = vmatpush1.bf16.msra.mxu0 0
    %3800 = vmatprep.subr.bf16.mxu0 0
    %3801 = vmatpush1.bf16.msra.mxu0 0
    %3802 = vmatprep.subr.bf16.mxu0 0
    %3803 = vmatpush1.bf16.msra.mxu0 0
    %3804 = vmatprep.mubr.bf16.mxu0 %v3427
    %3805 = vmatmul.mubr.bf16.gmra.mrb[0].mxu0 %v1023
    %v3806 = vpop.f32.mrb[0].mxu0
    %v3807 = vadd.f32 0.0, %v3806
    %v3808 = vpop.f32.mrb[0].mxu0
    %v3809 = vadd.f32 0.0, %v3808
    %v3810 = vpop.f32.mrb[0].mxu0
    %v3811 = vpop.f32.mrb[0].mxu0
    %3812 = vdwg.mxu0
    %3813 = vmatprep.subr.bf16.mxu0 %v2640
    %3814 = vmatpush1.bf16.msra.mxu0 %v2639
    %3815 = vmatprep.subr.bf16.mxu0 %v2672
    %3816 = vmatpush1.bf16.msra.mxu0 %v2671
    %3817 = vmatprep.subr.bf16.mxu0 %v2704
    %3818 = vmatpush1.bf16.msra.mxu0 %v2703
    %3819 = vmatprep.subr.bf16.mxu0 %v2736
    %3820 = vmatpush1.bf16.msra.mxu0 %v2735
    %3821 = vmatprep.subr.bf16.mxu0 %v2768
    %3822 = vmatpush1.bf16.msra.mxu0 %v2767
    %3823 = vmatprep.subr.bf16.mxu0 %v2800
    %3824 = vmatpush1.bf16.msra.mxu0 %v2799
    %3825 = vmatprep.subr.bf16.mxu0 %v2832
    %3826 = vmatpush1.bf16.msra.mxu0 %v2831
    %3827 = vmatprep.subr.bf16.mxu0 %v2864
    %3828 = vmatpush1.bf16.msra.mxu0 %v2863
    %3829 = vmatprep.subr.bf16.mxu0 %v2896
    %3830 = vmatpush1.bf16.msra.mxu0 %v2895
    %3831 = vmatprep.subr.bf16.mxu0 %v2928
    %3832 = vmatpush1.bf16.msra.mxu0 %v2927
    %3833 = vmatprep.subr.bf16.mxu0 %v2960
    %3834 = vmatpush1.bf16.msra.mxu0 %v2959
    %3835 = vmatprep.subr.bf16.mxu0 %v2992
    %3836 = vmatpush1.bf16.msra.mxu0 %v2991
    %3837 = vmatprep.subr.bf16.mxu0 %v3476
    %3838 = vmatpush1.bf16.msra.mxu0 %v3473
    %3839 = vmatprep.subr.bf16.mxu0 0
    %3840 = vmatpush1.bf16.msra.mxu0 0
    %3841 = vmatprep.subr.bf16.mxu0 0
    %3842 = vmatpush1.bf16.msra.mxu0 0
    %3843 = vmatprep.subr.bf16.mxu0 0
    %3844 = vmatpush1.bf16.msra.mxu0 0
    %3845 = vmatprep.mubr.bf16.mxu0 %v3427
    %3846 = vmatmul.mubr.bf16.gmra.mrb[0].mxu0 %v1023
    %v3847 = vpop.f32.mrb[0].mxu0
    %v3848 = vadd.f32 0.0, %v3847
    %v3849 = vpop.f32.mrb[0].mxu0
    %v3850 = vadd.f32 0.0, %v3849
    %v3851 = vpop.f32.mrb[0].mxu0
    %v3852 = vpop.f32.mrb[0].mxu0
    %3853 = vdwg.mxu0
    %3854 = vmatprep.subr.bf16.mxu0 %v2642
    %3855 = vmatpush1.bf16.msra.mxu0 %v2641
    %3856 = vmatprep.subr.bf16.mxu0 %v2674
    %3857 = vmatpush1.bf16.msra.mxu0 %v2673
    %3858 = vmatprep.subr.bf16.mxu0 %v2706
    %3859 = vmatpush1.bf16.msra.mxu0 %v2705
    %3860 = vmatprep.subr.bf16.mxu0 %v2738
    %3861 = vmatpush1.bf16.msra.mxu0 %v2737
    %3862 = vmatprep.subr.bf16.mxu0 %v2770
    %3863 = vmatpush1.bf16.msra.mxu0 %v2769
    %3864 = vmatprep.subr.bf16.mxu0 %v2802
    %3865 = vmatpush1.bf16.msra.mxu0 %v2801
    %3866 = vmatprep.subr.bf16.mxu0 %v2834
    %3867 = vmatpush1.bf16.msra.mxu0 %v2833
    %3868 = vmatprep.subr.bf16.mxu0 %v2866
    %3869 = vmatpush1.bf16.msra.mxu0 %v2865
    %3870 = vmatprep.subr.bf16.mxu0 %v2898
    %3871 = vmatpush1.bf16.msra.mxu0 %v2897
    %3872 = vmatprep.subr.bf16.mxu0 %v2930
    %3873 = vmatpush1.bf16.msra.mxu0 %v2929
    %3874 = vmatprep.subr.bf16.mxu0 %v2962
    %3875 = vmatpush1.bf16.msra.mxu0 %v2961
    %3876 = vmatprep.subr.bf16.mxu0 %v2994
    %3877 = vmatpush1.bf16.msra.mxu0 %v2993
    %3878 = vmatprep.subr.bf16.mxu0 %v3482
    %3879 = vmatpush1.bf16.msra.mxu0 %v3479
    %3880 = vmatprep.subr.bf16.mxu0 0
    %3881 = vmatpush1.bf16.msra.mxu0 0
    %3882 = vmatprep.subr.bf16.mxu0 0
    %3883 = vmatpush1.bf16.msra.mxu0 0
    %3884 = vmatprep.subr.bf16.mxu0 0
    %3885 = vmatpush1.bf16.msra.mxu0 0
    %3886 = vmatprep.mubr.bf16.mxu0 %v3427
    %3887 = vmatmul.mubr.bf16.gmra.mrb[0].mxu0 %v1023
    %v3888 = vpop.f32.mrb[0].mxu0
    %v3889 = vadd.f32 0.0, %v3888
    %v3890 = vpop.f32.mrb[0].mxu0
    %v3891 = vadd.f32 0.0, %v3890
    %v3892 = vpop.f32.mrb[0].mxu0
    %v3893 = vpop.f32.mrb[0].mxu0
    %3894 = vdwg.mxu0
    %3895 = vmatprep.subr.bf16.mxu0 %v2644
    %3896 = vmatpush1.bf16.msra.mxu0 %v2643
    %3897 = vmatprep.subr.bf16.mxu0 %v2676
    %3898 = vmatpush1.bf16.msra.mxu0 %v2675
    %3899 = vmatprep.subr.bf16.mxu0 %v2708
    %3900 = vmatpush1.bf16.msra.mxu0 %v2707
    %3901 = vmatprep.subr.bf16.mxu0 %v2740
    %3902 = vmatpush1.bf16.msra.mxu0 %v2739
    %3903 = vmatprep.subr.bf16.mxu0 %v2772
    %3904 = vmatpush1.bf16.msra.mxu0 %v2771
    %3905 = vmatprep.subr.bf16.mxu0 %v2804
    %3906 = vmatpush1.bf16.msra.mxu0 %v2803
    %3907 = vmatprep.subr.bf16.mxu0 %v2836
    %3908 = vmatpush1.bf16.msra.mxu0 %v2835
    %3909 = vmatprep.subr.bf16.mxu0 %v2868
    %3910 = vmatpush1.bf16.msra.mxu0 %v2867
    %3911 = vmatprep.subr.bf16.mxu0 %v2900
    %3912 = vmatpush1.bf16.msra.mxu0 %v2899
    %3913 = vmatprep.subr.bf16.mxu0 %v2932
    %3914 = vmatpush1.bf16.msra.mxu0 %v2931
    %3915 = vmatprep.subr.bf16.mxu0 %v2964
    %3916 = vmatpush1.bf16.msra.mxu0 %v2963
    %3917 = vmatprep.subr.bf16.mxu0 %v2996
    %3918 = vmatpush1.bf16.msra.mxu0 %v2995
    %3919 = vmatprep.subr.bf16.mxu0 %v3488
    %3920 = vmatpush1.bf16.msra.mxu0 %v3485
    %3921 = vmatprep.subr.bf16.mxu0 0
    %3922 = vmatpush1.bf16.msra.mxu0 0
    %3923 = vmatprep.subr.bf16.mxu0 0
    %3924 = vmatpush1.bf16.msra.mxu0 0
    %3925 = vmatprep.subr.bf16.mxu0 0
    %3926 = vmatpush1.bf16.msra.mxu0 0
    %3927 = vmatprep.mubr.bf16.mxu0 %v3427
    %3928 = vmatmul.mubr.bf16.gmra.mrb[0].mxu0 %v1023
    %v3929 = vpop.f32.mrb[0].mxu0
    %v3930 = vadd.f32 0.0, %v3929
    %v3931 = vpop.f32.mrb[0].mxu0
    %v3932 = vadd.f32 0.0, %v3931
    %v3933 = vpop.f32.mrb[0].mxu0
    %v3934 = vpop.f32.mrb[0].mxu0
    %3935 = vdwg.mxu0
    %3936 = vmatprep.subr.bf16.mxu0 %v2646
    %3937 = vmatpush1.bf16.msra.mxu0 %v2645
    %3938 = vmatprep.subr.bf16.mxu0 %v2678
    %3939 = vmatpush1.bf16.msra.mxu0 %v2677
    %3940 = vmatprep.subr.bf16.mxu0 %v2710
    %3941 = vmatpush1.bf16.msra.mxu0 %v2709
    %3942 = vmatprep.subr.bf16.mxu0 %v2742
    %3943 = vmatpush1.bf16.msra.mxu0 %v2741
    %3944 = vmatprep.subr.bf16.mxu0 %v2774
    %3945 = vmatpush1.bf16.msra.mxu0 %v2773
    %3946 = vmatprep.subr.bf16.mxu0 %v2806
    %3947 = vmatpush1.bf16.msra.mxu0 %v2805
    %3948 = vmatprep.subr.bf16.mxu0 %v2838
    %3949 = vmatpush1.bf16.msra.mxu0 %v2837
    %3950 = vmatprep.subr.bf16.mxu0 %v2870
    %3951 = vmatpush1.bf16.msra.mxu0 %v2869
    %3952 = vmatprep.subr.bf16.mxu0 %v2902
    %3953 = vmatpush1.bf16.msra.mxu0 %v2901
    %3954 = vmatprep.subr.bf16.mxu0 %v2934
    %3955 = vmatpush1.bf16.msra.mxu0 %v2933
    %3956 = vmatprep.subr.bf16.mxu0 %v2966
    %3957 = vmatpush1.bf16.msra.mxu0 %v2965
    %3958 = vmatprep.subr.bf16.mxu0 %v2998
    %3959 = vmatpush1.bf16.msra.mxu0 %v2997
    %3960 = vmatprep.subr.bf16.mxu0 %v3494
    %3961 = vmatpush1.bf16.msra.mxu0 %v3491
    %3962 = vmatprep.subr.bf16.mxu0 0
    %3963 = vmatpush1.bf16.msra.mxu0 0
    %3964 = vmatprep.subr.bf16.mxu0 0
    %3965 = vmatpush1.bf16.msra.mxu0 0
    %3966 = vmatprep.subr.bf16.mxu0 0
    %3967 = vmatpush1.bf16.msra.mxu0 0
    %3968 = vmatprep.mubr.bf16.mxu0 %v3427
    %3969 = vmatmul.mubr.bf16.gmra.mrb[0].mxu0 %v1023
    %v3970 = vpop.f32.mrb[0].mxu0
    %v3971 = vadd.f32 0.0, %v3970
    %v3972 = vpop.f32.mrb[0].mxu0
    %v3973 = vadd.f32 0.0, %v3972
    %v3974 = vpop.f32.mrb[0].mxu0
    %v3975 = vpop.f32.mrb[0].mxu0
    %3976 = vdwg.mxu0
    %3977 = vmatprep.subr.bf16.mxu0 %v2648
    %3978 = vmatpush1.bf16.msra.mxu0 %v2647
    %3979 = vmatprep.subr.bf16.mxu0 %v2680
    %3980 = vmatpush1.bf16.msra.mxu0 %v2679
    %3981 = vmatprep.subr.bf16.mxu0 %v2712
    %3982 = vmatpush1.bf16.msra.mxu0 %v2711
    %3983 = vmatprep.subr.bf16.mxu0 %v2744
    %3984 = vmatpush1.bf16.msra.mxu0 %v2743
    %3985 = vmatprep.subr.bf16.mxu0 %v2776
    %3986 = vmatpush1.bf16.msra.mxu0 %v2775
    %3987 = vmatprep.subr.bf16.mxu0 %v2808
    %3988 = vmatpush1.bf16.msra.mxu0 %v2807
    %3989 = vmatprep.subr.bf16.mxu0 %v2840
    %3990 = vmatpush1.bf16.msra.mxu0 %v2839
    %3991 = vmatprep.subr.bf16.mxu0 %v2872
    %3992 = vmatpush1.bf16.msra.mxu0 %v2871
    %3993 = vmatprep.subr.bf16.mxu0 %v2904
    %3994 = vmatpush1.bf16.msra.mxu0 %v2903
    %3995 = vmatprep.subr.bf16.mxu0 %v2936
    %3996 = vmatpush1.bf16.msra.mxu0 %v2935
    %3997 = vmatprep.subr.bf16.mxu0 %v2968
    %3998 = vmatpush1.bf16.msra.mxu0 %v2967
    %3999 = vmatprep.subr.bf16.mxu0 %v3000
    %4000 = vmatpush1.bf16.msra.mxu0 %v2999
    %4001 = vmatprep.subr.bf16.mxu0 %v3500
    %4002 = vmatpush1.bf16.msra.mxu0 %v3497
    %4003 = vmatprep.subr.bf16.mxu0 0
    %4004 = vmatpush1.bf16.msra.mxu0 0
    %4005 = vmatprep.subr.bf16.mxu0 0
    %4006 = vmatpush1.bf16.msra.mxu0 0
    %4007 = vmatprep.subr.bf16.mxu0 0
    %4008 = vmatpush1.bf16.msra.mxu0 0
    %4009 = vmatprep.mubr.bf16.mxu0 %v3427
    %4010 = vmatmul.mubr.bf16.gmra.mrb[0].mxu0 %v1023
    %v4011 = vpop.f32.mrb[0].mxu0
    %v4012 = vadd.f32 0.0, %v4011
    %v4013 = vpop.f32.mrb[0].mxu0
    %v4014 = vadd.f32 0.0, %v4013
    %v4015 = vpop.f32.mrb[0].mxu0
    %v4016 = vpop.f32.mrb[0].mxu0
    %4017 = vdwg.mxu0
    %4018 = vmatprep.subr.bf16.mxu0 %v2650
    %4019 = vmatpush1.bf16.msra.mxu0 %v2649
    %4020 = vmatprep.subr.bf16.mxu0 %v2682
    %4021 = vmatpush1.bf16.msra.mxu0 %v2681
    %4022 = vmatprep.subr.bf16.mxu0 %v2714
    %4023 = vmatpush1.bf16.msra.mxu0 %v2713
    %4024 = vmatprep.subr.bf16.mxu0 %v2746
    %4025 = vmatpush1.bf16.msra.mxu0 %v2745
    %4026 = vmatprep.subr.bf16.mxu0 %v2778
    %4027 = vmatpush1.bf16.msra.mxu0 %v2777
    %4028 = vmatprep.subr.bf16.mxu0 %v2810
    %4029 = vmatpush1.bf16.msra.mxu0 %v2809
    %4030 = vmatprep.subr.bf16.mxu0 %v2842
    %4031 = vmatpush1.bf16.msra.mxu0 %v2841
    %4032 = vmatprep.subr.bf16.mxu0 %v2874
    %4033 = vmatpush1.bf16.msra.mxu0 %v2873
    %4034 = vmatprep.subr.bf16.mxu0 %v2906
    %4035 = vmatpush1.bf16.msra.mxu0 %v2905
    %4036 = vmatprep.subr.bf16.mxu0 %v2938
    %4037 = vmatpush1.bf16.msra.mxu0 %v2937
    %4038 = vmatprep.subr.bf16.mxu0 %v2970
    %4039 = vmatpush1.bf16.msra.mxu0 %v2969
    %4040 = vmatprep.subr.bf16.mxu0 %v3002
    %4041 = vmatpush1.bf16.msra.mxu0 %v3001
    %4042 = vmatprep.subr.bf16.mxu0 %v3506
    %4043 = vmatpush1.bf16.msra.mxu0 %v3503
    %4044 = vmatprep.subr.bf16.mxu0 0
    %4045 = vmatpush1.bf16.msra.mxu0 0
    %4046 = vmatprep.subr.bf16.mxu0 0
    %4047 = vmatpush1.bf16.msra.mxu0 0
    %4048 = vmatprep.subr.bf16.mxu0 0
    %4049 = vmatpush1.bf16.msra.mxu0 0
    %4050 = vmatprep.mubr.bf16.mxu0 %v3427
    %4051 = vmatmul.mubr.bf16.gmra.mrb[0].mxu0 %v1023
    %v4052 = vpop.f32.mrb[0].mxu0
    %v4053 = vadd.f32 0.0, %v4052
    %v4054 = vpop.f32.mrb[0].mxu0
    %v4055 = vadd.f32 0.0, %v4054
    %v4056 = vpop.f32.mrb[0].mxu0
    %v4057 = vpop.f32.mrb[0].mxu0
    %4058 = vdwg.mxu0
    %4059 = vmatprep.subr.bf16.mxu0 %v2652
    %4060 = vmatpush1.bf16.msra.mxu0 %v2651
    %4061 = vmatprep.subr.bf16.mxu0 %v2684
    %4062 = vmatpush1.bf16.msra.mxu0 %v2683
    %4063 = vmatprep.subr.bf16.mxu0 %v2716
    %4064 = vmatpush1.bf16.msra.mxu0 %v2715
    %4065 = vmatprep.subr.bf16.mxu0 %v2748
    %4066 = vmatpush1.bf16.msra.mxu0 %v2747
    %4067 = vmatprep.subr.bf16.mxu0 %v2780
    %4068 = vmatpush1.bf16.msra.mxu0 %v2779
    %4069 = vmatprep.subr.bf16.mxu0 %v2812
    %4070 = vmatpush1.bf16.msra.mxu0 %v2811
    %4071 = vmatprep.subr.bf16.mxu0 %v2844
    %4072 = vmatpush1.bf16.msra.mxu0 %v2843
    %4073 = vmatprep.subr.bf16.mxu0 %v2876
    %4074 = vmatpush1.bf16.msra.mxu0 %v2875
    %4075 = vmatprep.subr.bf16.mxu0 %v2908
    %4076 = vmatpush1.bf16.msra.mxu0 %v2907
    %4077 = vmatprep.subr.bf16.mxu0 %v2940
    %4078 = vmatpush1.bf16.msra.mxu0 %v2939
    %4079 = vmatprep.subr.bf16.mxu0 %v2972
    %4080 = vmatpush1.bf16.msra.mxu0 %v2971
    %4081 = vmatprep.subr.bf16.mxu0 %v3004
    %4082 = vmatpush1.bf16.msra.mxu0 %v3003
    %4083 = vmatprep.subr.bf16.mxu0 %v3512
    %4084 = vmatpush1.bf16.msra.mxu0 %v3509
    %4085 = vmatprep.subr.bf16.mxu0 0
    %4086 = vmatpush1.bf16.msra.mxu0 0
    %4087 = vmatprep.subr.bf16.mxu0 0
    %4088 = vmatpush1.bf16.msra.mxu0 0
    %4089 = vmatprep.subr.bf16.mxu0 0
    %4090 = vmatpush1.bf16.msra.mxu0 0
    %4091 = vmatprep.mubr.bf16.mxu0 %v3427
    %4092 = vmatmul.mubr.bf16.gmra.mrb[0].mxu0 %v1023
    %v4093 = vpop.f32.mrb[0].mxu0
    %v4094 = vadd.f32 0.0, %v4093
    %v4095 = vpop.f32.mrb[0].mxu0
    %v4096 = vadd.f32 0.0, %v4095
    %v4097 = vpop.f32.mrb[0].mxu0
    %v4098 = vpop.f32.mrb[0].mxu0
    %4099 = vdwg.mxu0
    %4100 = vmatprep.subr.bf16.mxu0 %v2654
    %4101 = vmatpush1.bf16.msra.mxu0 %v2653
    %4102 = vmatprep.subr.bf16.mxu0 %v2686
    %4103 = vmatpush1.bf16.msra.mxu0 %v2685
    %4104 = vmatprep.subr.bf16.mxu0 %v2718
    %4105 = vmatpush1.bf16.msra.mxu0 %v2717
    %4106 = vmatprep.subr.bf16.mxu0 %v2750
    %4107 = vmatpush1.bf16.msra.mxu0 %v2749
    %4108 = vmatprep.subr.bf16.mxu0 %v2782
    %4109 = vmatpush1.bf16.msra.mxu0 %v2781
    %4110 = vmatprep.subr.bf16.mxu0 %v2814
    %4111 = vmatpush1.bf16.msra.mxu0 %v2813
    %4112 = vmatprep.subr.bf16.mxu0 %v2846
    %4113 = vmatpush1.bf16.msra.mxu0 %v2845
    %4114 = vmatprep.subr.bf16.mxu0 %v2878
    %4115 = vmatpush1.bf16.msra.mxu0 %v2877
    %4116 = vmatprep.subr.bf16.mxu0 %v2910
    %4117 = vmatpush1.bf16.msra.mxu0 %v2909
    %4118 = vmatprep.subr.bf16.mxu0 %v2942
    %4119 = vmatpush1.bf16.msra.mxu0 %v2941
    %4120 = vmatprep.subr.bf16.mxu0 %v2974
    %4121 = vmatpush1.bf16.msra.mxu0 %v2973
    %4122 = vmatprep.subr.bf16.mxu0 %v3006
    %4123 = vmatpush1.bf16.msra.mxu0 %v3005
    %4124 = vmatprep.subr.bf16.mxu0 %v3518
    %4125 = vmatpush1.bf16.msra.mxu0 %v3515
    %4126 = vmatprep.subr.bf16.mxu0 0
    %4127 = vmatpush1.bf16.msra.mxu0 0
    %4128 = vmatprep.subr.bf16.mxu0 0
    %4129 = vmatpush1.bf16.msra.mxu0 0
    %4130 = vmatprep.subr.bf16.mxu0 0
    %4131 = vmatpush1.bf16.msra.mxu0 0
    %4132 = vmatprep.mubr.bf16.mxu0 %v3427
    %4133 = vmatmul.mubr.bf16.gmra.mrb[0].mxu0 %v1023
    %v4134 = vpop.f32.mrb[0].mxu0
    %v4135 = vadd.f32 0.0, %v4134
    %v4136 = vpop.f32.mrb[0].mxu0
    %v4137 = vadd.f32 0.0, %v4136
    %v4138 = vpop.f32.mrb[0].mxu0
    %v4139 = vpop.f32.mrb[0].mxu0
    %4140 = vdwg.mxu0
    %4141 = vmatprep.subr.bf16.mxu0 %v2656
    %4142 = vmatpush1.bf16.msra.mxu0 %v2655
    %4143 = vmatprep.subr.bf16.mxu0 %v2688
    %4144 = vmatpush1.bf16.msra.mxu0 %v2687
    %4145 = vmatprep.subr.bf16.mxu0 %v2720
    %4146 = vmatpush1.bf16.msra.mxu0 %v2719
    %4147 = vmatprep.subr.bf16.mxu0 %v2752
    %4148 = vmatpush1.bf16.msra.mxu0 %v2751
    %4149 = vmatprep.subr.bf16.mxu0 %v2784
    %4150 = vmatpush1.bf16.msra.mxu0 %v2783
    %4151 = vmatprep.subr.bf16.mxu0 %v2816
    %4152 = vmatpush1.bf16.msra.mxu0 %v2815
    %4153 = vmatprep.subr.bf16.mxu0 %v2848
    %4154 = vmatpush1.bf16.msra.mxu0 %v2847
    %4155 = vmatprep.subr.bf16.mxu0 %v2880
    %4156 = vmatpush1.bf16.msra.mxu0 %v2879
    %4157 = vmatprep.subr.bf16.mxu0 %v2912
    %4158 = vmatpush1.bf16.msra.mxu0 %v2911
    %4159 = vmatprep.subr.bf16.mxu0 %v2944
    %4160 = vmatpush1.bf16.msra.mxu0 %v2943
    %4161 = vmatprep.subr.bf16.mxu0 %v2976
    %4162 = vmatpush1.bf16.msra.mxu0 %v2975
    %4163 = vmatprep.subr.bf16.mxu0 %v3008
    %4164 = vmatpush1.bf16.msra.mxu0 %v3007
    %4165 = vmatprep.subr.bf16.mxu0 %v3524
    %4166 = vmatpush1.bf16.msra.mxu0 %v3521
    %4167 = vmatprep.subr.bf16.mxu0 0
    %4168 = vmatpush1.bf16.msra.mxu0 0
    %4169 = vmatprep.subr.bf16.mxu0 0
    %4170 = vmatpush1.bf16.msra.mxu0 0
    %4171 = vmatprep.subr.bf16.mxu0 0
    %4172 = vmatpush1.bf16.msra.mxu0 0
    %4173 = vmatprep.mubr.bf16.mxu0 %v3427
    %4174 = vmatmul.mubr.bf16.gmra.mrb[0].mxu0 %v1023
    %v4175 = vpop.f32.mrb[0].mxu0
    %v4176 = vadd.f32 0.0, %v4175
    %v4177 = vpop.f32.mrb[0].mxu0
    %v4178 = vadd.f32 0.0, %v4177
    %v4179 = vpop.f32.mrb[0].mxu0
    %v4180 = vpop.f32.mrb[0].mxu0
    %4181 = vdwg.mxu0
    %v4182 = vld [vmem:[%s3] sm:$0xff]
    %v4183 = vld [vmem:[%s3 + $0x8] sm:$0xff]
    %v4184 = vld [vmem:[%s3 + $0x10] sm:$0xff]
    %v4185 = vld [vmem:[%s3 + $0x18] sm:$0xff]
    %v4190 = vlaneseq
    %v4191 = vshrl.u32 %v4190, 7
    %v4192 = vsub.s32 0, %v4191
    %v4193 = vrot.slane %v4182, %v4192
    %v4194 = vlaneseq
    %v4195 = vshrl.u32 %v4194, 7
    %v4196 = vsub.s32 1, %v4195
    %v4197 = vrot.slane %v4182, %v4196
    %v4198 = vlaneseq
    %v4199 = vshrl.u32 %v4198, 7
    %v4200 = vsub.s32 2, %v4199
    %v4201 = vrot.slane %v4182, %v4200
    %v4202 = vlaneseq
    %v4203 = vshrl.u32 %v4202, 7
    %v4204 = vsub.s32 3, %v4203
    %v4205 = vrot.slane %v4182, %v4204
    %v4206 = vlaneseq
    %v4207 = vshrl.u32 %v4206, 7
    %v4208 = vsub.s32 4, %v4207
    %v4209 = vrot.slane %v4182, %v4208
    %v4210 = vlaneseq
    %v4211 = vshrl.u32 %v4210, 7
    %v4212 = vsub.s32 5, %v4211
    %v4213 = vrot.slane %v4182, %v4212
    %v4214 = vlaneseq
    %v4215 = vshrl.u32 %v4214, 7
    %v4216 = vsub.s32 6, %v4215
    %v4217 = vrot.slane %v4182, %v4216
    %v4218 = vlaneseq
    %v4219 = vshrl.u32 %v4218, 7
    %v4220 = vsub.s32 7, %v4219
    %v4221 = vrot.slane %v4182, %v4220
    %v4222 = vlaneseq
    %v4223 = vshrl.u32 %v4222, 7
    %v4224 = vsub.s32 0, %v4223
    %v4225 = vrot.slane %v4183, %v4224
    %v4226 = vlaneseq
    %v4227 = vshrl.u32 %v4226, 7
    %v4228 = vsub.s32 1, %v4227
    %v4229 = vrot.slane %v4183, %v4228
    %v4230 = vlaneseq
    %v4231 = vshrl.u32 %v4230, 7
    %v4232 = vsub.s32 2, %v4231
    %v4233 = vrot.slane %v4183, %v4232
    %v4234 = vlaneseq
    %v4235 = vshrl.u32 %v4234, 7
    %v4236 = vsub.s32 3, %v4235
    %v4237 = vrot.slane %v4183, %v4236
    %v4238 = vlaneseq
    %v4239 = vshrl.u32 %v4238, 7
    %v4240 = vsub.s32 4, %v4239
    %v4241 = vrot.slane %v4183, %v4240
    %v4242 = vlaneseq
    %v4243 = vshrl.u32 %v4242, 7
    %v4244 = vsub.s32 5, %v4243
    %v4245 = vrot.slane %v4183, %v4244
    %v4246 = vlaneseq
    %v4247 = vshrl.u32 %v4246, 7
    %v4248 = vsub.s32 6, %v4247
    %v4249 = vrot.slane %v4183, %v4248
    %v4250 = vlaneseq
    %v4251 = vshrl.u32 %v4250, 7
    %v4252 = vsub.s32 7, %v4251
    %v4253 = vrot.slane %v4183, %v4252
    %v4254 = vlaneseq
    %v4255 = vshrl.u32 %v4254, 7
    %v4256 = vsub.s32 0, %v4255
    %v4257 = vrot.slane %v4184, %v4256
    %v4258 = vlaneseq
    %v4259 = vshrl.u32 %v4258, 7
    %v4260 = vsub.s32 1, %v4259
    %v4261 = vrot.slane %v4184, %v4260
    %v4262 = vlaneseq
    %v4263 = vshrl.u32 %v4262, 7
    %v4264 = vsub.s32 2, %v4263
    %v4265 = vrot.slane %v4184, %v4264
    %v4266 = vlaneseq
    %v4267 = vshrl.u32 %v4266, 7
    %v4268 = vsub.s32 3, %v4267
    %v4269 = vrot.slane %v4184, %v4268
    %v4270 = vlaneseq
    %v4271 = vshrl.u32 %v4270, 7
    %v4272 = vsub.s32 4, %v4271
    %v4273 = vrot.slane %v4184, %v4272
    %v4274 = vlaneseq
    %v4275 = vshrl.u32 %v4274, 7
    %v4276 = vsub.s32 5, %v4275
    %v4277 = vrot.slane %v4184, %v4276
    %v4278 = vlaneseq
    %v4279 = vshrl.u32 %v4278, 7
    %v4280 = vsub.s32 6, %v4279
    %v4281 = vrot.slane %v4184, %v4280
    %v4282 = vlaneseq
    %v4283 = vshrl.u32 %v4282, 7
    %v4284 = vsub.s32 7, %v4283
    %v4285 = vrot.slane %v4184, %v4284
    %v4286 = vlaneseq
    %v4287 = vshrl.u32 %v4286, 7
    %v4288 = vsub.s32 0, %v4287
    %v4289 = vrot.slane %v4185, %v4288
    %v4290 = vlaneseq
    %v4291 = vshrl.u32 %v4290, 7
    %v4292 = vsub.s32 1, %v4291
    %v4293 = vrot.slane %v4185, %v4292
    %v4294 = vlaneseq
    %v4295 = vshrl.u32 %v4294, 7
    %v4296 = vsub.s32 2, %v4295
    %v4297 = vrot.slane %v4185, %v4296
    %v4298 = vlaneseq
    %v4299 = vshrl.u32 %v4298, 7
    %v4300 = vsub.s32 3, %v4299
    %v4301 = vrot.slane %v4185, %v4300
    %v4302 = vlaneseq
    %v4303 = vshrl.u32 %v4302, 7
    %v4304 = vsub.s32 4, %v4303
    %v4305 = vrot.slane %v4185, %v4304
    %v4306 = vlaneseq
    %v4307 = vshrl.u32 %v4306, 7
    %v4308 = vsub.s32 5, %v4307
    %v4309 = vrot.slane %v4185, %v4308
    %v4310 = vlaneseq
    %v4311 = vshrl.u32 %v4310, 7
    %v4312 = vsub.s32 6, %v4311
    %v4313 = vrot.slane %v4185, %v4312
    %v4314 = vlaneseq
    %v4315 = vshrl.u32 %v4314, 7
    %v4316 = vsub.s32 7, %v4315
    %v4317 = vrot.slane %v4185, %v4316
    %v4350 = vmul.f32 %v3561, %v4193
    %v4351 = vmul.f32 %v3563, %v4197
    %v4352 = vmul.f32 %v3602, %v4201
    %v4353 = vmul.f32 %v3604, %v4205
    %v4354 = vmul.f32 %v3643, %v4209
    %v4355 = vmul.f32 %v3645, %v4213
    %v4356 = vmul.f32 %v3684, %v4217
    %v4357 = vmul.f32 %v3686, %v4221
    %v4358 = vmul.f32 %v3725, %v4225
    %v4359 = vmul.f32 %v3727, %v4229
    %v4360 = vmul.f32 %v3766, %v4233
    %v4361 = vmul.f32 %v3768, %v4237
    %v4362 = vmul.f32 %v3807, %v4241
    %v4363 = vmul.f32 %v3809, %v4245
    %v4364 = vmul.f32 %v3848, %v4249
    %v4365 = vmul.f32 %v3850, %v4253
    %v4366 = vmul.f32 %v3889, %v4257
    %v4367 = vmul.f32 %v3891, %v4261
    %v4368 = vmul.f32 %v3930, %v4265
    %v4369 = vmul.f32 %v3932, %v4269
    %v4370 = vmul.f32 %v3971, %v4273
    %v4371 = vmul.f32 %v3973, %v4277
    %v4372 = vmul.f32 %v4012, %v4281
    %v4373 = vmul.f32 %v4014, %v4285
    %v4374 = vmul.f32 %v4053, %v4289
    %v4375 = vmul.f32 %v4055, %v4293
    %v4376 = vmul.f32 %v4094, %v4297
    %v4377 = vmul.f32 %v4096, %v4301
    %v4378 = vmul.f32 %v4135, %v4305
    %v4379 = vmul.f32 %v4137, %v4309
    %v4380 = vmul.f32 %v4176, %v4313
    %v4381 = vmul.f32 %v4178, %v4317
    %v4382 = vld [vmem:[%s4] sm:$0xff]
    %v4383 = vld [vmem:[%s4 + $0x8] sm:$0xff]
    %v4384 = vld [vmem:[%s4 + $0x10] sm:$0xff]
    %v4385 = vld [vmem:[%s4 + $0x18] sm:$0xff]
    %v4390 = vlaneseq
    %v4391 = vshrl.u32 %v4390, 7
    %v4392 = vsub.s32 0, %v4391
    %v4393 = vrot.slane %v4382, %v4392
    %v4394 = vlaneseq
    %v4395 = vshrl.u32 %v4394, 7
    %v4396 = vsub.s32 1, %v4395
    %v4397 = vrot.slane %v4382, %v4396
    %v4398 = vlaneseq
    %v4399 = vshrl.u32 %v4398, 7
    %v4400 = vsub.s32 2, %v4399
    %v4401 = vrot.slane %v4382, %v4400
    %v4402 = vlaneseq
    %v4403 = vshrl.u32 %v4402, 7
    %v4404 = vsub.s32 3, %v4403
    %v4405 = vrot.slane %v4382, %v4404
    %v4406 = vlaneseq
    %v4407 = vshrl.u32 %v4406, 7
    %v4408 = vsub.s32 4, %v4407
    %v4409 = vrot.slane %v4382, %v4408
    %v4410 = vlaneseq
    %v4411 = vshrl.u32 %v4410, 7
    %v4412 = vsub.s32 5, %v4411
    %v4413 = vrot.slane %v4382, %v4412
    %v4414 = vlaneseq
    %v4415 = vshrl.u32 %v4414, 7
    %v4416 = vsub.s32 6, %v4415
    %v4417 = vrot.slane %v4382, %v4416
    %v4418 = vlaneseq
    %v4419 = vshrl.u32 %v4418, 7
    %v4420 = vsub.s32 7, %v4419
    %v4421 = vrot.slane %v4382, %v4420
    %v4422 = vlaneseq
    %v4423 = vshrl.u32 %v4422, 7
    %v4424 = vsub.s32 0, %v4423
    %v4425 = vrot.slane %v4383, %v4424
    %v4426 = vlaneseq
    %v4427 = vshrl.u32 %v4426, 7
    %v4428 = vsub.s32 1, %v4427
    %v4429 = vrot.slane %v4383, %v4428
    %v4430 = vlaneseq
    %v4431 = vshrl.u32 %v4430, 7
    %v4432 = vsub.s32 2, %v4431
    %v4433 = vrot.slane %v4383, %v4432
    %v4434 = vlaneseq
    %v4435 = vshrl.u32 %v4434, 7
    %v4436 = vsub.s32 3, %v4435
    %v4437 = vrot.slane %v4383, %v4436
    %v4438 = vlaneseq
    %v4439 = vshrl.u32 %v4438, 7
    %v4440 = vsub.s32 4, %v4439
    %v4441 = vrot.slane %v4383, %v4440
    %v4442 = vlaneseq
    %v4443 = vshrl.u32 %v4442, 7
    %v4444 = vsub.s32 5, %v4443
    %v4445 = vrot.slane %v4383, %v4444
    %v4446 = vlaneseq
    %v4447 = vshrl.u32 %v4446, 7
    %v4448 = vsub.s32 6, %v4447
    %v4449 = vrot.slane %v4383, %v4448
    %v4450 = vlaneseq
    %v4451 = vshrl.u32 %v4450, 7
    %v4452 = vsub.s32 7, %v4451
    %v4453 = vrot.slane %v4383, %v4452
    %v4454 = vlaneseq
    %v4455 = vshrl.u32 %v4454, 7
    %v4456 = vsub.s32 0, %v4455
    %v4457 = vrot.slane %v4384, %v4456
    %v4458 = vlaneseq
    %v4459 = vshrl.u32 %v4458, 7
    %v4460 = vsub.s32 1, %v4459
    %v4461 = vrot.slane %v4384, %v4460
    %v4462 = vlaneseq
    %v4463 = vshrl.u32 %v4462, 7
    %v4464 = vsub.s32 2, %v4463
    %v4465 = vrot.slane %v4384, %v4464
    %v4466 = vlaneseq
    %v4467 = vshrl.u32 %v4466, 7
    %v4468 = vsub.s32 3, %v4467
    %v4469 = vrot.slane %v4384, %v4468
    %v4470 = vlaneseq
    %v4471 = vshrl.u32 %v4470, 7
    %v4472 = vsub.s32 4, %v4471
    %v4473 = vrot.slane %v4384, %v4472
    %v4474 = vlaneseq
    %v4475 = vshrl.u32 %v4474, 7
    %v4476 = vsub.s32 5, %v4475
    %v4477 = vrot.slane %v4384, %v4476
    %v4478 = vlaneseq
    %v4479 = vshrl.u32 %v4478, 7
    %v4480 = vsub.s32 6, %v4479
    %v4481 = vrot.slane %v4384, %v4480
    %v4482 = vlaneseq
    %v4483 = vshrl.u32 %v4482, 7
    %v4484 = vsub.s32 7, %v4483
    %v4485 = vrot.slane %v4384, %v4484
    %v4486 = vlaneseq
    %v4487 = vshrl.u32 %v4486, 7
    %v4488 = vsub.s32 0, %v4487
    %v4489 = vrot.slane %v4385, %v4488
    %v4490 = vlaneseq
    %v4491 = vshrl.u32 %v4490, 7
    %v4492 = vsub.s32 1, %v4491
    %v4493 = vrot.slane %v4385, %v4492
    %v4494 = vlaneseq
    %v4495 = vshrl.u32 %v4494, 7
    %v4496 = vsub.s32 2, %v4495
    %v4497 = vrot.slane %v4385, %v4496
    %v4498 = vlaneseq
    %v4499 = vshrl.u32 %v4498, 7
    %v4500 = vsub.s32 3, %v4499
    %v4501 = vrot.slane %v4385, %v4500
    %v4502 = vlaneseq
    %v4503 = vshrl.u32 %v4502, 7
    %v4504 = vsub.s32 4, %v4503
    %v4505 = vrot.slane %v4385, %v4504
    %v4506 = vlaneseq
    %v4507 = vshrl.u32 %v4506, 7
    %v4508 = vsub.s32 5, %v4507
    %v4509 = vrot.slane %v4385, %v4508
    %v4510 = vlaneseq
    %v4511 = vshrl.u32 %v4510, 7
    %v4512 = vsub.s32 6, %v4511
    %v4513 = vrot.slane %v4385, %v4512
    %v4514 = vlaneseq
    %v4515 = vshrl.u32 %v4514, 7
    %v4516 = vsub.s32 7, %v4515
    %v4517 = vrot.slane %v4385, %v4516
    %v4550 = vadd.f32 %v4350, %v4393
    %v4551 = vadd.f32 %v4351, %v4397
    %v4552 = vadd.f32 %v4352, %v4401
    %v4553 = vadd.f32 %v4353, %v4405
    %v4554 = vadd.f32 %v4354, %v4409
    %v4555 = vadd.f32 %v4355, %v4413
    %v4556 = vadd.f32 %v4356, %v4417
    %v4557 = vadd.f32 %v4357, %v4421
    %v4558 = vadd.f32 %v4358, %v4425
    %v4559 = vadd.f32 %v4359, %v4429
    %v4560 = vadd.f32 %v4360, %v4433
    %v4561 = vadd.f32 %v4361, %v4437
    %v4562 = vadd.f32 %v4362, %v4441
    %v4563 = vadd.f32 %v4363, %v4445
    %v4564 = vadd.f32 %v4364, %v4449
    %v4565 = vadd.f32 %v4365, %v4453
    %v4566 = vadd.f32 %v4366, %v4457
    %v4567 = vadd.f32 %v4367, %v4461
    %v4568 = vadd.f32 %v4368, %v4465
    %v4569 = vadd.f32 %v4369, %v4469
    %v4570 = vadd.f32 %v4370, %v4473
    %v4571 = vadd.f32 %v4371, %v4477
    %v4572 = vadd.f32 %v4372, %v4481
    %v4573 = vadd.f32 %v4373, %v4485
    %v4574 = vadd.f32 %v4374, %v4489
    %v4575 = vadd.f32 %v4375, %v4493
    %v4576 = vadd.f32 %v4376, %v4497
    %v4577 = vadd.f32 %v4377, %v4501
    %v4578 = vadd.f32 %v4378, %v4505
    %v4579 = vadd.f32 %v4379, %v4509
    %v4580 = vadd.f32 %v4380, %v4513
    %v4581 = vadd.f32 %v4381, %v4517
    %v4582 = vmax.f32 %v4550, 0.0
    %v4583 = vmax.f32 %v4551, 0.0
    %v4584 = vmax.f32 %v4552, 0.0
    %v4585 = vmax.f32 %v4553, 0.0
    %v4586 = vmax.f32 %v4554, 0.0
    %v4587 = vmax.f32 %v4555, 0.0
    %v4588 = vmax.f32 %v4556, 0.0
    %v4589 = vmax.f32 %v4557, 0.0
    %v4590 = vmax.f32 %v4558, 0.0
    %v4591 = vmax.f32 %v4559, 0.0
    %v4592 = vmax.f32 %v4560, 0.0
    %v4593 = vmax.f32 %v4561, 0.0
    %v4594 = vmax.f32 %v4562, 0.0
    %v4595 = vmax.f32 %v4563, 0.0
    %v4596 = vmax.f32 %v4564, 0.0
    %v4597 = vmax.f32 %v4565, 0.0
    %v4598 = vmax.f32 %v4566, 0.0
    %v4599 = vmax.f32 %v4567, 0.0
    %v4600 = vmax.f32 %v4568, 0.0
    %v4601 = vmax.f32 %v4569, 0.0
    %v4602 = vmax.f32 %v4570, 0.0
    %v4603 = vmax.f32 %v4571, 0.0
    %v4604 = vmax.f32 %v4572, 0.0
    %v4605 = vmax.f32 %v4573, 0.0
    %v4606 = vmax.f32 %v4574, 0.0
    %v4607 = vmax.f32 %v4575, 0.0
    %v4608 = vmax.f32 %v4576, 0.0
    %v4609 = vmax.f32 %v4577, 0.0
    %v4610 = vmax.f32 %v4578, 0.0
    %v4611 = vmax.f32 %v4579, 0.0
    %v4612 = vmax.f32 %v4580, 0.0
    %v4613 = vmax.f32 %v4581, 0.0
    %v4614 = vpack.c.bf16 %v4582, %v4582
    %v4615 = vpack.c.bf16 %v4583, %v4583
    %v4616 = vpack.c.bf16 %v4584, %v4584
    %v4617 = vpack.c.bf16 %v4585, %v4585
    %v4618 = vpack.c.bf16 %v4586, %v4586
    %v4619 = vpack.c.bf16 %v4587, %v4587
    %v4620 = vpack.c.bf16 %v4588, %v4588
    %v4621 = vpack.c.bf16 %v4589, %v4589
    %v4622 = vpack.c.bf16 %v4590, %v4590
    %v4623 = vpack.c.bf16 %v4591, %v4591
    %v4624 = vpack.c.bf16 %v4592, %v4592
    %v4625 = vpack.c.bf16 %v4593, %v4593
    %v4626 = vpack.c.bf16 %v4594, %v4594
    %v4627 = vpack.c.bf16 %v4595, %v4595
    %v4628 = vpack.c.bf16 %v4596, %v4596
    %v4629 = vpack.c.bf16 %v4597, %v4597
    %v4630 = vpack.c.bf16 %v4598, %v4598
    %v4631 = vpack.c.bf16 %v4599, %v4599
    %v4632 = vpack.c.bf16 %v4600, %v4600
    %v4633 = vpack.c.bf16 %v4601, %v4601
    %v4634 = vpack.c.bf16 %v4602, %v4602
    %v4635 = vpack.c.bf16 %v4603, %v4603
    %v4636 = vpack.c.bf16 %v4604, %v4604
    %v4637 = vpack.c.bf16 %v4605, %v4605
    %v4638 = vpack.c.bf16 %v4606, %v4606
    %v4639 = vpack.c.bf16 %v4607, %v4607
    %v4640 = vpack.c.bf16 %v4608, %v4608
    %v4641 = vpack.c.bf16 %v4609, %v4609
    %v4642 = vpack.c.bf16 %v4610, %v4610
    %v4643 = vpack.c.bf16 %v4611, %v4611
    %v4644 = vpack.c.bf16 %v4612, %v4612
    %v4645 = vpack.c.bf16 %v4613, %v4613
    %v4646 = vld [vmem:[%s5] sm:$0xff]
    %v4647 = vld [vmem:[%s5 + $0x8] sm:$0xff]
    %v4648 = vld [vmem:[%s5 + $0x10] sm:$0xff]
    %v4649 = vld [vmem:[%s5 + $0x18] sm:$0xff]
    %v4650 = vld [vmem:[%s5 + $0x20] sm:$0xff]
    %v4651 = vld [vmem:[%s5 + $0x28] sm:$0xff]
    %v4652 = vld [vmem:[%s5 + $0x30] sm:$0xff]
    %v4653 = vld [vmem:[%s5 + $0x38] sm:$0xff]
    %v4654 = vld [vmem:[%s5 + $0x40] sm:$0xff]
    %v4655 = vld [vmem:[%s5 + $0x48] sm:$0xff]
    %v4656 = vld [vmem:[%s5 + $0x50] sm:$0xff]
    %v4657 = vld [vmem:[%s5 + $0x58] sm:$0xff]
    %v4658 = vld [vmem:[%s5 + $0x60] sm:$0xff]
    %v4659 = vld [vmem:[%s5 + $0x68] sm:$0xff]
    %v4660 = vld [vmem:[%s5 + $0x70] sm:$0xff]
    %v4661 = vld [vmem:[%s5 + $0x78] sm:$0xff]
    %v4662 = vld [vmem:[%s5 + $0x80] sm:$0xff]
    %v4663 = vld [vmem:[%s5 + $0x88] sm:$0xff]
    %v4664 = vld [vmem:[%s5 + $0x90] sm:$0xff]
    %v4665 = vld [vmem:[%s5 + $0x98] sm:$0xff]
    %v4666 = vld [vmem:[%s5 + $0xa0] sm:$0xff]
    %v4667 = vld [vmem:[%s5 + $0xa8] sm:$0xff]
    %v4668 = vld [vmem:[%s5 + $0xb0] sm:$0xff]
    %v4669 = vld [vmem:[%s5 + $0xb8] sm:$0xff]
    %v4670 = vld [vmem:[%s5 + $0xc0] sm:$0xff]
    %v4671 = vld [vmem:[%s5 + $0xc8] sm:$0xff]
    %v4672 = vld [vmem:[%s5 + $0xd0] sm:$0xff]
    %v4673 = vld [vmem:[%s5 + $0xd8] sm:$0xff]
    %v4674 = vld [vmem:[%s5 + $0xe0] sm:$0xff]
    %v4675 = vld [vmem:[%s5 + $0xe8] sm:$0xff]
    %v4676 = vld [vmem:[%s5 + $0xf0] sm:$0xff]
    %v4677 = vld [vmem:[%s5 + $0xf8] sm:$0xff]
    %v4678 = vld [vmem:[%s5 + $0x100] sm:$0xff]
    %v4679 = vld [vmem:[%s5 + $0x108] sm:$0xff]
    %v4680 = vld [vmem:[%s5 + $0x110] sm:$0xff]
    %v4681 = vld [vmem:[%s5 + $0x118] sm:$0xff]
    %v4682 = vld [vmem:[%s5 + $0x120] sm:$0xff]
    %v4683 = vld [vmem:[%s5 + $0x128] sm:$0xff]
    %v4684 = vld [vmem:[%s5 + $0x130] sm:$0xff]
    %v4685 = vld [vmem:[%s5 + $0x138] sm:$0xff]
    %v4686 = vld [vmem:[%s5 + $0x140] sm:$0xff]
    %v4687 = vld [vmem:[%s5 + $0x148] sm:$0xff]
    %v4688 = vld [vmem:[%s5 + $0x150] sm:$0xff]
    %v4689 = vld [vmem:[%s5 + $0x158] sm:$0xff]
    %v4690 = vld [vmem:[%s5 + $0x160] sm:$0xff]
    %v4691 = vld [vmem:[%s5 + $0x168] sm:$0xff]
    %v4692 = vld [vmem:[%s5 + $0x170] sm:$0xff]
    %v4693 = vld [vmem:[%s5 + $0x178] sm:$0xff]
    %v4694 = vld [vmem:[%s5 + $0x180] sm:$0xff]
    %v4695 = vld [vmem:[%s5 + $0x188] sm:$0xff]
    %v4696 = vld [vmem:[%s5 + $0x190] sm:$0xff]
    %v4697 = vld [vmem:[%s5 + $0x198] sm:$0xff]
    %v4698 = vld [vmem:[%s5 + $0x1a0] sm:$0xff]
    %v4699 = vld [vmem:[%s5 + $0x1a8] sm:$0xff]
    %v4700 = vld [vmem:[%s5 + $0x1b0] sm:$0xff]
    %v4701 = vld [vmem:[%s5 + $0x1b8] sm:$0xff]
    %v4702 = vld [vmem:[%s5 + $0x1c0] sm:$0xff]
    %v4703 = vld [vmem:[%s5 + $0x1c8] sm:$0xff]
    %v4704 = vld [vmem:[%s5 + $0x1d0] sm:$0xff]
    %v4705 = vld [vmem:[%s5 + $0x1d8] sm:$0xff]
    %v4706 = vld [vmem:[%s5 + $0x1e0] sm:$0xff]
    %v4707 = vld [vmem:[%s5 + $0x1e8] sm:$0xff]
    %v4708 = vld [vmem:[%s5 + $0x1f0] sm:$0xff]
    %v4709 = vld [vmem:[%s5 + $0x1f8] sm:$0xff]
    %v4710 = vld [vmem:[%s5 + $0x200] sm:$0xff]
    %v4711 = vld [vmem:[%s5 + $0x208] sm:$0xff]
    %v4712 = vld [vmem:[%s5 + $0x210] sm:$0xff]
    %v4713 = vld [vmem:[%s5 + $0x218] sm:$0xff]
    %v4714 = vld [vmem:[%s5 + $0x220] sm:$0xff]
    %v4715 = vld [vmem:[%s5 + $0x228] sm:$0xff]
    %v4716 = vld [vmem:[%s5 + $0x230] sm:$0xff]
    %v4717 = vld [vmem:[%s5 + $0x238] sm:$0xff]
    %v4718 = vld [vmem:[%s5 + $0x240] sm:$0xff]
    %v4719 = vld [vmem:[%s5 + $0x248] sm:$0xff]
    %v4720 = vld [vmem:[%s5 + $0x250] sm:$0xff]
    %v4721 = vld [vmem:[%s5 + $0x258] sm:$0xff]
    %v4722 = vld [vmem:[%s5 + $0x260] sm:$0xff]
    %v4723 = vld [vmem:[%s5 + $0x268] sm:$0xff]
    %v4724 = vld [vmem:[%s5 + $0x270] sm:$0xff]
    %v4725 = vld [vmem:[%s5 + $0x278] sm:$0xff]
    %v4726 = vld [vmem:[%s5 + $0x280] sm:$0xff]
    %v4727 = vld [vmem:[%s5 + $0x288] sm:$0xff]
    %v4728 = vld [vmem:[%s5 + $0x290] sm:$0xff]
    %v4729 = vld [vmem:[%s5 + $0x298] sm:$0xff]
    %v4730 = vld [vmem:[%s5 + $0x2a0] sm:$0xff]
    %v4731 = vld [vmem:[%s5 + $0x2a8] sm:$0xff]
    %v4732 = vld [vmem:[%s5 + $0x2b0] sm:$0xff]
    %v4733 = vld [vmem:[%s5 + $0x2b8] sm:$0xff]
    %v4734 = vld [vmem:[%s5 + $0x2c0] sm:$0xff]
    %v4735 = vld [vmem:[%s5 + $0x2c8] sm:$0xff]
    %v4736 = vld [vmem:[%s5 + $0x2d0] sm:$0xff]
    %v4737 = vld [vmem:[%s5 + $0x2d8] sm:$0xff]
    %v4738 = vld [vmem:[%s5 + $0x2e0] sm:$0xff]
    %v4739 = vld [vmem:[%s5 + $0x2e8] sm:$0xff]
    %v4740 = vld [vmem:[%s5 + $0x2f0] sm:$0xff]
    %v4741 = vld [vmem:[%s5 + $0x2f8] sm:$0xff]
    %v4742 = vld [vmem:[%s5 + $0x300] sm:$0xff]
    %v4743 = vld [vmem:[%s5 + $0x308] sm:$0xff]
    %v4744 = vld [vmem:[%s5 + $0x310] sm:$0xff]
    %v4745 = vld [vmem:[%s5 + $0x318] sm:$0xff]
    %v4746 = vld [vmem:[%s5 + $0x320] sm:$0xff]
    %v4747 = vld [vmem:[%s5 + $0x328] sm:$0xff]
    %v4748 = vld [vmem:[%s5 + $0x330] sm:$0xff]
    %v4749 = vld [vmem:[%s5 + $0x338] sm:$0xff]
    %v4750 = vld [vmem:[%s5 + $0x340] sm:$0xff]
    %v4751 = vld [vmem:[%s5 + $0x348] sm:$0xff]
    %v4752 = vld [vmem:[%s5 + $0x350] sm:$0xff]
    %v4753 = vld [vmem:[%s5 + $0x358] sm:$0xff]
    %v4754 = vld [vmem:[%s5 + $0x360] sm:$0xff]
    %v4755 = vld [vmem:[%s5 + $0x368] sm:$0xff]
    %v4756 = vld [vmem:[%s5 + $0x370] sm:$0xff]
    %v4757 = vld [vmem:[%s5 + $0x378] sm:$0xff]
    %v4758 = vld [vmem:[%s5 + $0x380] sm:$0xff]
    %v4759 = vld [vmem:[%s5 + $0x388] sm:$0xff]
    %v4760 = vld [vmem:[%s5 + $0x390] sm:$0xff]
    %v4761 = vld [vmem:[%s5 + $0x398] sm:$0xff]
    %v4762 = vld [vmem:[%s5 + $0x3a0] sm:$0xff]
    %v4763 = vld [vmem:[%s5 + $0x3a8] sm:$0xff]
    %v4764 = vld [vmem:[%s5 + $0x3b0] sm:$0xff]
    %v4765 = vld [vmem:[%s5 + $0x3b8] sm:$0xff]
    %v4766 = vld [vmem:[%s5 + $0x3c0] sm:$0xff]
    %v4767 = vld [vmem:[%s5 + $0x3c8] sm:$0xff]
    %v4768 = vld [vmem:[%s5 + $0x3d0] sm:$0xff]
    %v4769 = vld [vmem:[%s5 + $0x3d8] sm:$0xff]
    %v4770 = vld [vmem:[%s5 + $0x3e0] sm:$0xff]
    %v4771 = vld [vmem:[%s5 + $0x3e8] sm:$0xff]
    %v4772 = vld [vmem:[%s5 + $0x3f0] sm:$0xff]
    %v4773 = vld [vmem:[%s5 + $0x3f8] sm:$0xff]
    %v4774 = vld [vmem:[%s5 + $0x400] sm:$0xff]
    %v4775 = vld [vmem:[%s5 + $0x408] sm:$0xff]
    %v4776 = vld [vmem:[%s5 + $0x410] sm:$0xff]
    %v4777 = vld [vmem:[%s5 + $0x418] sm:$0xff]
    %v4778 = vld [vmem:[%s5 + $0x420] sm:$0xff]
    %v4779 = vld [vmem:[%s5 + $0x428] sm:$0xff]
    %v4780 = vld [vmem:[%s5 + $0x430] sm:$0xff]
    %v4781 = vld [vmem:[%s5 + $0x438] sm:$0xff]
    %v4782 = vld [vmem:[%s5 + $0x440] sm:$0xff]
    %v4783 = vld [vmem:[%s5 + $0x448] sm:$0xff]
    %v4784 = vld [vmem:[%s5 + $0x450] sm:$0xff]
    %v4785 = vld [vmem:[%s5 + $0x458] sm:$0xff]
    %v4786 = vld [vmem:[%s5 + $0x460] sm:$0xff]
    %v4787 = vld [vmem:[%s5 + $0x468] sm:$0xff]
    %v4788 = vld [vmem:[%s5 + $0x470] sm:$0xff]
    %v4789 = vld [vmem:[%s5 + $0x478] sm:$0xff]
    %v4790 = vld [vmem:[%s5 + $0x480] sm:$0xff]
    %v4791 = vld [vmem:[%s5 + $0x488] sm:$0xff]
    %v4792 = vld [vmem:[%s5 + $0x490] sm:$0xff]
    %v4793 = vld [vmem:[%s5 + $0x498] sm:$0xff]
    %v4794 = vld [vmem:[%s5 + $0x4a0] sm:$0xff]
    %v4795 = vld [vmem:[%s5 + $0x4a8] sm:$0xff]
    %v4796 = vld [vmem:[%s5 + $0x4b0] sm:$0xff]
    %v4797 = vld [vmem:[%s5 + $0x4b8] sm:$0xff]
    %v4798 = vld [vmem:[%s5 + $0x4c0] sm:$0xff]
    %v4799 = vld [vmem:[%s5 + $0x4c8] sm:$0xff]
    %v4800 = vld [vmem:[%s5 + $0x4d0] sm:$0xff]
    %v4801 = vld [vmem:[%s5 + $0x4d8] sm:$0xff]
    %v4802 = vld [vmem:[%s5 + $0x4e0] sm:$0xff]
    %v4803 = vld [vmem:[%s5 + $0x4e8] sm:$0xff]
    %v4804 = vld [vmem:[%s5 + $0x4f0] sm:$0xff]
    %v4805 = vld [vmem:[%s5 + $0x4f8] sm:$0xff]
    %v4806 = vld [vmem:[%s5 + $0x500] sm:$0xff]
    %v4807 = vld [vmem:[%s5 + $0x508] sm:$0xff]
    %v4808 = vld [vmem:[%s5 + $0x510] sm:$0xff]
    %v4809 = vld [vmem:[%s5 + $0x518] sm:$0xff]
    %v4810 = vld [vmem:[%s5 + $0x520] sm:$0xff]
    %v4811 = vld [vmem:[%s5 + $0x528] sm:$0xff]
    %v4812 = vld [vmem:[%s5 + $0x530] sm:$0xff]
    %v4813 = vld [vmem:[%s5 + $0x538] sm:$0xff]
    %v4814 = vld [vmem:[%s5 + $0x540] sm:$0xff]
    %v4815 = vld [vmem:[%s5 + $0x548] sm:$0xff]
    %v4816 = vld [vmem:[%s5 + $0x550] sm:$0xff]
    %v4817 = vld [vmem:[%s5 + $0x558] sm:$0xff]
    %v4818 = vld [vmem:[%s5 + $0x560] sm:$0xff]
    %v4819 = vld [vmem:[%s5 + $0x568] sm:$0xff]
    %v4820 = vld [vmem:[%s5 + $0x570] sm:$0xff]
    %v4821 = vld [vmem:[%s5 + $0x578] sm:$0xff]
    %v4822 = vld [vmem:[%s5 + $0x580] sm:$0xff]
    %v4823 = vld [vmem:[%s5 + $0x588] sm:$0xff]
    %v4824 = vld [vmem:[%s5 + $0x590] sm:$0xff]
    %v4825 = vld [vmem:[%s5 + $0x598] sm:$0xff]
    %v4826 = vld [vmem:[%s5 + $0x5a0] sm:$0xff]
    %v4827 = vld [vmem:[%s5 + $0x5a8] sm:$0xff]
    %v4828 = vld [vmem:[%s5 + $0x5b0] sm:$0xff]
    %v4829 = vld [vmem:[%s5 + $0x5b8] sm:$0xff]
    %v4830 = vld [vmem:[%s5 + $0x5c0] sm:$0xff]
    %v4831 = vld [vmem:[%s5 + $0x5c8] sm:$0xff]
    %v4832 = vld [vmem:[%s5 + $0x5d0] sm:$0xff]
    %v4833 = vld [vmem:[%s5 + $0x5d8] sm:$0xff]
    %v4834 = vld [vmem:[%s5 + $0x5e0] sm:$0xff]
    %v4835 = vld [vmem:[%s5 + $0x5e8] sm:$0xff]
    %v4836 = vld [vmem:[%s5 + $0x5f0] sm:$0xff]
    %v4837 = vld [vmem:[%s5 + $0x5f8] sm:$0xff]
    %v4838 = vld [vmem:[%s5 + $0x600] sm:$0xff]
    %v4839 = vld [vmem:[%s5 + $0x608] sm:$0xff]
    %v4840 = vld [vmem:[%s5 + $0x610] sm:$0xff]
    %v4841 = vld [vmem:[%s5 + $0x618] sm:$0xff]
    %v4842 = vld [vmem:[%s5 + $0x620] sm:$0xff]
    %v4843 = vld [vmem:[%s5 + $0x628] sm:$0xff]
    %v4844 = vld [vmem:[%s5 + $0x630] sm:$0xff]
    %v4845 = vld [vmem:[%s5 + $0x638] sm:$0xff]
    %v4846 = vld [vmem:[%s5 + $0x640] sm:$0xff]
    %v4847 = vld [vmem:[%s5 + $0x648] sm:$0xff]
    %v4848 = vld [vmem:[%s5 + $0x650] sm:$0xff]
    %v4849 = vld [vmem:[%s5 + $0x658] sm:$0xff]
    %v4850 = vld [vmem:[%s5 + $0x660] sm:$0xff]
    %v4851 = vld [vmem:[%s5 + $0x668] sm:$0xff]
    %v4852 = vld [vmem:[%s5 + $0x670] sm:$0xff]
    %v4853 = vld [vmem:[%s5 + $0x678] sm:$0xff]
    %v4854 = vld [vmem:[%s5 + $0x680] sm:$0xff]
    %v4855 = vld [vmem:[%s5 + $0x688] sm:$0xff]
    %v4856 = vld [vmem:[%s5 + $0x690] sm:$0xff]
    %v4857 = vld [vmem:[%s5 + $0x698] sm:$0xff]
    %v4858 = vld [vmem:[%s5 + $0x6a0] sm:$0xff]
    %v4859 = vld [vmem:[%s5 + $0x6a8] sm:$0xff]
    %v4860 = vld [vmem:[%s5 + $0x6b0] sm:$0xff]
    %v4861 = vld [vmem:[%s5 + $0x6b8] sm:$0xff]
    %v4862 = vld [vmem:[%s5 + $0x6c0] sm:$0xff]
    %v4863 = vld [vmem:[%s5 + $0x6c8] sm:$0xff]
    %v4864 = vld [vmem:[%s5 + $0x6d0] sm:$0xff]
    %v4865 = vld [vmem:[%s5 + $0x6d8] sm:$0xff]
    %v4866 = vld [vmem:[%s5 + $0x6e0] sm:$0xff]
    %v4867 = vld [vmem:[%s5 + $0x6e8] sm:$0xff]
    %v4868 = vld [vmem:[%s5 + $0x6f0] sm:$0xff]
    %v4869 = vld [vmem:[%s5 + $0x6f8] sm:$0xff]
    %v4870 = vld [vmem:[%s5 + $0x700] sm:$0xff]
    %v4871 = vld [vmem:[%s5 + $0x708] sm:$0xff]
    %v4872 = vld [vmem:[%s5 + $0x710] sm:$0xff]
    %v4873 = vld [vmem:[%s5 + $0x718] sm:$0xff]
    %v4874 = vld [vmem:[%s5 + $0x720] sm:$0xff]
    %v4875 = vld [vmem:[%s5 + $0x728] sm:$0xff]
    %v4876 = vld [vmem:[%s5 + $0x730] sm:$0xff]
    %v4877 = vld [vmem:[%s5 + $0x738] sm:$0xff]
    %v4878 = vld [vmem:[%s5 + $0x740] sm:$0xff]
    %v4879 = vld [vmem:[%s5 + $0x748] sm:$0xff]
    %v4880 = vld [vmem:[%s5 + $0x750] sm:$0xff]
    %v4881 = vld [vmem:[%s5 + $0x758] sm:$0xff]
    %v4882 = vld [vmem:[%s5 + $0x760] sm:$0xff]
    %v4883 = vld [vmem:[%s5 + $0x768] sm:$0xff]
    %v4884 = vld [vmem:[%s5 + $0x770] sm:$0xff]
    %v4885 = vld [vmem:[%s5 + $0x778] sm:$0xff]
    %v4886 = vld [vmem:[%s5 + $0x780] sm:$0xff]
    %v4887 = vld [vmem:[%s5 + $0x788] sm:$0xff]
    %v4888 = vld [vmem:[%s5 + $0x790] sm:$0xff]
    %v4889 = vld [vmem:[%s5 + $0x798] sm:$0xff]
    %v4890 = vld [vmem:[%s5 + $0x7a0] sm:$0xff]
    %v4891 = vld [vmem:[%s5 + $0x7a8] sm:$0xff]
    %v4892 = vld [vmem:[%s5 + $0x7b0] sm:$0xff]
    %v4893 = vld [vmem:[%s5 + $0x7b8] sm:$0xff]
    %v4894 = vld [vmem:[%s5 + $0x7c0] sm:$0xff]
    %v4895 = vld [vmem:[%s5 + $0x7c8] sm:$0xff]
    %v4896 = vld [vmem:[%s5 + $0x7d0] sm:$0xff]
    %v4897 = vld [vmem:[%s5 + $0x7d8] sm:$0xff]
    %v4898 = vld [vmem:[%s5 + $0x7e0] sm:$0xff]
    %v4899 = vld [vmem:[%s5 + $0x7e8] sm:$0xff]
    %v4900 = vld [vmem:[%s5 + $0x7f0] sm:$0xff]
    %v4901 = vld [vmem:[%s5 + $0x7f8] sm:$0xff]
    %v4902 = vld [vmem:[%s5 + $0x800] sm:$0xff]
    %v4903 = vld [vmem:[%s5 + $0x808] sm:$0xff]
    %v4904 = vld [vmem:[%s5 + $0x810] sm:$0xff]
    %v4905 = vld [vmem:[%s5 + $0x818] sm:$0xff]
    %v4906 = vld [vmem:[%s5 + $0x820] sm:$0xff]
    %v4907 = vld [vmem:[%s5 + $0x828] sm:$0xff]
    %v4908 = vld [vmem:[%s5 + $0x830] sm:$0xff]
    %v4909 = vld [vmem:[%s5 + $0x838] sm:$0xff]
    %v4910 = vld [vmem:[%s5 + $0x840] sm:$0xff]
    %v4911 = vld [vmem:[%s5 + $0x848] sm:$0xff]
    %v4912 = vld [vmem:[%s5 + $0x850] sm:$0xff]
    %v4913 = vld [vmem:[%s5 + $0x858] sm:$0xff]
    %v4914 = vld [vmem:[%s5 + $0x860] sm:$0xff]
    %v4915 = vld [vmem:[%s5 + $0x868] sm:$0xff]
    %v4916 = vld [vmem:[%s5 + $0x870] sm:$0xff]
    %v4917 = vld [vmem:[%s5 + $0x878] sm:$0xff]
    %v4918 = vld [vmem:[%s5 + $0x880] sm:$0xff]
    %v4919 = vld [vmem:[%s5 + $0x888] sm:$0xff]
    %v4920 = vld [vmem:[%s5 + $0x890] sm:$0xff]
    %v4921 = vld [vmem:[%s5 + $0x898] sm:$0xff]
    %v4922 = vld [vmem:[%s5 + $0x8a0] sm:$0xff]
    %v4923 = vld [vmem:[%s5 + $0x8a8] sm:$0xff]
    %v4924 = vld [vmem:[%s5 + $0x8b0] sm:$0xff]
    %v4925 = vld [vmem:[%s5 + $0x8b8] sm:$0xff]
    %v4926 = vld [vmem:[%s5 + $0x8c0] sm:$0xff]
    %v4927 = vld [vmem:[%s5 + $0x8c8] sm:$0xff]
    %v4928 = vld [vmem:[%s5 + $0x8d0] sm:$0xff]
    %v4929 = vld [vmem:[%s5 + $0x8d8] sm:$0xff]
    %v4930 = vld [vmem:[%s5 + $0x8e0] sm:$0xff]
    %v4931 = vld [vmem:[%s5 + $0x8e8] sm:$0xff]
    %v4932 = vld [vmem:[%s5 + $0x8f0] sm:$0xff]
    %v4933 = vld [vmem:[%s5 + $0x8f8] sm:$0xff]
    %v4934 = vld [vmem:[%s5 + $0x900] sm:$0xff]
    %v4935 = vld [vmem:[%s5 + $0x908] sm:$0xff]
    %v4936 = vld [vmem:[%s5 + $0x910] sm:$0xff]
    %v4937 = vld [vmem:[%s5 + $0x918] sm:$0xff]
    %v4938 = vld [vmem:[%s5 + $0x920] sm:$0xff]
    %v4939 = vld [vmem:[%s5 + $0x928] sm:$0xff]
    %v4940 = vld [vmem:[%s5 + $0x930] sm:$0xff]
    %v4941 = vld [vmem:[%s5 + $0x938] sm:$0xff]
    %v4942 = vld [vmem:[%s5 + $0x940] sm:$0xff]
    %v4943 = vld [vmem:[%s5 + $0x948] sm:$0xff]
    %v4944 = vld [vmem:[%s5 + $0x950] sm:$0xff]
    %v4945 = vld [vmem:[%s5 + $0x958] sm:$0xff]
    %v4946 = vld [vmem:[%s5 + $0x960] sm:$0xff]
    %v4947 = vld [vmem:[%s5 + $0x968] sm:$0xff]
    %v4948 = vld [vmem:[%s5 + $0x970] sm:$0xff]
    %v4949 = vld [vmem:[%s5 + $0x978] sm:$0xff]
    %v4950 = vld [vmem:[%s5 + $0x980] sm:$0xff]
    %v4951 = vld [vmem:[%s5 + $0x988] sm:$0xff]
    %v4952 = vld [vmem:[%s5 + $0x990] sm:$0xff]
    %v4953 = vld [vmem:[%s5 + $0x998] sm:$0xff]
    %v4954 = vld [vmem:[%s5 + $0x9a0] sm:$0xff]
    %v4955 = vld [vmem:[%s5 + $0x9a8] sm:$0xff]
    %v4956 = vld [vmem:[%s5 + $0x9b0] sm:$0xff]
    %v4957 = vld [vmem:[%s5 + $0x9b8] sm:$0xff]
    %v4958 = vld [vmem:[%s5 + $0x9c0] sm:$0xff]
    %v4959 = vld [vmem:[%s5 + $0x9c8] sm:$0xff]
    %v4960 = vld [vmem:[%s5 + $0x9d0] sm:$0xff]
    %v4961 = vld [vmem:[%s5 + $0x9d8] sm:$0xff]
    %v4962 = vld [vmem:[%s5 + $0x9e0] sm:$0xff]
    %v4963 = vld [vmem:[%s5 + $0x9e8] sm:$0xff]
    %v4964 = vld [vmem:[%s5 + $0x9f0] sm:$0xff]
    %v4965 = vld [vmem:[%s5 + $0x9f8] sm:$0xff]
    %v4966 = vld [vmem:[%s5 + $0xa00] sm:$0xff]
    %v4967 = vld [vmem:[%s5 + $0xa08] sm:$0xff]
    %v4968 = vld [vmem:[%s5 + $0xa10] sm:$0xff]
    %v4969 = vld [vmem:[%s5 + $0xa18] sm:$0xff]
    %v4970 = vld [vmem:[%s5 + $0xa20] sm:$0xff]
    %v4971 = vld [vmem:[%s5 + $0xa28] sm:$0xff]
    %v4972 = vld [vmem:[%s5 + $0xa30] sm:$0xff]
    %v4973 = vld [vmem:[%s5 + $0xa38] sm:$0xff]
    %v4974 = vld [vmem:[%s5 + $0xa40] sm:$0xff]
    %v4975 = vld [vmem:[%s5 + $0xa48] sm:$0xff]
    %v4976 = vld [vmem:[%s5 + $0xa50] sm:$0xff]
    %v4977 = vld [vmem:[%s5 + $0xa58] sm:$0xff]
    %v4978 = vld [vmem:[%s5 + $0xa60] sm:$0xff]
    %v4979 = vld [vmem:[%s5 + $0xa68] sm:$0xff]
    %v4980 = vld [vmem:[%s5 + $0xa70] sm:$0xff]
    %v4981 = vld [vmem:[%s5 + $0xa78] sm:$0xff]
    %v4982 = vld [vmem:[%s5 + $0xa80] sm:$0xff]
    %v4983 = vld [vmem:[%s5 + $0xa88] sm:$0xff]
    %v4984 = vld [vmem:[%s5 + $0xa90] sm:$0xff]
    %v4985 = vld [vmem:[%s5 + $0xa98] sm:$0xff]
    %v4986 = vld [vmem:[%s5 + $0xaa0] sm:$0xff]
    %v4987 = vld [vmem:[%s5 + $0xaa8] sm:$0xff]
    %v4988 = vld [vmem:[%s5 + $0xab0] sm:$0xff]
    %v4989 = vld [vmem:[%s5 + $0xab8] sm:$0xff]
    %v4990 = vld [vmem:[%s5 + $0xac0] sm:$0xff]
    %v4991 = vld [vmem:[%s5 + $0xac8] sm:$0xff]
    %v4992 = vld [vmem:[%s5 + $0xad0] sm:$0xff]
    %v4993 = vld [vmem:[%s5 + $0xad8] sm:$0xff]
    %v4994 = vld [vmem:[%s5 + $0xae0] sm:$0xff]
    %v4995 = vld [vmem:[%s5 + $0xae8] sm:$0xff]
    %v4996 = vld [vmem:[%s5 + $0xaf0] sm:$0xff]
    %v4997 = vld [vmem:[%s5 + $0xaf8] sm:$0xff]
    %v4998 = vld [vmem:[%s5 + $0xb00] sm:$0xff]
    %v4999 = vld [vmem:[%s5 + $0xb08] sm:$0xff]
    %v5000 = vld [vmem:[%s5 + $0xb10] sm:$0xff]
    %v5001 = vld [vmem:[%s5 + $0xb18] sm:$0xff]
    %v5002 = vld [vmem:[%s5 + $0xb20] sm:$0xff]
    %v5003 = vld [vmem:[%s5 + $0xb28] sm:$0xff]
    %v5004 = vld [vmem:[%s5 + $0xb30] sm:$0xff]
    %v5005 = vld [vmem:[%s5 + $0xb38] sm:$0xff]
    %v5006 = vld [vmem:[%s5 + $0xb40] sm:$0xff]
    %v5007 = vld [vmem:[%s5 + $0xb48] sm:$0xff]
    %v5008 = vld [vmem:[%s5 + $0xb50] sm:$0xff]
    %v5009 = vld [vmem:[%s5 + $0xb58] sm:$0xff]
    %v5010 = vld [vmem:[%s5 + $0xb60] sm:$0xff]
    %v5011 = vld [vmem:[%s5 + $0xb68] sm:$0xff]
    %v5012 = vld [vmem:[%s5 + $0xb70] sm:$0xff]
    %v5013 = vld [vmem:[%s5 + $0xb78] sm:$0xff]
    %v5014 = vld [vmem:[%s5 + $0xb80] sm:$0xff]
    %v5015 = vld [vmem:[%s5 + $0xb88] sm:$0xff]
    %v5016 = vld [vmem:[%s5 + $0xb90] sm:$0xff]
    %v5017 = vld [vmem:[%s5 + $0xb98] sm:$0xff]
    %v5018 = vld [vmem:[%s5 + $0xba0] sm:$0xff]
    %v5019 = vld [vmem:[%s5 + $0xba8] sm:$0xff]
    %v5020 = vld [vmem:[%s5 + $0xbb0] sm:$0xff]
    %v5021 = vld [vmem:[%s5 + $0xbb8] sm:$0xff]
    %v5022 = vld [vmem:[%s5 + $0xbc0] sm:$0xff]
    %v5023 = vld [vmem:[%s5 + $0xbc8] sm:$0xff]
    %v5024 = vld [vmem:[%s5 + $0xbd0] sm:$0xff]
    %v5025 = vld [vmem:[%s5 + $0xbd8] sm:$0xff]
    %v5026 = vld [vmem:[%s5 + $0xbe0] sm:$0xff]
    %v5027 = vld [vmem:[%s5 + $0xbe8] sm:$0xff]
    %v5028 = vld [vmem:[%s5 + $0xbf0] sm:$0xff]
    %v5029 = vld [vmem:[%s5 + $0xbf8] sm:$0xff]
    %v5030 = vld [vmem:[%s5 + $0xc00] sm:$0xff]
    %v5031 = vld [vmem:[%s5 + $0xc08] sm:$0xff]
    %v5032 = vld [vmem:[%s5 + $0xc10] sm:$0xff]
    %v5033 = vld [vmem:[%s5 + $0xc18] sm:$0xff]
    %v5034 = vld [vmem:[%s5 + $0xc20] sm:$0xff]
    %v5035 = vld [vmem:[%s5 + $0xc28] sm:$0xff]
    %v5036 = vld [vmem:[%s5 + $0xc30] sm:$0xff]
    %v5037 = vld [vmem:[%s5 + $0xc38] sm:$0xff]
    %v5038 = vld [vmem:[%s5 + $0xc40] sm:$0xff]
    %v5039 = vld [vmem:[%s5 + $0xc48] sm:$0xff]
    %v5040 = vld [vmem:[%s5 + $0xc50] sm:$0xff]
    %v5041 = vld [vmem:[%s5 + $0xc58] sm:$0xff]
    %v5042 = vld [vmem:[%s5 + $0xc60] sm:$0xff]
    %v5043 = vld [vmem:[%s5 + $0xc68] sm:$0xff]
    %v5044 = vld [vmem:[%s5 + $0xc70] sm:$0xff]
    %v5045 = vld [vmem:[%s5 + $0xc78] sm:$0xff]
    %v5046 = vld [vmem:[%s5 + $0xc80] sm:$0xff]
    %v5047 = vld [vmem:[%s5 + $0xc88] sm:$0xff]
    %v5048 = vld [vmem:[%s5 + $0xc90] sm:$0xff]
    %v5049 = vld [vmem:[%s5 + $0xc98] sm:$0xff]
    %v5050 = vld [vmem:[%s5 + $0xca0] sm:$0xff]
    %v5051 = vld [vmem:[%s5 + $0xca8] sm:$0xff]
    %v5052 = vld [vmem:[%s5 + $0xcb0] sm:$0xff]
    %v5053 = vld [vmem:[%s5 + $0xcb8] sm:$0xff]
    %v5054 = vld [vmem:[%s5 + $0xcc0] sm:$0xff]
    %v5055 = vld [vmem:[%s5 + $0xcc8] sm:$0xff]
    %v5056 = vld [vmem:[%s5 + $0xcd0] sm:$0xff]
    %v5057 = vld [vmem:[%s5 + $0xcd8] sm:$0xff]
    %v5058 = vld [vmem:[%s5 + $0xce0] sm:$0xff]
    %v5059 = vld [vmem:[%s5 + $0xce8] sm:$0xff]
    %v5060 = vld [vmem:[%s5 + $0xcf0] sm:$0xff]
    %v5061 = vld [vmem:[%s5 + $0xcf8] sm:$0xff]
    %v5062 = vld [vmem:[%s5 + $0xd00] sm:$0xff]
    %v5063 = vld [vmem:[%s5 + $0xd08] sm:$0xff]
    %v5064 = vld [vmem:[%s5 + $0xd10] sm:$0xff]
    %v5065 = vld [vmem:[%s5 + $0xd18] sm:$0xff]
    %v5066 = vld [vmem:[%s5 + $0xd20] sm:$0xff]
    %v5067 = vld [vmem:[%s5 + $0xd28] sm:$0xff]
    %v5068 = vld [vmem:[%s5 + $0xd30] sm:$0xff]
    %v5069 = vld [vmem:[%s5 + $0xd38] sm:$0xff]
    %v5070 = vld [vmem:[%s5 + $0xd40] sm:$0xff]
    %v5071 = vld [vmem:[%s5 + $0xd48] sm:$0xff]
    %v5072 = vld [vmem:[%s5 + $0xd50] sm:$0xff]
    %v5073 = vld [vmem:[%s5 + $0xd58] sm:$0xff]
    %v5074 = vld [vmem:[%s5 + $0xd60] sm:$0xff]
    %v5075 = vld [vmem:[%s5 + $0xd68] sm:$0xff]
    %v5076 = vld [vmem:[%s5 + $0xd70] sm:$0xff]
    %v5077 = vld [vmem:[%s5 + $0xd78] sm:$0xff]
    %v5078 = vld [vmem:[%s5 + $0xd80] sm:$0xff]
    %v5079 = vld [vmem:[%s5 + $0xd88] sm:$0xff]
    %v5080 = vld [vmem:[%s5 + $0xd90] sm:$0xff]
    %v5081 = vld [vmem:[%s5 + $0xd98] sm:$0xff]
    %v5082 = vld [vmem:[%s5 + $0xda0] sm:$0xff]
    %v5083 = vld [vmem:[%s5 + $0xda8] sm:$0xff]
    %v5084 = vld [vmem:[%s5 + $0xdb0] sm:$0xff]
    %v5085 = vld [vmem:[%s5 + $0xdb8] sm:$0xff]
    %v5086 = vld [vmem:[%s5 + $0xdc0] sm:$0xff]
    %v5087 = vld [vmem:[%s5 + $0xdc8] sm:$0xff]
    %v5088 = vld [vmem:[%s5 + $0xdd0] sm:$0xff]
    %v5089 = vld [vmem:[%s5 + $0xdd8] sm:$0xff]
    %v5090 = vld [vmem:[%s5 + $0xde0] sm:$0xff]
    %v5091 = vld [vmem:[%s5 + $0xde8] sm:$0xff]
    %v5092 = vld [vmem:[%s5 + $0xdf0] sm:$0xff]
    %v5093 = vld [vmem:[%s5 + $0xdf8] sm:$0xff]
    %v5094 = vld [vmem:[%s5 + $0xe00] sm:$0xff]
    %v5095 = vld [vmem:[%s5 + $0xe08] sm:$0xff]
    %v5096 = vld [vmem:[%s5 + $0xe10] sm:$0xff]
    %v5097 = vld [vmem:[%s5 + $0xe18] sm:$0xff]
    %v5098 = vld [vmem:[%s5 + $0xe20] sm:$0xff]
    %v5099 = vld [vmem:[%s5 + $0xe28] sm:$0xff]
    %v5100 = vld [vmem:[%s5 + $0xe30] sm:$0xff]
    %v5101 = vld [vmem:[%s5 + $0xe38] sm:$0xff]
    %v5102 = vld [vmem:[%s5 + $0xe40] sm:$0xff]
    %v5103 = vld [vmem:[%s5 + $0xe48] sm:$0xff]
    %v5104 = vld [vmem:[%s5 + $0xe50] sm:$0xff]
    %v5105 = vld [vmem:[%s5 + $0xe58] sm:$0xff]
    %v5106 = vld [vmem:[%s5 + $0xe60] sm:$0xff]
    %v5107 = vld [vmem:[%s5 + $0xe68] sm:$0xff]
    %v5108 = vld [vmem:[%s5 + $0xe70] sm:$0xff]
    %v5109 = vld [vmem:[%s5 + $0xe78] sm:$0xff]
    %v5110 = vld [vmem:[%s5 + $0xe80] sm:$0xff]
    %v5111 = vld [vmem:[%s5 + $0xe88] sm:$0xff]
    %v5112 = vld [vmem:[%s5 + $0xe90] sm:$0xff]
    %v5113 = vld [vmem:[%s5 + $0xe98] sm:$0xff]
    %v5114 = vld [vmem:[%s5 + $0xea0] sm:$0xff]
    %v5115 = vld [vmem:[%s5 + $0xea8] sm:$0xff]
    %v5116 = vld [vmem:[%s5 + $0xeb0] sm:$0xff]
    %v5117 = vld [vmem:[%s5 + $0xeb8] sm:$0xff]
    %v5118 = vld [vmem:[%s5 + $0xec0] sm:$0xff]
    %v5119 = vld [vmem:[%s5 + $0xec8] sm:$0xff]
    %v5120 = vld [vmem:[%s5 + $0xed0] sm:$0xff]
    %v5121 = vld [vmem:[%s5 + $0xed8] sm:$0xff]
    %v5122 = vld [vmem:[%s5 + $0xee0] sm:$0xff]
    %v5123 = vld [vmem:[%s5 + $0xee8] sm:$0xff]
    %v5124 = vld [vmem:[%s5 + $0xef0] sm:$0xff]
    %v5125 = vld [vmem:[%s5 + $0xef8] sm:$0xff]
    %v5126 = vld [vmem:[%s5 + $0xf00] sm:$0xff]
    %v5127 = vld [vmem:[%s5 + $0xf08] sm:$0xff]
    %v5128 = vld [vmem:[%s5 + $0xf10] sm:$0xff]
    %v5129 = vld [vmem:[%s5 + $0xf18] sm:$0xff]
    %v5130 = vld [vmem:[%s5 + $0xf20] sm:$0xff]
    %v5131 = vld [vmem:[%s5 + $0xf28] sm:$0xff]
    %v5132 = vld [vmem:[%s5 + $0xf30] sm:$0xff]
    %v5133 = vld [vmem:[%s5 + $0xf38] sm:$0xff]
    %v5134 = vld [vmem:[%s5 + $0xf40] sm:$0xff]
    %v5135 = vld [vmem:[%s5 + $0xf48] sm:$0xff]
    %v5136 = vld [vmem:[%s5 + $0xf50] sm:$0xff]
    %v5137 = vld [vmem:[%s5 + $0xf58] sm:$0xff]
    %v5138 = vld [vmem:[%s5 + $0xf60] sm:$0xff]
    %v5139 = vld [vmem:[%s5 + $0xf68] sm:$0xff]
    %v5140 = vld [vmem:[%s5 + $0xf70] sm:$0xff]
    %v5141 = vld [vmem:[%s5 + $0xf78] sm:$0xff]
    %v5142 = vld [vmem:[%s5 + $0xf80] sm:$0xff]
    %v5143 = vld [vmem:[%s5 + $0xf88] sm:$0xff]
    %v5144 = vld [vmem:[%s5 + $0xf90] sm:$0xff]
    %v5145 = vld [vmem:[%s5 + $0xf98] sm:$0xff]
    %v5146 = vld [vmem:[%s5 + $0xfa0] sm:$0xff]
    %v5147 = vld [vmem:[%s5 + $0xfa8] sm:$0xff]
    %v5148 = vld [vmem:[%s5 + $0xfb0] sm:$0xff]
    %v5149 = vld [vmem:[%s5 + $0xfb8] sm:$0xff]
    %v5150 = vld [vmem:[%s5 + $0xfc0] sm:$0xff]
    %v5151 = vld [vmem:[%s5 + $0xfc8] sm:$0xff]
    %v5152 = vld [vmem:[%s5 + $0xfd0] sm:$0xff]
    %v5153 = vld [vmem:[%s5 + $0xfd8] sm:$0xff]
    %v5154 = vld [vmem:[%s5 + $0xfe0] sm:$0xff]
    %v5155 = vld [vmem:[%s5 + $0xfe8] sm:$0xff]
    %v5156 = vld [vmem:[%s5 + $0xff0] sm:$0xff]
    %v5157 = vld [vmem:[%s5 + $0xff8] sm:$0xff]
    %v5670 = vunpack.c.l.b16 %v4646
    %v5671 = vunpack.c.h.b16 %v4646
    %v5672 = vunpack.c.l.b16 %v4647
    %v5673 = vunpack.c.h.b16 %v4647
    %v5674 = vunpack.c.l.b16 %v4648
    %v5675 = vunpack.c.h.b16 %v4648
    %v5676 = vunpack.c.l.b16 %v4649
    %v5677 = vunpack.c.h.b16 %v4649
    %v5678 = vunpack.c.l.b16 %v4650
    %v5679 = vunpack.c.h.b16 %v4650
    %v5680 = vunpack.c.l.b16 %v4651
    %v5681 = vunpack.c.h.b16 %v4651
    %v5682 = vunpack.c.l.b16 %v4652
    %v5683 = vunpack.c.h.b16 %v4652
    %v5684 = vunpack.c.l.b16 %v4653
    %v5685 = vunpack.c.h.b16 %v4653
    %v5686 = vunpack.c.l.b16 %v4654
    %v5687 = vunpack.c.h.b16 %v4654
    %v5688 = vunpack.c.l.b16 %v4655
    %v5689 = vunpack.c.h.b16 %v4655
    %v5690 = vunpack.c.l.b16 %v4656
    %v5691 = vunpack.c.h.b16 %v4656
    %v5692 = vunpack.c.l.b16 %v4657
    %v5693 = vunpack.c.h.b16 %v4657
    %v5694 = vunpack.c.l.b16 %v4658
    %v5695 = vunpack.c.h.b16 %v4658
    %v5696 = vunpack.c.l.b16 %v4659
    %v5697 = vunpack.c.h.b16 %v4659
    %v5698 = vunpack.c.l.b16 %v4660
    %v5699 = vunpack.c.h.b16 %v4660
    %v5700 = vunpack.c.l.b16 %v4661
    %v5701 = vunpack.c.h.b16 %v4661
    %v5702 = vunpack.c.l.b16 %v4662
    %v5703 = vunpack.c.h.b16 %v4662
    %v5704 = vunpack.c.l.b16 %v4663
    %v5705 = vunpack.c.h.b16 %v4663
    %v5706 = vunpack.c.l.b16 %v4664
    %v5707 = vunpack.c.h.b16 %v4664
    %v5708 = vunpack.c.l.b16 %v4665
    %v5709 = vunpack.c.h.b16 %v4665
    %v5710 = vunpack.c.l.b16 %v4666
    %v5711 = vunpack.c.h.b16 %v4666
    %v5712 = vunpack.c.l.b16 %v4667
    %v5713 = vunpack.c.h.b16 %v4667
    %v5714 = vunpack.c.l.b16 %v4668
    %v5715 = vunpack.c.h.b16 %v4668
    %v5716 = vunpack.c.l.b16 %v4669
    %v5717 = vunpack.c.h.b16 %v4669
    %v5718 = vunpack.c.l.b16 %v4670
    %v5719 = vunpack.c.h.b16 %v4670
    %v5720 = vunpack.c.l.b16 %v4671
    %v5721 = vunpack.c.h.b16 %v4671
    %v5722 = vunpack.c.l.b16 %v4672
    %v5723 = vunpack.c.h.b16 %v4672
    %v5724 = vunpack.c.l.b16 %v4673
    %v5725 = vunpack.c.h.b16 %v4673
    %v5726 = vunpack.c.l.b16 %v4674
    %v5727 = vunpack.c.h.b16 %v4674
    %v5728 = vunpack.c.l.b16 %v4675
    %v5729 = vunpack.c.h.b16 %v4675
    %v5730 = vunpack.c.l.b16 %v4676
    %v5731 = vunpack.c.h.b16 %v4676
    %v5732 = vunpack.c.l.b16 %v4677
    %v5733 = vunpack.c.h.b16 %v4677
    %v5734 = vunpack.c.l.b16 %v4678
    %v5735 = vunpack.c.h.b16 %v4678
    %v5736 = vunpack.c.l.b16 %v4679
    %v5737 = vunpack.c.h.b16 %v4679
    %v5738 = vunpack.c.l.b16 %v4680
    %v5739 = vunpack.c.h.b16 %v4680
    %v5740 = vunpack.c.l.b16 %v4681
    %v5741 = vunpack.c.h.b16 %v4681
    %v5742 = vunpack.c.l.b16 %v4682
    %v5743 = vunpack.c.h.b16 %v4682
    %v5744 = vunpack.c.l.b16 %v4683
    %v5745 = vunpack.c.h.b16 %v4683
    %v5746 = vunpack.c.l.b16 %v4684
    %v5747 = vunpack.c.h.b16 %v4684
    %v5748 = vunpack.c.l.b16 %v4685
    %v5749 = vunpack.c.h.b16 %v4685
    %v5750 = vunpack.c.l.b16 %v4686
    %v5751 = vunpack.c.h.b16 %v4686
    %v5752 = vunpack.c.l.b16 %v4687
    %v5753 = vunpack.c.h.b16 %v4687
    %v5754 = vunpack.c.l.b16 %v4688
    %v5755 = vunpack.c.h.b16 %v4688
    %v5756 = vunpack.c.l.b16 %v4689
    %v5757 = vunpack.c.h.b16 %v4689
    %v5758 = vunpack.c.l.b16 %v4690
    %v5759 = vunpack.c.h.b16 %v4690
    %v5760 = vunpack.c.l.b16 %v4691
    %v5761 = vunpack.c.h.b16 %v4691
    %v5762 = vunpack.c.l.b16 %v4692
    %v5763 = vunpack.c.h.b16 %v4692
    %v5764 = vunpack.c.l.b16 %v4693
    %v5765 = vunpack.c.h.b16 %v4693
    %v5766 = vunpack.c.l.b16 %v4694
    %v5767 = vunpack.c.h.b16 %v4694
    %v5768 = vunpack.c.l.b16 %v4695
    %v5769 = vunpack.c.h.b16 %v4695
    %v5770 = vunpack.c.l.b16 %v4696
    %v5771 = vunpack.c.h.b16 %v4696
    %v5772 = vunpack.c.l.b16 %v4697
    %v5773 = vunpack.c.h.b16 %v4697
    %v5774 = vunpack.c.l.b16 %v4698
    %v5775 = vunpack.c.h.b16 %v4698
    %v5776 = vunpack.c.l.b16 %v4699
    %v5777 = vunpack.c.h.b16 %v4699
    %v5778 = vunpack.c.l.b16 %v4700
    %v5779 = vunpack.c.h.b16 %v4700
    %v5780 = vunpack.c.l.b16 %v4701
    %v5781 = vunpack.c.h.b16 %v4701
    %v5782 = vunpack.c.l.b16 %v4702
    %v5783 = vunpack.c.h.b16 %v4702
    %v5784 = vunpack.c.l.b16 %v4703
    %v5785 = vunpack.c.h.b16 %v4703
    %v5786 = vunpack.c.l.b16 %v4704
    %v5787 = vunpack.c.h.b16 %v4704
    %v5788 = vunpack.c.l.b16 %v4705
    %v5789 = vunpack.c.h.b16 %v4705
    %v5790 = vunpack.c.l.b16 %v4706
    %v5791 = vunpack.c.h.b16 %v4706
    %v5792 = vunpack.c.l.b16 %v4707
    %v5793 = vunpack.c.h.b16 %v4707
    %v5794 = vunpack.c.l.b16 %v4708
    %v5795 = vunpack.c.h.b16 %v4708
    %v5796 = vunpack.c.l.b16 %v4709
    %v5797 = vunpack.c.h.b16 %v4709
    %v5798 = vunpack.c.l.b16 %v4710
    %v5799 = vunpack.c.h.b16 %v4710
    %v5800 = vunpack.c.l.b16 %v4711
    %v5801 = vunpack.c.h.b16 %v4711
    %v5802 = vunpack.c.l.b16 %v4712
    %v5803 = vunpack.c.h.b16 %v4712
    %v5804 = vunpack.c.l.b16 %v4713
    %v5805 = vunpack.c.h.b16 %v4713
    %v5806 = vunpack.c.l.b16 %v4714
    %v5807 = vunpack.c.h.b16 %v4714
    %v5808 = vunpack.c.l.b16 %v4715
    %v5809 = vunpack.c.h.b16 %v4715
    %v5810 = vunpack.c.l.b16 %v4716
    %v5811 = vunpack.c.h.b16 %v4716
    %v5812 = vunpack.c.l.b16 %v4717
    %v5813 = vunpack.c.h.b16 %v4717
    %v5814 = vunpack.c.l.b16 %v4718
    %v5815 = vunpack.c.h.b16 %v4718
    %v5816 = vunpack.c.l.b16 %v4719
    %v5817 = vunpack.c.h.b16 %v4719
    %v5818 = vunpack.c.l.b16 %v4720
    %v5819 = vunpack.c.h.b16 %v4720
    %v5820 = vunpack.c.l.b16 %v4721
    %v5821 = vunpack.c.h.b16 %v4721
    %v5822 = vunpack.c.l.b16 %v4722
    %v5823 = vunpack.c.h.b16 %v4722
    %v5824 = vunpack.c.l.b16 %v4723
    %v5825 = vunpack.c.h.b16 %v4723
    %v5826 = vunpack.c.l.b16 %v4724
    %v5827 = vunpack.c.h.b16 %v4724
    %v5828 = vunpack.c.l.b16 %v4725
    %v5829 = vunpack.c.h.b16 %v4725
    %v5830 = vunpack.c.l.b16 %v4726
    %v5831 = vunpack.c.h.b16 %v4726
    %v5832 = vunpack.c.l.b16 %v4727
    %v5833 = vunpack.c.h.b16 %v4727
    %v5834 = vunpack.c.l.b16 %v4728
    %v5835 = vunpack.c.h.b16 %v4728
    %v5836 = vunpack.c.l.b16 %v4729
    %v5837 = vunpack.c.h.b16 %v4729
    %v5838 = vunpack.c.l.b16 %v4730
    %v5839 = vunpack.c.h.b16 %v4730
    %v5840 = vunpack.c.l.b16 %v4731
    %v5841 = vunpack.c.h.b16 %v4731
    %v5842 = vunpack.c.l.b16 %v4732
    %v5843 = vunpack.c.h.b16 %v4732
    %v5844 = vunpack.c.l.b16 %v4733
    %v5845 = vunpack.c.h.b16 %v4733
    %v5846 = vunpack.c.l.b16 %v4734
    %v5847 = vunpack.c.h.b16 %v4734
    %v5848 = vunpack.c.l.b16 %v4735
    %v5849 = vunpack.c.h.b16 %v4735
    %v5850 = vunpack.c.l.b16 %v4736
    %v5851 = vunpack.c.h.b16 %v4736
    %v5852 = vunpack.c.l.b16 %v4737
    %v5853 = vunpack.c.h.b16 %v4737
    %v5854 = vunpack.c.l.b16 %v4738
    %v5855 = vunpack.c.h.b16 %v4738
    %v5856 = vunpack.c.l.b16 %v4739
    %v5857 = vunpack.c.h.b16 %v4739
    %v5858 = vunpack.c.l.b16 %v4740
    %v5859 = vunpack.c.h.b16 %v4740
    %v5860 = vunpack.c.l.b16 %v4741
    %v5861 = vunpack.c.h.b16 %v4741
    %v5862 = vunpack.c.l.b16 %v4742
    %v5863 = vunpack.c.h.b16 %v4742
    %v5864 = vunpack.c.l.b16 %v4743
    %v5865 = vunpack.c.h.b16 %v4743
    %v5866 = vunpack.c.l.b16 %v4744
    %v5867 = vunpack.c.h.b16 %v4744
    %v5868 = vunpack.c.l.b16 %v4745
    %v5869 = vunpack.c.h.b16 %v4745
    %v5870 = vunpack.c.l.b16 %v4746
    %v5871 = vunpack.c.h.b16 %v4746
    %v5872 = vunpack.c.l.b16 %v4747
    %v5873 = vunpack.c.h.b16 %v4747
    %v5874 = vunpack.c.l.b16 %v4748
    %v5875 = vunpack.c.h.b16 %v4748
    %v5876 = vunpack.c.l.b16 %v4749
    %v5877 = vunpack.c.h.b16 %v4749
    %v5878 = vunpack.c.l.b16 %v4750
    %v5879 = vunpack.c.h.b16 %v4750
    %v5880 = vunpack.c.l.b16 %v4751
    %v5881 = vunpack.c.h.b16 %v4751
    %v5882 = vunpack.c.l.b16 %v4752
    %v5883 = vunpack.c.h.b16 %v4752
    %v5884 = vunpack.c.l.b16 %v4753
    %v5885 = vunpack.c.h.b16 %v4753
    %v5886 = vunpack.c.l.b16 %v4754
    %v5887 = vunpack.c.h.b16 %v4754
    %v5888 = vunpack.c.l.b16 %v4755
    %v5889 = vunpack.c.h.b16 %v4755
    %v5890 = vunpack.c.l.b16 %v4756
    %v5891 = vunpack.c.h.b16 %v4756
    %v5892 = vunpack.c.l.b16 %v4757
    %v5893 = vunpack.c.h.b16 %v4757
    %v5894 = vunpack.c.l.b16 %v4758
    %v5895 = vunpack.c.h.b16 %v4758
    %v5896 = vunpack.c.l.b16 %v4759
    %v5897 = vunpack.c.h.b16 %v4759
    %v5898 = vunpack.c.l.b16 %v4760
    %v5899 = vunpack.c.h.b16 %v4760
    %v5900 = vunpack.c.l.b16 %v4761
    %v5901 = vunpack.c.h.b16 %v4761
    %v5902 = vunpack.c.l.b16 %v4762
    %v5903 = vunpack.c.h.b16 %v4762
    %v5904 = vunpack.c.l.b16 %v4763
    %v5905 = vunpack.c.h.b16 %v4763
    %v5906 = vunpack.c.l.b16 %v4764
    %v5907 = vunpack.c.h.b16 %v4764
    %v5908 = vunpack.c.l.b16 %v4765
    %v5909 = vunpack.c.h.b16 %v4765
    %v5910 = vunpack.c.l.b16 %v4766
    %v5911 = vunpack.c.h.b16 %v4766
    %v5912 = vunpack.c.l.b16 %v4767
    %v5913 = vunpack.c.h.b16 %v4767
    %v5914 = vunpack.c.l.b16 %v4768
    %v5915 = vunpack.c.h.b16 %v4768
    %v5916 = vunpack.c.l.b16 %v4769
    %v5917 = vunpack.c.h.b16 %v4769
    %v5918 = vunpack.c.l.b16 %v4770
    %v5919 = vunpack.c.h.b16 %v4770
    %v5920 = vunpack.c.l.b16 %v4771
    %v5921 = vunpack.c.h.b16 %v4771
    %v5922 = vunpack.c.l.b16 %v4772
    %v5923 = vunpack.c.h.b16 %v4772
    %v5924 = vunpack.c.l.b16 %v4773
    %v5925 = vunpack.c.h.b16 %v4773
    %v5926 = vunpack.c.l.b16 %v4774
    %v5927 = vunpack.c.h.b16 %v4774
    %v5928 = vunpack.c.l.b16 %v4775
    %v5929 = vunpack.c.h.b16 %v4775
    %v5930 = vunpack.c.l.b16 %v4776
    %v5931 = vunpack.c.h.b16 %v4776
    %v5932 = vunpack.c.l.b16 %v4777
    %v5933 = vunpack.c.h.b16 %v4777
    %v5934 = vunpack.c.l.b16 %v4778
    %v5935 = vunpack.c.h.b16 %v4778
    %v5936 = vunpack.c.l.b16 %v4779
    %v5937 = vunpack.c.h.b16 %v4779
    %v5938 = vunpack.c.l.b16 %v4780
    %v5939 = vunpack.c.h.b16 %v4780
    %v5940 = vunpack.c.l.b16 %v4781
    %v5941 = vunpack.c.h.b16 %v4781
    %v5942 = vunpack.c.l.b16 %v4782
    %v5943 = vunpack.c.h.b16 %v4782
    %v5944 = vunpack.c.l.b16 %v4783
    %v5945 = vunpack.c.h.b16 %v4783
    %v5946 = vunpack.c.l.b16 %v4784
    %v5947 = vunpack.c.h.b16 %v4784
    %v5948 = vunpack.c.l.b16 %v4785
    %v5949 = vunpack.c.h.b16 %v4785
    %v5950 = vunpack.c.l.b16 %v4786
    %v5951 = vunpack.c.h.b16 %v4786
    %v5952 = vunpack.c.l.b16 %v4787
    %v5953 = vunpack.c.h.b16 %v4787
    %v5954 = vunpack.c.l.b16 %v4788
    %v5955 = vunpack.c.h.b16 %v4788
    %v5956 = vunpack.c.l.b16 %v4789
    %v5957 = vunpack.c.h.b16 %v4789
    %v5958 = vunpack.c.l.b16 %v4790
    %v5959 = vunpack.c.h.b16 %v4790
    %v5960 = vunpack.c.l.b16 %v4791
    %v5961 = vunpack.c.h.b16 %v4791
    %v5962 = vunpack.c.l.b16 %v4792
    %v5963 = vunpack.c.h.b16 %v4792
    %v5964 = vunpack.c.l.b16 %v4793
    %v5965 = vunpack.c.h.b16 %v4793
    %v5966 = vunpack.c.l.b16 %v4794
    %v5967 = vunpack.c.h.b16 %v4794
    %v5968 = vunpack.c.l.b16 %v4795
    %v5969 = vunpack.c.h.b16 %v4795
    %v5970 = vunpack.c.l.b16 %v4796
    %v5971 = vunpack.c.h.b16 %v4796
    %v5972 = vunpack.c.l.b16 %v4797
    %v5973 = vunpack.c.h.b16 %v4797
    %v5974 = vunpack.c.l.b16 %v4798
    %v5975 = vunpack.c.h.b16 %v4798
    %v5976 = vunpack.c.l.b16 %v4799
    %v5977 = vunpack.c.h.b16 %v4799
    %v5978 = vunpack.c.l.b16 %v4800
    %v5979 = vunpack.c.h.b16 %v4800
    %v5980 = vunpack.c.l.b16 %v4801
    %v5981 = vunpack.c.h.b16 %v4801
    %v5982 = vunpack.c.l.b16 %v4802
    %v5983 = vunpack.c.h.b16 %v4802
    %v5984 = vunpack.c.l.b16 %v4803
    %v5985 = vunpack.c.h.b16 %v4803
    %v5986 = vunpack.c.l.b16 %v4804
    %v5987 = vunpack.c.h.b16 %v4804
    %v5988 = vunpack.c.l.b16 %v4805
    %v5989 = vunpack.c.h.b16 %v4805
    %v5990 = vunpack.c.l.b16 %v4806
    %v5991 = vunpack.c.h.b16 %v4806
    %v5992 = vunpack.c.l.b16 %v4807
    %v5993 = vunpack.c.h.b16 %v4807
    %v5994 = vunpack.c.l.b16 %v4808
    %v5995 = vunpack.c.h.b16 %v4808
    %v5996 = vunpack.c.l.b16 %v4809
    %v5997 = vunpack.c.h.b16 %v4809
    %v5998 = vunpack.c.l.b16 %v4810
    %v5999 = vunpack.c.h.b16 %v4810
    %v6000 = vunpack.c.l.b16 %v4811
    %v6001 = vunpack.c.h.b16 %v4811
    %v6002 = vunpack.c.l.b16 %v4812
    %v6003 = vunpack.c.h.b16 %v4812
    %v6004 = vunpack.c.l.b16 %v4813
    %v6005 = vunpack.c.h.b16 %v4813
    %v6006 = vunpack.c.l.b16 %v4814
    %v6007 = vunpack.c.h.b16 %v4814
    %v6008 = vunpack.c.l.b16 %v4815
    %v6009 = vunpack.c.h.b16 %v4815
    %v6010 = vunpack.c.l.b16 %v4816
    %v6011 = vunpack.c.h.b16 %v4816
    %v6012 = vunpack.c.l.b16 %v4817
    %v6013 = vunpack.c.h.b16 %v4817
    %v6014 = vunpack.c.l.b16 %v4818
    %v6015 = vunpack.c.h.b16 %v4818
    %v6016 = vunpack.c.l.b16 %v4819
    %v6017 = vunpack.c.h.b16 %v4819
    %v6018 = vunpack.c.l.b16 %v4820
    %v6019 = vunpack.c.h.b16 %v4820
    %v6020 = vunpack.c.l.b16 %v4821
    %v6021 = vunpack.c.h.b16 %v4821
    %v6022 = vunpack.c.l.b16 %v4822
    %v6023 = vunpack.c.h.b16 %v4822
    %v6024 = vunpack.c.l.b16 %v4823
    %v6025 = vunpack.c.h.b16 %v4823
    %v6026 = vunpack.c.l.b16 %v4824
    %v6027 = vunpack.c.h.b16 %v4824
    %v6028 = vunpack.c.l.b16 %v4825
    %v6029 = vunpack.c.h.b16 %v4825
    %v6030 = vunpack.c.l.b16 %v4826
    %v6031 = vunpack.c.h.b16 %v4826
    %v6032 = vunpack.c.l.b16 %v4827
    %v6033 = vunpack.c.h.b16 %v4827
    %v6034 = vunpack.c.l.b16 %v4828
    %v6035 = vunpack.c.h.b16 %v4828
    %v6036 = vunpack.c.l.b16 %v4829
    %v6037 = vunpack.c.h.b16 %v4829
    %v6038 = vunpack.c.l.b16 %v4830
    %v6039 = vunpack.c.h.b16 %v4830
    %v6040 = vunpack.c.l.b16 %v4831
    %v6041 = vunpack.c.h.b16 %v4831
    %v6042 = vunpack.c.l.b16 %v4832
    %v6043 = vunpack.c.h.b16 %v4832
    %v6044 = vunpack.c.l.b16 %v4833
    %v6045 = vunpack.c.h.b16 %v4833
    %v6046 = vunpack.c.l.b16 %v4834
    %v6047 = vunpack.c.h.b16 %v4834
    %v6048 = vunpack.c.l.b16 %v4835
    %v6049 = vunpack.c.h.b16 %v4835
    %v6050 = vunpack.c.l.b16 %v4836
    %v6051 = vunpack.c.h.b16 %v4836
    %v6052 = vunpack.c.l.b16 %v4837
    %v6053 = vunpack.c.h.b16 %v4837
    %v6054 = vunpack.c.l.b16 %v4838
    %v6055 = vunpack.c.h.b16 %v4838
    %v6056 = vunpack.c.l.b16 %v4839
    %v6057 = vunpack.c.h.b16 %v4839
    %v6058 = vunpack.c.l.b16 %v4840
    %v6059 = vunpack.c.h.b16 %v4840
    %v6060 = vunpack.c.l.b16 %v4841
    %v6061 = vunpack.c.h.b16 %v4841
    %v6062 = vunpack.c.l.b16 %v4842
    %v6063 = vunpack.c.h.b16 %v4842
    %v6064 = vunpack.c.l.b16 %v4843
    %v6065 = vunpack.c.h.b16 %v4843
    %v6066 = vunpack.c.l.b16 %v4844
    %v6067 = vunpack.c.h.b16 %v4844
    %v6068 = vunpack.c.l.b16 %v4845
    %v6069 = vunpack.c.h.b16 %v4845
    %v6070 = vunpack.c.l.b16 %v4846
    %v6071 = vunpack.c.h.b16 %v4846
    %v6072 = vunpack.c.l.b16 %v4847
    %v6073 = vunpack.c.h.b16 %v4847
    %v6074 = vunpack.c.l.b16 %v4848
    %v6075 = vunpack.c.h.b16 %v4848
    %v6076 = vunpack.c.l.b16 %v4849
    %v6077 = vunpack.c.h.b16 %v4849
    %v6078 = vunpack.c.l.b16 %v4850
    %v6079 = vunpack.c.h.b16 %v4850
    %v6080 = vunpack.c.l.b16 %v4851
    %v6081 = vunpack.c.h.b16 %v4851
    %v6082 = vunpack.c.l.b16 %v4852
    %v6083 = vunpack.c.h.b16 %v4852
    %v6084 = vunpack.c.l.b16 %v4853
    %v6085 = vunpack.c.h.b16 %v4853
    %v6086 = vunpack.c.l.b16 %v4854
    %v6087 = vunpack.c.h.b16 %v4854
    %v6088 = vunpack.c.l.b16 %v4855
    %v6089 = vunpack.c.h.b16 %v4855
    %v6090 = vunpack.c.l.b16 %v4856
    %v6091 = vunpack.c.h.b16 %v4856
    %v6092 = vunpack.c.l.b16 %v4857
    %v6093 = vunpack.c.h.b16 %v4857
    %v6094 = vunpack.c.l.b16 %v4858
    %v6095 = vunpack.c.h.b16 %v4858
    %v6096 = vunpack.c.l.b16 %v4859
    %v6097 = vunpack.c.h.b16 %v4859
    %v6098 = vunpack.c.l.b16 %v4860
    %v6099 = vunpack.c.h.b16 %v4860
    %v6100 = vunpack.c.l.b16 %v4861
    %v6101 = vunpack.c.h.b16 %v4861
    %v6102 = vunpack.c.l.b16 %v4862
    %v6103 = vunpack.c.h.b16 %v4862
    %v6104 = vunpack.c.l.b16 %v4863
    %v6105 = vunpack.c.h.b16 %v4863
    %v6106 = vunpack.c.l.b16 %v4864
    %v6107 = vunpack.c.h.b16 %v4864
    %v6108 = vunpack.c.l.b16 %v4865
    %v6109 = vunpack.c.h.b16 %v4865
    %v6110 = vunpack.c.l.b16 %v4866
    %v6111 = vunpack.c.h.b16 %v4866
    %v6112 = vunpack.c.l.b16 %v4867
    %v6113 = vunpack.c.h.b16 %v4867
    %v6114 = vunpack.c.l.b16 %v4868
    %v6115 = vunpack.c.h.b16 %v4868
    %v6116 = vunpack.c.l.b16 %v4869
    %v6117 = vunpack.c.h.b16 %v4869
    %v6118 = vunpack.c.l.b16 %v4870
    %v6119 = vunpack.c.h.b16 %v4870
    %v6120 = vunpack.c.l.b16 %v4871
    %v6121 = vunpack.c.h.b16 %v4871
    %v6122 = vunpack.c.l.b16 %v4872
    %v6123 = vunpack.c.h.b16 %v4872
    %v6124 = vunpack.c.l.b16 %v4873
    %v6125 = vunpack.c.h.b16 %v4873
    %v6126 = vunpack.c.l.b16 %v4874
    %v6127 = vunpack.c.h.b16 %v4874
    %v6128 = vunpack.c.l.b16 %v4875
    %v6129 = vunpack.c.h.b16 %v4875
    %v6130 = vunpack.c.l.b16 %v4876
    %v6131 = vunpack.c.h.b16 %v4876
    %v6132 = vunpack.c.l.b16 %v4877
    %v6133 = vunpack.c.h.b16 %v4877
    %v6134 = vunpack.c.l.b16 %v4878
    %v6135 = vunpack.c.h.b16 %v4878
    %v6136 = vunpack.c.l.b16 %v4879
    %v6137 = vunpack.c.h.b16 %v4879
    %v6138 = vunpack.c.l.b16 %v4880
    %v6139 = vunpack.c.h.b16 %v4880
    %v6140 = vunpack.c.l.b16 %v4881
    %v6141 = vunpack.c.h.b16 %v4881
    %v6142 = vunpack.c.l.b16 %v4882
    %v6143 = vunpack.c.h.b16 %v4882
    %v6144 = vunpack.c.l.b16 %v4883
    %v6145 = vunpack.c.h.b16 %v4883
    %v6146 = vunpack.c.l.b16 %v4884
    %v6147 = vunpack.c.h.b16 %v4884
    %v6148 = vunpack.c.l.b16 %v4885
    %v6149 = vunpack.c.h.b16 %v4885
    %v6150 = vunpack.c.l.b16 %v4886
    %v6151 = vunpack.c.h.b16 %v4886
    %v6152 = vunpack.c.l.b16 %v4887
    %v6153 = vunpack.c.h.b16 %v4887
    %v6154 = vunpack.c.l.b16 %v4888
    %v6155 = vunpack.c.h.b16 %v4888
    %v6156 = vunpack.c.l.b16 %v4889
    %v6157 = vunpack.c.h.b16 %v4889
    %v6158 = vunpack.c.l.b16 %v4890
    %v6159 = vunpack.c.h.b16 %v4890
    %v6160 = vunpack.c.l.b16 %v4891
    %v6161 = vunpack.c.h.b16 %v4891
    %v6162 = vunpack.c.l.b16 %v4892
    %v6163 = vunpack.c.h.b16 %v4892
    %v6164 = vunpack.c.l.b16 %v4893
    %v6165 = vunpack.c.h.b16 %v4893
    %v6166 = vunpack.c.l.b16 %v4894
    %v6167 = vunpack.c.h.b16 %v4894
    %v6168 = vunpack.c.l.b16 %v4895
    %v6169 = vunpack.c.h.b16 %v4895
    %v6170 = vunpack.c.l.b16 %v4896
    %v6171 = vunpack.c.h.b16 %v4896
    %v6172 = vunpack.c.l.b16 %v4897
    %v6173 = vunpack.c.h.b16 %v4897
    %v6174 = vunpack.c.l.b16 %v4898
    %v6175 = vunpack.c.h.b16 %v4898
    %v6176 = vunpack.c.l.b16 %v4899
    %v6177 = vunpack.c.h.b16 %v4899
    %v6178 = vunpack.c.l.b16 %v4900
    %v6179 = vunpack.c.h.b16 %v4900
    %v6180 = vunpack.c.l.b16 %v4901
    %v6181 = vunpack.c.h.b16 %v4901
    %v6182 = vunpack.c.l.b16 %v4902
    %v6183 = vunpack.c.h.b16 %v4902
    %v6184 = vunpack.c.l.b16 %v4903
    %v6185 = vunpack.c.h.b16 %v4903
    %v6186 = vunpack.c.l.b16 %v4904
    %v6187 = vunpack.c.h.b16 %v4904
    %v6188 = vunpack.c.l.b16 %v4905
    %v6189 = vunpack.c.h.b16 %v4905
    %v6190 = vunpack.c.l.b16 %v4906
    %v6191 = vunpack.c.h.b16 %v4906
    %v6192 = vunpack.c.l.b16 %v4907
    %v6193 = vunpack.c.h.b16 %v4907
    %v6194 = vunpack.c.l.b16 %v4908
    %v6195 = vunpack.c.h.b16 %v4908
    %v6196 = vunpack.c.l.b16 %v4909
    %v6197 = vunpack.c.h.b16 %v4909
    %v6198 = vunpack.c.l.b16 %v4910
    %v6199 = vunpack.c.h.b16 %v4910
    %v6200 = vunpack.c.l.b16 %v4911
    %v6201 = vunpack.c.h.b16 %v4911
    %v6202 = vunpack.c.l.b16 %v4912
    %v6203 = vunpack.c.h.b16 %v4912
    %v6204 = vunpack.c.l.b16 %v4913
    %v6205 = vunpack.c.h.b16 %v4913
    %v6206 = vunpack.c.l.b16 %v4914
    %v6207 = vunpack.c.h.b16 %v4914
    %v6208 = vunpack.c.l.b16 %v4915
    %v6209 = vunpack.c.h.b16 %v4915
    %v6210 = vunpack.c.l.b16 %v4916
    %v6211 = vunpack.c.h.b16 %v4916
    %v6212 = vunpack.c.l.b16 %v4917
    %v6213 = vunpack.c.h.b16 %v4917
    %v6214 = vunpack.c.l.b16 %v4918
    %v6215 = vunpack.c.h.b16 %v4918
    %v6216 = vunpack.c.l.b16 %v4919
    %v6217 = vunpack.c.h.b16 %v4919
    %v6218 = vunpack.c.l.b16 %v4920
    %v6219 = vunpack.c.h.b16 %v4920
    %v6220 = vunpack.c.l.b16 %v4921
    %v6221 = vunpack.c.h.b16 %v4921
    %v6222 = vunpack.c.l.b16 %v4922
    %v6223 = vunpack.c.h.b16 %v4922
    %v6224 = vunpack.c.l.b16 %v4923
    %v6225 = vunpack.c.h.b16 %v4923
    %v6226 = vunpack.c.l.b16 %v4924
    %v6227 = vunpack.c.h.b16 %v4924
    %v6228 = vunpack.c.l.b16 %v4925
    %v6229 = vunpack.c.h.b16 %v4925
    %v6230 = vunpack.c.l.b16 %v4926
    %v6231 = vunpack.c.h.b16 %v4926
    %v6232 = vunpack.c.l.b16 %v4927
    %v6233 = vunpack.c.h.b16 %v4927
    %v6234 = vunpack.c.l.b16 %v4928
    %v6235 = vunpack.c.h.b16 %v4928
    %v6236 = vunpack.c.l.b16 %v4929
    %v6237 = vunpack.c.h.b16 %v4929
    %v6238 = vunpack.c.l.b16 %v4930
    %v6239 = vunpack.c.h.b16 %v4930
    %v6240 = vunpack.c.l.b16 %v4931
    %v6241 = vunpack.c.h.b16 %v4931
    %v6242 = vunpack.c.l.b16 %v4932
    %v6243 = vunpack.c.h.b16 %v4932
    %v6244 = vunpack.c.l.b16 %v4933
    %v6245 = vunpack.c.h.b16 %v4933
    %v6246 = vunpack.c.l.b16 %v4934
    %v6247 = vunpack.c.h.b16 %v4934
    %v6248 = vunpack.c.l.b16 %v4935
    %v6249 = vunpack.c.h.b16 %v4935
    %v6250 = vunpack.c.l.b16 %v4936
    %v6251 = vunpack.c.h.b16 %v4936
    %v6252 = vunpack.c.l.b16 %v4937
    %v6253 = vunpack.c.h.b16 %v4937
    %v6254 = vunpack.c.l.b16 %v4938
    %v6255 = vunpack.c.h.b16 %v4938
    %v6256 = vunpack.c.l.b16 %v4939
    %v6257 = vunpack.c.h.b16 %v4939
    %v6258 = vunpack.c.l.b16 %v4940
    %v6259 = vunpack.c.h.b16 %v4940
    %v6260 = vunpack.c.l.b16 %v4941
    %v6261 = vunpack.c.h.b16 %v4941
    %v6262 = vunpack.c.l.b16 %v4942
    %v6263 = vunpack.c.h.b16 %v4942
    %v6264 = vunpack.c.l.b16 %v4943
    %v6265 = vunpack.c.h.b16 %v4943
    %v6266 = vunpack.c.l.b16 %v4944
    %v6267 = vunpack.c.h.b16 %v4944
    %v6268 = vunpack.c.l.b16 %v4945
    %v6269 = vunpack.c.h.b16 %v4945
    %v6270 = vunpack.c.l.b16 %v4946
    %v6271 = vunpack.c.h.b16 %v4946
    %v6272 = vunpack.c.l.b16 %v4947
    %v6273 = vunpack.c.h.b16 %v4947
    %v6274 = vunpack.c.l.b16 %v4948
    %v6275 = vunpack.c.h.b16 %v4948
    %v6276 = vunpack.c.l.b16 %v4949
    %v6277 = vunpack.c.h.b16 %v4949
    %v6278 = vunpack.c.l.b16 %v4950
    %v6279 = vunpack.c.h.b16 %v4950
    %v6280 = vunpack.c.l.b16 %v4951
    %v6281 = vunpack.c.h.b16 %v4951
    %v6282 = vunpack.c.l.b16 %v4952
    %v6283 = vunpack.c.h.b16 %v4952
    %v6284 = vunpack.c.l.b16 %v4953
    %v6285 = vunpack.c.h.b16 %v4953
    %v6286 = vunpack.c.l.b16 %v4954
    %v6287 = vunpack.c.h.b16 %v4954
    %v6288 = vunpack.c.l.b16 %v4955
    %v6289 = vunpack.c.h.b16 %v4955
    %v6290 = vunpack.c.l.b16 %v4956
    %v6291 = vunpack.c.h.b16 %v4956
    %v6292 = vunpack.c.l.b16 %v4957
    %v6293 = vunpack.c.h.b16 %v4957
    %v6294 = vunpack.c.l.b16 %v4958
    %v6295 = vunpack.c.h.b16 %v4958
    %v6296 = vunpack.c.l.b16 %v4959
    %v6297 = vunpack.c.h.b16 %v4959
    %v6298 = vunpack.c.l.b16 %v4960
    %v6299 = vunpack.c.h.b16 %v4960
    %v6300 = vunpack.c.l.b16 %v4961
    %v6301 = vunpack.c.h.b16 %v4961
    %v6302 = vunpack.c.l.b16 %v4962
    %v6303 = vunpack.c.h.b16 %v4962
    %v6304 = vunpack.c.l.b16 %v4963
    %v6305 = vunpack.c.h.b16 %v4963
    %v6306 = vunpack.c.l.b16 %v4964
    %v6307 = vunpack.c.h.b16 %v4964
    %v6308 = vunpack.c.l.b16 %v4965
    %v6309 = vunpack.c.h.b16 %v4965
    %v6310 = vunpack.c.l.b16 %v4966
    %v6311 = vunpack.c.h.b16 %v4966
    %v6312 = vunpack.c.l.b16 %v4967
    %v6313 = vunpack.c.h.b16 %v4967
    %v6314 = vunpack.c.l.b16 %v4968
    %v6315 = vunpack.c.h.b16 %v4968
    %v6316 = vunpack.c.l.b16 %v4969
    %v6317 = vunpack.c.h.b16 %v4969
    %v6318 = vunpack.c.l.b16 %v4970
    %v6319 = vunpack.c.h.b16 %v4970
    %v6320 = vunpack.c.l.b16 %v4971
    %v6321 = vunpack.c.h.b16 %v4971
    %v6322 = vunpack.c.l.b16 %v4972
    %v6323 = vunpack.c.h.b16 %v4972
    %v6324 = vunpack.c.l.b16 %v4973
    %v6325 = vunpack.c.h.b16 %v4973
    %v6326 = vunpack.c.l.b16 %v4974
    %v6327 = vunpack.c.h.b16 %v4974
    %v6328 = vunpack.c.l.b16 %v4975
    %v6329 = vunpack.c.h.b16 %v4975
    %v6330 = vunpack.c.l.b16 %v4976
    %v6331 = vunpack.c.h.b16 %v4976
    %v6332 = vunpack.c.l.b16 %v4977
    %v6333 = vunpack.c.h.b16 %v4977
    %v6334 = vunpack.c.l.b16 %v4978
    %v6335 = vunpack.c.h.b16 %v4978
    %v6336 = vunpack.c.l.b16 %v4979
    %v6337 = vunpack.c.h.b16 %v4979
    %v6338 = vunpack.c.l.b16 %v4980
    %v6339 = vunpack.c.h.b16 %v4980
    %v6340 = vunpack.c.l.b16 %v4981
    %v6341 = vunpack.c.h.b16 %v4981
    %v6342 = vunpack.c.l.b16 %v4982
    %v6343 = vunpack.c.h.b16 %v4982
    %v6344 = vunpack.c.l.b16 %v4983
    %v6345 = vunpack.c.h.b16 %v4983
    %v6346 = vunpack.c.l.b16 %v4984
    %v6347 = vunpack.c.h.b16 %v4984
    %v6348 = vunpack.c.l.b16 %v4985
    %v6349 = vunpack.c.h.b16 %v4985
    %v6350 = vunpack.c.l.b16 %v4986
    %v6351 = vunpack.c.h.b16 %v4986
    %v6352 = vunpack.c.l.b16 %v4987
    %v6353 = vunpack.c.h.b16 %v4987
    %v6354 = vunpack.c.l.b16 %v4988
    %v6355 = vunpack.c.h.b16 %v4988
    %v6356 = vunpack.c.l.b16 %v4989
    %v6357 = vunpack.c.h.b16 %v4989
    %v6358 = vunpack.c.l.b16 %v4990
    %v6359 = vunpack.c.h.b16 %v4990
    %v6360 = vunpack.c.l.b16 %v4991
    %v6361 = vunpack.c.h.b16 %v4991
    %v6362 = vunpack.c.l.b16 %v4992
    %v6363 = vunpack.c.h.b16 %v4992
    %v6364 = vunpack.c.l.b16 %v4993
    %v6365 = vunpack.c.h.b16 %v4993
    %v6366 = vunpack.c.l.b16 %v4994
    %v6367 = vunpack.c.h.b16 %v4994
    %v6368 = vunpack.c.l.b16 %v4995
    %v6369 = vunpack.c.h.b16 %v4995
    %v6370 = vunpack.c.l.b16 %v4996
    %v6371 = vunpack.c.h.b16 %v4996
    %v6372 = vunpack.c.l.b16 %v4997
    %v6373 = vunpack.c.h.b16 %v4997
    %v6374 = vunpack.c.l.b16 %v4998
    %v6375 = vunpack.c.h.b16 %v4998
    %v6376 = vunpack.c.l.b16 %v4999
    %v6377 = vunpack.c.h.b16 %v4999
    %v6378 = vunpack.c.l.b16 %v5000
    %v6379 = vunpack.c.h.b16 %v5000
    %v6380 = vunpack.c.l.b16 %v5001
    %v6381 = vunpack.c.h.b16 %v5001
    %v6382 = vunpack.c.l.b16 %v5002
    %v6383 = vunpack.c.h.b16 %v5002
    %v6384 = vunpack.c.l.b16 %v5003
    %v6385 = vunpack.c.h.b16 %v5003
    %v6386 = vunpack.c.l.b16 %v5004
    %v6387 = vunpack.c.h.b16 %v5004
    %v6388 = vunpack.c.l.b16 %v5005
    %v6389 = vunpack.c.h.b16 %v5005
    %v6390 = vunpack.c.l.b16 %v5006
    %v6391 = vunpack.c.h.b16 %v5006
    %v6392 = vunpack.c.l.b16 %v5007
    %v6393 = vunpack.c.h.b16 %v5007
    %v6394 = vunpack.c.l.b16 %v5008
    %v6395 = vunpack.c.h.b16 %v5008
    %v6396 = vunpack.c.l.b16 %v5009
    %v6397 = vunpack.c.h.b16 %v5009
    %v6398 = vunpack.c.l.b16 %v5010
    %v6399 = vunpack.c.h.b16 %v5010
    %v6400 = vunpack.c.l.b16 %v5011
    %v6401 = vunpack.c.h.b16 %v5011
    %v6402 = vunpack.c.l.b16 %v5012
    %v6403 = vunpack.c.h.b16 %v5012
    %v6404 = vunpack.c.l.b16 %v5013
    %v6405 = vunpack.c.h.b16 %v5013
    %v6406 = vunpack.c.l.b16 %v5014
    %v6407 = vunpack.c.h.b16 %v5014
    %v6408 = vunpack.c.l.b16 %v5015
    %v6409 = vunpack.c.h.b16 %v5015
    %v6410 = vunpack.c.l.b16 %v5016
    %v6411 = vunpack.c.h.b16 %v5016
    %v6412 = vunpack.c.l.b16 %v5017
    %v6413 = vunpack.c.h.b16 %v5017
    %v6414 = vunpack.c.l.b16 %v5018
    %v6415 = vunpack.c.h.b16 %v5018
    %v6416 = vunpack.c.l.b16 %v5019
    %v6417 = vunpack.c.h.b16 %v5019
    %v6418 = vunpack.c.l.b16 %v5020
    %v6419 = vunpack.c.h.b16 %v5020
    %v6420 = vunpack.c.l.b16 %v5021
    %v6421 = vunpack.c.h.b16 %v5021
    %v6422 = vunpack.c.l.b16 %v5022
    %v6423 = vunpack.c.h.b16 %v5022
    %v6424 = vunpack.c.l.b16 %v5023
    %v6425 = vunpack.c.h.b16 %v5023
    %v6426 = vunpack.c.l.b16 %v5024
    %v6427 = vunpack.c.h.b16 %v5024
    %v6428 = vunpack.c.l.b16 %v5025
    %v6429 = vunpack.c.h.b16 %v5025
    %v6430 = vunpack.c.l.b16 %v5026
    %v6431 = vunpack.c.h.b16 %v5026
    %v6432 = vunpack.c.l.b16 %v5027
    %v6433 = vunpack.c.h.b16 %v5027
    %v6434 = vunpack.c.l.b16 %v5028
    %v6435 = vunpack.c.h.b16 %v5028
    %v6436 = vunpack.c.l.b16 %v5029
    %v6437 = vunpack.c.h.b16 %v5029
    %v6438 = vunpack.c.l.b16 %v5030
    %v6439 = vunpack.c.h.b16 %v5030
    %v6440 = vunpack.c.l.b16 %v5031
    %v6441 = vunpack.c.h.b16 %v5031
    %v6442 = vunpack.c.l.b16 %v5032
    %v6443 = vunpack.c.h.b16 %v5032
    %v6444 = vunpack.c.l.b16 %v5033
    %v6445 = vunpack.c.h.b16 %v5033
    %v6446 = vunpack.c.l.b16 %v5034
    %v6447 = vunpack.c.h.b16 %v5034
    %v6448 = vunpack.c.l.b16 %v5035
    %v6449 = vunpack.c.h.b16 %v5035
    %v6450 = vunpack.c.l.b16 %v5036
    %v6451 = vunpack.c.h.b16 %v5036
    %v6452 = vunpack.c.l.b16 %v5037
    %v6453 = vunpack.c.h.b16 %v5037
    %v6454 = vunpack.c.l.b16 %v5038
    %v6455 = vunpack.c.h.b16 %v5038
    %v6456 = vunpack.c.l.b16 %v5039
    %v6457 = vunpack.c.h.b16 %v5039
    %v6458 = vunpack.c.l.b16 %v5040
    %v6459 = vunpack.c.h.b16 %v5040
    %v6460 = vunpack.c.l.b16 %v5041
    %v6461 = vunpack.c.h.b16 %v5041
    %v6462 = vunpack.c.l.b16 %v5042
    %v6463 = vunpack.c.h.b16 %v5042
    %v6464 = vunpack.c.l.b16 %v5043
    %v6465 = vunpack.c.h.b16 %v5043
    %v6466 = vunpack.c.l.b16 %v5044
    %v6467 = vunpack.c.h.b16 %v5044
    %v6468 = vunpack.c.l.b16 %v5045
    %v6469 = vunpack.c.h.b16 %v5045
    %v6470 = vunpack.c.l.b16 %v5046
    %v6471 = vunpack.c.h.b16 %v5046
    %v6472 = vunpack.c.l.b16 %v5047
    %v6473 = vunpack.c.h.b16 %v5047
    %v6474 = vunpack.c.l.b16 %v5048
    %v6475 = vunpack.c.h.b16 %v5048
    %v6476 = vunpack.c.l.b16 %v5049
    %v6477 = vunpack.c.h.b16 %v5049
    %v6478 = vunpack.c.l.b16 %v5050
    %v6479 = vunpack.c.h.b16 %v5050
    %v6480 = vunpack.c.l.b16 %v5051
    %v6481 = vunpack.c.h.b16 %v5051
    %v6482 = vunpack.c.l.b16 %v5052
    %v6483 = vunpack.c.h.b16 %v5052
    %v6484 = vunpack.c.l.b16 %v5053
    %v6485 = vunpack.c.h.b16 %v5053
    %v6486 = vunpack.c.l.b16 %v5054
    %v6487 = vunpack.c.h.b16 %v5054
    %v6488 = vunpack.c.l.b16 %v5055
    %v6489 = vunpack.c.h.b16 %v5055
    %v6490 = vunpack.c.l.b16 %v5056
    %v6491 = vunpack.c.h.b16 %v5056
    %v6492 = vunpack.c.l.b16 %v5057
    %v6493 = vunpack.c.h.b16 %v5057
    %v6494 = vunpack.c.l.b16 %v5058
    %v6495 = vunpack.c.h.b16 %v5058
    %v6496 = vunpack.c.l.b16 %v5059
    %v6497 = vunpack.c.h.b16 %v5059
    %v6498 = vunpack.c.l.b16 %v5060
    %v6499 = vunpack.c.h.b16 %v5060
    %v6500 = vunpack.c.l.b16 %v5061
    %v6501 = vunpack.c.h.b16 %v5061
    %v6502 = vunpack.c.l.b16 %v5062
    %v6503 = vunpack.c.h.b16 %v5062
    %v6504 = vunpack.c.l.b16 %v5063
    %v6505 = vunpack.c.h.b16 %v5063
    %v6506 = vunpack.c.l.b16 %v5064
    %v6507 = vunpack.c.h.b16 %v5064
    %v6508 = vunpack.c.l.b16 %v5065
    %v6509 = vunpack.c.h.b16 %v5065
    %v6510 = vunpack.c.l.b16 %v5066
    %v6511 = vunpack.c.h.b16 %v5066
    %v6512 = vunpack.c.l.b16 %v5067
    %v6513 = vunpack.c.h.b16 %v5067
    %v6514 = vunpack.c.l.b16 %v5068
    %v6515 = vunpack.c.h.b16 %v5068
    %v6516 = vunpack.c.l.b16 %v5069
    %v6517 = vunpack.c.h.b16 %v5069
    %v6518 = vunpack.c.l.b16 %v5070
    %v6519 = vunpack.c.h.b16 %v5070
    %v6520 = vunpack.c.l.b16 %v5071
    %v6521 = vunpack.c.h.b16 %v5071
    %v6522 = vunpack.c.l.b16 %v5072
    %v6523 = vunpack.c.h.b16 %v5072
    %v6524 = vunpack.c.l.b16 %v5073
    %v6525 = vunpack.c.h.b16 %v5073
    %v6526 = vunpack.c.l.b16 %v5074
    %v6527 = vunpack.c.h.b16 %v5074
    %v6528 = vunpack.c.l.b16 %v5075
    %v6529 = vunpack.c.h.b16 %v5075
    %v6530 = vunpack.c.l.b16 %v5076
    %v6531 = vunpack.c.h.b16 %v5076
    %v6532 = vunpack.c.l.b16 %v5077
    %v6533 = vunpack.c.h.b16 %v5077
    %v6534 = vunpack.c.l.b16 %v5078
    %v6535 = vunpack.c.h.b16 %v5078
    %v6536 = vunpack.c.l.b16 %v5079
    %v6537 = vunpack.c.h.b16 %v5079
    %v6538 = vunpack.c.l.b16 %v5080
    %v6539 = vunpack.c.h.b16 %v5080
    %v6540 = vunpack.c.l.b16 %v5081
    %v6541 = vunpack.c.h.b16 %v5081
    %v6542 = vunpack.c.l.b16 %v5082
    %v6543 = vunpack.c.h.b16 %v5082
    %v6544 = vunpack.c.l.b16 %v5083
    %v6545 = vunpack.c.h.b16 %v5083
    %v6546 = vunpack.c.l.b16 %v5084
    %v6547 = vunpack.c.h.b16 %v5084
    %v6548 = vunpack.c.l.b16 %v5085
    %v6549 = vunpack.c.h.b16 %v5085
    %v6550 = vunpack.c.l.b16 %v5086
    %v6551 = vunpack.c.h.b16 %v5086
    %v6552 = vunpack.c.l.b16 %v5087
    %v6553 = vunpack.c.h.b16 %v5087
    %v6554 = vunpack.c.l.b16 %v5088
    %v6555 = vunpack.c.h.b16 %v5088
    %v6556 = vunpack.c.l.b16 %v5089
    %v6557 = vunpack.c.h.b16 %v5089
    %v6558 = vunpack.c.l.b16 %v5090
    %v6559 = vunpack.c.h.b16 %v5090
    %v6560 = vunpack.c.l.b16 %v5091
    %v6561 = vunpack.c.h.b16 %v5091
    %v6562 = vunpack.c.l.b16 %v5092
    %v6563 = vunpack.c.h.b16 %v5092
    %v6564 = vunpack.c.l.b16 %v5093
    %v6565 = vunpack.c.h.b16 %v5093
    %v6566 = vunpack.c.l.b16 %v5094
    %v6567 = vunpack.c.h.b16 %v5094
    %v6568 = vunpack.c.l.b16 %v5095
    %v6569 = vunpack.c.h.b16 %v5095
    %v6570 = vunpack.c.l.b16 %v5096
    %v6571 = vunpack.c.h.b16 %v5096
    %v6572 = vunpack.c.l.b16 %v5097
    %v6573 = vunpack.c.h.b16 %v5097
    %v6574 = vunpack.c.l.b16 %v5098
    %v6575 = vunpack.c.h.b16 %v5098
    %v6576 = vunpack.c.l.b16 %v5099
    %v6577 = vunpack.c.h.b16 %v5099
    %v6578 = vunpack.c.l.b16 %v5100
    %v6579 = vunpack.c.h.b16 %v5100
    %v6580 = vunpack.c.l.b16 %v5101
    %v6581 = vunpack.c.h.b16 %v5101
    %v6582 = vunpack.c.l.b16 %v5102
    %v6583 = vunpack.c.h.b16 %v5102
    %v6584 = vunpack.c.l.b16 %v5103
    %v6585 = vunpack.c.h.b16 %v5103
    %v6586 = vunpack.c.l.b16 %v5104
    %v6587 = vunpack.c.h.b16 %v5104
    %v6588 = vunpack.c.l.b16 %v5105
    %v6589 = vunpack.c.h.b16 %v5105
    %v6590 = vunpack.c.l.b16 %v5106
    %v6591 = vunpack.c.h.b16 %v5106
    %v6592 = vunpack.c.l.b16 %v5107
    %v6593 = vunpack.c.h.b16 %v5107
    %v6594 = vunpack.c.l.b16 %v5108
    %v6595 = vunpack.c.h.b16 %v5108
    %v6596 = vunpack.c.l.b16 %v5109
    %v6597 = vunpack.c.h.b16 %v5109
    %v6598 = vunpack.c.l.b16 %v5110
    %v6599 = vunpack.c.h.b16 %v5110
    %v6600 = vunpack.c.l.b16 %v5111
    %v6601 = vunpack.c.h.b16 %v5111
    %v6602 = vunpack.c.l.b16 %v5112
    %v6603 = vunpack.c.h.b16 %v5112
    %v6604 = vunpack.c.l.b16 %v5113
    %v6605 = vunpack.c.h.b16 %v5113
    %v6606 = vunpack.c.l.b16 %v5114
    %v6607 = vunpack.c.h.b16 %v5114
    %v6608 = vunpack.c.l.b16 %v5115
    %v6609 = vunpack.c.h.b16 %v5115
    %v6610 = vunpack.c.l.b16 %v5116
    %v6611 = vunpack.c.h.b16 %v5116
    %v6612 = vunpack.c.l.b16 %v5117
    %v6613 = vunpack.c.h.b16 %v5117
    %v6614 = vunpack.c.l.b16 %v5118
    %v6615 = vunpack.c.h.b16 %v5118
    %v6616 = vunpack.c.l.b16 %v5119
    %v6617 = vunpack.c.h.b16 %v5119
    %v6618 = vunpack.c.l.b16 %v5120
    %v6619 = vunpack.c.h.b16 %v5120
    %v6620 = vunpack.c.l.b16 %v5121
    %v6621 = vunpack.c.h.b16 %v5121
    %v6622 = vunpack.c.l.b16 %v5122
    %v6623 = vunpack.c.h.b16 %v5122
    %v6624 = vunpack.c.l.b16 %v5123
    %v6625 = vunpack.c.h.b16 %v5123
    %v6626 = vunpack.c.l.b16 %v5124
    %v6627 = vunpack.c.h.b16 %v5124
    %v6628 = vunpack.c.l.b16 %v5125
    %v6629 = vunpack.c.h.b16 %v5125
    %v6630 = vunpack.c.l.b16 %v5126
    %v6631 = vunpack.c.h.b16 %v5126
    %v6632 = vunpack.c.l.b16 %v5127
    %v6633 = vunpack.c.h.b16 %v5127
    %v6634 = vunpack.c.l.b16 %v5128
    %v6635 = vunpack.c.h.b16 %v5128
    %v6636 = vunpack.c.l.b16 %v5129
    %v6637 = vunpack.c.h.b16 %v5129
    %v6638 = vunpack.c.l.b16 %v5130
    %v6639 = vunpack.c.h.b16 %v5130
    %v6640 = vunpack.c.l.b16 %v5131
    %v6641 = vunpack.c.h.b16 %v5131
    %v6642 = vunpack.c.l.b16 %v5132
    %v6643 = vunpack.c.h.b16 %v5132
    %v6644 = vunpack.c.l.b16 %v5133
    %v6645 = vunpack.c.h.b16 %v5133
    %v6646 = vunpack.c.l.b16 %v5134
    %v6647 = vunpack.c.h.b16 %v5134
    %v6648 = vunpack.c.l.b16 %v5135
    %v6649 = vunpack.c.h.b16 %v5135
    %v6650 = vunpack.c.l.b16 %v5136
    %v6651 = vunpack.c.h.b16 %v5136
    %v6652 = vunpack.c.l.b16 %v5137
    %v6653 = vunpack.c.h.b16 %v5137
    %v6654 = vunpack.c.l.b16 %v5138
    %v6655 = vunpack.c.h.b16 %v5138
    %v6656 = vunpack.c.l.b16 %v5139
    %v6657 = vunpack.c.h.b16 %v5139
    %v6658 = vunpack.c.l.b16 %v5140
    %v6659 = vunpack.c.h.b16 %v5140
    %v6660 = vunpack.c.l.b16 %v5141
    %v6661 = vunpack.c.h.b16 %v5141
    %v6662 = vunpack.c.l.b16 %v5142
    %v6663 = vunpack.c.h.b16 %v5142
    %v6664 = vunpack.c.l.b16 %v5143
    %v6665 = vunpack.c.h.b16 %v5143
    %v6666 = vunpack.c.l.b16 %v5144
    %v6667 = vunpack.c.h.b16 %v5144
    %v6668 = vunpack.c.l.b16 %v5145
    %v6669 = vunpack.c.h.b16 %v5145
    %v6670 = vunpack.c.l.b16 %v5146
    %v6671 = vunpack.c.h.b16 %v5146
    %v6672 = vunpack.c.l.b16 %v5147
    %v6673 = vunpack.c.h.b16 %v5147
    %v6674 = vunpack.c.l.b16 %v5148
    %v6675 = vunpack.c.h.b16 %v5148
    %v6676 = vunpack.c.l.b16 %v5149
    %v6677 = vunpack.c.h.b16 %v5149
    %v6678 = vunpack.c.l.b16 %v5150
    %v6679 = vunpack.c.h.b16 %v5150
    %v6680 = vunpack.c.l.b16 %v5151
    %v6681 = vunpack.c.h.b16 %v5151
    %v6682 = vunpack.c.l.b16 %v5152
    %v6683 = vunpack.c.h.b16 %v5152
    %v6684 = vunpack.c.l.b16 %v5153
    %v6685 = vunpack.c.h.b16 %v5153
    %v6686 = vunpack.c.l.b16 %v5154
    %v6687 = vunpack.c.h.b16 %v5154
    %v6688 = vunpack.c.l.b16 %v5155
    %v6689 = vunpack.c.h.b16 %v5155
    %v6690 = vunpack.c.l.b16 %v5156
    %v6691 = vunpack.c.h.b16 %v5156
    %v6692 = vunpack.c.l.b16 %v5157
    %v6693 = vunpack.c.h.b16 %v5157
    %v6694 = vpack.c.b16 %v5672, %v5670
    %v6695 = vpack.c.b16 %v5673, %v5671
    %v6696 = vpack.c.b16 %v5676, %v5674
    %v6697 = vpack.c.b16 %v5677, %v5675
    %v6698 = vpack.c.b16 %v5680, %v5678
    %v6699 = vpack.c.b16 %v5681, %v5679
    %v6700 = vpack.c.b16 %v5684, %v5682
    %v6701 = vpack.c.b16 %v5685, %v5683
    %v6702 = vpack.c.b16 %v5688, %v5686
    %v6703 = vpack.c.b16 %v5689, %v5687
    %v6704 = vpack.c.b16 %v5692, %v5690
    %v6705 = vpack.c.b16 %v5693, %v5691
    %v6706 = vpack.c.b16 %v5696, %v5694
    %v6707 = vpack.c.b16 %v5697, %v5695
    %v6708 = vpack.c.b16 %v5700, %v5698
    %v6709 = vpack.c.b16 %v5701, %v5699
    %v6710 = vpack.c.b16 %v5704, %v5702
    %v6711 = vpack.c.b16 %v5705, %v5703
    %v6712 = vpack.c.b16 %v5708, %v5706
    %v6713 = vpack.c.b16 %v5709, %v5707
    %v6714 = vpack.c.b16 %v5712, %v5710
    %v6715 = vpack.c.b16 %v5713, %v5711
    %v6716 = vpack.c.b16 %v5716, %v5714
    %v6717 = vpack.c.b16 %v5717, %v5715
    %v6718 = vpack.c.b16 %v5720, %v5718
    %v6719 = vpack.c.b16 %v5721, %v5719
    %v6720 = vpack.c.b16 %v5724, %v5722
    %v6721 = vpack.c.b16 %v5725, %v5723
    %v6722 = vpack.c.b16 %v5728, %v5726
    %v6723 = vpack.c.b16 %v5729, %v5727
    %v6724 = vpack.c.b16 %v5732, %v5730
    %v6725 = vpack.c.b16 %v5733, %v5731
    %v6726 = vpack.c.b16 %v5736, %v5734
    %v6727 = vpack.c.b16 %v5737, %v5735
    %v6728 = vpack.c.b16 %v5740, %v5738
    %v6729 = vpack.c.b16 %v5741, %v5739
    %v6730 = vpack.c.b16 %v5744, %v5742
    %v6731 = vpack.c.b16 %v5745, %v5743
    %v6732 = vpack.c.b16 %v5748, %v5746
    %v6733 = vpack.c.b16 %v5749, %v5747
    %v6734 = vpack.c.b16 %v5752, %v5750
    %v6735 = vpack.c.b16 %v5753, %v5751
    %v6736 = vpack.c.b16 %v5756, %v5754
    %v6737 = vpack.c.b16 %v5757, %v5755
    %v6738 = vpack.c.b16 %v5760, %v5758
    %v6739 = vpack.c.b16 %v5761, %v5759
    %v6740 = vpack.c.b16 %v5764, %v5762
    %v6741 = vpack.c.b16 %v5765, %v5763
    %v6742 = vpack.c.b16 %v5768, %v5766
    %v6743 = vpack.c.b16 %v5769, %v5767
    %v6744 = vpack.c.b16 %v5772, %v5770
    %v6745 = vpack.c.b16 %v5773, %v5771
    %v6746 = vpack.c.b16 %v5776, %v5774
    %v6747 = vpack.c.b16 %v5777, %v5775
    %v6748 = vpack.c.b16 %v5780, %v5778
    %v6749 = vpack.c.b16 %v5781, %v5779
    %v6750 = vpack.c.b16 %v5784, %v5782
    %v6751 = vpack.c.b16 %v5785, %v5783
    %v6752 = vpack.c.b16 %v5788, %v5786
    %v6753 = vpack.c.b16 %v5789, %v5787
    %v6754 = vpack.c.b16 %v5792, %v5790
    %v6755 = vpack.c.b16 %v5793, %v5791
    %v6756 = vpack.c.b16 %v5796, %v5794
    %v6757 = vpack.c.b16 %v5797, %v5795
    %v6758 = vpack.c.b16 %v5800, %v5798
    %v6759 = vpack.c.b16 %v5801, %v5799
    %v6760 = vpack.c.b16 %v5804, %v5802
    %v6761 = vpack.c.b16 %v5805, %v5803
    %v6762 = vpack.c.b16 %v5808, %v5806
    %v6763 = vpack.c.b16 %v5809, %v5807
    %v6764 = vpack.c.b16 %v5812, %v5810
    %v6765 = vpack.c.b16 %v5813, %v5811
    %v6766 = vpack.c.b16 %v5816, %v5814
    %v6767 = vpack.c.b16 %v5817, %v5815
    %v6768 = vpack.c.b16 %v5820, %v5818
    %v6769 = vpack.c.b16 %v5821, %v5819
    %v6770 = vpack.c.b16 %v5824, %v5822
    %v6771 = vpack.c.b16 %v5825, %v5823
    %v6772 = vpack.c.b16 %v5828, %v5826
    %v6773 = vpack.c.b16 %v5829, %v5827
    %v6774 = vpack.c.b16 %v5832, %v5830
    %v6775 = vpack.c.b16 %v5833, %v5831
    %v6776 = vpack.c.b16 %v5836, %v5834
    %v6777 = vpack.c.b16 %v5837, %v5835
    %v6778 = vpack.c.b16 %v5840, %v5838
    %v6779 = vpack.c.b16 %v5841, %v5839
    %v6780 = vpack.c.b16 %v5844, %v5842
    %v6781 = vpack.c.b16 %v5845, %v5843
    %v6782 = vpack.c.b16 %v5848, %v5846
    %v6783 = vpack.c.b16 %v5849, %v5847
    %v6784 = vpack.c.b16 %v5852, %v5850
    %v6785 = vpack.c.b16 %v5853, %v5851
    %v6786 = vpack.c.b16 %v5856, %v5854
    %v6787 = vpack.c.b16 %v5857, %v5855
    %v6788 = vpack.c.b16 %v5860, %v5858
    %v6789 = vpack.c.b16 %v5861, %v5859
    %v6790 = vpack.c.b16 %v5864, %v5862
    %v6791 = vpack.c.b16 %v5865, %v5863
    %v6792 = vpack.c.b16 %v5868, %v5866
    %v6793 = vpack.c.b16 %v5869, %v5867
    %v6794 = vpack.c.b16 %v5872, %v5870
    %v6795 = vpack.c.b16 %v5873, %v5871
    %v6796 = vpack.c.b16 %v5876, %v5874
    %v6797 = vpack.c.b16 %v5877, %v5875
    %v6798 = vpack.c.b16 %v5880, %v5878
    %v6799 = vpack.c.b16 %v5881, %v5879
    %v6800 = vpack.c.b16 %v5884, %v5882
    %v6801 = vpack.c.b16 %v5885, %v5883
    %v6802 = vpack.c.b16 %v5888, %v5886
    %v6803 = vpack.c.b16 %v5889, %v5887
    %v6804 = vpack.c.b16 %v5892, %v5890
    %v6805 = vpack.c.b16 %v5893, %v5891
    %v6806 = vpack.c.b16 %v5896, %v5894
    %v6807 = vpack.c.b16 %v5897, %v5895
    %v6808 = vpack.c.b16 %v5900, %v5898
    %v6809 = vpack.c.b16 %v5901, %v5899
    %v6810 = vpack.c.b16 %v5904, %v5902
    %v6811 = vpack.c.b16 %v5905, %v5903
    %v6812 = vpack.c.b16 %v5908, %v5906
    %v6813 = vpack.c.b16 %v5909, %v5907
    %v6814 = vpack.c.b16 %v5912, %v5910
    %v6815 = vpack.c.b16 %v5913, %v5911
    %v6816 = vpack.c.b16 %v5916, %v5914
    %v6817 = vpack.c.b16 %v5917, %v5915
    %v6818 = vpack.c.b16 %v5920, %v5918
    %v6819 = vpack.c.b16 %v5921, %v5919
    %v6820 = vpack.c.b16 %v5924, %v5922
    %v6821 = vpack.c.b16 %v5925, %v5923
    %v6822 = vpack.c.b16 %v5928, %v5926
    %v6823 = vpack.c.b16 %v5929, %v5927
    %v6824 = vpack.c.b16 %v5932, %v5930
    %v6825 = vpack.c.b16 %v5933, %v5931
    %v6826 = vpack.c.b16 %v5936, %v5934
    %v6827 = vpack.c.b16 %v5937, %v5935
    %v6828 = vpack.c.b16 %v5940, %v5938
    %v6829 = vpack.c.b16 %v5941, %v5939
    %v6830 = vpack.c.b16 %v5944, %v5942
    %v6831 = vpack.c.b16 %v5945, %v5943
    %v6832 = vpack.c.b16 %v5948, %v5946
    %v6833 = vpack.c.b16 %v5949, %v5947
    %v6834 = vpack.c.b16 %v5952, %v5950
    %v6835 = vpack.c.b16 %v5953, %v5951
    %v6836 = vpack.c.b16 %v5956, %v5954
    %v6837 = vpack.c.b16 %v5957, %v5955
    %v6838 = vpack.c.b16 %v5960, %v5958
    %v6839 = vpack.c.b16 %v5961, %v5959
    %v6840 = vpack.c.b16 %v5964, %v5962
    %v6841 = vpack.c.b16 %v5965, %v5963
    %v6842 = vpack.c.b16 %v5968, %v5966
    %v6843 = vpack.c.b16 %v5969, %v5967
    %v6844 = vpack.c.b16 %v5972, %v5970
    %v6845 = vpack.c.b16 %v5973, %v5971
    %v6846 = vpack.c.b16 %v5976, %v5974
    %v6847 = vpack.c.b16 %v5977, %v5975
    %v6848 = vpack.c.b16 %v5980, %v5978
    %v6849 = vpack.c.b16 %v5981, %v5979
    %v6850 = vpack.c.b16 %v5984, %v5982
    %v6851 = vpack.c.b16 %v5985, %v5983
    %v6852 = vpack.c.b16 %v5988, %v5986
    %v6853 = vpack.c.b16 %v5989, %v5987
    %v6854 = vpack.c.b16 %v5992, %v5990
    %v6855 = vpack.c.b16 %v5993, %v5991
    %v6856 = vpack.c.b16 %v5996, %v5994
    %v6857 = vpack.c.b16 %v5997, %v5995
    %v6858 = vpack.c.b16 %v6000, %v5998
    %v6859 = vpack.c.b16 %v6001, %v5999
    %v6860 = vpack.c.b16 %v6004, %v6002
    %v6861 = vpack.c.b16 %v6005, %v6003
    %v6862 = vpack.c.b16 %v6008, %v6006
    %v6863 = vpack.c.b16 %v6009, %v6007
    %v6864 = vpack.c.b16 %v6012, %v6010
    %v6865 = vpack.c.b16 %v6013, %v6011
    %v6866 = vpack.c.b16 %v6016, %v6014
    %v6867 = vpack.c.b16 %v6017, %v6015
    %v6868 = vpack.c.b16 %v6020, %v6018
    %v6869 = vpack.c.b16 %v6021, %v6019
    %v6870 = vpack.c.b16 %v6024, %v6022
    %v6871 = vpack.c.b16 %v6025, %v6023
    %v6872 = vpack.c.b16 %v6028, %v6026
    %v6873 = vpack.c.b16 %v6029, %v6027
    %v6874 = vpack.c.b16 %v6032, %v6030
    %v6875 = vpack.c.b16 %v6033, %v6031
    %v6876 = vpack.c.b16 %v6036, %v6034
    %v6877 = vpack.c.b16 %v6037, %v6035
    %v6878 = vpack.c.b16 %v6040, %v6038
    %v6879 = vpack.c.b16 %v6041, %v6039
    %v6880 = vpack.c.b16 %v6044, %v6042
    %v6881 = vpack.c.b16 %v6045, %v6043
    %v6882 = vpack.c.b16 %v6048, %v6046
    %v6883 = vpack.c.b16 %v6049, %v6047
    %v6884 = vpack.c.b16 %v6052, %v6050
    %v6885 = vpack.c.b16 %v6053, %v6051
    %v6886 = vpack.c.b16 %v6056, %v6054
    %v6887 = vpack.c.b16 %v6057, %v6055
    %v6888 = vpack.c.b16 %v6060, %v6058
    %v6889 = vpack.c.b16 %v6061, %v6059
    %v6890 = vpack.c.b16 %v6064, %v6062
    %v6891 = vpack.c.b16 %v6065, %v6063
    %v6892 = vpack.c.b16 %v6068, %v6066
    %v6893 = vpack.c.b16 %v6069, %v6067
    %v6894 = vpack.c.b16 %v6072, %v6070
    %v6895 = vpack.c.b16 %v6073, %v6071
    %v6896 = vpack.c.b16 %v6076, %v6074
    %v6897 = vpack.c.b16 %v6077, %v6075
    %v6898 = vpack.c.b16 %v6080, %v6078
    %v6899 = vpack.c.b16 %v6081, %v6079
    %v6900 = vpack.c.b16 %v6084, %v6082
    %v6901 = vpack.c.b16 %v6085, %v6083
    %v6902 = vpack.c.b16 %v6088, %v6086
    %v6903 = vpack.c.b16 %v6089, %v6087
    %v6904 = vpack.c.b16 %v6092, %v6090
    %v6905 = vpack.c.b16 %v6093, %v6091
    %v6906 = vpack.c.b16 %v6096, %v6094
    %v6907 = vpack.c.b16 %v6097, %v6095
    %v6908 = vpack.c.b16 %v6100, %v6098
    %v6909 = vpack.c.b16 %v6101, %v6099
    %v6910 = vpack.c.b16 %v6104, %v6102
    %v6911 = vpack.c.b16 %v6105, %v6103
    %v6912 = vpack.c.b16 %v6108, %v6106
    %v6913 = vpack.c.b16 %v6109, %v6107
    %v6914 = vpack.c.b16 %v6112, %v6110
    %v6915 = vpack.c.b16 %v6113, %v6111
    %v6916 = vpack.c.b16 %v6116, %v6114
    %v6917 = vpack.c.b16 %v6117, %v6115
    %v6918 = vpack.c.b16 %v6120, %v6118
    %v6919 = vpack.c.b16 %v6121, %v6119
    %v6920 = vpack.c.b16 %v6124, %v6122
    %v6921 = vpack.c.b16 %v6125, %v6123
    %v6922 = vpack.c.b16 %v6128, %v6126
    %v6923 = vpack.c.b16 %v6129, %v6127
    %v6924 = vpack.c.b16 %v6132, %v6130
    %v6925 = vpack.c.b16 %v6133, %v6131
    %v6926 = vpack.c.b16 %v6136, %v6134
    %v6927 = vpack.c.b16 %v6137, %v6135
    %v6928 = vpack.c.b16 %v6140, %v6138
    %v6929 = vpack.c.b16 %v6141, %v6139
    %v6930 = vpack.c.b16 %v6144, %v6142
    %v6931 = vpack.c.b16 %v6145, %v6143
    %v6932 = vpack.c.b16 %v6148, %v6146
    %v6933 = vpack.c.b16 %v6149, %v6147
    %v6934 = vpack.c.b16 %v6152, %v6150
    %v6935 = vpack.c.b16 %v6153, %v6151
    %v6936 = vpack.c.b16 %v6156, %v6154
    %v6937 = vpack.c.b16 %v6157, %v6155
    %v6938 = vpack.c.b16 %v6160, %v6158
    %v6939 = vpack.c.b16 %v6161, %v6159
    %v6940 = vpack.c.b16 %v6164, %v6162
    %v6941 = vpack.c.b16 %v6165, %v6163
    %v6942 = vpack.c.b16 %v6168, %v6166
    %v6943 = vpack.c.b16 %v6169, %v6167
    %v6944 = vpack.c.b16 %v6172, %v6170
    %v6945 = vpack.c.b16 %v6173, %v6171
    %v6946 = vpack.c.b16 %v6176, %v6174
    %v6947 = vpack.c.b16 %v6177, %v6175
    %v6948 = vpack.c.b16 %v6180, %v6178
    %v6949 = vpack.c.b16 %v6181, %v6179
    %v6950 = vpack.c.b16 %v6184, %v6182
    %v6951 = vpack.c.b16 %v6185, %v6183
    %v6952 = vpack.c.b16 %v6188, %v6186
    %v6953 = vpack.c.b16 %v6189, %v6187
    %v6954 = vpack.c.b16 %v6192, %v6190
    %v6955 = vpack.c.b16 %v6193, %v6191
    %v6956 = vpack.c.b16 %v6196, %v6194
    %v6957 = vpack.c.b16 %v6197, %v6195
    %v6958 = vpack.c.b16 %v6200, %v6198
    %v6959 = vpack.c.b16 %v6201, %v6199
    %v6960 = vpack.c.b16 %v6204, %v6202
    %v6961 = vpack.c.b16 %v6205, %v6203
    %v6962 = vpack.c.b16 %v6208, %v6206
    %v6963 = vpack.c.b16 %v6209, %v6207
    %v6964 = vpack.c.b16 %v6212, %v6210
    %v6965 = vpack.c.b16 %v6213, %v6211
    %v6966 = vpack.c.b16 %v6216, %v6214
    %v6967 = vpack.c.b16 %v6217, %v6215
    %v6968 = vpack.c.b16 %v6220, %v6218
    %v6969 = vpack.c.b16 %v6221, %v6219
    %v6970 = vpack.c.b16 %v6224, %v6222
    %v6971 = vpack.c.b16 %v6225, %v6223
    %v6972 = vpack.c.b16 %v6228, %v6226
    %v6973 = vpack.c.b16 %v6229, %v6227
    %v6974 = vpack.c.b16 %v6232, %v6230
    %v6975 = vpack.c.b16 %v6233, %v6231
    %v6976 = vpack.c.b16 %v6236, %v6234
    %v6977 = vpack.c.b16 %v6237, %v6235
    %v6978 = vpack.c.b16 %v6240, %v6238
    %v6979 = vpack.c.b16 %v6241, %v6239
    %v6980 = vpack.c.b16 %v6244, %v6242
    %v6981 = vpack.c.b16 %v6245, %v6243
    %v6982 = vpack.c.b16 %v6248, %v6246
    %v6983 = vpack.c.b16 %v6249, %v6247
    %v6984 = vpack.c.b16 %v6252, %v6250
    %v6985 = vpack.c.b16 %v6253, %v6251
    %v6986 = vpack.c.b16 %v6256, %v6254
    %v6987 = vpack.c.b16 %v6257, %v6255
    %v6988 = vpack.c.b16 %v6260, %v6258
    %v6989 = vpack.c.b16 %v6261, %v6259
    %v6990 = vpack.c.b16 %v6264, %v6262
    %v6991 = vpack.c.b16 %v6265, %v6263
    %v6992 = vpack.c.b16 %v6268, %v6266
    %v6993 = vpack.c.b16 %v6269, %v6267
    %v6994 = vpack.c.b16 %v6272, %v6270
    %v6995 = vpack.c.b16 %v6273, %v6271
    %v6996 = vpack.c.b16 %v6276, %v6274
    %v6997 = vpack.c.b16 %v6277, %v6275
    %v6998 = vpack.c.b16 %v6280, %v6278
    %v6999 = vpack.c.b16 %v6281, %v6279
    %v7000 = vpack.c.b16 %v6284, %v6282
    %v7001 = vpack.c.b16 %v6285, %v6283
    %v7002 = vpack.c.b16 %v6288, %v6286
    %v7003 = vpack.c.b16 %v6289, %v6287
    %v7004 = vpack.c.b16 %v6292, %v6290
    %v7005 = vpack.c.b16 %v6293, %v6291
    %v7006 = vpack.c.b16 %v6296, %v6294
    %v7007 = vpack.c.b16 %v6297, %v6295
    %v7008 = vpack.c.b16 %v6300, %v6298
    %v7009 = vpack.c.b16 %v6301, %v6299
    %v7010 = vpack.c.b16 %v6304, %v6302
    %v7011 = vpack.c.b16 %v6305, %v6303
    %v7012 = vpack.c.b16 %v6308, %v6306
    %v7013 = vpack.c.b16 %v6309, %v6307
    %v7014 = vpack.c.b16 %v6312, %v6310
    %v7015 = vpack.c.b16 %v6313, %v6311
    %v7016 = vpack.c.b16 %v6316, %v6314
    %v7017 = vpack.c.b16 %v6317, %v6315
    %v7018 = vpack.c.b16 %v6320, %v6318
    %v7019 = vpack.c.b16 %v6321, %v6319
    %v7020 = vpack.c.b16 %v6324, %v6322
    %v7021 = vpack.c.b16 %v6325, %v6323
    %v7022 = vpack.c.b16 %v6328, %v6326
    %v7023 = vpack.c.b16 %v6329, %v6327
    %v7024 = vpack.c.b16 %v6332, %v6330
    %v7025 = vpack.c.b16 %v6333, %v6331
    %v7026 = vpack.c.b16 %v6336, %v6334
    %v7027 = vpack.c.b16 %v6337, %v6335
    %v7028 = vpack.c.b16 %v6340, %v6338
    %v7029 = vpack.c.b16 %v6341, %v6339
    %v7030 = vpack.c.b16 %v6344, %v6342
    %v7031 = vpack.c.b16 %v6345, %v6343
    %v7032 = vpack.c.b16 %v6348, %v6346
    %v7033 = vpack.c.b16 %v6349, %v6347
    %v7034 = vpack.c.b16 %v6352, %v6350
    %v7035 = vpack.c.b16 %v6353, %v6351
    %v7036 = vpack.c.b16 %v6356, %v6354
    %v7037 = vpack.c.b16 %v6357, %v6355
    %v7038 = vpack.c.b16 %v6360, %v6358
    %v7039 = vpack.c.b16 %v6361, %v6359
    %v7040 = vpack.c.b16 %v6364, %v6362
    %v7041 = vpack.c.b16 %v6365, %v6363
    %v7042 = vpack.c.b16 %v6368, %v6366
    %v7043 = vpack.c.b16 %v6369, %v6367
    %v7044 = vpack.c.b16 %v6372, %v6370
    %v7045 = vpack.c.b16 %v6373, %v6371
    %v7046 = vpack.c.b16 %v6376, %v6374
    %v7047 = vpack.c.b16 %v6377, %v6375
    %v7048 = vpack.c.b16 %v6380, %v6378
    %v7049 = vpack.c.b16 %v6381, %v6379
    %v7050 = vpack.c.b16 %v6384, %v6382
    %v7051 = vpack.c.b16 %v6385, %v6383
    %v7052 = vpack.c.b16 %v6388, %v6386
    %v7053 = vpack.c.b16 %v6389, %v6387
    %v7054 = vpack.c.b16 %v6392, %v6390
    %v7055 = vpack.c.b16 %v6393, %v6391
    %v7056 = vpack.c.b16 %v6396, %v6394
    %v7057 = vpack.c.b16 %v6397, %v6395
    %v7058 = vpack.c.b16 %v6400, %v6398
    %v7059 = vpack.c.b16 %v6401, %v6399
    %v7060 = vpack.c.b16 %v6404, %v6402
    %v7061 = vpack.c.b16 %v6405, %v6403
    %v7062 = vpack.c.b16 %v6408, %v6406
    %v7063 = vpack.c.b16 %v6409, %v6407
    %v7064 = vpack.c.b16 %v6412, %v6410
    %v7065 = vpack.c.b16 %v6413, %v6411
    %v7066 = vpack.c.b16 %v6416, %v6414
    %v7067 = vpack.c.b16 %v6417, %v6415
    %v7068 = vpack.c.b16 %v6420, %v6418
    %v7069 = vpack.c.b16 %v6421, %v6419
    %v7070 = vpack.c.b16 %v6424, %v6422
    %v7071 = vpack.c.b16 %v6425, %v6423
    %v7072 = vpack.c.b16 %v6428, %v6426
    %v7073 = vpack.c.b16 %v6429, %v6427
    %v7074 = vpack.c.b16 %v6432, %v6430
    %v7075 = vpack.c.b16 %v6433, %v6431
    %v7076 = vpack.c.b16 %v6436, %v6434
    %v7077 = vpack.c.b16 %v6437, %v6435
    %v7078 = vpack.c.b16 %v6440, %v6438
    %v7079 = vpack.c.b16 %v6441, %v6439
    %v7080 = vpack.c.b16 %v6444, %v6442
    %v7081 = vpack.c.b16 %v6445, %v6443
    %v7082 = vpack.c.b16 %v6448, %v6446
    %v7083 = vpack.c.b16 %v6449, %v6447
    %v7084 = vpack.c.b16 %v6452, %v6450
    %v7085 = vpack.c.b16 %v6453, %v6451
    %v7086 = vpack.c.b16 %v6456, %v6454
    %v7087 = vpack.c.b16 %v6457, %v6455
    %v7088 = vpack.c.b16 %v6460, %v6458
    %v7089 = vpack.c.b16 %v6461, %v6459
    %v7090 = vpack.c.b16 %v6464, %v6462
    %v7091 = vpack.c.b16 %v6465, %v6463
    %v7092 = vpack.c.b16 %v6468, %v6466
    %v7093 = vpack.c.b16 %v6469, %v6467
    %v7094 = vpack.c.b16 %v6472, %v6470
    %v7095 = vpack.c.b16 %v6473, %v6471
    %v7096 = vpack.c.b16 %v6476, %v6474
    %v7097 = vpack.c.b16 %v6477, %v6475
    %v7098 = vpack.c.b16 %v6480, %v6478
    %v7099 = vpack.c.b16 %v6481, %v6479
    %v7100 = vpack.c.b16 %v6484, %v6482
    %v7101 = vpack.c.b16 %v6485, %v6483
    %v7102 = vpack.c.b16 %v6488, %v6486
    %v7103 = vpack.c.b16 %v6489, %v6487
    %v7104 = vpack.c.b16 %v6492, %v6490
    %v7105 = vpack.c.b16 %v6493, %v6491
    %v7106 = vpack.c.b16 %v6496, %v6494
    %v7107 = vpack.c.b16 %v6497, %v6495
    %v7108 = vpack.c.b16 %v6500, %v6498
    %v7109 = vpack.c.b16 %v6501, %v6499
    %v7110 = vpack.c.b16 %v6504, %v6502
    %v7111 = vpack.c.b16 %v6505, %v6503
    %v7112 = vpack.c.b16 %v6508, %v6506
    %v7113 = vpack.c.b16 %v6509, %v6507
    %v7114 = vpack.c.b16 %v6512, %v6510
    %v7115 = vpack.c.b16 %v6513, %v6511
    %v7116 = vpack.c.b16 %v6516, %v6514
    %v7117 = vpack.c.b16 %v6517, %v6515
    %v7118 = vpack.c.b16 %v6520, %v6518
    %v7119 = vpack.c.b16 %v6521, %v6519
    %v7120 = vpack.c.b16 %v6524, %v6522
    %v7121 = vpack.c.b16 %v6525, %v6523
    %v7122 = vpack.c.b16 %v6528, %v6526
    %v7123 = vpack.c.b16 %v6529, %v6527
    %v7124 = vpack.c.b16 %v6532, %v6530
    %v7125 = vpack.c.b16 %v6533, %v6531
    %v7126 = vpack.c.b16 %v6536, %v6534
    %v7127 = vpack.c.b16 %v6537, %v6535
    %v7128 = vpack.c.b16 %v6540, %v6538
    %v7129 = vpack.c.b16 %v6541, %v6539
    %v7130 = vpack.c.b16 %v6544, %v6542
    %v7131 = vpack.c.b16 %v6545, %v6543
    %v7132 = vpack.c.b16 %v6548, %v6546
    %v7133 = vpack.c.b16 %v6549, %v6547
    %v7134 = vpack.c.b16 %v6552, %v6550
    %v7135 = vpack.c.b16 %v6553, %v6551
    %v7136 = vpack.c.b16 %v6556, %v6554
    %v7137 = vpack.c.b16 %v6557, %v6555
    %v7138 = vpack.c.b16 %v6560, %v6558
    %v7139 = vpack.c.b16 %v6561, %v6559
    %v7140 = vpack.c.b16 %v6564, %v6562
    %v7141 = vpack.c.b16 %v6565, %v6563
    %v7142 = vpack.c.b16 %v6568, %v6566
    %v7143 = vpack.c.b16 %v6569, %v6567
    %v7144 = vpack.c.b16 %v6572, %v6570
    %v7145 = vpack.c.b16 %v6573, %v6571
    %v7146 = vpack.c.b16 %v6576, %v6574
    %v7147 = vpack.c.b16 %v6577, %v6575
    %v7148 = vpack.c.b16 %v6580, %v6578
    %v7149 = vpack.c.b16 %v6581, %v6579
    %v7150 = vpack.c.b16 %v6584, %v6582
    %v7151 = vpack.c.b16 %v6585, %v6583
    %v7152 = vpack.c.b16 %v6588, %v6586
    %v7153 = vpack.c.b16 %v6589, %v6587
    %v7154 = vpack.c.b16 %v6592, %v6590
    %v7155 = vpack.c.b16 %v6593, %v6591
    %v7156 = vpack.c.b16 %v6596, %v6594
    %v7157 = vpack.c.b16 %v6597, %v6595
    %v7158 = vpack.c.b16 %v6600, %v6598
    %v7159 = vpack.c.b16 %v6601, %v6599
    %v7160 = vpack.c.b16 %v6604, %v6602
    %v7161 = vpack.c.b16 %v6605, %v6603
    %v7162 = vpack.c.b16 %v6608, %v6606
    %v7163 = vpack.c.b16 %v6609, %v6607
    %v7164 = vpack.c.b16 %v6612, %v6610
    %v7165 = vpack.c.b16 %v6613, %v6611
    %v7166 = vpack.c.b16 %v6616, %v6614
    %v7167 = vpack.c.b16 %v6617, %v6615
    %v7168 = vpack.c.b16 %v6620, %v6618
    %v7169 = vpack.c.b16 %v6621, %v6619
    %v7170 = vpack.c.b16 %v6624, %v6622
    %v7171 = vpack.c.b16 %v6625, %v6623
    %v7172 = vpack.c.b16 %v6628, %v6626
    %v7173 = vpack.c.b16 %v6629, %v6627
    %v7174 = vpack.c.b16 %v6632, %v6630
    %v7175 = vpack.c.b16 %v6633, %v6631
    %v7176 = vpack.c.b16 %v6636, %v6634
    %v7177 = vpack.c.b16 %v6637, %v6635
    %v7178 = vpack.c.b16 %v6640, %v6638
    %v7179 = vpack.c.b16 %v6641, %v6639
    %v7180 = vpack.c.b16 %v6644, %v6642
    %v7181 = vpack.c.b16 %v6645, %v6643
    %v7182 = vpack.c.b16 %v6648, %v6646
    %v7183 = vpack.c.b16 %v6649, %v6647
    %v7184 = vpack.c.b16 %v6652, %v6650
    %v7185 = vpack.c.b16 %v6653, %v6651
    %v7186 = vpack.c.b16 %v6656, %v6654
    %v7187 = vpack.c.b16 %v6657, %v6655
    %v7188 = vpack.c.b16 %v6660, %v6658
    %v7189 = vpack.c.b16 %v6661, %v6659
    %v7190 = vpack.c.b16 %v6664, %v6662
    %v7191 = vpack.c.b16 %v6665, %v6663
    %v7192 = vpack.c.b16 %v6668, %v6666
    %v7193 = vpack.c.b16 %v6669, %v6667
    %v7194 = vpack.c.b16 %v6672, %v6670
    %v7195 = vpack.c.b16 %v6673, %v6671
    %v7196 = vpack.c.b16 %v6676, %v6674
    %v7197 = vpack.c.b16 %v6677, %v6675
    %v7198 = vpack.c.b16 %v6680, %v6678
    %v7199 = vpack.c.b16 %v6681, %v6679
    %v7200 = vpack.c.b16 %v6684, %v6682
    %v7201 = vpack.c.b16 %v6685, %v6683
    %v7202 = vpack.c.b16 %v6688, %v6686
    %v7203 = vpack.c.b16 %v6689, %v6687
    %v7204 = vpack.c.b16 %v6692, %v6690
    %v7205 = vpack.c.b16 %v6693, %v6691
    %7718 = vmatprep.subr.bf16.mxu0 %v6695
    %7719 = vmatpush1.bf16.msra.mxu0 %v6694
    %7720 = vmatprep.subr.bf16.mxu0 %v6697
    %7721 = vmatpush1.bf16.msra.mxu0 %v6696
    %7722 = vmatprep.subr.bf16.mxu0 %v6699
    %7723 = vmatpush1.bf16.msra.mxu0 %v6698
    %7724 = vmatprep.subr.bf16.mxu0 %v6701
    %7725 = vmatpush1.bf16.msra.mxu0 %v6700
    %7726 = vmatprep.subr.bf16.mxu0 %v6703
    %7727 = vmatpush1.bf16.msra.mxu0 %v6702
    %7728 = vmatprep.subr.bf16.mxu0 %v6705
    %7729 = vmatpush1.bf16.msra.mxu0 %v6704
    %7730 = vmatprep.subr.bf16.mxu0 %v6707
    %7731 = vmatpush1.bf16.msra.mxu0 %v6706
    %7732 = vmatprep.subr.bf16.mxu0 %v6709
    %7733 = vmatpush1.bf16.msra.mxu0 %v6708
    %7734 = vmatprep.subr.bf16.mxu0 %v6711
    %7735 = vmatpush1.bf16.msra.mxu0 %v6710
    %7736 = vmatprep.subr.bf16.mxu0 %v6713
    %7737 = vmatpush1.bf16.msra.mxu0 %v6712
    %7738 = vmatprep.subr.bf16.mxu0 %v6715
    %7739 = vmatpush1.bf16.msra.mxu0 %v6714
    %7740 = vmatprep.subr.bf16.mxu0 %v6717
    %7741 = vmatpush1.bf16.msra.mxu0 %v6716
    %7742 = vmatprep.subr.bf16.mxu0 %v6719
    %7743 = vmatpush1.bf16.msra.mxu0 %v6718
    %7744 = vmatprep.subr.bf16.mxu0 %v6721
    %7745 = vmatpush1.bf16.msra.mxu0 %v6720
    %7746 = vmatprep.subr.bf16.mxu0 %v6723
    %7747 = vmatpush1.bf16.msra.mxu0 %v6722
    %7748 = vmatprep.subr.bf16.mxu0 %v6725
    %7749 = vmatpush1.bf16.msra.mxu0 %v6724
    %7750 = vmatprep.mubr.bf16.mxu0 %v4615
    %7751 = vmatmul.mubr.bf16.gmra.mrb[0].mxu0 %v4614
    %v7752 = vpop.f32.mrb[0].mxu0
    %v7753 = vadd.f32 0.0, %v7752
    %v7754 = vpop.f32.mrb[0].mxu0
    %v7755 = vadd.f32 0.0, %v7754
    %v7756 = vpop.f32.mrb[0].mxu0
    %v7757 = vpop.f32.mrb[0].mxu0
    %7758 = vdwg.mxu0
    %7759 = vmatprep.subr.bf16.mxu0 %v6727
    %7760 = vmatpush1.bf16.msra.mxu0 %v6726
    %7761 = vmatprep.subr.bf16.mxu0 %v6729
    %7762 = vmatpush1.bf16.msra.mxu0 %v6728
    %7763 = vmatprep.subr.bf16.mxu0 %v6731
    %7764 = vmatpush1.bf16.msra.mxu0 %v6730
    %7765 = vmatprep.subr.bf16.mxu0 %v6733
    %7766 = vmatpush1.bf16.msra.mxu0 %v6732
    %7767 = vmatprep.subr.bf16.mxu0 %v6735
    %7768 = vmatpush1.bf16.msra.mxu0 %v6734
    %7769 = vmatprep.subr.bf16.mxu0 %v6737
    %7770 = vmatpush1.bf16.msra.mxu0 %v6736
    %7771 = vmatprep.subr.bf16.mxu0 %v6739
    %7772 = vmatpush1.bf16.msra.mxu0 %v6738
    %7773 = vmatprep.subr.bf16.mxu0 %v6741
    %7774 = vmatpush1.bf16.msra.mxu0 %v6740
    %7775 = vmatprep.subr.bf16.mxu0 %v6743
    %7776 = vmatpush1.bf16.msra.mxu0 %v6742
    %7777 = vmatprep.subr.bf16.mxu0 %v6745
    %7778 = vmatpush1.bf16.msra.mxu0 %v6744
    %7779 = vmatprep.subr.bf16.mxu0 %v6747
    %7780 = vmatpush1.bf16.msra.mxu0 %v6746
    %7781 = vmatprep.subr.bf16.mxu0 %v6749
    %7782 = vmatpush1.bf16.msra.mxu0 %v6748
    %7783 = vmatprep.subr.bf16.mxu0 %v6751
    %7784 = vmatpush1.bf16.msra.mxu0 %v6750
    %7785 = vmatprep.subr.bf16.mxu0 %v6753
    %7786 = vmatpush1.bf16.msra.mxu0 %v6752
    %7787 = vmatprep.subr.bf16.mxu0 %v6755
    %7788 = vmatpush1.bf16.msra.mxu0 %v6754
    %7789 = vmatprep.subr.bf16.mxu0 %v6757
    %7790 = vmatpush1.bf16.msra.mxu0 %v6756
    %7791 = vmatprep.mubr.bf16.mxu0 %v4617
    %7792 = vmatmul.mubr.bf16.gmra.mrb[0].mxu0 %v4616
    %v7793 = vpop.f32.mrb[0].mxu0
    %v7794 = vadd.f32 %v7753, %v7793
    %v7795 = vpop.f32.mrb[0].mxu0
    %v7796 = vadd.f32 %v7755, %v7795
    %v7797 = vpop.f32.mrb[0].mxu0
    %v7798 = vpop.f32.mrb[0].mxu0
    %7799 = vdwg.mxu0
    %7800 = vmatprep.subr.bf16.mxu0 %v6759
    %7801 = vmatpush1.bf16.msra.mxu0 %v6758
    %7802 = vmatprep.subr.bf16.mxu0 %v6761
    %7803 = vmatpush1.bf16.msra.mxu0 %v6760
    %7804 = vmatprep.subr.bf16.mxu0 %v6763
    %7805 = vmatpush1.bf16.msra.mxu0 %v6762
    %7806 = vmatprep.subr.bf16.mxu0 %v6765
    %7807 = vmatpush1.bf16.msra.mxu0 %v6764
    %7808 = vmatprep.subr.bf16.mxu0 %v6767
    %7809 = vmatpush1.bf16.msra.mxu0 %v6766
    %7810 = vmatprep.subr.bf16.mxu0 %v6769
    %7811 = vmatpush1.bf16.msra.mxu0 %v6768
    %7812 = vmatprep.subr.bf16.mxu0 %v6771
    %7813 = vmatpush1.bf16.msra.mxu0 %v6770
    %7814 = vmatprep.subr.bf16.mxu0 %v6773
    %7815 = vmatpush1.bf16.msra.mxu0 %v6772
    %7816 = vmatprep.subr.bf16.mxu0 %v6775
    %7817 = vmatpush1.bf16.msra.mxu0 %v6774
    %7818 = vmatprep.subr.bf16.mxu0 %v6777
    %7819 = vmatpush1.bf16.msra.mxu0 %v6776
    %7820 = vmatprep.subr.bf16.mxu0 %v6779
    %7821 = vmatpush1.bf16.msra.mxu0 %v6778
    %7822 = vmatprep.subr.bf16.mxu0 %v6781
    %7823 = vmatpush1.bf16.msra.mxu0 %v6780
    %7824 = vmatprep.subr.bf16.mxu0 %v6783
    %7825 = vmatpush1.bf16.msra.mxu0 %v6782
    %7826 = vmatprep.subr.bf16.mxu0 %v6785
    %7827 = vmatpush1.bf16.msra.mxu0 %v6784
    %7828 = vmatprep.subr.bf16.mxu0 %v6787
    %7829 = vmatpush1.bf16.msra.mxu0 %v6786
    %7830 = vmatprep.subr.bf16.mxu0 %v6789
    %7831 = vmatpush1.bf16.msra.mxu0 %v6788
    %7832 = vmatprep.mubr.bf16.mxu0 %v4619
    %7833 = vmatmul.mubr.bf16.gmra.mrb[0].mxu0 %v4618
    %v7834 = vpop.f32.mrb[0].mxu0
    %v7835 = vadd.f32 %v7794, %v7834
    %v7836 = vpop.f32.mrb[0].mxu0
    %v7837 = vadd.f32 %v7796, %v7836
    %v7838 = vpop.f32.mrb[0].mxu0
    %v7839 = vpop.f32.mrb[0].mxu0
    %7840 = vdwg.mxu0
    %7841 = vmatprep.subr.bf16.mxu0 %v6791
    %7842 = vmatpush1.bf16.msra.mxu0 %v6790
    %7843 = vmatprep.subr.bf16.mxu0 %v6793
    %7844 = vmatpush1.bf16.msra.mxu0 %v6792
    %7845 = vmatprep.subr.bf16.mxu0 %v6795
    %7846 = vmatpush1.bf16.msra.mxu0 %v6794
    %7847 = vmatprep.subr.bf16.mxu0 %v6797
    %7848 = vmatpush1.bf16.msra.mxu0 %v6796
    %7849 = vmatprep.subr.bf16.mxu0 %v6799
    %7850 = vmatpush1.bf16.msra.mxu0 %v6798
    %7851 = vmatprep.subr.bf16.mxu0 %v6801
    %7852 = vmatpush1.bf16.msra.mxu0 %v6800
    %7853 = vmatprep.subr.bf16.mxu0 %v6803
    %7854 = vmatpush1.bf16.msra.mxu0 %v6802
    %7855 = vmatprep.subr.bf16.mxu0 %v6805
    %7856 = vmatpush1.bf16.msra.mxu0 %v6804
    %7857 = vmatprep.subr.bf16.mxu0 %v6807
    %7858 = vmatpush1.bf16.msra.mxu0 %v6806
    %7859 = vmatprep.subr.bf16.mxu0 %v6809
    %7860 = vmatpush1.bf16.msra.mxu0 %v6808
    %7861 = vmatprep.subr.bf16.mxu0 %v6811
    %7862 = vmatpush1.bf16.msra.mxu0 %v6810
    %7863 = vmatprep.subr.bf16.mxu0 %v6813
    %7864 = vmatpush1.bf16.msra.mxu0 %v6812
    %7865 = vmatprep.subr.bf16.mxu0 %v6815
    %7866 = vmatpush1.bf16.msra.mxu0 %v6814
    %7867 = vmatprep.subr.bf16.mxu0 %v6817
    %7868 = vmatpush1.bf16.msra.mxu0 %v6816
    %7869 = vmatprep.subr.bf16.mxu0 %v6819
    %7870 = vmatpush1.bf16.msra.mxu0 %v6818
    %7871 = vmatprep.subr.bf16.mxu0 %v6821
    %7872 = vmatpush1.bf16.msra.mxu0 %v6820
    %7873 = vmatprep.mubr.bf16.mxu0 %v4621
    %7874 = vmatmul.mubr.bf16.gmra.mrb[0].mxu0 %v4620
    %v7875 = vpop.f32.mrb[0].mxu0
    %v7876 = vadd.f32 %v7835, %v7875
    %v7877 = vpop.f32.mrb[0].mxu0
    %v7878 = vadd.f32 %v7837, %v7877
    %v7879 = vpop.f32.mrb[0].mxu0
    %v7880 = vpop.f32.mrb[0].mxu0
    %7881 = vdwg.mxu0
    %7882 = vmatprep.subr.bf16.mxu0 %v6823
    %7883 = vmatpush1.bf16.msra.mxu0 %v6822
    %7884 = vmatprep.subr.bf16.mxu0 %v6825
    %7885 = vmatpush1.bf16.msra.mxu0 %v6824
    %7886 = vmatprep.subr.bf16.mxu0 %v6827
    %7887 = vmatpush1.bf16.msra.mxu0 %v6826
    %7888 = vmatprep.subr.bf16.mxu0 %v6829
    %7889 = vmatpush1.bf16.msra.mxu0 %v6828
    %7890 = vmatprep.subr.bf16.mxu0 %v6831
    %7891 = vmatpush1.bf16.msra.mxu0 %v6830
    %7892 = vmatprep.subr.bf16.mxu0 %v6833
    %7893 = vmatpush1.bf16.msra.mxu0 %v6832
    %7894 = vmatprep.subr.bf16.mxu0 %v6835
    %7895 = vmatpush1.bf16.msra.mxu0 %v6834
    %7896 = vmatprep.subr.bf16.mxu0 %v6837
    %7897 = vmatpush1.bf16.msra.mxu0 %v6836
    %7898 = vmatprep.subr.bf16.mxu0 %v6839
    %7899 = vmatpush1.bf16.msra.mxu0 %v6838
    %7900 = vmatprep.subr.bf16.mxu0 %v6841
    %7901 = vmatpush1.bf16.msra.mxu0 %v6840
    %7902 = vmatprep.subr.bf16.mxu0 %v6843
    %7903 = vmatpush1.bf16.msra.mxu0 %v6842
    %7904 = vmatprep.subr.bf16.mxu0 %v6845
    %7905 = vmatpush1.bf16.msra.mxu0 %v6844
    %7906 = vmatprep.subr.bf16.mxu0 %v6847
    %7907 = vmatpush1.bf16.msra.mxu0 %v6846
    %7908 = vmatprep.subr.bf16.mxu0 %v6849
    %7909 = vmatpush1.bf16.msra.mxu0 %v6848
    %7910 = vmatprep.subr.bf16.mxu0 %v6851
    %7911 = vmatpush1.bf16.msra.mxu0 %v6850
    %7912 = vmatprep.subr.bf16.mxu0 %v6853
    %7913 = vmatpush1.bf16.msra.mxu0 %v6852
    %7914 = vmatprep.mubr.bf16.mxu0 %v4623
    %7915 = vmatmul.mubr.bf16.gmra.mrb[0].mxu0 %v4622
    %v7916 = vpop.f32.mrb[0].mxu0
    %v7917 = vadd.f32 %v7876, %v7916
    %v7918 = vpop.f32.mrb[0].mxu0
    %v7919 = vadd.f32 %v7878, %v7918
    %v7920 = vpop.f32.mrb[0].mxu0
    %v7921 = vpop.f32.mrb[0].mxu0
    %7922 = vdwg.mxu0
    %7923 = vmatprep.subr.bf16.mxu0 %v6855
    %7924 = vmatpush1.bf16.msra.mxu0 %v6854
    %7925 = vmatprep.subr.bf16.mxu0 %v6857
    %7926 = vmatpush1.bf16.msra.mxu0 %v6856
    %7927 = vmatprep.subr.bf16.mxu0 %v6859
    %7928 = vmatpush1.bf16.msra.mxu0 %v6858
    %7929 = vmatprep.subr.bf16.mxu0 %v6861
    %7930 = vmatpush1.bf16.msra.mxu0 %v6860
    %7931 = vmatprep.subr.bf16.mxu0 %v6863
    %7932 = vmatpush1.bf16.msra.mxu0 %v6862
    %7933 = vmatprep.subr.bf16.mxu0 %v6865
    %7934 = vmatpush1.bf16.msra.mxu0 %v6864
    %7935 = vmatprep.subr.bf16.mxu0 %v6867
    %7936 = vmatpush1.bf16.msra.mxu0 %v6866
    %7937 = vmatprep.subr.bf16.mxu0 %v6869
    %7938 = vmatpush1.bf16.msra.mxu0 %v6868
    %7939 = vmatprep.subr.bf16.mxu0 %v6871
    %7940 = vmatpush1.bf16.msra.mxu0 %v6870
    %7941 = vmatprep.subr.bf16.mxu0 %v6873
    %7942 = vmatpush1.bf16.msra.mxu0 %v6872
    %7943 = vmatprep.subr.bf16.mxu0 %v6875
    %7944 = vmatpush1.bf16.msra.mxu0 %v6874
    %7945 = vmatprep.subr.bf16.mxu0 %v6877
    %7946 = vmatpush1.bf16.msra.mxu0 %v6876
    %7947 = vmatprep.subr.bf16.mxu0 %v6879
    %7948 = vmatpush1.bf16.msra.mxu0 %v6878
    %7949 = vmatprep.subr.bf16.mxu0 %v6881
    %7950 = vmatpush1.bf16.msra.mxu0 %v6880
    %7951 = vmatprep.subr.bf16.mxu0 %v6883
    %7952 = vmatpush1.bf16.msra.mxu0 %v6882
    %7953 = vmatprep.subr.bf16.mxu0 %v6885
    %7954 = vmatpush1.bf16.msra.mxu0 %v6884
    %7955 = vmatprep.mubr.bf16.mxu0 %v4625
    %7956 = vmatmul.mubr.bf16.gmra.mrb[0].mxu0 %v4624
    %v7957 = vpop.f32.mrb[0].mxu0
    %v7958 = vadd.f32 %v7917, %v7957
    %v7959 = vpop.f32.mrb[0].mxu0
    %v7960 = vadd.f32 %v7919, %v7959
    %v7961 = vpop.f32.mrb[0].mxu0
    %v7962 = vpop.f32.mrb[0].mxu0
    %7963 = vdwg.mxu0
    %7964 = vmatprep.subr.bf16.mxu0 %v6887
    %7965 = vmatpush1.bf16.msra.mxu0 %v6886
    %7966 = vmatprep.subr.bf16.mxu0 %v6889
    %7967 = vmatpush1.bf16.msra.mxu0 %v6888
    %7968 = vmatprep.subr.bf16.mxu0 %v6891
    %7969 = vmatpush1.bf16.msra.mxu0 %v6890
    %7970 = vmatprep.subr.bf16.mxu0 %v6893
    %7971 = vmatpush1.bf16.msra.mxu0 %v6892
    %7972 = vmatprep.subr.bf16.mxu0 %v6895
    %7973 = vmatpush1.bf16.msra.mxu0 %v6894
    %7974 = vmatprep.subr.bf16.mxu0 %v6897
    %7975 = vmatpush1.bf16.msra.mxu0 %v6896
    %7976 = vmatprep.subr.bf16.mxu0 %v6899
    %7977 = vmatpush1.bf16.msra.mxu0 %v6898
    %7978 = vmatprep.subr.bf16.mxu0 %v6901
    %7979 = vmatpush1.bf16.msra.mxu0 %v6900
    %7980 = vmatprep.subr.bf16.mxu0 %v6903
    %7981 = vmatpush1.bf16.msra.mxu0 %v6902
    %7982 = vmatprep.subr.bf16.mxu0 %v6905
    %7983 = vmatpush1.bf16.msra.mxu0 %v6904
    %7984 = vmatprep.subr.bf16.mxu0 %v6907
    %7985 = vmatpush1.bf16.msra.mxu0 %v6906
    %7986 = vmatprep.subr.bf16.mxu0 %v6909
    %7987 = vmatpush1.bf16.msra.mxu0 %v6908
    %7988 = vmatprep.subr.bf16.mxu0 %v6911
    %7989 = vmatpush1.bf16.msra.mxu0 %v6910
    %7990 = vmatprep.subr.bf16.mxu0 %v6913
    %7991 = vmatpush1.bf16.msra.mxu0 %v6912
    %7992 = vmatprep.subr.bf16.mxu0 %v6915
    %7993 = vmatpush1.bf16.msra.mxu0 %v6914
    %7994 = vmatprep.subr.bf16.mxu0 %v6917
    %7995 = vmatpush1.bf16.msra.mxu0 %v6916
    %7996 = vmatprep.mubr.bf16.mxu0 %v4627
    %7997 = vmatmul.mubr.bf16.gmra.mrb[0].mxu0 %v4626
    %v7998 = vpop.f32.mrb[0].mxu0
    %v7999 = vadd.f32 %v7958, %v7998
    %v8000 = vpop.f32.mrb[0].mxu0
    %v8001 = vadd.f32 %v7960, %v8000
    %v8002 = vpop.f32.mrb[0].mxu0
    %v8003 = vpop.f32.mrb[0].mxu0
    %8004 = vdwg.mxu0
    %8005 = vmatprep.subr.bf16.mxu0 %v6919
    %8006 = vmatpush1.bf16.msra.mxu0 %v6918
    %8007 = vmatprep.subr.bf16.mxu0 %v6921
    %8008 = vmatpush1.bf16.msra.mxu0 %v6920
    %8009 = vmatprep.subr.bf16.mxu0 %v6923
    %8010 = vmatpush1.bf16.msra.mxu0 %v6922
    %8011 = vmatprep.subr.bf16.mxu0 %v6925
    %8012 = vmatpush1.bf16.msra.mxu0 %v6924
    %8013 = vmatprep.subr.bf16.mxu0 %v6927
    %8014 = vmatpush1.bf16.msra.mxu0 %v6926
    %8015 = vmatprep.subr.bf16.mxu0 %v6929
    %8016 = vmatpush1.bf16.msra.mxu0 %v6928
    %8017 = vmatprep.subr.bf16.mxu0 %v6931
    %8018 = vmatpush1.bf16.msra.mxu0 %v6930
    %8019 = vmatprep.subr.bf16.mxu0 %v6933
    %8020 = vmatpush1.bf16.msra.mxu0 %v6932
    %8021 = vmatprep.subr.bf16.mxu0 %v6935
    %8022 = vmatpush1.bf16.msra.mxu0 %v6934
    %8023 = vmatprep.subr.bf16.mxu0 %v6937
    %8024 = vmatpush1.bf16.msra.mxu0 %v6936
    %8025 = vmatprep.subr.bf16.mxu0 %v6939
    %8026 = vmatpush1.bf16.msra.mxu0 %v6938
    %8027 = vmatprep.subr.bf16.mxu0 %v6941
    %8028 = vmatpush1.bf16.msra.mxu0 %v6940
    %8029 = vmatprep.subr.bf16.mxu0 %v6943
    %8030 = vmatpush1.bf16.msra.mxu0 %v6942
    %8031 = vmatprep.subr.bf16.mxu0 %v6945
    %8032 = vmatpush1.bf16.msra.mxu0 %v6944
    %8033 = vmatprep.subr.bf16.mxu0 %v6947
    %8034 = vmatpush1.bf16.msra.mxu0 %v6946
    %8035 = vmatprep.subr.bf16.mxu0 %v6949
    %8036 = vmatpush1.bf16.msra.mxu0 %v6948
    %8037 = vmatprep.mubr.bf16.mxu0 %v4629
    %8038 = vmatmul.mubr.bf16.gmra.mrb[0].mxu0 %v4628
    %v8039 = vpop.f32.mrb[0].mxu0
    %v8040 = vadd.f32 %v7999, %v8039
    %v8041 = vpop.f32.mrb[0].mxu0
    %v8042 = vadd.f32 %v8001, %v8041
    %v8043 = vpop.f32.mrb[0].mxu0
    %v8044 = vpop.f32.mrb[0].mxu0
    %8045 = vdwg.mxu0
    %8046 = vmatprep.subr.bf16.mxu0 %v6951
    %8047 = vmatpush1.bf16.msra.mxu0 %v6950
    %8048 = vmatprep.subr.bf16.mxu0 %v6953
    %8049 = vmatpush1.bf16.msra.mxu0 %v6952
    %8050 = vmatprep.subr.bf16.mxu0 %v6955
    %8051 = vmatpush1.bf16.msra.mxu0 %v6954
    %8052 = vmatprep.subr.bf16.mxu0 %v6957
    %8053 = vmatpush1.bf16.msra.mxu0 %v6956
    %8054 = vmatprep.subr.bf16.mxu0 %v6959
    %8055 = vmatpush1.bf16.msra.mxu0 %v6958
    %8056 = vmatprep.subr.bf16.mxu0 %v6961
    %8057 = vmatpush1.bf16.msra.mxu0 %v6960
    %8058 = vmatprep.subr.bf16.mxu0 %v6963
    %8059 = vmatpush1.bf16.msra.mxu0 %v6962
    %8060 = vmatprep.subr.bf16.mxu0 %v6965
    %8061 = vmatpush1.bf16.msra.mxu0 %v6964
    %8062 = vmatprep.subr.bf16.mxu0 %v6967
    %8063 = vmatpush1.bf16.msra.mxu0 %v6966
    %8064 = vmatprep.subr.bf16.mxu0 %v6969
    %8065 = vmatpush1.bf16.msra.mxu0 %v6968
    %8066 = vmatprep.subr.bf16.mxu0 %v6971
    %8067 = vmatpush1.bf16.msra.mxu0 %v6970
    %8068 = vmatprep.subr.bf16.mxu0 %v6973
    %8069 = vmatpush1.bf16.msra.mxu0 %v6972
    %8070 = vmatprep.subr.bf16.mxu0 %v6975
    %8071 = vmatpush1.bf16.msra.mxu0 %v6974
    %8072 = vmatprep.subr.bf16.mxu0 %v6977
    %8073 = vmatpush1.bf16.msra.mxu0 %v6976
    %8074 = vmatprep.subr.bf16.mxu0 %v6979
    %8075 = vmatpush1.bf16.msra.mxu0 %v6978
    %8076 = vmatprep.subr.bf16.mxu0 %v6981
    %8077 = vmatpush1.bf16.msra.mxu0 %v6980
    %8078 = vmatprep.mubr.bf16.mxu0 %v4631
    %8079 = vmatmul.mubr.bf16.gmra.mrb[0].mxu0 %v4630
    %v8080 = vpop.f32.mrb[0].mxu0
    %v8081 = vadd.f32 %v8040, %v8080
    %v8082 = vpop.f32.mrb[0].mxu0
    %v8083 = vadd.f32 %v8042, %v8082
    %v8084 = vpop.f32.mrb[0].mxu0
    %v8085 = vpop.f32.mrb[0].mxu0
    %8086 = vdwg.mxu0
    %8087 = vmatprep.subr.bf16.mxu0 %v6983
    %8088 = vmatpush1.bf16.msra.mxu0 %v6982
    %8089 = vmatprep.subr.bf16.mxu0 %v6985
    %8090 = vmatpush1.bf16.msra.mxu0 %v6984
    %8091 = vmatprep.subr.bf16.mxu0 %v6987
    %8092 = vmatpush1.bf16.msra.mxu0 %v6986
    %8093 = vmatprep.subr.bf16.mxu0 %v6989
    %8094 = vmatpush1.bf16.msra.mxu0 %v6988
    %8095 = vmatprep.subr.bf16.mxu0 %v6991
    %8096 = vmatpush1.bf16.msra.mxu0 %v6990
    %8097 = vmatprep.subr.bf16.mxu0 %v6993
    %8098 = vmatpush1.bf16.msra.mxu0 %v6992
    %8099 = vmatprep.subr.bf16.mxu0 %v6995
    %8100 = vmatpush1.bf16.msra.mxu0 %v6994
    %8101 = vmatprep.subr.bf16.mxu0 %v6997
    %8102 = vmatpush1.bf16.msra.mxu0 %v6996
    %8103 = vmatprep.subr.bf16.mxu0 %v6999
    %8104 = vmatpush1.bf16.msra.mxu0 %v6998
    %8105 = vmatprep.subr.bf16.mxu0 %v7001
    %8106 = vmatpush1.bf16.msra.mxu0 %v7000
    %8107 = vmatprep.subr.bf16.mxu0 %v7003
    %8108 = vmatpush1.bf16.msra.mxu0 %v7002
    %8109 = vmatprep.subr.bf16.mxu0 %v7005
    %8110 = vmatpush1.bf16.msra.mxu0 %v7004
    %8111 = vmatprep.subr.bf16.mxu0 %v7007
    %8112 = vmatpush1.bf16.msra.mxu0 %v7006
    %8113 = vmatprep.subr.bf16.mxu0 %v7009
    %8114 = vmatpush1.bf16.msra.mxu0 %v7008
    %8115 = vmatprep.subr.bf16.mxu0 %v7011
    %8116 = vmatpush1.bf16.msra.mxu0 %v7010
    %8117 = vmatprep.subr.bf16.mxu0 %v7013
    %8118 = vmatpush1.bf16.msra.mxu0 %v7012
    %8119 = vmatprep.mubr.bf16.mxu0 %v4633
    %8120 = vmatmul.mubr.bf16.gmra.mrb[0].mxu0 %v4632
    %v8121 = vpop.f32.mrb[0].mxu0
    %v8122 = vadd.f32 %v8081, %v8121
    %v8123 = vpop.f32.mrb[0].mxu0
    %v8124 = vadd.f32 %v8083, %v8123
    %v8125 = vpop.f32.mrb[0].mxu0
    %v8126 = vpop.f32.mrb[0].mxu0
    %8127 = vdwg.mxu0
    %8128 = vmatprep.subr.bf16.mxu0 %v7015
    %8129 = vmatpush1.bf16.msra.mxu0 %v7014
    %8130 = vmatprep.subr.bf16.mxu0 %v7017
    %8131 = vmatpush1.bf16.msra.mxu0 %v7016
    %8132 = vmatprep.subr.bf16.mxu0 %v7019
    %8133 = vmatpush1.bf16.msra.mxu0 %v7018
    %8134 = vmatprep.subr.bf16.mxu0 %v7021
    %8135 = vmatpush1.bf16.msra.mxu0 %v7020
    %8136 = vmatprep.subr.bf16.mxu0 %v7023
    %8137 = vmatpush1.bf16.msra.mxu0 %v7022
    %8138 = vmatprep.subr.bf16.mxu0 %v7025
    %8139 = vmatpush1.bf16.msra.mxu0 %v7024
    %8140 = vmatprep.subr.bf16.mxu0 %v7027
    %8141 = vmatpush1.bf16.msra.mxu0 %v7026
    %8142 = vmatprep.subr.bf16.mxu0 %v7029
    %8143 = vmatpush1.bf16.msra.mxu0 %v7028
    %8144 = vmatprep.subr.bf16.mxu0 %v7031
    %8145 = vmatpush1.bf16.msra.mxu0 %v7030
    %8146 = vmatprep.subr.bf16.mxu0 %v7033
    %8147 = vmatpush1.bf16.msra.mxu0 %v7032
    %8148 = vmatprep.subr.bf16.mxu0 %v7035
    %8149 = vmatpush1.bf16.msra.mxu0 %v7034
    %8150 = vmatprep.subr.bf16.mxu0 %v7037
    %8151 = vmatpush1.bf16.msra.mxu0 %v7036
    %8152 = vmatprep.subr.bf16.mxu0 %v7039
    %8153 = vmatpush1.bf16.msra.mxu0 %v7038
    %8154 = vmatprep.subr.bf16.mxu0 %v7041
    %8155 = vmatpush1.bf16.msra.mxu0 %v7040
    %8156 = vmatprep.subr.bf16.mxu0 %v7043
    %8157 = vmatpush1.bf16.msra.mxu0 %v7042
    %8158 = vmatprep.subr.bf16.mxu0 %v7045
    %8159 = vmatpush1.bf16.msra.mxu0 %v7044
    %8160 = vmatprep.mubr.bf16.mxu0 %v4635
    %8161 = vmatmul.mubr.bf16.gmra.mrb[0].mxu0 %v4634
    %v8162 = vpop.f32.mrb[0].mxu0
    %v8163 = vadd.f32 %v8122, %v8162
    %v8164 = vpop.f32.mrb[0].mxu0
    %v8165 = vadd.f32 %v8124, %v8164
    %v8166 = vpop.f32.mrb[0].mxu0
    %v8167 = vpop.f32.mrb[0].mxu0
    %8168 = vdwg.mxu0
    %8169 = vmatprep.subr.bf16.mxu0 %v7047
    %8170 = vmatpush1.bf16.msra.mxu0 %v7046
    %8171 = vmatprep.subr.bf16.mxu0 %v7049
    %8172 = vmatpush1.bf16.msra.mxu0 %v7048
    %8173 = vmatprep.subr.bf16.mxu0 %v7051
    %8174 = vmatpush1.bf16.msra.mxu0 %v7050
    %8175 = vmatprep.subr.bf16.mxu0 %v7053
    %8176 = vmatpush1.bf16.msra.mxu0 %v7052
    %8177 = vmatprep.subr.bf16.mxu0 %v7055
    %8178 = vmatpush1.bf16.msra.mxu0 %v7054
    %8179 = vmatprep.subr.bf16.mxu0 %v7057
    %8180 = vmatpush1.bf16.msra.mxu0 %v7056
    %8181 = vmatprep.subr.bf16.mxu0 %v7059
    %8182 = vmatpush1.bf16.msra.mxu0 %v7058
    %8183 = vmatprep.subr.bf16.mxu0 %v7061
    %8184 = vmatpush1.bf16.msra.mxu0 %v7060
    %8185 = vmatprep.subr.bf16.mxu0 %v7063
    %8186 = vmatpush1.bf16.msra.mxu0 %v7062
    %8187 = vmatprep.subr.bf16.mxu0 %v7065
    %8188 = vmatpush1.bf16.msra.mxu0 %v7064
    %8189 = vmatprep.subr.bf16.mxu0 %v7067
    %8190 = vmatpush1.bf16.msra.mxu0 %v7066
    %8191 = vmatprep.subr.bf16.mxu0 %v7069
    %8192 = vmatpush1.bf16.msra.mxu0 %v7068
    %8193 = vmatprep.subr.bf16.mxu0 %v7071
    %8194 = vmatpush1.bf16.msra.mxu0 %v7070
    %8195 = vmatprep.subr.bf16.mxu0 %v7073
    %8196 = vmatpush1.bf16.msra.mxu0 %v7072
    %8197 = vmatprep.subr.bf16.mxu0 %v7075
    %8198 = vmatpush1.bf16.msra.mxu0 %v7074
    %8199 = vmatprep.subr.bf16.mxu0 %v7077
    %8200 = vmatpush1.bf16.msra.mxu0 %v7076
    %8201 = vmatprep.mubr.bf16.mxu0 %v4637
    %8202 = vmatmul.mubr.bf16.gmra.mrb[0].mxu0 %v4636
    %v8203 = vpop.f32.mrb[0].mxu0
    %v8204 = vadd.f32 %v8163, %v8203
    %v8205 = vpop.f32.mrb[0].mxu0
    %v8206 = vadd.f32 %v8165, %v8205
    %v8207 = vpop.f32.mrb[0].mxu0
    %v8208 = vpop.f32.mrb[0].mxu0
    %8209 = vdwg.mxu0
    %8210 = vmatprep.subr.bf16.mxu0 %v7079
    %8211 = vmatpush1.bf16.msra.mxu0 %v7078
    %8212 = vmatprep.subr.bf16.mxu0 %v7081
    %8213 = vmatpush1.bf16.msra.mxu0 %v7080
    %8214 = vmatprep.subr.bf16.mxu0 %v7083
    %8215 = vmatpush1.bf16.msra.mxu0 %v7082
    %8216 = vmatprep.subr.bf16.mxu0 %v7085
    %8217 = vmatpush1.bf16.msra.mxu0 %v7084
    %8218 = vmatprep.subr.bf16.mxu0 %v7087
    %8219 = vmatpush1.bf16.msra.mxu0 %v7086
    %8220 = vmatprep.subr.bf16.mxu0 %v7089
    %8221 = vmatpush1.bf16.msra.mxu0 %v7088
    %8222 = vmatprep.subr.bf16.mxu0 %v7091
    %8223 = vmatpush1.bf16.msra.mxu0 %v7090
    %8224 = vmatprep.subr.bf16.mxu0 %v7093
    %8225 = vmatpush1.bf16.msra.mxu0 %v7092
    %8226 = vmatprep.subr.bf16.mxu0 %v7095
    %8227 = vmatpush1.bf16.msra.mxu0 %v7094
    %8228 = vmatprep.subr.bf16.mxu0 %v7097
    %8229 = vmatpush1.bf16.msra.mxu0 %v7096
    %8230 = vmatprep.subr.bf16.mxu0 %v7099
    %8231 = vmatpush1.bf16.msra.mxu0 %v7098
    %8232 = vmatprep.subr.bf16.mxu0 %v7101
    %8233 = vmatpush1.bf16.msra.mxu0 %v7100
    %8234 = vmatprep.subr.bf16.mxu0 %v7103
    %8235 = vmatpush1.bf16.msra.mxu0 %v7102
    %8236 = vmatprep.subr.bf16.mxu0 %v7105
    %8237 = vmatpush1.bf16.msra.mxu0 %v7104
    %8238 = vmatprep.subr.bf16.mxu0 %v7107
    %8239 = vmatpush1.bf16.msra.mxu0 %v7106
    %8240 = vmatprep.subr.bf16.mxu0 %v7109
    %8241 = vmatpush1.bf16.msra.mxu0 %v7108
    %8242 = vmatprep.mubr.bf16.mxu0 %v4639
    %8243 = vmatmul.mubr.bf16.gmra.mrb[0].mxu0 %v4638
    %v8244 = vpop.f32.mrb[0].mxu0
    %v8245 = vadd.f32 %v8204, %v8244
    %v8246 = vpop.f32.mrb[0].mxu0
    %v8247 = vadd.f32 %v8206, %v8246
    %v8248 = vpop.f32.mrb[0].mxu0
    %v8249 = vpop.f32.mrb[0].mxu0
    %8250 = vdwg.mxu0
    %8251 = vmatprep.subr.bf16.mxu0 %v7111
    %8252 = vmatpush1.bf16.msra.mxu0 %v7110
    %8253 = vmatprep.subr.bf16.mxu0 %v7113
    %8254 = vmatpush1.bf16.msra.mxu0 %v7112
    %8255 = vmatprep.subr.bf16.mxu0 %v7115
    %8256 = vmatpush1.bf16.msra.mxu0 %v7114
    %8257 = vmatprep.subr.bf16.mxu0 %v7117
    %8258 = vmatpush1.bf16.msra.mxu0 %v7116
    %8259 = vmatprep.subr.bf16.mxu0 %v7119
    %8260 = vmatpush1.bf16.msra.mxu0 %v7118
    %8261 = vmatprep.subr.bf16.mxu0 %v7121
    %8262 = vmatpush1.bf16.msra.mxu0 %v7120
    %8263 = vmatprep.subr.bf16.mxu0 %v7123
    %8264 = vmatpush1.bf16.msra.mxu0 %v7122
    %8265 = vmatprep.subr.bf16.mxu0 %v7125
    %8266 = vmatpush1.bf16.msra.mxu0 %v7124
    %8267 = vmatprep.subr.bf16.mxu0 %v7127
    %8268 = vmatpush1.bf16.msra.mxu0 %v7126
    %8269 = vmatprep.subr.bf16.mxu0 %v7129
    %8270 = vmatpush1.bf16.msra.mxu0 %v7128
    %8271 = vmatprep.subr.bf16.mxu0 %v7131
    %8272 = vmatpush1.bf16.msra.mxu0 %v7130
    %8273 = vmatprep.subr.bf16.mxu0 %v7133
    %8274 = vmatpush1.bf16.msra.mxu0 %v7132
    %8275 = vmatprep.subr.bf16.mxu0 %v7135
    %8276 = vmatpush1.bf16.msra.mxu0 %v7134
    %8277 = vmatprep.subr.bf16.mxu0 %v7137
    %8278 = vmatpush1.bf16.msra.mxu0 %v7136
    %8279 = vmatprep.subr.bf16.mxu0 %v7139
    %8280 = vmatpush1.bf16.msra.mxu0 %v7138
    %8281 = vmatprep.subr.bf16.mxu0 %v7141
    %8282 = vmatpush1.bf16.msra.mxu0 %v7140
    %8283 = vmatprep.mubr.bf16.mxu0 %v4641
    %8284 = vmatmul.mubr.bf16.gmra.mrb[0].mxu0 %v4640
    %v8285 = vpop.f32.mrb[0].mxu0
    %v8286 = vadd.f32 %v8245, %v8285
    %v8287 = vpop.f32.mrb[0].mxu0
    %v8288 = vadd.f32 %v8247, %v8287
    %v8289 = vpop.f32.mrb[0].mxu0
    %v8290 = vpop.f32.mrb[0].mxu0
    %8291 = vdwg.mxu0
    %8292 = vmatprep.subr.bf16.mxu0 %v7143
    %8293 = vmatpush1.bf16.msra.mxu0 %v7142
    %8294 = vmatprep.subr.bf16.mxu0 %v7145
    %8295 = vmatpush1.bf16.msra.mxu0 %v7144
    %8296 = vmatprep.subr.bf16.mxu0 %v7147
    %8297 = vmatpush1.bf16.msra.mxu0 %v7146
    %8298 = vmatprep.subr.bf16.mxu0 %v7149
    %8299 = vmatpush1.bf16.msra.mxu0 %v7148
    %8300 = vmatprep.subr.bf16.mxu0 %v7151
    %8301 = vmatpush1.bf16.msra.mxu0 %v7150
    %8302 = vmatprep.subr.bf16.mxu0 %v7153
    %8303 = vmatpush1.bf16.msra.mxu0 %v7152
    %8304 = vmatprep.subr.bf16.mxu0 %v7155
    %8305 = vmatpush1.bf16.msra.mxu0 %v7154
    %8306 = vmatprep.subr.bf16.mxu0 %v7157
    %8307 = vmatpush1.bf16.msra.mxu0 %v7156
    %8308 = vmatprep.subr.bf16.mxu0 %v7159
    %8309 = vmatpush1.bf16.msra.mxu0 %v7158
    %8310 = vmatprep.subr.bf16.mxu0 %v7161
    %8311 = vmatpush1.bf16.msra.mxu0 %v7160
    %8312 = vmatprep.subr.bf16.mxu0 %v7163
    %8313 = vmatpush1.bf16.msra.mxu0 %v7162
    %8314 = vmatprep.subr.bf16.mxu0 %v7165
    %8315 = vmatpush1.bf16.msra.mxu0 %v7164
    %8316 = vmatprep.subr.bf16.mxu0 %v7167
    %8317 = vmatpush1.bf16.msra.mxu0 %v7166
    %8318 = vmatprep.subr.bf16.mxu0 %v7169
    %8319 = vmatpush1.bf16.msra.mxu0 %v7168
    %8320 = vmatprep.subr.bf16.mxu0 %v7171
    %8321 = vmatpush1.bf16.msra.mxu0 %v7170
    %8322 = vmatprep.subr.bf16.mxu0 %v7173
    %8323 = vmatpush1.bf16.msra.mxu0 %v7172
    %8324 = vmatprep.mubr.bf16.mxu0 %v4643
    %8325 = vmatmul.mubr.bf16.gmra.mrb[0].mxu0 %v4642
    %v8326 = vpop.f32.mrb[0].mxu0
    %v8327 = vadd.f32 %v8286, %v8326
    %v8328 = vpop.f32.mrb[0].mxu0
    %v8329 = vadd.f32 %v8288, %v8328
    %v8330 = vpop.f32.mrb[0].mxu0
    %v8331 = vpop.f32.mrb[0].mxu0
    %8332 = vdwg.mxu0
    %8333 = vmatprep.subr.bf16.mxu0 %v7175
    %8334 = vmatpush1.bf16.msra.mxu0 %v7174
    %8335 = vmatprep.subr.bf16.mxu0 %v7177
    %8336 = vmatpush1.bf16.msra.mxu0 %v7176
    %8337 = vmatprep.subr.bf16.mxu0 %v7179
    %8338 = vmatpush1.bf16.msra.mxu0 %v7178
    %8339 = vmatprep.subr.bf16.mxu0 %v7181
    %8340 = vmatpush1.bf16.msra.mxu0 %v7180
    %8341 = vmatprep.subr.bf16.mxu0 %v7183
    %8342 = vmatpush1.bf16.msra.mxu0 %v7182
    %8343 = vmatprep.subr.bf16.mxu0 %v7185
    %8344 = vmatpush1.bf16.msra.mxu0 %v7184
    %8345 = vmatprep.subr.bf16.mxu0 %v7187
    %8346 = vmatpush1.bf16.msra.mxu0 %v7186
    %8347 = vmatprep.subr.bf16.mxu0 %v7189
    %8348 = vmatpush1.bf16.msra.mxu0 %v7188
    %8349 = vmatprep.subr.bf16.mxu0 %v7191
    %8350 = vmatpush1.bf16.msra.mxu0 %v7190
    %8351 = vmatprep.subr.bf16.mxu0 %v7193
    %8352 = vmatpush1.bf16.msra.mxu0 %v7192
    %8353 = vmatprep.subr.bf16.mxu0 %v7195
    %8354 = vmatpush1.bf16.msra.mxu0 %v7194
    %8355 = vmatprep.subr.bf16.mxu0 %v7197
    %8356 = vmatpush1.bf16.msra.mxu0 %v7196
    %8357 = vmatprep.subr.bf16.mxu0 %v7199
    %8358 = vmatpush1.bf16.msra.mxu0 %v7198
    %8359 = vmatprep.subr.bf16.mxu0 %v7201
    %8360 = vmatpush1.bf16.msra.mxu0 %v7200
    %8361 = vmatprep.subr.bf16.mxu0 %v7203
    %8362 = vmatpush1.bf16.msra.mxu0 %v7202
    %8363 = vmatprep.subr.bf16.mxu0 %v7205
    %8364 = vmatpush1.bf16.msra.mxu0 %v7204
    %8365 = vmatprep.mubr.bf16.mxu0 %v4645
    %8366 = vmatmul.mubr.bf16.gmra.mrb[0].mxu0 %v4644
    %v8367 = vpop.f32.mrb[0].mxu0
    %v8368 = vadd.f32 %v8327, %v8367
    %v8369 = vpop.f32.mrb[0].mxu0
    %v8370 = vadd.f32 %v8329, %v8369
    %v8371 = vpop.f32.mrb[0].mxu0
    %v8372 = vpop.f32.mrb[0].mxu0
    %8373 = vdwg.mxu0
    %v8374 = vld [vmem:[%s6] sm:$0x3]
    %v8376 = vlaneseq
    %v8377 = vshrl.u32 %v8376, 7
    %v8378 = vsub.s32 0, %v8377
    %v8379 = vrot.slane %v8374, %v8378
    %v8380 = vlaneseq
    %v8381 = vshrl.u32 %v8380, 7
    %v8382 = vsub.s32 1, %v8381
    %v8383 = vrot.slane %v8374, %v8382
    %v8386 = vmul.f32 %v8368, %v8379
    %v8387 = vmul.f32 %v8370, %v8383
    %v8388 = vld [vmem:[%s7] sm:$0x3]
    %v8390 = vlaneseq
    %v8391 = vshrl.u32 %v8390, 7
    %v8392 = vsub.s32 0, %v8391
    %v8393 = vrot.slane %v8388, %v8392
    %v8394 = vlaneseq
    %v8395 = vshrl.u32 %v8394, 7
    %v8396 = vsub.s32 1, %v8395
    %v8397 = vrot.slane %v8388, %v8396
    %v8400 = vadd.f32 %v8386, %v8393
    %v8401 = vadd.f32 %v8387, %v8397
    %v8402 = vmax.f32 %v8400, 0.0
    %v8403 = vmax.f32 %v8401, 0.0
    %v8404 = vpack.c.bf16 %v8402, %v8402
    %v8405 = vpack.c.bf16 %v8403, %v8403
    %v8406 = vld [vmem:[%s8] sm:$0xf]
    %v8407 = vld [vmem:[%s8 + $0x4] sm:$0xf]
    %v8408 = vld [vmem:[%s8 + $0x8] sm:$0xf]
    %v8409 = vld [vmem:[%s8 + $0xc] sm:$0xf]
    %v8410 = vld [vmem:[%s8 + $0x10] sm:$0xf]
    %v8411 = vld [vmem:[%s8 + $0x14] sm:$0xf]
    %v8412 = vld [vmem:[%s8 + $0x18] sm:$0xf]
    %v8413 = vld [vmem:[%s8 + $0x1c] sm:$0xf]
    %v8414 = vld [vmem:[%s8 + $0x20] sm:$0xf]
    %v8415 = vld [vmem:[%s8 + $0x24] sm:$0xf]
    %v8416 = vld [vmem:[%s8 + $0x28] sm:$0xf]
    %v8417 = vld [vmem:[%s8 + $0x2c] sm:$0xf]
    %v8418 = vld [vmem:[%s8 + $0x30] sm:$0xf]
    %v8419 = vld [vmem:[%s8 + $0x34] sm:$0xf]
    %v8420 = vld [vmem:[%s8 + $0x38] sm:$0xf]
    %v8421 = vld [vmem:[%s8 + $0x3c] sm:$0xf]
    %v8422 = vld [vmem:[%s8 + $0x40] sm:$0xf]
    %v8423 = vld [vmem:[%s8 + $0x44] sm:$0xf]
    %v8424 = vld [vmem:[%s8 + $0x48] sm:$0xf]
    %v8425 = vld [vmem:[%s8 + $0x4c] sm:$0xf]
    %v8426 = vld [vmem:[%s8 + $0x50] sm:$0xf]
    %v8427 = vld [vmem:[%s8 + $0x54] sm:$0xf]
    %v8428 = vld [vmem:[%s8 + $0x58] sm:$0xf]
    %v8429 = vld [vmem:[%s8 + $0x5c] sm:$0xf]
    %v8430 = vld [vmem:[%s8 + $0x60] sm:$0xf]
    %v8431 = vld [vmem:[%s9] sm:$0x1]
    %v8433 = vlaneseq
    %v8434 = vshrl.u32 %v8433, 7
    %v8435 = vsub.s32 0, %v8434
    %v8436 = vrot.slane %v8431, %v8435
    %v8463 = vunpack.c.l.b16 %v8406
    %v8464 = vunpack.c.l.b16 %v8407
    %v8465 = vunpack.c.l.b16 %v8408
    %v8466 = vunpack.c.l.b16 %v8409
    %v8467 = vunpack.c.l.b16 %v8410
    %v8468 = vunpack.c.l.b16 %v8411
    %v8469 = vunpack.c.l.b16 %v8412
    %v8470 = vunpack.c.l.b16 %v8413
    %v8471 = vunpack.c.l.b16 %v8414
    %v8472 = vunpack.c.l.b16 %v8415
    %v8473 = vunpack.c.l.b16 %v8416
    %v8474 = vunpack.c.l.b16 %v8417
    %v8475 = vunpack.c.l.b16 %v8418
    %v8476 = vunpack.c.l.b16 %v8419
    %v8477 = vunpack.c.l.b16 %v8420
    %v8478 = vunpack.c.l.b16 %v8421
    %v8479 = vunpack.c.l.b16 %v8422
    %v8480 = vunpack.c.l.b16 %v8423
    %v8481 = vunpack.c.l.b16 %v8424
    %v8482 = vunpack.c.l.b16 %v8425
    %v8483 = vunpack.c.l.b16 %v8426
    %v8484 = vunpack.c.l.b16 %v8427
    %v8485 = vunpack.c.l.b16 %v8428
    %v8486 = vunpack.c.l.b16 %v8429
    %v8487 = vunpack.c.l.b16 %v8430
    %v8488 = vpack.c.b16 %v8464, %v8463
    %v8489 = vpack.c.b16 %v8466, %v8465
    %v8490 = vpack.c.b16 %v8468, %v8467
    %v8491 = vpack.c.b16 %v8470, %v8469
    %v8492 = vpack.c.b16 %v8472, %v8471
    %v8493 = vpack.c.b16 %v8474, %v8473
    %v8494 = vpack.c.b16 %v8476, %v8475
    %v8495 = vpack.c.b16 %v8478, %v8477
    %v8496 = vpack.c.b16 %v8480, %v8479
    %v8497 = vpack.c.b16 %v8482, %v8481
    %v8498 = vpack.c.b16 %v8484, %v8483
    %v8499 = vpack.c.b16 %v8486, %v8485
    %v8500 = vpack.c.b16 %v8487, %v8487
    %vm8513 = vcmask 588800
    %v8515 = vsel %vm8513, %v8405, 0
    %vm8517 = vcmask 1043456
    %v8519 = vsel %vm8517, %v8500, 0
    %8521 = vmatprep.subr.bf16.mxu0 0
    %8522 = vmatpush1.bf16.msra.mxu0 %v8488
    %8523 = vmatprep.subr.bf16.mxu0 0
    %8524 = vmatpush1.bf16.msra.mxu0 %v8489
    %8525 = vmatprep.subr.bf16.mxu0 0
    %8526 = vmatpush1.bf16.msra.mxu0 %v8490
    %8527 = vmatprep.subr.bf16.mxu0 0
    %8528 = vmatpush1.bf16.msra.mxu0 %v8491
    %8529 = vmatprep.subr.bf16.mxu0 0
    %8530 = vmatpush1.bf16.msra.mxu0 %v8492
    %8531 = vmatprep.subr.bf16.mxu0 0
    %8532 = vmatpush1.bf16.msra.mxu0 %v8493
    %8533 = vmatprep.subr.bf16.mxu0 0
    %8534 = vmatpush1.bf16.msra.mxu0 %v8494
    %8535 = vmatprep.subr.bf16.mxu0 0
    %8536 = vmatpush1.bf16.msra.mxu0 %v8495
    %8537 = vmatprep.subr.bf16.mxu0 0
    %8538 = vmatpush1.bf16.msra.mxu0 %v8496
    %8539 = vmatprep.subr.bf16.mxu0 0
    %8540 = vmatpush1.bf16.msra.mxu0 %v8497
    %8541 = vmatprep.subr.bf16.mxu0 0
    %8542 = vmatpush1.bf16.msra.mxu0 %v8498
    %8543 = vmatprep.subr.bf16.mxu0 0
    %8544 = vmatpush1.bf16.msra.mxu0 %v8499
    %8545 = vmatprep.subr.bf16.mxu0 0
    %8546 = vmatpush1.bf16.msra.mxu0 %v8519
    %8547 = vmatprep.subr.bf16.mxu0 0
    %8548 = vmatpush1.bf16.msra.mxu0 0
    %8549 = vmatprep.subr.bf16.mxu0 0
    %8550 = vmatpush1.bf16.msra.mxu0 0
    %8551 = vmatprep.subr.bf16.mxu0 0
    %8552 = vmatpush1.bf16.msra.mxu0 0
    %8553 = vmatprep.mubr.bf16.mxu0 %v8515
    %8554 = vmatmul.mubr.bf16.gmra.mrb[0].mxu0 %v8404
    %v8555 = vpop.f32.mrb[0].mxu0
    %v8556 = vadd.f32 %v8436, %v8555
    %v8557 = vpop.f32.mrb[0].mxu0
    %v8558 = vpop.f32.mrb[0].mxu0
    %v8559 = vpop.f32.mrb[0].mxu0
    %8560 = vdwg.mxu0
    %8561 = vst [vmem:[#allocation2] sm:$0x3] %v8556
    // Predicated region
    $region42: #{tpu_custom_call.1} parent=1 // pred_check
      _
    $region43: #{tpu_custom_call.1} parent=1 // pred_check_branch
      %8563 = sbr.rel (0) target = $region45
    $region44: #{tpu_custom_call.1} parent=1 // pred_region
      %s8565 = ssub.s32 32, 32
      %8566 = vsyncadd [#allocation3], %s8565
      %s8568 = sshll.u32 [#allocation2], 4
      %s8569 = int_to_ptr.vmem [resolvable:$true] %s8568
      %8571 = dma.vmem_to_hbm [thread:$0]  %s8569, 32, %s10, [#allocation3]
    $region45: #{tpu_custom_call.1} parent=1 // pred_fallthru
      _
    // Predicated region
    $region46: #{tpu_custom_call.1} parent=1 // pred_check
      _
    $region47: #{tpu_custom_call.1} parent=1 // pred_check_branch
      %8573 = sbr.rel (0) target = $region49
    $region48: #{tpu_custom_call.1} parent=1 // pred_region
      %8574 = dma.done [#allocation3], 32
    $region49: #{tpu_custom_call.1} parent=1 // pred_fallthru
      _
    %8575 = vsyncpa [#allocation3], 1

</llo_original>
